<compile_context>
chip_gen: v7x
topology: tpu7x:2x2x1
jax: 0.10.0
libtpu: 0.0.40
codegen_flags: <defaults>
</compile_context>

<pallas_src>
import functools

import jax
import jax.numpy as jnp
from jax import lax
from jax.experimental import pallas as pl
from jax.experimental.pallas import tpu as pltpu

LANE = 128  # TPU lane width; kernel channel dims are padded to this.


def _sigmoid(z):
    return 1.0 / (1.0 + jnp.exp(-z))


# ----------------------------------------------------------------------------
# Pallas kernels
# ----------------------------------------------------------------------------
def _conv_pool_bn_kernel(p_ref, w_ref, b_ref, g_ref, bt_ref, o_ref, *, pp):
    """Fused conv (im2col matmul) + bias + ReLU + MaxPool + BatchNorm (batch stats).

    p_ref : (pp, M, K)  im2col patches, pool-window-offset major.
    w_ref : (K, 128)    conv weights, Cout zero-padded to 128 lanes.
    b/g/bt: (1, 128)    bias / gamma / beta, zero-padded.
    o_ref : (M, 128)    pooled+normalized output (lane-dense store).
    """
    pooled = None
    for j in range(pp):  # unrolled window max; each slab is one MXU matmul
        y = jnp.dot(p_ref[j], w_ref[...], preferred_element_type=jnp.float32)
        y = jnp.maximum(y + b_ref[...], 0.0)
        pooled = y if pooled is None else jnp.maximum(pooled, y)
    mean = jnp.mean(pooled, axis=0, keepdims=True)
    var = jnp.mean((pooled - mean) ** 2, axis=0, keepdims=True)
    o_ref[...] = (pooled - mean) * lax.rsqrt(var + 1e-5) * g_ref[...] + bt_ref[...]


def _lstm_kernel(x_ref, wih_ref, whh_ref, b_ref, o_ref, *, hidden):
    """Stacked LSTM, all layers + timesteps fused in one kernel.

    x_ref  : (T, B, 128)  time-major inputs, features zero-padded to 128 lanes.
    wih_ref: (L, 128, 4H) input->gate weights (rows past the real in-dim are 0).
    whh_ref: (L, H, 4H)   hidden->gate weights.
    b_ref  : (L, 1, 4H)   combined bias (b_ih + b_hh).
    o_ref  : (T, B, 128)  hidden states of the last layer (padded); also used as
                          the layer-to-layer sequence buffer.
    """
    n_layers = wih_ref.shape[0]
    T, B, F = x_ref.shape
    H = hidden
    o_ref[...] = x_ref[...]
    for l in range(n_layers):
        def step(t, carry, l=l):
            h, c = carry
            x_t = o_ref[t]                                            # (B, 128)
            gates = (jnp.dot(x_t, wih_ref[l], preferred_element_type=jnp.float32)
                     + jnp.dot(h, whh_ref[l], preferred_element_type=jnp.float32)
                     + b_ref[l])                                      # (B, 4H)
            i = _sigmoid(gates[:, 0:H])
            f = _sigmoid(gates[:, H:2 * H])
            g = jnp.tanh(gates[:, 2 * H:3 * H])
            o = _sigmoid(gates[:, 3 * H:4 * H])
            c_new = f * c + i * g
            h_new = o * jnp.tanh(c_new)
            o_ref[t] = jnp.concatenate(
                [h_new, jnp.zeros((B, F - H), jnp.float32)], axis=1)
            return h_new, c_new

        z = jnp.zeros((B, H), jnp.float32)
        lax.fori_loop(0, T, step, (z, z))


def _head_kernel(f_ref, w1_ref, b1_ref, m_ref, w2_ref, b2_ref, o_ref):
    """Fused fc1 + ReLU + dropout(mask) + fc2, everything padded to 128 lanes."""
    h = jnp.dot(f_ref[...], w1_ref[...], preferred_element_type=jnp.float32) + b1_ref[...]
    h = jnp.maximum(h, 0.0) * m_ref[...]
    o_ref[...] = jnp.dot(h, w2_ref[...], preferred_element_type=jnp.float32) + b2_ref[...]


# ----------------------------------------------------------------------------
# Wrappers
# ----------------------------------------------------------------------------
def conv_pool_bn_pallas(x, w, b, gamma, beta, pool):
    """x: (N,H,W,Cin) -> fused 3x3 VALID conv + ReLU + MaxPool(pool) + BatchNorm.
    Returns (N, Hp, Wp, 128); only the first Cout lanes are meaningful."""
    N, H, W, Cin = x.shape
    KH, KW, _, Cout = w.shape
    Ho, Wo = H - KH + 1, W - KW + 1
    Hp, Wp = Ho // pool, Wo // pool
    K = KH * KW * Cin
    pp, mp = pool * pool, N * Hp * Wp

    # im2col (wrapper-side glue), rows ordered pool-window-offset major so the
    # kernel takes the window max over the leading axis with plain VPU maximums.
    cols = [x[:, kh:kh + Ho, kw:kw + Wo, :] for kh in range(KH) for kw in range(KW)]
    patches = jnp.concatenate(cols, axis=-1)                  # (N, Ho, Wo, K)
    patches = patches[:, :Hp * pool, :Wp * pool, :]
    patches = patches.reshape(N, Hp, pool, Wp, pool, K)
    patches = patches.transpose(2, 4, 0, 1, 3, 5).reshape(pp, mp, K)

    wp_ = jnp.pad(w.reshape(K, Cout), ((0, 0), (0, LANE - Cout)))
    bp = jnp.pad(b.reshape(1, Cout), ((0, 0), (0, LANE - Cout)))
    gp = jnp.pad(gamma.reshape(1, Cout), ((0, 0), (0, LANE - Cout)))
    btp = jnp.pad(beta.reshape(1, Cout), ((0, 0), (0, LANE - Cout)))

    out = pl.pallas_call(
        functools.partial(_conv_pool_bn_kernel, pp=pp),
        out_shape=jax.ShapeDtypeStruct((mp, LANE), jnp.float32),
        grid=(1,),
        in_specs=[
            pl.BlockSpec((pp, mp, K), lambda i: (0, 0, 0)),
            pl.BlockSpec((K, LANE), lambda i: (0, 0)),
            pl.BlockSpec((1, LANE), lambda i: (0, 0)),
            pl.BlockSpec((1, LANE), lambda i: (0, 0)),
            pl.BlockSpec((1, LANE), lambda i: (0, 0)),
        ],
        out_specs=pl.BlockSpec((mp, LANE), lambda i: (0, 0)),
        compiler_params=pltpu.CompilerParams(dimension_semantics=("arbitrary",)),
    )(patches, wp_, bp, gp, btp)
    return out.reshape(N, Hp, Wp, LANE)


def lstm_pallas(seq, lstm_params, hidden):
    """seq: (T, B, 128) time-major, feature-padded.  Returns (T, B, 128)."""
    T, B, _ = seq.shape
    L = len(lstm_params)
    wih = jnp.stack([jnp.pad(p["wih"], ((0, LANE - p["wih"].shape[0]), (0, 0)))
                     for p in lstm_params])                        # (L, 128, 4H)
    whh = jnp.stack([p["whh"] for p in lstm_params])               # (L, H, 4H)
    bias = jnp.stack([p["b"].reshape(1, -1) for p in lstm_params])  # (L, 1, 4H)

    return pl.pallas_call(
        functools.partial(_lstm_kernel, hidden=hidden),
        out_shape=jax.ShapeDtypeStruct((T, B, LANE), jnp.float32),
        grid=(1,),
        in_specs=[
            pl.BlockSpec((T, B, LANE), lambda i: (0, 0, 0)),
            pl.BlockSpec((L, LANE, 4 * hidden), lambda i: (0, 0, 0)),
            pl.BlockSpec((L, hidden, 4 * hidden), lambda i: (0, 0, 0)),
            pl.BlockSpec((L, 1, 4 * hidden), lambda i: (0, 0, 0)),
        ],
        out_specs=pl.BlockSpec((T, B, LANE), lambda i: (0, 0, 0)),
        compiler_params=pltpu.CompilerParams(dimension_semantics=("arbitrary",)),
    )(seq, wih, whh, bias)


def head_pallas(feat, w1, b1, mask, w2, b2, out_dim):
    """feat: (N, Fin) -> fc1 + ReLU + dropout-mask + fc2 -> (N, out_dim)."""
    N, Fin = feat.shape
    Hd = w1.shape[1]
    w1p = jnp.pad(w1, ((0, 0), (0, LANE - Hd)))
    b1p = jnp.pad(b1.reshape(1, -1), ((0, 0), (0, LANE - Hd)))
    mkp = jnp.pad(mask, ((0, 0), (0, LANE - Hd)))
    w2p = jnp.pad(w2, ((0, LANE - Hd), (0, LANE - w2.shape[1])))
    b2p = jnp.pad(b2.reshape(1, -1), ((0, 0), (0, LANE - w2.shape[1])))

    out = pl.pallas_call(
        _head_kernel,
        out_shape=jax.ShapeDtypeStruct((N, LANE), jnp.float32),
        grid=(1,),
        in_specs=[
            pl.BlockSpec((N, Fin), lambda i: (0, 0)),
            pl.BlockSpec((Fin, LANE), lambda i: (0, 0)),
            pl.BlockSpec((1, LANE), lambda i: (0, 0)),
            pl.BlockSpec((N, LANE), lambda i: (0, 0)),
            pl.BlockSpec((LANE, LANE), lambda i: (0, 0)),
            pl.BlockSpec((1, LANE), lambda i: (0, 0)),
        ],
        out_specs=pl.BlockSpec((N, LANE), lambda i: (0, 0)),
        compiler_params=pltpu.CompilerParams(dimension_semantics=("arbitrary",)),
    )(feat, w1p, b1p, mkp, w2p, b2p)
    return out[:, :out_dim]


# ----------------------------------------------------------------------------
# Full CRNN_b_spec forward (Pallas path)
# ----------------------------------------------------------------------------
def crnn_forward(x_nchw, params, drop_mask, *, hidden, out_dim):
    N = x_nchw.shape[0]

    # ---------------- CNN ----------------
    x = jnp.transpose(x_nchw, (0, 2, 3, 1)).astype(jnp.float32)      # NHWC
    x = conv_pool_bn_pallas(x, params["w1"], params["b1"],
                            params["g1"], params["be1"], 2)
    x = conv_pool_bn_pallas(x[..., :params["w2"].shape[2]], params["w2"], params["b2"],
                            params["g2"], params["be2"], 2)
    x = conv_pool_bn_pallas(x[..., :params["w3"].shape[2]], params["w3"], params["b3"],
                            params["g3"], params["be3"], 4)
    x = x[..., :params["w3"].shape[3]]
    cnn_out = jnp.transpose(x, (0, 3, 1, 2)).reshape(N, -1)          # PyTorch flatten order

    # ---------------- RNN_b ----------------
    r = x_nchw[:, 0].astype(jnp.float32)          # squeeze(dim=1): (N, H, W)
    r = jnp.transpose(r, (0, 2, 1))               # permute(0,2,1): (N, W, H)
    _, Wd, Hd = r.shape
    T, F = Wd // 2, Hd // 2
    assert F <= LANE
    r = r[:, :T * 2, :F * 2].reshape(N, T, 2, F, 2).max(axis=(2, 4))  # MaxPool2d(2)
    seq = jnp.transpose(r, (1, 0, 2))             # (T, N, F) time-major
    seq = jnp.pad(seq, ((0, 0), (0, 0), (0, LANE - F)))
    lstm_out = lstm_pallas(seq, params["lstm"], hidden)               # (T, N, 128)
    rnn_out = jnp.transpose(lstm_out[:, :, :hidden], (1, 0, 2)).reshape(N, -1)

    # ---------------- head ----------------
    feat = jnp.concatenate([cnn_out, rnn_out], axis=1)
    return head_pallas(feat, params["fc1_w"], params["fc1_b"], drop_mask,
                       params["fc2_w"], params["fc2_b"], out_dim)


# ----------------------------------------------------------------------------
# Pure-JAX reference (for correctness check)
# ----------------------------------------------------------------------------
def crnn_forward_ref(x_nchw, params, drop_mask, *, hidden, out_dim):
    N = x_nchw.shape[0]
    x = jnp.transpose(x_nchw, (0, 2, 3, 1)).astype(jnp.float32)

    def block(x, w, b, g, bt, p):
        y = lax.conv_general_dilated(x, w, (1, 1), "VALID",
                                     dimension_numbers=("NHWC", "HWIO", "NHWC"))
        y = jnp.maximum(y + b[None, None, None, :], 0.0)
        y = lax.reduce_window(y, -jnp.inf, lax.max, (1, p, p, 1), (1, p, p, 1), "VALID")
        mean = jnp.mean(y, axis=(0, 1, 2), keepdims=True)
        var = jnp.mean((y - mean) ** 2, axis=(0, 1, 2), keepdims=True)
        return (y - mean) * lax.rsqrt(var + 1e-5) * g + bt

    y = block(x, params["w1"], params["b1"], params["g1"], params["be1"], 2)
    y = block(y, params["w2"], params["b2"], params["g2"], params["be2"], 2)
    y = block(y, params["w3"], params["b3"], params["g3"], params["be3"], 4)
    cnn_out = jnp.transpose(y, (0, 3, 1, 2)).reshape(N, -1)

    r = x_nchw[:, 0].astype(jnp.float32)
    r = jnp.transpose(r, (0, 2, 1))
    _, Wd, Hd = r.shape
    T, F = Wd // 2, Hd // 2
    seq = r[:, :T * 2, :F * 2].reshape(N, T, 2, F, 2).max(axis=(2, 4))  # (N, T, F)
    H = hidden
    for lp in params["lstm"]:
        def step(carry, x_t, lp=lp):
            h, c = carry
            gates = x_t @ lp["wih"] + h @ lp["whh"] + lp["b"]
            i = _sigmoid(gates[:, 0:H]); f = _sigmoid(gates[:, H:2 * H])
            g = jnp.tanh(gates[:, 2 * H:3 * H]); o = _sigmoid(gates[:, 3 * H:4 * H])
            c = f * c + i * g
            h = o * jnp.tanh(c)
            return (h, c), h
        init = (jnp.zeros((N, H), jnp.float32), jnp.zeros((N, H), jnp.float32))
        _, ys = lax.scan(step, init, jnp.swapaxes(seq, 0, 1))
        seq = jnp.swapaxes(ys, 0, 1)
    rnn_out = seq.reshape(N, -1)

    feat = jnp.concatenate([cnn_out, rnn_out], axis=1)
    h1 = jnp.maximum(feat @ params["fc1_w"] + params["fc1_b"], 0.0) * drop_mask
    return h1 @ params["fc2_w"] + params["fc2_b"]


# ----------------------------------------------------------------------------
# Deterministic parameter init
# ----------------------------------------------------------------------------
def init_params(key, in_channels, lstm_in, hidden, n_layers, fc_in, out_dim):
    keys = iter(jax.random.split(key, 32))

    def nrm(shape, scale):
        return (scale * jax.random.normal(next(keys), shape, jnp.float32)).astype(jnp.float32)

    def conv(kh, kw, cin, cout):
        return nrm((kh, kw, cin, cout), 1.0 / (kh * kw * cin) ** 0.5)

    p = {
        "w1": conv(3, 3, in_channels, 16), "b1": nrm((16,), 0.01),
        "g1": 1.0 + nrm((16,), 0.1), "be1": nrm((16,), 0.1),
        "w2": conv(3, 3, 16, 32), "b2": nrm((32,), 0.01),
        "g2": 1.0 + nrm((32,), 0.1), "be2": nrm((32,), 0.1),
        "w3": conv(3, 3, 32, 64), "b3": nrm((64,), 0.01),
        "g3": 1.0 + nrm((64,), 0.1), "be3": nrm((64,), 0.1),
    }
    lstm = []
    in_dim = lstm_in
    for _ in range(n_layers):
        lstm.append({
            "wih": nrm((in_dim, 4 * hidden), 1.0 / in_dim ** 0.5),
            "whh": nrm((hidden, 4 * hidden), 1.0 / hidden ** 0.5),
            "b": nrm((4 * hidden,), 0.01),
        })
        in_dim = hidden
    p["lstm"] = lstm
    p["fc1_w"] = nrm((fc_in, 32), 1.0 / fc_in ** 0.5)
    p["fc1_b"] = nrm((32,), 0.01)
    p["fc2_w"] = nrm((32, out_dim), 1.0 / 32 ** 0.5)
    p["fc2_b"] = nrm((out_dim,), 0.01)
    return p


if __name__ == "__main__":
    key = jax.random.PRNGKey(0)
    k_x, k_p, k_d = jax.random.split(key, 3)

    # Small shapes consistent with the module:
    #   x: (N=2, C=1, 30, 30)
    #   CNN: 30 ->conv 28 ->pool2 14 ->conv 12 ->pool2 6 ->conv 4 ->pool4 1 => 64 feats
    #   RNN_b: permute + MaxPool2d(2) => seq_len 15, input_size//2 = 15, hidden 64,
    #          2 stacked LSTM layers => 15*64 = 960 feats
    #   head: fc_in = 64 + 960 = 1024 -> fc1(32) -> ReLU -> dropout -> fc2(10)
    N, C, H, W = 2, 1, 30, 30
    hidden, n_layers, out_dim = 64, 2, 10
    T, F = W // 2, H // 2
    fc_in = 64 + T * hidden

    x = jax.random.normal(k_x, (N, C, H, W), jnp.float32)
    params = init_params(k_p, C, F, hidden, n_layers, fc_in, out_dim)
    # Training-mode dropout (p=0.5, inverted scaling); same mask used by kernel & ref.
    drop_mask = (jax.random.bernoulli(k_d, 0.5, (N, 32)) / 0.5).astype(jnp.float32)

    fwd = jax.jit(functools.partial(crnn_forward, hidden=hidden, out_dim=out_dim))
    out = jax.block_until_ready(fwd(x, params, drop_mask))
    assert out.shape == (N, out_dim), out.shape

    ref = jax.block_until_ready(
        crnn_forward_ref(x, params, drop_mask, hidden=hidden, out_dim=out_dim))
    err = float(jnp.max(jnp.abs(out - ref)))
    assert err < 5e-3, f"max abs err {err}"

    print("KERNEL_OK")
</pallas_src>

<mosaic_0001>
module attributes {stable_mosaic.version = 11 : i64} {
  func.func @_conv_pool_bn_kernel(%arg0: i32, %arg1: memref<4x392x9xf32, #tpu.memory_space<vmem>>, %arg2: memref<9x128xf32, #tpu.memory_space<vmem>>, %arg3: memref<1x128xf32, #tpu.memory_space<vmem>>, %arg4: memref<1x128xf32, #tpu.memory_space<vmem>>, %arg5: memref<1x128xf32, #tpu.memory_space<vmem>>, %arg6: memref<392x128xf32, #tpu.memory_space<vmem>>) attributes {dimension_semantics = [#tpu.dimension_semantics<arbitrary>], iteration_bounds = array<i64: 1>, scalar_prefetch = 0 : i64, scratch_operands = 0 : i64, tpu.core_type = #tpu.core_type<tc>, window_params = [{pipeline_mode = #tpu.pipeline_mode<synchronous>, transform_indices = @transform_0, window_bounds = array<i64: 4, 392, 9>}, {pipeline_mode = #tpu.pipeline_mode<synchronous>, transform_indices = @transform_1, window_bounds = array<i64: 9, 128>}, {pipeline_mode = #tpu.pipeline_mode<synchronous>, transform_indices = @transform_2, window_bounds = array<i64: 1, 128>}, {pipeline_mode = #tpu.pipeline_mode<synchronous>, transform_indices = @transform_3, window_bounds = array<i64: 1, 128>}, {pipeline_mode = #tpu.pipeline_mode<synchronous>, transform_indices = @transform_4, window_bounds = array<i64: 1, 128>}, {pipeline_mode = #tpu.pipeline_mode<synchronous>, transform_indices = @transform_5, window_bounds = array<i64: 392, 128>}]} {
    %c0 = arith.constant 0 : index
    %c0_0 = arith.constant 0 : index
    %c0_1 = arith.constant 0 : index
    %0 = vector.load %arg1[%c0, %c0_0, %c0_1] : memref<4x392x9xf32, #tpu.memory_space<vmem>>, vector<1x392x9xf32>
    %1 = vector.shape_cast %0 : vector<1x392x9xf32> to vector<392x9xf32>
    %c0_2 = arith.constant 0 : index
    %c0_3 = arith.constant 0 : index
    %2 = vector.load %arg2[%c0_2, %c0_3] : memref<9x128xf32, #tpu.memory_space<vmem>>, vector<9x128xf32>
    %cst = arith.constant dense<0.000000e+00> : vector<392x128xf32>
    %3 = tpu.matmul %1, %2, %cst {dimension_numbers = #tpu.dot_dimension_numbers<[1], [0], [0], [1], [0, 0, 1, 1], [], []>} : vector<392x9xf32>, vector<9x128xf32>, vector<392x128xf32> -> vector<392x128xf32>
    %c0_4 = arith.constant 0 : index
    %c0_5 = arith.constant 0 : index
    %4 = vector.load %arg3[%c0_4, %c0_5] : memref<1x128xf32, #tpu.memory_space<vmem>>, vector<1x128xf32>
    %5 = vector.broadcast %4 : vector<1x128xf32> to vector<392x128xf32>
    %6 = arith.addf %3, %5 : vector<392x128xf32>
    %cst_6 = arith.constant 0.000000e+00 : f32
    %7 = vector.broadcast %cst_6 : f32 to vector<392x128xf32>
    %8 = arith.maximumf %6, %7 : vector<392x128xf32>
    %c1 = arith.constant 1 : index
    %c0_7 = arith.constant 0 : index
    %c0_8 = arith.constant 0 : index
    %9 = vector.load %arg1[%c1, %c0_7, %c0_8] : memref<4x392x9xf32, #tpu.memory_space<vmem>>, vector<1x392x9xf32>
    %10 = vector.shape_cast %9 : vector<1x392x9xf32> to vector<392x9xf32>
    %c0_9 = arith.constant 0 : index
    %c0_10 = arith.constant 0 : index
    %11 = vector.load %arg2[%c0_9, %c0_10] : memref<9x128xf32, #tpu.memory_space<vmem>>, vector<9x128xf32>
    %cst_11 = arith.constant dense<0.000000e+00> : vector<392x128xf32>
    %12 = tpu.matmul %10, %11, %cst_11 {dimension_numbers = #tpu.dot_dimension_numbers<[1], [0], [0], [1], [0, 0, 1, 1], [], []>} : vector<392x9xf32>, vector<9x128xf32>, vector<392x128xf32> -> vector<392x128xf32>
    %c0_12 = arith.constant 0 : index
    %c0_13 = arith.constant 0 : index
    %13 = vector.load %arg3[%c0_12, %c0_13] : memref<1x128xf32, #tpu.memory_space<vmem>>, vector<1x128xf32>
    %14 = vector.broadcast %13 : vector<1x128xf32> to vector<392x128xf32>
    %15 = arith.addf %12, %14 : vector<392x128xf32>
    %cst_14 = arith.constant 0.000000e+00 : f32
    %16 = vector.broadcast %cst_14 : f32 to vector<392x128xf32>
    %17 = arith.maximumf %15, %16 : vector<392x128xf32>
    %18 = arith.maximumf %8, %17 : vector<392x128xf32>
    %c2 = arith.constant 2 : index
    %c0_15 = arith.constant 0 : index
    %c0_16 = arith.constant 0 : index
    %19 = vector.load %arg1[%c2, %c0_15, %c0_16] : memref<4x392x9xf32, #tpu.memory_space<vmem>>, vector<1x392x9xf32>
    %20 = vector.shape_cast %19 : vector<1x392x9xf32> to vector<392x9xf32>
    %c0_17 = arith.constant 0 : index
    %c0_18 = arith.constant 0 : index
    %21 = vector.load %arg2[%c0_17, %c0_18] : memref<9x128xf32, #tpu.memory_space<vmem>>, vector<9x128xf32>
    %cst_19 = arith.constant dense<0.000000e+00> : vector<392x128xf32>
    %22 = tpu.matmul %20, %21, %cst_19 {dimension_numbers = #tpu.dot_dimension_numbers<[1], [0], [0], [1], [0, 0, 1, 1], [], []>} : vector<392x9xf32>, vector<9x128xf32>, vector<392x128xf32> -> vector<392x128xf32>
    %c0_20 = arith.constant 0 : index
    %c0_21 = arith.constant 0 : index
    %23 = vector.load %arg3[%c0_20, %c0_21] : memref<1x128xf32, #tpu.memory_space<vmem>>, vector<1x128xf32>
    %24 = vector.broadcast %23 : vector<1x128xf32> to vector<392x128xf32>
    %25 = arith.addf %22, %24 : vector<392x128xf32>
    %cst_22 = arith.constant 0.000000e+00 : f32
    %26 = vector.broadcast %cst_22 : f32 to vector<392x128xf32>
    %27 = arith.maximumf %25, %26 : vector<392x128xf32>
    %28 = arith.maximumf %18, %27 : vector<392x128xf32>
    %c3 = arith.constant 3 : index
    %c0_23 = arith.constant 0 : index
    %c0_24 = arith.constant 0 : index
    %29 = vector.load %arg1[%c3, %c0_23, %c0_24] : memref<4x392x9xf32, #tpu.memory_space<vmem>>, vector<1x392x9xf32>
    %30 = vector.shape_cast %29 : vector<1x392x9xf32> to vector<392x9xf32>
    %c0_25 = arith.constant 0 : index
    %c0_26 = arith.constant 0 : index
    %31 = vector.load %arg2[%c0_25, %c0_26] : memref<9x128xf32, #tpu.memory_space<vmem>>, vector<9x128xf32>
    %cst_27 = arith.constant dense<0.000000e+00> : vector<392x128xf32>
    %32 = tpu.matmul %30, %31, %cst_27 {dimension_numbers = #tpu.dot_dimension_numbers<[1], [0], [0], [1], [0, 0, 1, 1], [], []>} : vector<392x9xf32>, vector<9x128xf32>, vector<392x128xf32> -> vector<392x128xf32>
    %c0_28 = arith.constant 0 : index
    %c0_29 = arith.constant 0 : index
    %33 = vector.load %arg3[%c0_28, %c0_29] : memref<1x128xf32, #tpu.memory_space<vmem>>, vector<1x128xf32>
    %34 = vector.broadcast %33 : vector<1x128xf32> to vector<392x128xf32>
    %35 = arith.addf %32, %34 : vector<392x128xf32>
    %cst_30 = arith.constant 0.000000e+00 : f32
    %36 = vector.broadcast %cst_30 : f32 to vector<392x128xf32>
    %37 = arith.maximumf %35, %36 : vector<392x128xf32>
    %38 = arith.maximumf %28, %37 : vector<392x128xf32>
    %cst_31 = arith.constant dense<0.000000e+00> : vector<128xf32>
    %39 = vector.multi_reduction <add>, %38, %cst_31 [0] : vector<392x128xf32> to vector<128xf32>
    %40 = vector.shape_cast %39 : vector<128xf32> to vector<1x128xf32>
    %cst_32 = arith.constant 3.920000e+02 : f32
    %41 = vector.broadcast %cst_32 : f32 to vector<1x128xf32>
    %42 = arith.divf %40, %41 : vector<1x128xf32>
    %43 = vector.broadcast %42 : vector<1x128xf32> to vector<392x128xf32>
    %44 = arith.subf %38, %43 : vector<392x128xf32>
    %45 = arith.mulf %44, %44 : vector<392x128xf32>
    %cst_33 = arith.constant dense<0.000000e+00> : vector<128xf32>
    %46 = vector.multi_reduction <add>, %45, %cst_33 [0] : vector<392x128xf32> to vector<128xf32>
    %47 = vector.shape_cast %46 : vector<128xf32> to vector<1x128xf32>
    %cst_34 = arith.constant 3.920000e+02 : f32
    %48 = vector.broadcast %cst_34 : f32 to vector<1x128xf32>
    %49 = arith.divf %47, %48 : vector<1x128xf32>
    %50 = vector.broadcast %42 : vector<1x128xf32> to vector<392x128xf32>
    %51 = arith.subf %38, %50 : vector<392x128xf32>
    %cst_35 = arith.constant 9.99999974E-6 : f32
    %52 = vector.broadcast %cst_35 : f32 to vector<1x128xf32>
    %53 = arith.addf %49, %52 : vector<1x128xf32>
    %54 = math.rsqrt %53 : vector<1x128xf32>
    %55 = vector.broadcast %54 : vector<1x128xf32> to vector<392x128xf32>
    %56 = arith.mulf %51, %55 : vector<392x128xf32>
    %c0_36 = arith.constant 0 : index
    %c0_37 = arith.constant 0 : index
    %57 = vector.load %arg4[%c0_36, %c0_37] : memref<1x128xf32, #tpu.memory_space<vmem>>, vector<1x128xf32>
    %58 = vector.broadcast %57 : vector<1x128xf32> to vector<392x128xf32>
    %59 = arith.mulf %56, %58 : vector<392x128xf32>
    %c0_38 = arith.constant 0 : index
    %c0_39 = arith.constant 0 : index
    %60 = vector.load %arg5[%c0_38, %c0_39] : memref<1x128xf32, #tpu.memory_space<vmem>>, vector<1x128xf32>
    %61 = vector.broadcast %60 : vector<1x128xf32> to vector<392x128xf32>
    %62 = arith.addf %59, %61 : vector<392x128xf32>
    %c0_40 = arith.constant 0 : index
    %c0_41 = arith.constant 0 : index
    %63 = vector.load %arg6[%c0_40, %c0_41] : memref<392x128xf32, #tpu.memory_space<vmem>>, vector<392x128xf32>
    tpu.vector_store %arg6[%c0_40, %c0_41], %62 {strides = array<i32>} : memref<392x128xf32, #tpu.memory_space<vmem>>, vector<392x128xf32>,
    return
  }
  func.func @transform_0(%arg0: i32) -> (i32, i32, i32) {
    %c0_i32 = arith.constant 0 : i32
    %c0_i32_0 = arith.constant 0 : i32
    %c0_i32_1 = arith.constant 0 : i32
    %c0_i32_2 = arith.constant 0 : i32
    return %c0_i32, %c0_i32_0, %c0_i32_1 : i32, i32, i32
  }
  func.func @transform_1(%arg0: i32) -> (i32, i32) {
    %c0_i32 = arith.constant 0 : i32
    %c0_i32_0 = arith.constant 0 : i32
    %c0_i32_1 = arith.constant 0 : i32
    return %c0_i32, %c0_i32_0 : i32, i32
  }
  func.func @transform_2(%arg0: i32) -> (i32, i32) {
    %c0_i32 = arith.constant 0 : i32
    %c0_i32_0 = arith.constant 0 : i32
    %c0_i32_1 = arith.constant 0 : i32
    return %c0_i32, %c0_i32_0 : i32, i32
  }
  func.func @transform_3(%arg0: i32) -> (i32, i32) {
    %c0_i32 = arith.constant 0 : i32
    %c0_i32_0 = arith.constant 0 : i32
    %c0_i32_1 = arith.constant 0 : i32
    return %c0_i32, %c0_i32_0 : i32, i32
  }
  func.func @transform_4(%arg0: i32) -> (i32, i32) {
    %c0_i32 = arith.constant 0 : i32
    %c0_i32_0 = arith.constant 0 : i32
    %c0_i32_1 = arith.constant 0 : i32
    return %c0_i32, %c0_i32_0 : i32, i32
  }
  func.func @transform_5(%arg0: i32) -> (i32, i32) {
    %c0_i32 = arith.constant 0 : i32
    %c0_i32_0 = arith.constant 0 : i32
    %c0_i32_1 = arith.constant 0 : i32
    return %c0_i32, %c0_i32_0 : i32, i32
  }
}

module attributes {stable_mosaic.version = 11 : i64} {
  func.func @_conv_pool_bn_kernel(%arg0: i32, %arg1: memref<4x72x144xf32, #tpu.memory_space<vmem>>, %arg2: memref<144x128xf32, #tpu.memory_space<vmem>>, %arg3: memref<1x128xf32, #tpu.memory_space<vmem>>, %arg4: memref<1x128xf32, #tpu.memory_space<vmem>>, %arg5: memref<1x128xf32, #tpu.memory_space<vmem>>, %arg6: memref<72x128xf32, #tpu.memory_space<vmem>>) attributes {dimension_semantics = [#tpu.dimension_semantics<arbitrary>], iteration_bounds = array<i64: 1>, scalar_prefetch = 0 : i64, scratch_operands = 0 : i64, tpu.core_type = #tpu.core_type<tc>, window_params = [{pipeline_mode = #tpu.pipeline_mode<synchronous>, transform_indices = @transform_0, window_bounds = array<i64: 4, 72, 144>}, {pipeline_mode = #tpu.pipeline_mode<synchronous>, transform_indices = @transform_1, window_bounds = array<i64: 144, 128>}, {pipeline_mode = #tpu.pipeline_mode<synchronous>, transform_indices = @transform_2, window_bounds = array<i64: 1, 128>}, {pipeline_mode = #tpu.pipeline_mode<synchronous>, transform_indices = @transform_3, window_bounds = array<i64: 1, 128>}, {pipeline_mode = #tpu.pipeline_mode<synchronous>, transform_indices = @transform_4, window_bounds = array<i64: 1, 128>}, {pipeline_mode = #tpu.pipeline_mode<synchronous>, transform_indices = @transform_5, window_bounds = array<i64: 72, 128>}]} {
    %c0 = arith.constant 0 : index
    %c0_0 = arith.constant 0 : index
    %c0_1 = arith.constant 0 : index
    %0 = vector.load %arg1[%c0, %c0_0, %c0_1] : memref<4x72x144xf32, #tpu.memory_space<vmem>>, vector<1x72x144xf32>
    %1 = vector.shape_cast %0 : vector<1x72x144xf32> to vector<72x144xf32>
    %c0_2 = arith.constant 0 : index
    %c0_3 = arith.constant 0 : index
    %2 = vector.load %arg2[%c0_2, %c0_3] : memref<144x128xf32, #tpu.memory_space<vmem>>, vector<144x128xf32>
    %cst = arith.constant dense<0.000000e+00> : vector<72x128xf32>
    %3 = tpu.matmul %1, %2, %cst {dimension_numbers = #tpu.dot_dimension_numbers<[1], [0], [0], [1], [0, 0, 1, 1], [], []>} : vector<72x144xf32>, vector<144x128xf32>, vector<72x128xf32> -> vector<72x128xf32>
    %c0_4 = arith.constant 0 : index
    %c0_5 = arith.constant 0 : index
    %4 = vector.load %arg3[%c0_4, %c0_5] : memref<1x128xf32, #tpu.memory_space<vmem>>, vector<1x128xf32>
    %5 = vector.broadcast %4 : vector<1x128xf32> to vector<72x128xf32>
    %6 = arith.addf %3, %5 : vector<72x128xf32>
    %cst_6 = arith.constant 0.000000e+00 : f32
    %7 = vector.broadcast %cst_6 : f32 to vector<72x128xf32>
    %8 = arith.maximumf %6, %7 : vector<72x128xf32>
    %c1 = arith.constant 1 : index
    %c0_7 = arith.constant 0 : index
    %c0_8 = arith.constant 0 : index
    %9 = vector.load %arg1[%c1, %c0_7, %c0_8] : memref<4x72x144xf32, #tpu.memory_space<vmem>>, vector<1x72x144xf32>
    %10 = vector.shape_cast %9 : vector<1x72x144xf32> to vector<72x144xf32>
    %c0_9 = arith.constant 0 : index
    %c0_10 = arith.constant 0 : index
    %11 = vector.load %arg2[%c0_9, %c0_10] : memref<144x128xf32, #tpu.memory_space<vmem>>, vector<144x128xf32>
    %cst_11 = arith.constant dense<0.000000e+00> : vector<72x128xf32>
    %12 = tpu.matmul %10, %11, %cst_11 {dimension_numbers = #tpu.dot_dimension_numbers<[1], [0], [0], [1], [0, 0, 1, 1], [], []>} : vector<72x144xf32>, vector<144x128xf32>, vector<72x128xf32> -> vector<72x128xf32>
    %c0_12 = arith.constant 0 : index
    %c0_13 = arith.constant 0 : index
    %13 = vector.load %arg3[%c0_12, %c0_13] : memref<1x128xf32, #tpu.memory_space<vmem>>, vector<1x128xf32>
    %14 = vector.broadcast %13 : vector<1x128xf32> to vector<72x128xf32>
    %15 = arith.addf %12, %14 : vector<72x128xf32>
    %cst_14 = arith.constant 0.000000e+00 : f32
    %16 = vector.broadcast %cst_14 : f32 to vector<72x128xf32>
    %17 = arith.maximumf %15, %16 : vector<72x128xf32>
    %18 = arith.maximumf %8, %17 : vector<72x128xf32>
    %c2 = arith.constant 2 : index
    %c0_15 = arith.constant 0 : index
    %c0_16 = arith.constant 0 : index
    %19 = vector.load %arg1[%c2, %c0_15, %c0_16] : memref<4x72x144xf32, #tpu.memory_space<vmem>>, vector<1x72x144xf32>
    %20 = vector.shape_cast %19 : vector<1x72x144xf32> to vector<72x144xf32>
    %c0_17 = arith.constant 0 : index
    %c0_18 = arith.constant 0 : index
    %21 = vector.load %arg2[%c0_17, %c0_18] : memref<144x128xf32, #tpu.memory_space<vmem>>, vector<144x128xf32>
    %cst_19 = arith.constant dense<0.000000e+00> : vector<72x128xf32>
    %22 = tpu.matmul %20, %21, %cst_19 {dimension_numbers = #tpu.dot_dimension_numbers<[1], [0], [0], [1], [0, 0, 1, 1], [], []>} : vector<72x144xf32>, vector<144x128xf32>, vector<72x128xf32> -> vector<72x128xf32>
    %c0_20 = arith.constant 0 : index
    %c0_21 = arith.constant 0 : index
    %23 = vector.load %arg3[%c0_20, %c0_21] : memref<1x128xf32, #tpu.memory_space<vmem>>, vector<1x128xf32>
    %24 = vector.broadcast %23 : vector<1x128xf32> to vector<72x128xf32>
    %25 = arith.addf %22, %24 : vector<72x128xf32>
    %cst_22 = arith.constant 0.000000e+00 : f32
    %26 = vector.broadcast %cst_22 : f32 to vector<72x128xf32>
    %27 = arith.maximumf %25, %26 : vector<72x128xf32>
    %28 = arith.maximumf %18, %27 : vector<72x128xf32>
    %c3 = arith.constant 3 : index
    %c0_23 = arith.constant 0 : index
    %c0_24 = arith.constant 0 : index
    %29 = vector.load %arg1[%c3, %c0_23, %c0_24] : memref<4x72x144xf32, #tpu.memory_space<vmem>>, vector<1x72x144xf32>
    %30 = vector.shape_cast %29 : vector<1x72x144xf32> to vector<72x144xf32>
    %c0_25 = arith.constant 0 : index
    %c0_26 = arith.constant 0 : index
    %31 = vector.load %arg2[%c0_25, %c0_26] : memref<144x128xf32, #tpu.memory_space<vmem>>, vector<144x128xf32>
    %cst_27 = arith.constant dense<0.000000e+00> : vector<72x128xf32>
    %32 = tpu.matmul %30, %31, %cst_27 {dimension_numbers = #tpu.dot_dimension_numbers<[1], [0], [0], [1], [0, 0, 1, 1], [], []>} : vector<72x144xf32>, vector<144x128xf32>, vector<72x128xf32> -> vector<72x128xf32>
    %c0_28 = arith.constant 0 : index
    %c0_29 = arith.constant 0 : index
    %33 = vector.load %arg3[%c0_28, %c0_29] : memref<1x128xf32, #tpu.memory_space<vmem>>, vector<1x128xf32>
    %34 = vector.broadcast %33 : vector<1x128xf32> to vector<72x128xf32>
    %35 = arith.addf %32, %34 : vector<72x128xf32>
    %cst_30 = arith.constant 0.000000e+00 : f32
    %36 = vector.broadcast %cst_30 : f32 to vector<72x128xf32>
    %37 = arith.maximumf %35, %36 : vector<72x128xf32>
    %38 = arith.maximumf %28, %37 : vector<72x128xf32>
    %cst_31 = arith.constant dense<0.000000e+00> : vector<128xf32>
    %39 = vector.multi_reduction <add>, %38, %cst_31 [0] : vector<72x128xf32> to vector<128xf32>
    %40 = vector.shape_cast %39 : vector<128xf32> to vector<1x128xf32>
    %cst_32 = arith.constant 7.200000e+01 : f32
    %41 = vector.broadcast %cst_32 : f32 to vector<1x128xf32>
    %42 = arith.divf %40, %41 : vector<1x128xf32>
    %43 = vector.broadcast %42 : vector<1x128xf32> to vector<72x128xf32>
    %44 = arith.subf %38, %43 : vector<72x128xf32>
    %45 = arith.mulf %44, %44 : vector<72x128xf32>
    %cst_33 = arith.constant dense<0.000000e+00> : vector<128xf32>
    %46 = vector.multi_reduction <add>, %45, %cst_33 [0] : vector<72x128xf32> to vector<128xf32>
    %47 = vector.shape_cast %46 : vector<128xf32> to vector<1x128xf32>
    %cst_34 = arith.constant 7.200000e+01 : f32
    %48 = vector.broadcast %cst_34 : f32 to vector<1x128xf32>
    %49 = arith.divf %47, %48 : vector<1x128xf32>
    %50 = vector.broadcast %42 : vector<1x128xf32> to vector<72x128xf32>
    %51 = arith.subf %38, %50 : vector<72x128xf32>
    %cst_35 = arith.constant 9.99999974E-6 : f32
    %52 = vector.broadcast %cst_35 : f32 to vector<1x128xf32>
    %53 = arith.addf %49, %52 : vector<1x128xf32>
    %54 = math.rsqrt %53 : vector<1x128xf32>
    %55 = vector.broadcast %54 : vector<1x128xf32> to vector<72x128xf32>
    %56 = arith.mulf %51, %55 : vector<72x128xf32>
    %c0_36 = arith.constant 0 : index
    %c0_37 = arith.constant 0 : index
    %57 = vector.load %arg4[%c0_36, %c0_37] : memref<1x128xf32, #tpu.memory_space<vmem>>, vector<1x128xf32>
    %58 = vector.broadcast %57 : vector<1x128xf32> to vector<72x128xf32>
    %59 = arith.mulf %56, %58 : vector<72x128xf32>
    %c0_38 = arith.constant 0 : index
    %c0_39 = arith.constant 0 : index
    %60 = vector.load %arg5[%c0_38, %c0_39] : memref<1x128xf32, #tpu.memory_space<vmem>>, vector<1x128xf32>
    %61 = vector.broadcast %60 : vector<1x128xf32> to vector<72x128xf32>
    %62 = arith.addf %59, %61 : vector<72x128xf32>
    %c0_40 = arith.constant 0 : index
    %c0_41 = arith.constant 0 : index
    %63 = vector.load %arg6[%c0_40, %c0_41] : memref<72x128xf32, #tpu.memory_space<vmem>>, vector<72x128xf32>
    tpu.vector_store %arg6[%c0_40, %c0_41], %62 {strides = array<i32>} : memref<72x128xf32, #tpu.memory_space<vmem>>, vector<72x128xf32>,
    return
  }
  func.func @transform_0(%arg0: i32) -> (i32, i32, i32) {
    %c0_i32 = arith.constant 0 : i32
    %c0_i32_0 = arith.constant 0 : i32
    %c0_i32_1 = arith.constant 0 : i32
    %c0_i32_2 = arith.constant 0 : i32
    return %c0_i32, %c0_i32_0, %c0_i32_1 : i32, i32, i32
  }
  func.func @transform_1(%arg0: i32) -> (i32, i32) {
    %c0_i32 = arith.constant 0 : i32
    %c0_i32_0 = arith.constant 0 : i32
    %c0_i32_1 = arith.constant 0 : i32
    return %c0_i32, %c0_i32_0 : i32, i32
  }
  func.func @transform_2(%arg0: i32) -> (i32, i32) {
    %c0_i32 = arith.constant 0 : i32
    %c0_i32_0 = arith.constant 0 : i32
    %c0_i32_1 = arith.constant 0 : i32
    return %c0_i32, %c0_i32_0 : i32, i32
  }
  func.func @transform_3(%arg0: i32) -> (i32, i32) {
    %c0_i32 = arith.constant 0 : i32
    %c0_i32_0 = arith.constant 0 : i32
    %c0_i32_1 = arith.constant 0 : i32
    return %c0_i32, %c0_i32_0 : i32, i32
  }
  func.func @transform_4(%arg0: i32) -> (i32, i32) {
    %c0_i32 = arith.constant 0 : i32
    %c0_i32_0 = arith.constant 0 : i32
    %c0_i32_1 = arith.constant 0 : i32
    return %c0_i32, %c0_i32_0 : i32, i32
  }
  func.func @transform_5(%arg0: i32) -> (i32, i32) {
    %c0_i32 = arith.constant 0 : i32
    %c0_i32_0 = arith.constant 0 : i32
    %c0_i32_1 = arith.constant 0 : i32
    return %c0_i32, %c0_i32_0 : i32, i32
  }
}

module attributes {stable_mosaic.version = 11 : i64} {
  func.func @_conv_pool_bn_kernel(%arg0: i32, %arg1: memref<16x2x288xf32, #tpu.memory_space<vmem>>, %arg2: memref<288x128xf32, #tpu.memory_space<vmem>>, %arg3: memref<1x128xf32, #tpu.memory_space<vmem>>, %arg4: memref<1x128xf32, #tpu.memory_space<vmem>>, %arg5: memref<1x128xf32, #tpu.memory_space<vmem>>, %arg6: memref<2x128xf32, #tpu.memory_space<vmem>>) attributes {dimension_semantics = [#tpu.dimension_semantics<arbitrary>], iteration_bounds = array<i64: 1>, scalar_prefetch = 0 : i64, scratch_operands = 0 : i64, tpu.core_type = #tpu.core_type<tc>, window_params = [{pipeline_mode = #tpu.pipeline_mode<synchronous>, transform_indices = @transform_0, window_bounds = array<i64: 16, 2, 288>}, {pipeline_mode = #tpu.pipeline_mode<synchronous>, transform_indices = @transform_1, window_bounds = array<i64: 288, 128>}, {pipeline_mode = #tpu.pipeline_mode<synchronous>, transform_indices = @transform_2, window_bounds = array<i64: 1, 128>}, {pipeline_mode = #tpu.pipeline_mode<synchronous>, transform_indices = @transform_3, window_bounds = array<i64: 1, 128>}, {pipeline_mode = #tpu.pipeline_mode<synchronous>, transform_indices = @transform_4, window_bounds = array<i64: 1, 128>}, {pipeline_mode = #tpu.pipeline_mode<synchronous>, transform_indices = @transform_5, window_bounds = array<i64: 2, 128>}]} {
    %c0 = arith.constant 0 : index
    %c0_0 = arith.constant 0 : index
    %c0_1 = arith.constant 0 : index
    %0 = vector.load %arg1[%c0, %c0_0, %c0_1] : memref<16x2x288xf32, #tpu.memory_space<vmem>>, vector<1x2x288xf32>
    %1 = vector.shape_cast %0 : vector<1x2x288xf32> to vector<2x288xf32>
    %c0_2 = arith.constant 0 : index
    %c0_3 = arith.constant 0 : index
    %2 = vector.load %arg2[%c0_2, %c0_3] : memref<288x128xf32, #tpu.memory_space<vmem>>, vector<288x128xf32>
    %cst = arith.constant dense<0.000000e+00> : vector<2x128xf32>
    %3 = tpu.matmul %1, %2, %cst {dimension_numbers = #tpu.dot_dimension_numbers<[1], [0], [0], [1], [0, 0, 1, 1], [], []>} : vector<2x288xf32>, vector<288x128xf32>, vector<2x128xf32> -> vector<2x128xf32>
    %c0_4 = arith.constant 0 : index
    %c0_5 = arith.constant 0 : index
    %4 = vector.load %arg3[%c0_4, %c0_5] : memref<1x128xf32, #tpu.memory_space<vmem>>, vector<1x128xf32>
    %5 = vector.broadcast %4 : vector<1x128xf32> to vector<2x128xf32>
    %6 = arith.addf %3, %5 : vector<2x128xf32>
    %cst_6 = arith.constant 0.000000e+00 : f32
    %7 = vector.broadcast %cst_6 : f32 to vector<2x128xf32>
    %8 = arith.maximumf %6, %7 : vector<2x128xf32>
    %c1 = arith.constant 1 : index
    %c0_7 = arith.constant 0 : index
    %c0_8 = arith.constant 0 : index
    %9 = vector.load %arg1[%c1, %c0_7, %c0_8] : memref<16x2x288xf32, #tpu.memory_space<vmem>>, vector<1x2x288xf32>
    %10 = vector.shape_cast %9 : vector<1x2x288xf32> to vector<2x288xf32>
    %c0_9 = arith.constant 0 : index
    %c0_10 = arith.constant 0 : index
    %11 = vector.load %arg2[%c0_9, %c0_10] : memref<288x128xf32, #tpu.memory_space<vmem>>, vector<288x128xf32>
    %cst_11 = arith.constant dense<0.000000e+00> : vector<2x128xf32>
    %12 = tpu.matmul %10, %11, %cst_11 {dimension_numbers = #tpu.dot_dimension_numbers<[1], [0], [0], [1], [0, 0, 1, 1], [], []>} : vector<2x288xf32>, vector<288x128xf32>, vector<2x128xf32> -> vector<2x128xf32>
    %c0_12 = arith.constant 0 : index
    %c0_13 = arith.constant 0 : index
    %13 = vector.load %arg3[%c0_12, %c0_13] : memref<1x128xf32, #tpu.memory_space<vmem>>, vector<1x128xf32>
    %14 = vector.broadcast %13 : vector<1x128xf32> to vector<2x128xf32>
    %15 = arith.addf %12, %14 : vector<2x128xf32>
    %cst_14 = arith.constant 0.000000e+00 : f32
    %16 = vector.broadcast %cst_14 : f32 to vector<2x128xf32>
    %17 = arith.maximumf %15, %16 : vector<2x128xf32>
    %18 = arith.maximumf %8, %17 : vector<2x128xf32>
    %c2 = arith.constant 2 : index
    %c0_15 = arith.constant 0 : index
    %c0_16 = arith.constant 0 : index
    %19 = vector.load %arg1[%c2, %c0_15, %c0_16] : memref<16x2x288xf32, #tpu.memory_space<vmem>>, vector<1x2x288xf32>
    %20 = vector.shape_cast %19 : vector<1x2x288xf32> to vector<2x288xf32>
    %c0_17 = arith.constant 0 : index
    %c0_18 = arith.constant 0 : index
    %21 = vector.load %arg2[%c0_17, %c0_18] : memref<288x128xf32, #tpu.memory_space<vmem>>, vector<288x128xf32>
    %cst_19 = arith.constant dense<0.000000e+00> : vector<2x128xf32>
    %22 = tpu.matmul %20, %21, %cst_19 {dimension_numbers = #tpu.dot_dimension_numbers<[1], [0], [0], [1], [0, 0, 1, 1], [], []>} : vector<2x288xf32>, vector<288x128xf32>, vector<2x128xf32> -> vector<2x128xf32>
    %c0_20 = arith.constant 0 : index
    %c0_21 = arith.constant 0 : index
    %23 = vector.load %arg3[%c0_20, %c0_21] : memref<1x128xf32, #tpu.memory_space<vmem>>, vector<1x128xf32>
    %24 = vector.broadcast %23 : vector<1x128xf32> to vector<2x128xf32>
    %25 = arith.addf %22, %24 : vector<2x128xf32>
    %cst_22 = arith.constant 0.000000e+00 : f32
    %26 = vector.broadcast %cst_22 : f32 to vector<2x128xf32>
    %27 = arith.maximumf %25, %26 : vector<2x128xf32>
    %28 = arith.maximumf %18, %27 : vector<2x128xf32>
    %c3 = arith.constant 3 : index
    %c0_23 = arith.constant 0 : index
    %c0_24 = arith.constant 0 : index
    %29 = vector.load %arg1[%c3, %c0_23, %c0_24] : memref<16x2x288xf32, #tpu.memory_space<vmem>>, vector<1x2x288xf32>
    %30 = vector.shape_cast %29 : vector<1x2x288xf32> to vector<2x288xf32>
    %c0_25 = arith.constant 0 : index
    %c0_26 = arith.constant 0 : index
    %31 = vector.load %arg2[%c0_25, %c0_26] : memref<288x128xf32, #tpu.memory_space<vmem>>, vector<288x128xf32>
    %cst_27 = arith.constant dense<0.000000e+00> : vector<2x128xf32>
    %32 = tpu.matmul %30, %31, %cst_27 {dimension_numbers = #tpu.dot_dimension_numbers<[1], [0], [0], [1], [0, 0, 1, 1], [], []>} : vector<2x288xf32>, vector<288x128xf32>, vector<2x128xf32> -> vector<2x128xf32>
    %c0_28 = arith.constant 0 : index
    %c0_29 = arith.constant 0 : index
    %33 = vector.load %arg3[%c0_28, %c0_29] : memref<1x128xf32, #tpu.memory_space<vmem>>, vector<1x128xf32>
    %34 = vector.broadcast %33 : vector<1x128xf32> to vector<2x128xf32>
    %35 = arith.addf %32, %34 : vector<2x128xf32>
    %cst_30 = arith.constant 0.000000e+00 : f32
    %36 = vector.broadcast %cst_30 : f32 to vector<2x128xf32>
    %37 = arith.maximumf %35, %36 : vector<2x128xf32>
    %38 = arith.maximumf %28, %37 : vector<2x128xf32>
    %c4 = arith.constant 4 : index
    %c0_31 = arith.constant 0 : index
    %c0_32 = arith.constant 0 : index
    %39 = vector.load %arg1[%c4, %c0_31, %c0_32] : memref<16x2x288xf32, #tpu.memory_space<vmem>>, vector<1x2x288xf32>
    %40 = vector.shape_cast %39 : vector<1x2x288xf32> to vector<2x288xf32>
    %c0_33 = arith.constant 0 : index
    %c0_34 = arith.constant 0 : index
    %41 = vector.load %arg2[%c0_33, %c0_34] : memref<288x128xf32, #tpu.memory_space<vmem>>, vector<288x128xf32>
    %cst_35 = arith.constant dense<0.000000e+00> : vector<2x128xf32>
    %42 = tpu.matmul %40, %41, %cst_35 {dimension_numbers = #tpu.dot_dimension_numbers<[1], [0], [0], [1], [0, 0, 1, 1], [], []>} : vector<2x288xf32>, vector<288x128xf32>, vector<2x128xf32> -> vector<2x128xf32>
    %c0_36 = arith.constant 0 : index
    %c0_37 = arith.constant 0 : index
    %43 = vector.load %arg3[%c0_36, %c0_37] : memref<1x128xf32, #tpu.memory_space<vmem>>, vector<1x128xf32>
    %44 = vector.broadcast %43 : vector<1x128xf32> to vector<2x128xf32>
    %45 = arith.addf %42, %44 : vector<2x128xf32>
    %cst_38 = arith.constant 0.000000e+00 : f32
    %46 = vector.broadcast %cst_38 : f32 to vector<2x128xf32>
    %47 = arith.maximumf %45, %46 : vector<2x128xf32>
    %48 = arith.maximumf %38, %47 : vector<2x128xf32>
    %c5 = arith.constant 5 : index
    %c0_39 = arith.constant 0 : index
    %c0_40 = arith.constant 0 : index
    %49 = vector.load %arg1[%c5, %c0_39, %c0_40] : memref<16x2x288xf32, #tpu.memory_space<vmem>>, vector<1x2x288xf32>
    %50 = vector.shape_cast %49 : vector<1x2x288xf32> to vector<2x288xf32>
    %c0_41 = arith.constant 0 : index
    %c0_42 = arith.constant 0 : index
    %51 = vector.load %arg2[%c0_41, %c0_42] : memref<288x128xf32, #tpu.memory_space<vmem>>, vector<288x128xf32>
    %cst_43 = arith.constant dense<0.000000e+00> : vector<2x128xf32>
    %52 = tpu.matmul %50, %51, %cst_43 {dimension_numbers = #tpu.dot_dimension_numbers<[1], [0], [0], [1], [0, 0, 1, 1], [], []>} : vector<2x288xf32>, vector<288x128xf32>, vector<2x128xf32> -> vector<2x128xf32>
    %c0_44 = arith.constant 0 : index
    %c0_45 = arith.constant 0 : index
    %53 = vector.load %arg3[%c0_44, %c0_45] : memref<1x128xf32, #tpu.memory_space<vmem>>, vector<1x128xf32>
    %54 = vector.broadcast %53 : vector<1x128xf32> to vector<2x128xf32>
    %55 = arith.addf %52, %54 : vector<2x128xf32>
    %cst_46 = arith.constant 0.000000e+00 : f32
    %56 = vector.broadcast %cst_46 : f32 to vector<2x128xf32>
    %57 = arith.maximumf %55, %56 : vector<2x128xf32>
    %58 = arith.maximumf %48, %57 : vector<2x128xf32>
    %c6 = arith.constant 6 : index
    %c0_47 = arith.constant 0 : index
    %c0_48 = arith.constant 0 : index
    %59 = vector.load %arg1[%c6, %c0_47, %c0_48] : memref<16x2x288xf32, #tpu.memory_space<vmem>>, vector<1x2x288xf32>
    %60 = vector.shape_cast %59 : vector<1x2x288xf32> to vector<2x288xf32>
    %c0_49 = arith.constant 0 : index
    %c0_50 = arith.constant 0 : index
    %61 = vector.load %arg2[%c0_49, %c0_50] : memref<288x128xf32, #tpu.memory_space<vmem>>, vector<288x128xf32>
    %cst_51 = arith.constant dense<0.000000e+00> : vector<2x128xf32>
    %62 = tpu.matmul %60, %61, %cst_51 {dimension_numbers = #tpu.dot_dimension_numbers<[1], [0], [0], [1], [0, 0, 1, 1], [], []>} : vector<2x288xf32>, vector<288x128xf32>, vector<2x128xf32> -> vector<2x128xf32>
    %c0_52 = arith.constant 0 : index
    %c0_53 = arith.constant 0 : index
    %63 = vector.load %arg3[%c0_52, %c0_53] : memref<1x128xf32, #tpu.memory_space<vmem>>, vector<1x128xf32>
    %64 = vector.broadcast %63 : vector<1x128xf32> to vector<2x128xf32>
    %65 = arith.addf %62, %64 : vector<2x128xf32>
    %cst_54 = arith.constant 0.000000e+00 : f32
    %66 = vector.broadcast %cst_54 : f32 to vector<2x128xf32>
    %67 = arith.maximumf %65, %66 : vector<2x128xf32>
    %68 = arith.maximumf %58, %67 : vector<2x128xf32>
    %c7 = arith.constant 7 : index
    %c0_55 = arith.constant 0 : index
    %c0_56 = arith.constant 0 : index
    %69 = vector.load %arg1[%c7, %c0_55, %c0_56] : memref<16x2x288xf32, #tpu.memory_space<vmem>>, vector<1x2x288xf32>
    %70 = vector.shape_cast %69 : vector<1x2x288xf32> to vector<2x288xf32>
    %c0_57 = arith.constant 0 : index
    %c0_58 = arith.constant 0 : index
    %71 = vector.load %arg2[%c0_57, %c0_58] : memref<288x128xf32, #tpu.memory_space<vmem>>, vector<288x128xf32>
    %cst_59 = arith.constant dense<0.000000e+00> : vector<2x128xf32>
    %72 = tpu.matmul %70, %71, %cst_59 {dimension_numbers = #tpu.dot_dimension_numbers<[1], [0], [0], [1], [0, 0, 1, 1], [], []>} : vector<2x288xf32>, vector<288x128xf32>, vector<2x128xf32> -> vector<2x128xf32>
    %c0_60 = arith.constant 0 : index
    %c0_61 = arith.constant 0 : index
    %73 = vector.load %arg3[%c0_60, %c0_61] : memref<1x128xf32, #tpu.memory_space<vmem>>, vector<1x128xf32>
    %74 = vector.broadcast %73 : vector<1x128xf32> to vector<2x128xf32>
    %75 = arith.addf %72, %74 : vector<2x128xf32>
    %cst_62 = arith.constant 0.000000e+00 : f32
    %76 = vector.broadcast %cst_62 : f32 to vector<2x128xf32>
    %77 = arith.maximumf %75, %76 : vector<2x128xf32>
    %78 = arith.maximumf %68, %77 : vector<2x128xf32>
    %c8 = arith.constant 8 : index
    %c0_63 = arith.constant 0 : index
    %c0_64 = arith.constant 0 : index
    %79 = vector.load %arg1[%c8, %c0_63, %c0_64] : memref<16x2x288xf32, #tpu.memory_space<vmem>>, vector<1x2x288xf32>
    %80 = vector.shape_cast %79 : vector<1x2x288xf32> to vector<2x288xf32>
    %c0_65 = arith.constant 0 : index
    %c0_66 = arith.constant 0 : index
    %81 = vector.load %arg2[%c0_65, %c0_66] : memref<288x128xf32, #tpu.memory_space<vmem>>, vector<288x128xf32>
    %cst_67 = arith.constant dense<0.000000e+00> : vector<2x128xf32>
    %82 = tpu.matmul %80, %81, %cst_67 {dimension_numbers = #tpu.dot_dimension_numbers<[1], [0], [0], [1], [0, 0, 1, 1], [], []>} : vector<2x288xf32>, vector<288x128xf32>, vector<2x128xf32> -> vector<2x128xf32>
    %c0_68 = arith.constant 0 : index
    %c0_69 = arith.constant 0 : index
    %83 = vector.load %arg3[%c0_68, %c0_69] : memref<1x128xf32, #tpu.memory_space<vmem>>, vector<1x128xf32>
    %84 = vector.broadcast %83 : vector<1x128xf32> to vector<2x128xf32>
    %85 = arith.addf %82, %84 : vector<2x128xf32>
    %cst_70 = arith.constant 0.000000e+00 : f32
    %86 = vector.broadcast %cst_70 : f32 to vector<2x128xf32>
    %87 = arith.maximumf %85, %86 : vector<2x128xf32>
    %88 = arith.maximumf %78, %87 : vector<2x128xf32>
    %c9 = arith.constant 9 : index
    %c0_71 = arith.constant 0 : index
    %c0_72 = arith.constant 0 : index
    %89 = vector.load %arg1[%c9, %c0_71, %c0_72] : memref<16x2x288xf32, #tpu.memory_space<vmem>>, vector<1x2x288xf32>
    %90 = vector.shape_cast %89 : vector<1x2x288xf32> to vector<2x288xf32>
    %c0_73 = arith.constant 0 : index
    %c0_74 = arith.constant 0 : index
    %91 = vector.load %arg2[%c0_73, %c0_74] : memref<288x128xf32, #tpu.memory_space<vmem>>, vector<288x128xf32>
    %cst_75 = arith.constant dense<0.000000e+00> : vector<2x128xf32>
    %92 = tpu.matmul %90, %91, %cst_75 {dimension_numbers = #tpu.dot_dimension_numbers<[1], [0], [0], [1], [0, 0, 1, 1], [], []>} : vector<2x288xf32>, vector<288x128xf32>, vector<2x128xf32> -> vector<2x128xf32>
    %c0_76 = arith.constant 0 : index
    %c0_77 = arith.constant 0 : index
    %93 = vector.load %arg3[%c0_76, %c0_77] : memref<1x128xf32, #tpu.memory_space<vmem>>, vector<1x128xf32>
    %94 = vector.broadcast %93 : vector<1x128xf32> to vector<2x128xf32>
    %95 = arith.addf %92, %94 : vector<2x128xf32>
    %cst_78 = arith.constant 0.000000e+00 : f32
    %96 = vector.broadcast %cst_78 : f32 to vector<2x128xf32>
    %97 = arith.maximumf %95, %96 : vector<2x128xf32>
    %98 = arith.maximumf %88, %97 : vector<2x128xf32>
    %c10 = arith.constant 10 : index
    %c0_79 = arith.constant 0 : index
    %c0_80 = arith.constant 0 : index
    %99 = vector.load %arg1[%c10, %c0_79, %c0_80] : memref<16x2x288xf32, #tpu.memory_space<vmem>>, vector<1x2x288xf32>
    %100 = vector.shape_cast %99 : vector<1x2x288xf32> to vector<2x288xf32>
    %c0_81 = arith.constant 0 : index
    %c0_82 = arith.constant 0 : index
    %101 = vector.load %arg2[%c0_81, %c0_82] : memref<288x128xf32, #tpu.memory_space<vmem>>, vector<288x128xf32>
    %cst_83 = arith.constant dense<0.000000e+00> : vector<2x128xf32>
    %102 = tpu.matmul %100, %101, %cst_83 {dimension_numbers = #tpu.dot_dimension_numbers<[1], [0], [0], [1], [0, 0, 1, 1], [], []>} : vector<2x288xf32>, vector<288x128xf32>, vector<2x128xf32> -> vector<2x128xf32>
    %c0_84 = arith.constant 0 : index
    %c0_85 = arith.constant 0 : index
    %103 = vector.load %arg3[%c0_84, %c0_85] : memref<1x128xf32, #tpu.memory_space<vmem>>, vector<1x128xf32>
    %104 = vector.broadcast %103 : vector<1x128xf32> to vector<2x128xf32>
    %105 = arith.addf %102, %104 : vector<2x128xf32>
    %cst_86 = arith.constant 0.000000e+00 : f32
    %106 = vector.broadcast %cst_86 : f32 to vector<2x128xf32>
    %107 = arith.maximumf %105, %106 : vector<2x128xf32>
    %108 = arith.maximumf %98, %107 : vector<2x128xf32>
    %c11 = arith.constant 11 : index
    %c0_87 = arith.constant 0 : index
    %c0_88 = arith.constant 0 : index
    %109 = vector.load %arg1[%c11, %c0_87, %c0_88] : memref<16x2x288xf32, #tpu.memory_space<vmem>>, vector<1x2x288xf32>
    %110 = vector.shape_cast %109 : vector<1x2x288xf32> to vector<2x288xf32>
    %c0_89 = arith.constant 0 : index
    %c0_90 = arith.constant 0 : index
    %111 = vector.load %arg2[%c0_89, %c0_90] : memref<288x128xf32, #tpu.memory_space<vmem>>, vector<288x128xf32>
    %cst_91 = arith.constant dense<0.000000e+00> : vector<2x128xf32>
    %112 = tpu.matmul %110, %111, %cst_91 {dimension_numbers = #tpu.dot_dimension_numbers<[1], [0], [0], [1], [0, 0, 1, 1], [], []>} : vector<2x288xf32>, vector<288x128xf32>, vector<2x128xf32> -> vector<2x128xf32>
    %c0_92 = arith.constant 0 : index
    %c0_93 = arith.constant 0 : index
    %113 = vector.load %arg3[%c0_92, %c0_93] : memref<1x128xf32, #tpu.memory_space<vmem>>, vector<1x128xf32>
    %114 = vector.broadcast %113 : vector<1x128xf32> to vector<2x128xf32>
    %115 = arith.addf %112, %114 : vector<2x128xf32>
    %cst_94 = arith.constant 0.000000e+00 : f32
    %116 = vector.broadcast %cst_94 : f32 to vector<2x128xf32>
    %117 = arith.maximumf %115, %116 : vector<2x128xf32>
    %118 = arith.maximumf %108, %117 : vector<2x128xf32>
    %c12 = arith.constant 12 : index
    %c0_95 = arith.constant 0 : index
    %c0_96 = arith.constant 0 : index
    %119 = vector.load %arg1[%c12, %c0_95, %c0_96] : memref<16x2x288xf32, #tpu.memory_space<vmem>>, vector<1x2x288xf32>
    %120 = vector.shape_cast %119 : vector<1x2x288xf32> to vector<2x288xf32>
    %c0_97 = arith.constant 0 : index
    %c0_98 = arith.constant 0 : index
    %121 = vector.load %arg2[%c0_97, %c0_98] : memref<288x128xf32, #tpu.memory_space<vmem>>, vector<288x128xf32>
    %cst_99 = arith.constant dense<0.000000e+00> : vector<2x128xf32>
    %122 = tpu.matmul %120, %121, %cst_99 {dimension_numbers = #tpu.dot_dimension_numbers<[1], [0], [0], [1], [0, 0, 1, 1], [], []>} : vector<2x288xf32>, vector<288x128xf32>, vector<2x128xf32> -> vector<2x128xf32>
    %c0_100 = arith.constant 0 : index
    %c0_101 = arith.constant 0 : index
    %123 = vector.load %arg3[%c0_100, %c0_101] : memref<1x128xf32, #tpu.memory_space<vmem>>, vector<1x128xf32>
    %124 = vector.broadcast %123 : vector<1x128xf32> to vector<2x128xf32>
    %125 = arith.addf %122, %124 : vector<2x128xf32>
    %cst_102 = arith.constant 0.000000e+00 : f32
    %126 = vector.broadcast %cst_102 : f32 to vector<2x128xf32>
    %127 = arith.maximumf %125, %126 : vector<2x128xf32>
    %128 = arith.maximumf %118, %127 : vector<2x128xf32>
    %c13 = arith.constant 13 : index
    %c0_103 = arith.constant 0 : index
    %c0_104 = arith.constant 0 : index
    %129 = vector.load %arg1[%c13, %c0_103, %c0_104] : memref<16x2x288xf32, #tpu.memory_space<vmem>>, vector<1x2x288xf32>
    %130 = vector.shape_cast %129 : vector<1x2x288xf32> to vector<2x288xf32>
    %c0_105 = arith.constant 0 : index
    %c0_106 = arith.constant 0 : index
    %131 = vector.load %arg2[%c0_105, %c0_106] : memref<288x128xf32, #tpu.memory_space<vmem>>, vector<288x128xf32>
    %cst_107 = arith.constant dense<0.000000e+00> : vector<2x128xf32>
    %132 = tpu.matmul %130, %131, %cst_107 {dimension_numbers = #tpu.dot_dimension_numbers<[1], [0], [0], [1], [0, 0, 1, 1], [], []>} : vector<2x288xf32>, vector<288x128xf32>, vector<2x128xf32> -> vector<2x128xf32>
    %c0_108 = arith.constant 0 : index
    %c0_109 = arith.constant 0 : index
    %133 = vector.load %arg3[%c0_108, %c0_109] : memref<1x128xf32, #tpu.memory_space<vmem>>, vector<1x128xf32>
    %134 = vector.broadcast %133 : vector<1x128xf32> to vector<2x128xf32>
    %135 = arith.addf %132, %134 : vector<2x128xf32>
    %cst_110 = arith.constant 0.000000e+00 : f32
    %136 = vector.broadcast %cst_110 : f32 to vector<2x128xf32>
    %137 = arith.maximumf %135, %136 : vector<2x128xf32>
    %138 = arith.maximumf %128, %137 : vector<2x128xf32>
    %c14 = arith.constant 14 : index
    %c0_111 = arith.constant 0 : index
    %c0_112 = arith.constant 0 : index
    %139 = vector.load %arg1[%c14, %c0_111, %c0_112] : memref<16x2x288xf32, #tpu.memory_space<vmem>>, vector<1x2x288xf32>
    %140 = vector.shape_cast %139 : vector<1x2x288xf32> to vector<2x288xf32>
    %c0_113 = arith.constant 0 : index
    %c0_114 = arith.constant 0 : index
    %141 = vector.load %arg2[%c0_113, %c0_114] : memref<288x128xf32, #tpu.memory_space<vmem>>, vector<288x128xf32>
    %cst_115 = arith.constant dense<0.000000e+00> : vector<2x128xf32>
    %142 = tpu.matmul %140, %141, %cst_115 {dimension_numbers = #tpu.dot_dimension_numbers<[1], [0], [0], [1], [0, 0, 1, 1], [], []>} : vector<2x288xf32>, vector<288x128xf32>, vector<2x128xf32> -> vector<2x128xf32>
    %c0_116 = arith.constant 0 : index
    %c0_117 = arith.constant 0 : index
    %143 = vector.load %arg3[%c0_116, %c0_117] : memref<1x128xf32, #tpu.memory_space<vmem>>, vector<1x128xf32>
    %144 = vector.broadcast %143 : vector<1x128xf32> to vector<2x128xf32>
    %145 = arith.addf %142, %144 : vector<2x128xf32>
    %cst_118 = arith.constant 0.000000e+00 : f32
    %146 = vector.broadcast %cst_118 : f32 to vector<2x128xf32>
    %147 = arith.maximumf %145, %146 : vector<2x128xf32>
    %148 = arith.maximumf %138, %147 : vector<2x128xf32>
    %c15 = arith.constant 15 : index
    %c0_119 = arith.constant 0 : index
    %c0_120 = arith.constant 0 : index
    %149 = vector.load %arg1[%c15, %c0_119, %c0_120] : memref<16x2x288xf32, #tpu.memory_space<vmem>>, vector<1x2x288xf32>
    %150 = vector.shape_cast %149 : vector<1x2x288xf32> to vector<2x288xf32>
    %c0_121 = arith.constant 0 : index
    %c0_122 = arith.constant 0 : index
    %151 = vector.load %arg2[%c0_121, %c0_122] : memref<288x128xf32, #tpu.memory_space<vmem>>, vector<288x128xf32>
    %cst_123 = arith.constant dense<0.000000e+00> : vector<2x128xf32>
    %152 = tpu.matmul %150, %151, %cst_123 {dimension_numbers = #tpu.dot_dimension_numbers<[1], [0], [0], [1], [0, 0, 1, 1], [], []>} : vector<2x288xf32>, vector<288x128xf32>, vector<2x128xf32> -> vector<2x128xf32>
    %c0_124 = arith.constant 0 : index
    %c0_125 = arith.constant 0 : index
    %153 = vector.load %arg3[%c0_124, %c0_125] : memref<1x128xf32, #tpu.memory_space<vmem>>, vector<1x128xf32>
    %154 = vector.broadcast %153 : vector<1x128xf32> to vector<2x128xf32>
    %155 = arith.addf %152, %154 : vector<2x128xf32>
    %cst_126 = arith.constant 0.000000e+00 : f32
    %156 = vector.broadcast %cst_126 : f32 to vector<2x128xf32>
    %157 = arith.maximumf %155, %156 : vector<2x128xf32>
    %158 = arith.maximumf %148, %157 : vector<2x128xf32>
    %cst_127 = arith.constant dense<0.000000e+00> : vector<128xf32>
    %159 = vector.multi_reduction <add>, %158, %cst_127 [0] : vector<2x128xf32> to vector<128xf32>
    %160 = vector.shape_cast %159 : vector<128xf32> to vector<1x128xf32>
    %cst_128 = arith.constant 2.000000e+00 : f32
    %161 = vector.broadcast %cst_128 : f32 to vector<1x128xf32>
    %162 = arith.divf %160, %161 : vector<1x128xf32>
    %163 = vector.broadcast %162 : vector<1x128xf32> to vector<2x128xf32>
    %164 = arith.subf %158, %163 : vector<2x128xf32>
    %165 = arith.mulf %164, %164 : vector<2x128xf32>
    %cst_129 = arith.constant dense<0.000000e+00> : vector<128xf32>
    %166 = vector.multi_reduction <add>, %165, %cst_129 [0] : vector<2x128xf32> to vector<128xf32>
    %167 = vector.shape_cast %166 : vector<128xf32> to vector<1x128xf32>
    %cst_130 = arith.constant 2.000000e+00 : f32
    %168 = vector.broadcast %cst_130 : f32 to vector<1x128xf32>
    %169 = arith.divf %167, %168 : vector<1x128xf32>
    %170 = vector.broadcast %162 : vector<1x128xf32> to vector<2x128xf32>
    %171 = arith.subf %158, %170 : vector<2x128xf32>
    %cst_131 = arith.constant 9.99999974E-6 : f32
    %172 = vector.broadcast %cst_131 : f32 to vector<1x128xf32>
    %173 = arith.addf %169, %172 : vector<1x128xf32>
    %174 = math.rsqrt %173 : vector<1x128xf32>
    %175 = vector.broadcast %174 : vector<1x128xf32> to vector<2x128xf32>
    %176 = arith.mulf %171, %175 : vector<2x128xf32>
    %c0_132 = arith.constant 0 : index
    %c0_133 = arith.constant 0 : index
    %177 = vector.load %arg4[%c0_132, %c0_133] : memref<1x128xf32, #tpu.memory_space<vmem>>, vector<1x128xf32>
    %178 = vector.broadcast %177 : vector<1x128xf32> to vector<2x128xf32>
    %179 = arith.mulf %176, %178 : vector<2x128xf32>
    %c0_134 = arith.constant 0 : index
    %c0_135 = arith.constant 0 : index
    %180 = vector.load %arg5[%c0_134, %c0_135] : memref<1x128xf32, #tpu.memory_space<vmem>>, vector<1x128xf32>
    %181 = vector.broadcast %180 : vector<1x128xf32> to vector<2x128xf32>
    %182 = arith.addf %179, %181 : vector<2x128xf32>
    %c0_136 = arith.constant 0 : index
    %c0_137 = arith.constant 0 : index
    %183 = vector.load %arg6[%c0_136, %c0_137] : memref<2x128xf32, #tpu.memory_space<vmem>>, vector<2x128xf32>
    tpu.vector_store %arg6[%c0_136, %c0_137], %182 {strides = array<i32>} : memref<2x128xf32, #tpu.memory_space<vmem>>, vector<2x128xf32>,
    return
  }
  func.func @transform_0(%arg0: i32) -> (i32, i32, i32) {
    %c0_i32 = arith.constant 0 : i32
    %c0_i32_0 = arith.constant 0 : i32
    %c0_i32_1 = arith.constant 0 : i32
    %c0_i32_2 = arith.constant 0 : i32
    return %c0_i32, %c0_i32_0, %c0_i32_1 : i32, i32, i32
  }
  func.func @transform_1(%arg0: i32) -> (i32, i32) {
    %c0_i32 = arith.constant 0 : i32
    %c0_i32_0 = arith.constant 0 : i32
    %c0_i32_1 = arith.constant 0 : i32
    return %c0_i32, %c0_i32_0 : i32, i32
  }
  func.func @transform_2(%arg0: i32) -> (i32, i32) {
    %c0_i32 = arith.constant 0 : i32
    %c0_i32_0 = arith.constant 0 : i32
    %c0_i32_1 = arith.constant 0 : i32
    return %c0_i32, %c0_i32_0 : i32, i32
  }
  func.func @transform_3(%arg0: i32) -> (i32, i32) {
    %c0_i32 = arith.constant 0 : i32
    %c0_i32_0 = arith.constant 0 : i32
    %c0_i32_1 = arith.constant 0 : i32
    return %c0_i32, %c0_i32_0 : i32, i32
  }
  func.func @transform_4(%arg0: i32) -> (i32, i32) {
    %c0_i32 = arith.constant 0 : i32
    %c0_i32_0 = arith.constant 0 : i32
    %c0_i32_1 = arith.constant 0 : i32
    return %c0_i32, %c0_i32_0 : i32, i32
  }
  func.func @transform_5(%arg0: i32) -> (i32, i32) {
    %c0_i32 = arith.constant 0 : i32
    %c0_i32_0 = arith.constant 0 : i32
    %c0_i32_1 = arith.constant 0 : i32
    return %c0_i32, %c0_i32_0 : i32, i32
  }
}

module attributes {stable_mosaic.version = 11 : i64} {
  func.func @_lstm_kernel(%arg0: i32, %arg1: memref<15x2x128xf32, #tpu.memory_space<vmem>>, %arg2: memref<2x128x256xf32, #tpu.memory_space<vmem>>, %arg3: memref<2x64x256xf32, #tpu.memory_space<vmem>>, %arg4: memref<2x1x256xf32, #tpu.memory_space<vmem>>, %arg5: memref<15x2x128xf32, #tpu.memory_space<vmem>>) attributes {dimension_semantics = [#tpu.dimension_semantics<arbitrary>], iteration_bounds = array<i64: 1>, scalar_prefetch = 0 : i64, scratch_operands = 0 : i64, tpu.core_type = #tpu.core_type<tc>, window_params = [{pipeline_mode = #tpu.pipeline_mode<synchronous>, transform_indices = @transform_0, window_bounds = array<i64: 15, 2, 128>}, {pipeline_mode = #tpu.pipeline_mode<synchronous>, transform_indices = @transform_1, window_bounds = array<i64: 2, 128, 256>}, {pipeline_mode = #tpu.pipeline_mode<synchronous>, transform_indices = @transform_2, window_bounds = array<i64: 2, 64, 256>}, {pipeline_mode = #tpu.pipeline_mode<synchronous>, transform_indices = @transform_3, window_bounds = array<i64: 2, 1, 256>}, {pipeline_mode = #tpu.pipeline_mode<synchronous>, transform_indices = @transform_4, window_bounds = array<i64: 15, 2, 128>}]} {
    %c0 = arith.constant 0 : index
    %c0_0 = arith.constant 0 : index
    %c0_1 = arith.constant 0 : index
    %0 = vector.load %arg1[%c0, %c0_0, %c0_1] : memref<15x2x128xf32, #tpu.memory_space<vmem>>, vector<15x2x128xf32>
    %c0_2 = arith.constant 0 : index
    %c0_3 = arith.constant 0 : index
    %c0_4 = arith.constant 0 : index
    %1 = vector.load %arg5[%c0_2, %c0_3, %c0_4] : memref<15x2x128xf32, #tpu.memory_space<vmem>>, vector<15x2x128xf32>
    tpu.vector_store %arg5[%c0_2, %c0_3, %c0_4], %0 {strides = array<i32>} : memref<15x2x128xf32, #tpu.memory_space<vmem>>, vector<15x2x128xf32>,
    %cst = arith.constant 0.000000e+00 : f32
    %2 = vector.broadcast %cst : f32 to vector<2x64xf32>
    %c0_i32 = arith.constant 0 : i32
    %c15_i32 = arith.constant 15 : i32
    %3 = arith.addi %c0_i32, %c15_i32 : i32
    %c1_i32 = arith.constant 1 : i32
    %4:2 = scf.for %arg6 = %c0_i32 to %3 step %c1_i32 iter_args(%arg7 = %2, %arg8 = %2) -> (vector<2x64xf32>, vector<2x64xf32>)  : i32 {
      %8 = arith.index_cast %arg6 : i32 to index
      %c0_11 = arith.constant 0 : index
      %c0_12 = arith.constant 0 : index
      %9 = vector.load %arg5[%8, %c0_11, %c0_12] : memref<15x2x128xf32, #tpu.memory_space<vmem>>, vector<1x2x128xf32>
      %10 = vector.shape_cast %9 : vector<1x2x128xf32> to vector<2x128xf32>
      %c0_13 = arith.constant 0 : index
      %c0_14 = arith.constant 0 : index
      %c0_15 = arith.constant 0 : index
      %11 = vector.load %arg2[%c0_13, %c0_14, %c0_15] : memref<2x128x256xf32, #tpu.memory_space<vmem>>, vector<1x128x256xf32>
      %12 = vector.shape_cast %11 : vector<1x128x256xf32> to vector<128x256xf32>
      %cst_16 = arith.constant dense<0.000000e+00> : vector<2x256xf32>
      %13 = tpu.matmul %10, %12, %cst_16 {dimension_numbers = #tpu.dot_dimension_numbers<[1], [0], [0], [1], [0, 0, 1, 1], [], []>} : vector<2x128xf32>, vector<128x256xf32>, vector<2x256xf32> -> vector<2x256xf32>
      %c0_17 = arith.constant 0 : index
      %c0_18 = arith.constant 0 : index
      %c0_19 = arith.constant 0 : index
      %14 = vector.load %arg3[%c0_17, %c0_18, %c0_19] : memref<2x64x256xf32, #tpu.memory_space<vmem>>, vector<1x64x256xf32>
      %15 = vector.shape_cast %14 : vector<1x64x256xf32> to vector<64x256xf32>
      %cst_20 = arith.constant dense<0.000000e+00> : vector<2x256xf32>
      %16 = tpu.matmul %arg7, %15, %cst_20 {dimension_numbers = #tpu.dot_dimension_numbers<[1], [0], [0], [1], [0, 0, 1, 1], [], []>} : vector<2x64xf32>, vector<64x256xf32>, vector<2x256xf32> -> vector<2x256xf32>
      %17 = arith.addf %13, %16 : vector<2x256xf32>
      %c0_21 = arith.constant 0 : index
      %c0_22 = arith.constant 0 : index
      %c0_23 = arith.constant 0 : index
      %18 = vector.load %arg4[%c0_21, %c0_22, %c0_23] : memref<2x1x256xf32, #tpu.memory_space<vmem>>, vector<1x1x256xf32>
      %19 = vector.shape_cast %18 : vector<1x1x256xf32> to vector<1x256xf32>
      %20 = vector.broadcast %19 : vector<1x256xf32> to vector<2x256xf32>
      %21 = arith.addf %17, %20 : vector<2x256xf32>
      %22 = vector.extract_strided_slice %21 {offsets = [0, 0], sizes = [2, 64], strides = [1, 1]} : vector<2x256xf32> to vector<2x64xf32>
      %cst_24 = arith.constant 0.000000e+00 : f32
      %23 = vector.broadcast %cst_24 : f32 to vector<2x64xf32>
      %24 = arith.subf %23, %22 : vector<2x64xf32>
      %25 = math.exp %24 : vector<2x64xf32>
      %cst_25 = arith.constant 1.000000e+00 : f32
      %26 = vector.broadcast %cst_25 : f32 to vector<2x64xf32>
      %27 = arith.addf %26, %25 : vector<2x64xf32>
      %cst_26 = arith.constant 1.000000e+00 : f32
      %28 = vector.broadcast %cst_26 : f32 to vector<2x64xf32>
      %29 = arith.divf %28, %27 : vector<2x64xf32>
      %30 = vector.extract_strided_slice %21 {offsets = [0, 64], sizes = [2, 64], strides = [1, 1]} : vector<2x256xf32> to vector<2x64xf32>
      %cst_27 = arith.constant 0.000000e+00 : f32
      %31 = vector.broadcast %cst_27 : f32 to vector<2x64xf32>
      %32 = arith.subf %31, %30 : vector<2x64xf32>
      %33 = math.exp %32 : vector<2x64xf32>
      %cst_28 = arith.constant 1.000000e+00 : f32
      %34 = vector.broadcast %cst_28 : f32 to vector<2x64xf32>
      %35 = arith.addf %34, %33 : vector<2x64xf32>
      %cst_29 = arith.constant 1.000000e+00 : f32
      %36 = vector.broadcast %cst_29 : f32 to vector<2x64xf32>
      %37 = arith.divf %36, %35 : vector<2x64xf32>
      %38 = vector.extract_strided_slice %21 {offsets = [0, 128], sizes = [2, 64], strides = [1, 1]} : vector<2x256xf32> to vector<2x64xf32>
      %39 = math.tanh %38 : vector<2x64xf32>
      %40 = vector.extract_strided_slice %21 {offsets = [0, 192], sizes = [2, 64], strides = [1, 1]} : vector<2x256xf32> to vector<2x64xf32>
      %cst_30 = arith.constant 0.000000e+00 : f32
      %41 = vector.broadcast %cst_30 : f32 to vector<2x64xf32>
      %42 = arith.subf %41, %40 : vector<2x64xf32>
      %43 = math.exp %42 : vector<2x64xf32>
      %cst_31 = arith.constant 1.000000e+00 : f32
      %44 = vector.broadcast %cst_31 : f32 to vector<2x64xf32>
      %45 = arith.addf %44, %43 : vector<2x64xf32>
      %cst_32 = arith.constant 1.000000e+00 : f32
      %46 = vector.broadcast %cst_32 : f32 to vector<2x64xf32>
      %47 = arith.divf %46, %45 : vector<2x64xf32>
      %48 = arith.mulf %37, %arg8 : vector<2x64xf32>
      %49 = arith.mulf %29, %39 : vector<2x64xf32>
      %50 = arith.addf %48, %49 : vector<2x64xf32>
      %51 = math.tanh %50 : vector<2x64xf32>
      %52 = arith.mulf %47, %51 : vector<2x64xf32>
      %cst_33 = arith.constant 0.000000e+00 : f32
      %53 = vector.broadcast %cst_33 : f32 to vector<2x64xf32>
      %54 = tpu.concatenate %52, %53 in 1 : vector<2x64xf32>, vector<2x64xf32> -> vector<2x128xf32>
      %55 = arith.index_cast %arg6 : i32 to index
      %c0_34 = arith.constant 0 : index
      %c0_35 = arith.constant 0 : index
      %56 = vector.load %arg5[%55, %c0_34, %c0_35] : memref<15x2x128xf32, #tpu.memory_space<vmem>>, vector<1x2x128xf32>
      %57 = vector.shape_cast %56 : vector<1x2x128xf32> to vector<2x128xf32>
      %58 = vector.shape_cast %54 : vector<2x128xf32> to vector<1x2x128xf32>
      tpu.vector_store %arg5[%55, %c0_34, %c0_35], %58 {strides = array<i32>} : memref<15x2x128xf32, #tpu.memory_space<vmem>>, vector<1x2x128xf32>,
      scf.yield %52, %50 : vector<2x64xf32>, vector<2x64xf32>
    }
    %c15_i32_5 = arith.constant 15 : i32
    %cst_6 = arith.constant 0.000000e+00 : f32
    %5 = vector.broadcast %cst_6 : f32 to vector<2x64xf32>
    %c0_i32_7 = arith.constant 0 : i32
    %c15_i32_8 = arith.constant 15 : i32
    %6 = arith.addi %c0_i32_7, %c15_i32_8 : i32
    %c1_i32_9 = arith.constant 1 : i32
    %7:2 = scf.for %arg6 = %c0_i32_7 to %6 step %c1_i32_9 iter_args(%arg7 = %5, %arg8 = %5) -> (vector<2x64xf32>, vector<2x64xf32>)  : i32 {
      %8 = arith.index_cast %arg6 : i32 to index
      %c0_11 = arith.constant 0 : index
      %c0_12 = arith.constant 0 : index
      %9 = vector.load %arg5[%8, %c0_11, %c0_12] : memref<15x2x128xf32, #tpu.memory_space<vmem>>, vector<1x2x128xf32>
      %10 = vector.shape_cast %9 : vector<1x2x128xf32> to vector<2x128xf32>
      %c1 = arith.constant 1 : index
      %c0_13 = arith.constant 0 : index
      %c0_14 = arith.constant 0 : index
      %11 = vector.load %arg2[%c1, %c0_13, %c0_14] : memref<2x128x256xf32, #tpu.memory_space<vmem>>, vector<1x128x256xf32>
      %12 = vector.shape_cast %11 : vector<1x128x256xf32> to vector<128x256xf32>
      %cst_15 = arith.constant dense<0.000000e+00> : vector<2x256xf32>
      %13 = tpu.matmul %10, %12, %cst_15 {dimension_numbers = #tpu.dot_dimension_numbers<[1], [0], [0], [1], [0, 0, 1, 1], [], []>} : vector<2x128xf32>, vector<128x256xf32>, vector<2x256xf32> -> vector<2x256xf32>
      %c1_16 = arith.constant 1 : index
      %c0_17 = arith.constant 0 : index
      %c0_18 = arith.constant 0 : index
      %14 = vector.load %arg3[%c1_16, %c0_17, %c0_18] : memref<2x64x256xf32, #tpu.memory_space<vmem>>, vector<1x64x256xf32>
      %15 = vector.shape_cast %14 : vector<1x64x256xf32> to vector<64x256xf32>
      %cst_19 = arith.constant dense<0.000000e+00> : vector<2x256xf32>
      %16 = tpu.matmul %arg7, %15, %cst_19 {dimension_numbers = #tpu.dot_dimension_numbers<[1], [0], [0], [1], [0, 0, 1, 1], [], []>} : vector<2x64xf32>, vector<64x256xf32>, vector<2x256xf32> -> vector<2x256xf32>
      %17 = arith.addf %13, %16 : vector<2x256xf32>
      %c1_20 = arith.constant 1 : index
      %c0_21 = arith.constant 0 : index
      %c0_22 = arith.constant 0 : index
      %18 = vector.load %arg4[%c1_20, %c0_21, %c0_22] : memref<2x1x256xf32, #tpu.memory_space<vmem>>, vector<1x1x256xf32>
      %19 = vector.shape_cast %18 : vector<1x1x256xf32> to vector<1x256xf32>
      %20 = vector.broadcast %19 : vector<1x256xf32> to vector<2x256xf32>
      %21 = arith.addf %17, %20 : vector<2x256xf32>
      %22 = vector.extract_strided_slice %21 {offsets = [0, 0], sizes = [2, 64], strides = [1, 1]} : vector<2x256xf32> to vector<2x64xf32>
      %cst_23 = arith.constant 0.000000e+00 : f32
      %23 = vector.broadcast %cst_23 : f32 to vector<2x64xf32>
      %24 = arith.subf %23, %22 : vector<2x64xf32>
      %25 = math.exp %24 : vector<2x64xf32>
      %cst_24 = arith.constant 1.000000e+00 : f32
      %26 = vector.broadcast %cst_24 : f32 to vector<2x64xf32>
      %27 = arith.addf %26, %25 : vector<2x64xf32>
      %cst_25 = arith.constant 1.000000e+00 : f32
      %28 = vector.broadcast %cst_25 : f32 to vector<2x64xf32>
      %29 = arith.divf %28, %27 : vector<2x64xf32>
      %30 = vector.extract_strided_slice %21 {offsets = [0, 64], sizes = [2, 64], strides = [1, 1]} : vector<2x256xf32> to vector<2x64xf32>
      %cst_26 = arith.constant 0.000000e+00 : f32
      %31 = vector.broadcast %cst_26 : f32 to vector<2x64xf32>
      %32 = arith.subf %31, %30 : vector<2x64xf32>
      %33 = math.exp %32 : vector<2x64xf32>
      %cst_27 = arith.constant 1.000000e+00 : f32
      %34 = vector.broadcast %cst_27 : f32 to vector<2x64xf32>
      %35 = arith.addf %34, %33 : vector<2x64xf32>
      %cst_28 = arith.constant 1.000000e+00 : f32
      %36 = vector.broadcast %cst_28 : f32 to vector<2x64xf32>
      %37 = arith.divf %36, %35 : vector<2x64xf32>
      %38 = vector.extract_strided_slice %21 {offsets = [0, 128], sizes = [2, 64], strides = [1, 1]} : vector<2x256xf32> to vector<2x64xf32>
      %39 = math.tanh %38 : vector<2x64xf32>
      %40 = vector.extract_strided_slice %21 {offsets = [0, 192], sizes = [2, 64], strides = [1, 1]} : vector<2x256xf32> to vector<2x64xf32>
      %cst_29 = arith.constant 0.000000e+00 : f32
      %41 = vector.broadcast %cst_29 : f32 to vector<2x64xf32>
      %42 = arith.subf %41, %40 : vector<2x64xf32>
      %43 = math.exp %42 : vector<2x64xf32>
      %cst_30 = arith.constant 1.000000e+00 : f32
      %44 = vector.broadcast %cst_30 : f32 to vector<2x64xf32>
      %45 = arith.addf %44, %43 : vector<2x64xf32>
      %cst_31 = arith.constant 1.000000e+00 : f32
      %46 = vector.broadcast %cst_31 : f32 to vector<2x64xf32>
      %47 = arith.divf %46, %45 : vector<2x64xf32>
      %48 = arith.mulf %37, %arg8 : vector<2x64xf32>
      %49 = arith.mulf %29, %39 : vector<2x64xf32>
      %50 = arith.addf %48, %49 : vector<2x64xf32>
      %51 = math.tanh %50 : vector<2x64xf32>
      %52 = arith.mulf %47, %51 : vector<2x64xf32>
      %cst_32 = arith.constant 0.000000e+00 : f32
      %53 = vector.broadcast %cst_32 : f32 to vector<2x64xf32>
      %54 = tpu.concatenate %52, %53 in 1 : vector<2x64xf32>, vector<2x64xf32> -> vector<2x128xf32>
      %55 = arith.index_cast %arg6 : i32 to index
      %c0_33 = arith.constant 0 : index
      %c0_34 = arith.constant 0 : index
      %56 = vector.load %arg5[%55, %c0_33, %c0_34] : memref<15x2x128xf32, #tpu.memory_space<vmem>>, vector<1x2x128xf32>
      %57 = vector.shape_cast %56 : vector<1x2x128xf32> to vector<2x128xf32>
      %58 = vector.shape_cast %54 : vector<2x128xf32> to vector<1x2x128xf32>
      tpu.vector_store %arg5[%55, %c0_33, %c0_34], %58 {strides = array<i32>} : memref<15x2x128xf32, #tpu.memory_space<vmem>>, vector<1x2x128xf32>,
      scf.yield %52, %50 : vector<2x64xf32>, vector<2x64xf32>
    }
    %c15_i32_10 = arith.constant 15 : i32
    return
  }
  func.func @transform_0(%arg0: i32) -> (i32, i32, i32) {
    %c0_i32 = arith.constant 0 : i32
    %c0_i32_0 = arith.constant 0 : i32
    %c0_i32_1 = arith.constant 0 : i32
    %c0_i32_2 = arith.constant 0 : i32
    return %c0_i32, %c0_i32_0, %c0_i32_1 : i32, i32, i32
  }
  func.func @transform_1(%arg0: i32) -> (i32, i32, i32) {
    %c0_i32 = arith.constant 0 : i32
    %c0_i32_0 = arith.constant 0 : i32
    %c0_i32_1 = arith.constant 0 : i32
    %c0_i32_2 = arith.constant 0 : i32
    return %c0_i32, %c0_i32_0, %c0_i32_1 : i32, i32, i32
  }
  func.func @transform_2(%arg0: i32) -> (i32, i32, i32) {
    %c0_i32 = arith.constant 0 : i32
    %c0_i32_0 = arith.constant 0 : i32
    %c0_i32_1 = arith.constant 0 : i32
    %c0_i32_2 = arith.constant 0 : i32
    return %c0_i32, %c0_i32_0, %c0_i32_1 : i32, i32, i32
  }
  func.func @transform_3(%arg0: i32) -> (i32, i32, i32) {
    %c0_i32 = arith.constant 0 : i32
    %c0_i32_0 = arith.constant 0 : i32
    %c0_i32_1 = arith.constant 0 : i32
    %c0_i32_2 = arith.constant 0 : i32
    return %c0_i32, %c0_i32_0, %c0_i32_1 : i32, i32, i32
  }
  func.func @transform_4(%arg0: i32) -> (i32, i32, i32) {
    %c0_i32 = arith.constant 0 : i32
    %c0_i32_0 = arith.constant 0 : i32
    %c0_i32_1 = arith.constant 0 : i32
    %c0_i32_2 = arith.constant 0 : i32
    return %c0_i32, %c0_i32_0, %c0_i32_1 : i32, i32, i32
  }
}

module attributes {stable_mosaic.version = 11 : i64} {
  func.func @_head_kernel(%arg0: i32, %arg1: memref<2x1024xf32, #tpu.memory_space<vmem>>, %arg2: memref<1024x128xf32, #tpu.memory_space<vmem>>, %arg3: memref<1x128xf32, #tpu.memory_space<vmem>>, %arg4: memref<2x128xf32, #tpu.memory_space<vmem>>, %arg5: memref<128x128xf32, #tpu.memory_space<vmem>>, %arg6: memref<1x128xf32, #tpu.memory_space<vmem>>, %arg7: memref<2x128xf32, #tpu.memory_space<vmem>>) attributes {dimension_semantics = [#tpu.dimension_semantics<arbitrary>], iteration_bounds = array<i64: 1>, scalar_prefetch = 0 : i64, scratch_operands = 0 : i64, tpu.core_type = #tpu.core_type<tc>, window_params = [{pipeline_mode = #tpu.pipeline_mode<synchronous>, transform_indices = @transform_0, window_bounds = array<i64: 2, 1024>}, {pipeline_mode = #tpu.pipeline_mode<synchronous>, transform_indices = @transform_1, window_bounds = array<i64: 1024, 128>}, {pipeline_mode = #tpu.pipeline_mode<synchronous>, transform_indices = @transform_2, window_bounds = array<i64: 1, 128>}, {pipeline_mode = #tpu.pipeline_mode<synchronous>, transform_indices = @transform_3, window_bounds = array<i64: 2, 128>}, {pipeline_mode = #tpu.pipeline_mode<synchronous>, transform_indices = @transform_4, window_bounds = array<i64: 128, 128>}, {pipeline_mode = #tpu.pipeline_mode<synchronous>, transform_indices = @transform_5, window_bounds = array<i64: 1, 128>}, {pipeline_mode = #tpu.pipeline_mode<synchronous>, transform_indices = @transform_6, window_bounds = array<i64: 2, 128>}]} {
    %c0 = arith.constant 0 : index
    %c0_0 = arith.constant 0 : index
    %0 = vector.load %arg1[%c0, %c0_0] : memref<2x1024xf32, #tpu.memory_space<vmem>>, vector<2x1024xf32>
    %c0_1 = arith.constant 0 : index
    %c0_2 = arith.constant 0 : index
    %1 = vector.load %arg2[%c0_1, %c0_2] : memref<1024x128xf32, #tpu.memory_space<vmem>>, vector<1024x128xf32>
    %cst = arith.constant dense<0.000000e+00> : vector<2x128xf32>
    %2 = tpu.matmul %0, %1, %cst {dimension_numbers = #tpu.dot_dimension_numbers<[1], [0], [0], [1], [0, 0, 1, 1], [], []>} : vector<2x1024xf32>, vector<1024x128xf32>, vector<2x128xf32> -> vector<2x128xf32>
    %c0_3 = arith.constant 0 : index
    %c0_4 = arith.constant 0 : index
    %3 = vector.load %arg3[%c0_3, %c0_4] : memref<1x128xf32, #tpu.memory_space<vmem>>, vector<1x128xf32>
    %4 = vector.broadcast %3 : vector<1x128xf32> to vector<2x128xf32>
    %5 = arith.addf %2, %4 : vector<2x128xf32>
    %cst_5 = arith.constant 0.000000e+00 : f32
    %6 = vector.broadcast %cst_5 : f32 to vector<2x128xf32>
    %7 = arith.maximumf %5, %6 : vector<2x128xf32>
    %c0_6 = arith.constant 0 : index
    %c0_7 = arith.constant 0 : index
    %8 = vector.load %arg4[%c0_6, %c0_7] : memref<2x128xf32, #tpu.memory_space<vmem>>, vector<2x128xf32>
    %9 = arith.mulf %7, %8 : vector<2x128xf32>
    %c0_8 = arith.constant 0 : index
    %c0_9 = arith.constant 0 : index
    %10 = vector.load %arg5[%c0_8, %c0_9] : memref<128x128xf32, #tpu.memory_space<vmem>>, vector<128x128xf32>
    %cst_10 = arith.constant dense<0.000000e+00> : vector<2x128xf32>
    %11 = tpu.matmul %9, %10, %cst_10 {dimension_numbers = #tpu.dot_dimension_numbers<[1], [0], [0], [1], [0, 0, 1, 1], [], []>} : vector<2x128xf32>, vector<128x128xf32>, vector<2x128xf32> -> vector<2x128xf32>
    %c0_11 = arith.constant 0 : index
    %c0_12 = arith.constant 0 : index
    %12 = vector.load %arg6[%c0_11, %c0_12] : memref<1x128xf32, #tpu.memory_space<vmem>>, vector<1x128xf32>
    %13 = vector.broadcast %12 : vector<1x128xf32> to vector<2x128xf32>
    %14 = arith.addf %11, %13 : vector<2x128xf32>
    %c0_13 = arith.constant 0 : index
    %c0_14 = arith.constant 0 : index
    %15 = vector.load %arg7[%c0_13, %c0_14] : memref<2x128xf32, #tpu.memory_space<vmem>>, vector<2x128xf32>
    tpu.vector_store %arg7[%c0_13, %c0_14], %14 {strides = array<i32>} : memref<2x128xf32, #tpu.memory_space<vmem>>, vector<2x128xf32>,
    return
  }
  func.func @transform_0(%arg0: i32) -> (i32, i32) {
    %c0_i32 = arith.constant 0 : i32
    %c0_i32_0 = arith.constant 0 : i32
    %c0_i32_1 = arith.constant 0 : i32
    return %c0_i32, %c0_i32_0 : i32, i32
  }
  func.func @transform_1(%arg0: i32) -> (i32, i32) {
    %c0_i32 = arith.constant 0 : i32
    %c0_i32_0 = arith.constant 0 : i32
    %c0_i32_1 = arith.constant 0 : i32
    return %c0_i32, %c0_i32_0 : i32, i32
  }
  func.func @transform_2(%arg0: i32) -> (i32, i32) {
    %c0_i32 = arith.constant 0 : i32
    %c0_i32_0 = arith.constant 0 : i32
    %c0_i32_1 = arith.constant 0 : i32
    return %c0_i32, %c0_i32_0 : i32, i32
  }
  func.func @transform_3(%arg0: i32) -> (i32, i32) {
    %c0_i32 = arith.constant 0 : i32
    %c0_i32_0 = arith.constant 0 : i32
    %c0_i32_1 = arith.constant 0 : i32
    return %c0_i32, %c0_i32_0 : i32, i32
  }
  func.func @transform_4(%arg0: i32) -> (i32, i32) {
    %c0_i32 = arith.constant 0 : i32
    %c0_i32_0 = arith.constant 0 : i32
    %c0_i32_1 = arith.constant 0 : i32
    return %c0_i32, %c0_i32_0 : i32, i32
  }
  func.func @transform_5(%arg0: i32) -> (i32, i32) {
    %c0_i32 = arith.constant 0 : i32
    %c0_i32_0 = arith.constant 0 : i32
    %c0_i32_1 = arith.constant 0 : i32
    return %c0_i32, %c0_i32_0 : i32, i32
  }
  func.func @transform_6(%arg0: i32) -> (i32, i32) {
    %c0_i32 = arith.constant 0 : i32
    %c0_i32_0 = arith.constant 0 : i32
    %c0_i32_1 = arith.constant 0 : i32
    return %c0_i32, %c0_i32_0 : i32, i32
  }
}

</mosaic_0001>

<llo_original>
// kernel: crnn_forward.5
$region0: #{crnn_forward.5}
  #allocation0 [shape = 'u32[]', space=smem, size = 0x4, offset = 0x4, fixed_abs, tag = 'smem constant byte address 0x4 - core index']
  #allocation1 [shape = 'u32[144,128]{1,0:T(1,128)}', space=vmem, size = 0x12000, scoped, tag = 'internal scratch']
  %s0 = inlined_call_operand.vmem [shape: f32[4,392,9], index: 0, kind: input, shape index: {}]
  %s1 = inlined_call_operand.vmem [shape: f32[9,128], index: 1, kind: input, shape index: {}]
  %s2 = inlined_call_operand.vmem [shape: f32[1,128], index: 2, kind: input, shape index: {}]
  %s3 = inlined_call_operand.vmem [shape: f32[1,128], index: 3, kind: input, shape index: {}]
  %s4 = inlined_call_operand.vmem [shape: f32[1,128], index: 4, kind: input, shape index: {}]
  %s5 = inlined_call_operand.vmem [shape: f32[392,128], index: 5, kind: output, shape index: {}]
  %s6 = sld [smem:[#allocation0]]
  $region30: #{crnn_forward.5} parent=0
    _
  %s8 = ssub.s32 1, %s6
  %s9 = scalar_select 0, %s8, %s6
  // Predicated region
  $region2: #{crnn_forward.5} parent=0 // pred_check
    _
  $region3: #{crnn_forward.5} parent=0 // pred_check_branch
    %11 = sbr.rel (0) target = $region5
  $region4: #{crnn_forward.5} parent=0 // pred_region
    _
  $region5: #{crnn_forward.5} parent=0 // pred_fallthru
    _
  // Predicated region
  $region6: #{crnn_forward.5} parent=0 // pred_check
    _
  $region7: #{crnn_forward.5} parent=0 // pred_check_branch
    %13 = sbr.rel (0) target = $region9
  $region8: #{crnn_forward.5} parent=0 // pred_region
    _
  $region9: #{crnn_forward.5} parent=0 // pred_fallthru
    _
  // Predicated region
  $region10: #{crnn_forward.5} parent=0 // pred_check
    _
  $region11: #{crnn_forward.5} parent=0 // pred_check_branch
    %15 = sbr.rel (0) target = $region13
  $region12: #{crnn_forward.5} parent=0 // pred_region
    _
  $region13: #{crnn_forward.5} parent=0 // pred_fallthru
    _
  // Predicated region
  $region14: #{crnn_forward.5} parent=0 // pred_check
    _
  $region15: #{crnn_forward.5} parent=0 // pred_check_branch
    %17 = sbr.rel (0) target = $region17
  $region16: #{crnn_forward.5} parent=0 // pred_region
    _
  $region17: #{crnn_forward.5} parent=0 // pred_fallthru
    _
  // Predicated region
  $region18: #{crnn_forward.5} parent=0 // pred_check
    _
  $region19: #{crnn_forward.5} parent=0 // pred_check_branch
    %19 = sbr.rel (0) target = $region21
  $region20: #{crnn_forward.5} parent=0 // pred_region
    _
  $region21: #{crnn_forward.5} parent=0 // pred_fallthru
    _
  %v20 = vld [vmem:[%s0] sm:$0xff]
  %v21 = vld [vmem:[%s0 + $0x8] sm:$0xff]
  %v22 = vld [vmem:[%s0 + $0x10] sm:$0xff]
  %v23 = vld [vmem:[%s0 + $0x18] sm:$0xff]
  %v24 = vld [vmem:[%s0 + $0x20] sm:$0xff]
  %v25 = vld [vmem:[%s0 + $0x28] sm:$0xff]
  %v26 = vld [vmem:[%s0 + $0x30] sm:$0xff]
  %v27 = vld [vmem:[%s0 + $0x38] sm:$0xff]
  %v28 = vld [vmem:[%s0 + $0x40] sm:$0xff]
  %v29 = vld [vmem:[%s0 + $0x48] sm:$0xff]
  %v30 = vld [vmem:[%s0 + $0x50] sm:$0xff]
  %v31 = vld [vmem:[%s0 + $0x58] sm:$0xff]
  %v32 = vld [vmem:[%s0 + $0x60] sm:$0xff]
  %v33 = vld [vmem:[%s0 + $0x68] sm:$0xff]
  %v34 = vld [vmem:[%s0 + $0x70] sm:$0xff]
  %v35 = vld [vmem:[%s0 + $0x78] sm:$0xff]
  %v36 = vld [vmem:[%s0 + $0x80] sm:$0xff]
  %v37 = vld [vmem:[%s0 + $0x88] sm:$0xff]
  %v38 = vld [vmem:[%s0 + $0x90] sm:$0xff]
  %v39 = vld [vmem:[%s0 + $0x98] sm:$0xff]
  %v40 = vld [vmem:[%s0 + $0xa0] sm:$0xff]
  %v41 = vld [vmem:[%s0 + $0xa8] sm:$0xff]
  %v42 = vld [vmem:[%s0 + $0xb0] sm:$0xff]
  %v43 = vld [vmem:[%s0 + $0xb8] sm:$0xff]
  %v44 = vld [vmem:[%s0 + $0xc0] sm:$0xff]
  %v45 = vld [vmem:[%s0 + $0xc8] sm:$0xff]
  %v46 = vld [vmem:[%s0 + $0xd0] sm:$0xff]
  %v47 = vld [vmem:[%s0 + $0xd8] sm:$0xff]
  %v48 = vld [vmem:[%s0 + $0xe0] sm:$0xff]
  %v49 = vld [vmem:[%s0 + $0xe8] sm:$0xff]
  %v50 = vld [vmem:[%s0 + $0xf0] sm:$0xff]
  %v51 = vld [vmem:[%s0 + $0xf8] sm:$0xff]
  %v52 = vld [vmem:[%s0 + $0x100] sm:$0xff]
  %v53 = vld [vmem:[%s0 + $0x108] sm:$0xff]
  %v54 = vld [vmem:[%s0 + $0x110] sm:$0xff]
  %v55 = vld [vmem:[%s0 + $0x118] sm:$0xff]
  %v56 = vld [vmem:[%s0 + $0x120] sm:$0xff]
  %v57 = vld [vmem:[%s0 + $0x128] sm:$0xff]
  %v58 = vld [vmem:[%s0 + $0x130] sm:$0xff]
  %v59 = vld [vmem:[%s0 + $0x138] sm:$0xff]
  %v60 = vld [vmem:[%s0 + $0x140] sm:$0xff]
  %v61 = vld [vmem:[%s0 + $0x148] sm:$0xff]
  %v62 = vld [vmem:[%s0 + $0x150] sm:$0xff]
  %v63 = vld [vmem:[%s0 + $0x158] sm:$0xff]
  %v64 = vld [vmem:[%s0 + $0x160] sm:$0xff]
  %v65 = vld [vmem:[%s0 + $0x168] sm:$0xff]
  %v66 = vld [vmem:[%s0 + $0x170] sm:$0xff]
  %v67 = vld [vmem:[%s0 + $0x178] sm:$0xff]
  %v68 = vld [vmem:[%s0 + $0x180] sm:$0xff]
  %v69 = vld [vmem:[%s1] sm:$0xff]
  %v70 = vld [vmem:[%s1 + $0x8] sm:$0x1]
  %v71 = vld [vmem:[%s2] sm:$0x1]
  %v73 = vlaneseq
  %v74 = vshrl.u32 %v73, 7
  %v75 = vsub.s32 0, %v74
  %v76 = vrot.slane %v71, %v75
  %vm78 = vcmask 72704
  %v80 = vsel %vm78, %v20, 0
  %v83 = vsel %vm78, %v21, 0
  %v86 = vsel %vm78, %v22, 0
  %v89 = vsel %vm78, %v23, 0
  %v92 = vsel %vm78, %v24, 0
  %v95 = vsel %vm78, %v25, 0
  %v98 = vsel %vm78, %v26, 0
  %v101 = vsel %vm78, %v27, 0
  %v104 = vsel %vm78, %v28, 0
  %v107 = vsel %vm78, %v29, 0
  %v110 = vsel %vm78, %v30, 0
  %v113 = vsel %vm78, %v31, 0
  %v116 = vsel %vm78, %v32, 0
  %v119 = vsel %vm78, %v33, 0
  %v122 = vsel %vm78, %v34, 0
  %v125 = vsel %vm78, %v35, 0
  %v128 = vsel %vm78, %v36, 0
  %v131 = vsel %vm78, %v37, 0
  %v134 = vsel %vm78, %v38, 0
  %v137 = vsel %vm78, %v39, 0
  %v140 = vsel %vm78, %v40, 0
  %v143 = vsel %vm78, %v41, 0
  %v146 = vsel %vm78, %v42, 0
  %v149 = vsel %vm78, %v43, 0
  %v152 = vsel %vm78, %v44, 0
  %v155 = vsel %vm78, %v45, 0
  %v158 = vsel %vm78, %v46, 0
  %v161 = vsel %vm78, %v47, 0
  %v164 = vsel %vm78, %v48, 0
  %v167 = vsel %vm78, %v49, 0
  %v170 = vsel %vm78, %v50, 0
  %v173 = vsel %vm78, %v51, 0
  %v176 = vsel %vm78, %v52, 0
  %v179 = vsel %vm78, %v53, 0
  %v182 = vsel %vm78, %v54, 0
  %v185 = vsel %vm78, %v55, 0
  %v188 = vsel %vm78, %v56, 0
  %v191 = vsel %vm78, %v57, 0
  %v194 = vsel %vm78, %v58, 0
  %v197 = vsel %vm78, %v59, 0
  %v200 = vsel %vm78, %v60, 0
  %v203 = vsel %vm78, %v61, 0
  %v206 = vsel %vm78, %v62, 0
  %v209 = vsel %vm78, %v63, 0
  %v212 = vsel %vm78, %v64, 0
  %v215 = vsel %vm78, %v65, 0
  %v218 = vsel %vm78, %v66, 0
  %v221 = vsel %vm78, %v67, 0
  %v224 = vsel %vm78, %v68, 0
  %vm226 = vcmask 1040384
  %v228 = vsel %vm226, %v70, 0
  %230 = vmatprep.subr.mxu0 0.0
  %231 = vmatpush1.msra.mxu0 %v69
  %232 = vmatprep.subr.mxu0 0.0
  %233 = vmatpush1.msra.mxu0 %v228
  %234 = vmatprep.subr.mxu0 0.0
  %235 = vmatpush1.msra.mxu0 0.0
  %236 = vmatprep.subr.mxu0 0.0
  %237 = vmatpush1.msra.mxu0 0.0
  %238 = vmatprep.subr.mxu0 0.0
  %239 = vmatpush1.msra.mxu0 0.0
  %240 = vmatprep.subr.mxu0 0.0
  %241 = vmatpush1.msra.mxu0 0.0
  %242 = vmatprep.subr.mxu0 0.0
  %243 = vmatpush1.msra.mxu0 0.0
  %244 = vmatprep.subr.mxu0 0.0
  %245 = vmatpush1.msra.mxu0 0.0
  %246 = vmatprep.subr.mxu0 0.0
  %247 = vmatpush1.msra.mxu0 0.0
  %248 = vmatprep.subr.mxu0 0.0
  %249 = vmatpush1.msra.mxu0 0.0
  %250 = vmatprep.subr.mxu0 0.0
  %251 = vmatpush1.msra.mxu0 0.0
  %252 = vmatprep.subr.mxu0 0.0
  %253 = vmatpush1.msra.mxu0 0.0
  %254 = vmatprep.subr.mxu0 0.0
  %255 = vmatpush1.msra.mxu0 0.0
  %256 = vmatprep.subr.mxu0 0.0
  %257 = vmatpush1.msra.mxu0 0.0
  %258 = vmatprep.subr.mxu0 0.0
  %259 = vmatpush1.msra.mxu0 0.0
  %260 = vmatprep.subr.mxu0 0.0
  %261 = vmatpush1.msra.mxu0 0.0
  %262 = vmatprep.subr.mxu0 0.0
  %263 = vmatpush1.msra.mxu0 0.0
  %264 = vmatprep.subr.mxu0 0.0
  %265 = vmatpush1.msra.mxu0 0.0
  %266 = vmatprep.subr.mxu0 0.0
  %267 = vmatpush1.msra.mxu0 0.0
  %268 = vmatprep.subr.mxu0 0.0
  %269 = vmatpush1.msra.mxu0 0.0
  %270 = vmatprep.subr.mxu0 0.0
  %271 = vmatpush1.msra.mxu0 0.0
  %272 = vmatprep.subr.mxu0 0.0
  %273 = vmatpush1.msra.mxu0 0.0
  %274 = vmatprep.subr.mxu0 0.0
  %275 = vmatpush1.msra.mxu0 0.0
  %276 = vmatprep.subr.mxu0 0.0
  %277 = vmatpush1.msra.mxu0 0.0
  %278 = vmatprep.subr.mxu0 0.0
  %279 = vmatpush1.msra.mxu0 0.0
  %280 = vmatprep.subr.mxu0 0.0
  %281 = vmatpush1.msra.mxu0 0.0
  %282 = vmatprep.subr.mxu0 0.0
  %283 = vmatpush1.msra.mxu0 0.0
  %284 = vmatprep.subr.mxu0 0.0
  %285 = vmatpush1.msra.mxu0 0.0
  %286 = vmatprep.subr.mxu0 0.0
  %287 = vmatpush1.msra.mxu0 0.0
  %288 = vmatprep.subr.mxu0 0.0
  %289 = vmatpush1.msra.mxu0 0.0
  %290 = vmatprep.subr.mxu0 0.0
  %291 = vmatpush1.msra.mxu0 0.0
  %292 = vmatprep.subr.mxu0 0.0
  %293 = vmatpush1.msra.mxu0 0.0
  %294 = vmatprep.mubr.f32.mxu0 0.0
  %295 = vmatmul.mubr.f32.gmra.mrb[0].mxu0 %v80
  %v296 = vpop.f32.mrb[0].mxu0
  %v297 = vadd.f32 %v76, %v296
  %v298 = vpop.f32.mrb[0].mxu0
  %299 = vmatprep.mubr.f32.mxu0 0.0
  %300 = vmatmul.mubr.f32.gmra.mrb[0].mxu0 %v83
  %v301 = vpop.f32.mrb[0].mxu0
  %v302 = vadd.f32 %v76, %v301
  %v303 = vpop.f32.mrb[0].mxu0
  %304 = vmatprep.mubr.f32.mxu0 0.0
  %305 = vmatmul.mubr.f32.gmra.mrb[0].mxu0 %v86
  %v306 = vpop.f32.mrb[0].mxu0
  %v307 = vadd.f32 %v76, %v306
  %v308 = vpop.f32.mrb[0].mxu0
  %309 = vmatprep.mubr.f32.mxu0 0.0
  %310 = vmatmul.mubr.f32.gmra.mrb[0].mxu0 %v89
  %v311 = vpop.f32.mrb[0].mxu0
  %v312 = vadd.f32 %v76, %v311
  %v313 = vpop.f32.mrb[0].mxu0
  %314 = vmatprep.mubr.f32.mxu0 0.0
  %315 = vmatmul.mubr.f32.gmra.mrb[0].mxu0 %v92
  %v316 = vpop.f32.mrb[0].mxu0
  %v317 = vadd.f32 %v76, %v316
  %v318 = vpop.f32.mrb[0].mxu0
  %319 = vmatprep.mubr.f32.mxu0 0.0
  %320 = vmatmul.mubr.f32.gmra.mrb[0].mxu0 %v95
  %v321 = vpop.f32.mrb[0].mxu0
  %v322 = vadd.f32 %v76, %v321
  %v323 = vpop.f32.mrb[0].mxu0
  %324 = vmatprep.mubr.f32.mxu0 0.0
  %325 = vmatmul.mubr.f32.gmra.mrb[0].mxu0 %v98
  %v326 = vpop.f32.mrb[0].mxu0
  %v327 = vadd.f32 %v76, %v326
  %v328 = vpop.f32.mrb[0].mxu0
  %329 = vmatprep.mubr.f32.mxu0 0.0
  %330 = vmatmul.mubr.f32.gmra.mrb[0].mxu0 %v101
  %v331 = vpop.f32.mrb[0].mxu0
  %v332 = vadd.f32 %v76, %v331
  %v333 = vpop.f32.mrb[0].mxu0
  %334 = vmatprep.mubr.f32.mxu0 0.0
  %335 = vmatmul.mubr.f32.gmra.mrb[0].mxu0 %v104
  %v336 = vpop.f32.mrb[0].mxu0
  %v337 = vadd.f32 %v76, %v336
  %v338 = vpop.f32.mrb[0].mxu0
  %339 = vmatprep.mubr.f32.mxu0 0.0
  %340 = vmatmul.mubr.f32.gmra.mrb[0].mxu0 %v107
  %v341 = vpop.f32.mrb[0].mxu0
  %v342 = vadd.f32 %v76, %v341
  %v343 = vpop.f32.mrb[0].mxu0
  %344 = vmatprep.mubr.f32.mxu0 0.0
  %345 = vmatmul.mubr.f32.gmra.mrb[0].mxu0 %v110
  %v346 = vpop.f32.mrb[0].mxu0
  %v347 = vadd.f32 %v76, %v346
  %v348 = vpop.f32.mrb[0].mxu0
  %349 = vmatprep.mubr.f32.mxu0 0.0
  %350 = vmatmul.mubr.f32.gmra.mrb[0].mxu0 %v113
  %v351 = vpop.f32.mrb[0].mxu0
  %v352 = vadd.f32 %v76, %v351
  %v353 = vpop.f32.mrb[0].mxu0
  %354 = vmatprep.mubr.f32.mxu0 0.0
  %355 = vmatmul.mubr.f32.gmra.mrb[0].mxu0 %v116
  %v356 = vpop.f32.mrb[0].mxu0
  %v357 = vadd.f32 %v76, %v356
  %v358 = vpop.f32.mrb[0].mxu0
  %359 = vmatprep.mubr.f32.mxu0 0.0
  %360 = vmatmul.mubr.f32.gmra.mrb[0].mxu0 %v119
  %v361 = vpop.f32.mrb[0].mxu0
  %v362 = vadd.f32 %v76, %v361
  %v363 = vpop.f32.mrb[0].mxu0
  %364 = vmatprep.mubr.f32.mxu0 0.0
  %365 = vmatmul.mubr.f32.gmra.mrb[0].mxu0 %v122
  %v366 = vpop.f32.mrb[0].mxu0
  %v367 = vadd.f32 %v76, %v366
  %v368 = vpop.f32.mrb[0].mxu0
  %369 = vmatprep.mubr.f32.mxu0 0.0
  %370 = vmatmul.mubr.f32.gmra.mrb[0].mxu0 %v125
  %v371 = vpop.f32.mrb[0].mxu0
  %v372 = vadd.f32 %v76, %v371
  %v373 = vpop.f32.mrb[0].mxu0
  %374 = vmatprep.mubr.f32.mxu0 0.0
  %375 = vmatmul.mubr.f32.gmra.mrb[0].mxu0 %v128
  %v376 = vpop.f32.mrb[0].mxu0
  %v377 = vadd.f32 %v76, %v376
  %v378 = vpop.f32.mrb[0].mxu0
  %379 = vmatprep.mubr.f32.mxu0 0.0
  %380 = vmatmul.mubr.f32.gmra.mrb[0].mxu0 %v131
  %v381 = vpop.f32.mrb[0].mxu0
  %v382 = vadd.f32 %v76, %v381
  %v383 = vpop.f32.mrb[0].mxu0
  %384 = vmatprep.mubr.f32.mxu0 0.0
  %385 = vmatmul.mubr.f32.gmra.mrb[0].mxu0 %v134
  %v386 = vpop.f32.mrb[0].mxu0
  %v387 = vadd.f32 %v76, %v386
  %v388 = vpop.f32.mrb[0].mxu0
  %389 = vmatprep.mubr.f32.mxu0 0.0
  %390 = vmatmul.mubr.f32.gmra.mrb[0].mxu0 %v137
  %v391 = vpop.f32.mrb[0].mxu0
  %v392 = vadd.f32 %v76, %v391
  %v393 = vpop.f32.mrb[0].mxu0
  %394 = vmatprep.mubr.f32.mxu0 0.0
  %395 = vmatmul.mubr.f32.gmra.mrb[0].mxu0 %v140
  %v396 = vpop.f32.mrb[0].mxu0
  %v397 = vadd.f32 %v76, %v396
  %v398 = vpop.f32.mrb[0].mxu0
  %399 = vmatprep.mubr.f32.mxu0 0.0
  %400 = vmatmul.mubr.f32.gmra.mrb[0].mxu0 %v143
  %v401 = vpop.f32.mrb[0].mxu0
  %v402 = vadd.f32 %v76, %v401
  %v403 = vpop.f32.mrb[0].mxu0
  %404 = vmatprep.mubr.f32.mxu0 0.0
  %405 = vmatmul.mubr.f32.gmra.mrb[0].mxu0 %v146
  %v406 = vpop.f32.mrb[0].mxu0
  %v407 = vadd.f32 %v76, %v406
  %v408 = vpop.f32.mrb[0].mxu0
  %409 = vmatprep.mubr.f32.mxu0 0.0
  %410 = vmatmul.mubr.f32.gmra.mrb[0].mxu0 %v149
  %v411 = vpop.f32.mrb[0].mxu0
  %v412 = vadd.f32 %v76, %v411
  %v413 = vpop.f32.mrb[0].mxu0
  %414 = vmatprep.mubr.f32.mxu0 0.0
  %415 = vmatmul.mubr.f32.gmra.mrb[0].mxu0 %v152
  %v416 = vpop.f32.mrb[0].mxu0
  %v417 = vadd.f32 %v76, %v416
  %v418 = vpop.f32.mrb[0].mxu0
  %419 = vmatprep.mubr.f32.mxu0 0.0
  %420 = vmatmul.mubr.f32.gmra.mrb[0].mxu0 %v155
  %v421 = vpop.f32.mrb[0].mxu0
  %v422 = vadd.f32 %v76, %v421
  %v423 = vpop.f32.mrb[0].mxu0
  %424 = vmatprep.mubr.f32.mxu0 0.0
  %425 = vmatmul.mubr.f32.gmra.mrb[0].mxu0 %v158
  %v426 = vpop.f32.mrb[0].mxu0
  %v427 = vadd.f32 %v76, %v426
  %v428 = vpop.f32.mrb[0].mxu0
  %429 = vmatprep.mubr.f32.mxu0 0.0
  %430 = vmatmul.mubr.f32.gmra.mrb[0].mxu0 %v161
  %v431 = vpop.f32.mrb[0].mxu0
  %v432 = vadd.f32 %v76, %v431
  %v433 = vpop.f32.mrb[0].mxu0
  %434 = vmatprep.mubr.f32.mxu0 0.0
  %435 = vmatmul.mubr.f32.gmra.mrb[0].mxu0 %v164
  %v436 = vpop.f32.mrb[0].mxu0
  %v437 = vadd.f32 %v76, %v436
  %v438 = vpop.f32.mrb[0].mxu0
  %439 = vmatprep.mubr.f32.mxu0 0.0
  %440 = vmatmul.mubr.f32.gmra.mrb[0].mxu0 %v167
  %v441 = vpop.f32.mrb[0].mxu0
  %v442 = vadd.f32 %v76, %v441
  %v443 = vpop.f32.mrb[0].mxu0
  %444 = vmatprep.mubr.f32.mxu0 0.0
  %445 = vmatmul.mubr.f32.gmra.mrb[0].mxu0 %v170
  %v446 = vpop.f32.mrb[0].mxu0
  %v447 = vadd.f32 %v76, %v446
  %v448 = vpop.f32.mrb[0].mxu0
  %449 = vmatprep.mubr.f32.mxu0 0.0
  %450 = vmatmul.mubr.f32.gmra.mrb[0].mxu0 %v173
  %v451 = vpop.f32.mrb[0].mxu0
  %v452 = vadd.f32 %v76, %v451
  %v453 = vpop.f32.mrb[0].mxu0
  %454 = vmatprep.mubr.f32.mxu0 0.0
  %455 = vmatmul.mubr.f32.gmra.mrb[0].mxu0 %v176
  %v456 = vpop.f32.mrb[0].mxu0
  %v457 = vadd.f32 %v76, %v456
  %v458 = vpop.f32.mrb[0].mxu0
  %459 = vmatprep.mubr.f32.mxu0 0.0
  %460 = vmatmul.mubr.f32.gmra.mrb[0].mxu0 %v179
  %v461 = vpop.f32.mrb[0].mxu0
  %v462 = vadd.f32 %v76, %v461
  %v463 = vpop.f32.mrb[0].mxu0
  %464 = vmatprep.mubr.f32.mxu0 0.0
  %465 = vmatmul.mubr.f32.gmra.mrb[0].mxu0 %v182
  %v466 = vpop.f32.mrb[0].mxu0
  %v467 = vadd.f32 %v76, %v466
  %v468 = vpop.f32.mrb[0].mxu0
  %469 = vmatprep.mubr.f32.mxu0 0.0
  %470 = vmatmul.mubr.f32.gmra.mrb[0].mxu0 %v185
  %v471 = vpop.f32.mrb[0].mxu0
  %v472 = vadd.f32 %v76, %v471
  %v473 = vpop.f32.mrb[0].mxu0
  %474 = vmatprep.mubr.f32.mxu0 0.0
  %475 = vmatmul.mubr.f32.gmra.mrb[0].mxu0 %v188
  %v476 = vpop.f32.mrb[0].mxu0
  %v477 = vadd.f32 %v76, %v476
  %v478 = vpop.f32.mrb[0].mxu0
  %479 = vmatprep.mubr.f32.mxu0 0.0
  %480 = vmatmul.mubr.f32.gmra.mrb[0].mxu0 %v191
  %v481 = vpop.f32.mrb[0].mxu0
  %v482 = vadd.f32 %v76, %v481
  %v483 = vpop.f32.mrb[0].mxu0
  %484 = vmatprep.mubr.f32.mxu0 0.0
  %485 = vmatmul.mubr.f32.gmra.mrb[0].mxu0 %v194
  %v486 = vpop.f32.mrb[0].mxu0
  %v487 = vadd.f32 %v76, %v486
  %v488 = vpop.f32.mrb[0].mxu0
  %489 = vmatprep.mubr.f32.mxu0 0.0
  %490 = vmatmul.mubr.f32.gmra.mrb[0].mxu0 %v197
  %v491 = vpop.f32.mrb[0].mxu0
  %v492 = vadd.f32 %v76, %v491
  %v493 = vpop.f32.mrb[0].mxu0
  %494 = vmatprep.mubr.f32.mxu0 0.0
  %495 = vmatmul.mubr.f32.gmra.mrb[0].mxu0 %v200
  %v496 = vpop.f32.mrb[0].mxu0
  %v497 = vadd.f32 %v76, %v496
  %v498 = vpop.f32.mrb[0].mxu0
  %499 = vmatprep.mubr.f32.mxu0 0.0
  %500 = vmatmul.mubr.f32.gmra.mrb[0].mxu0 %v203
  %v501 = vpop.f32.mrb[0].mxu0
  %v502 = vadd.f32 %v76, %v501
  %v503 = vpop.f32.mrb[0].mxu0
  %504 = vmatprep.mubr.f32.mxu0 0.0
  %505 = vmatmul.mubr.f32.gmra.mrb[0].mxu0 %v206
  %v506 = vpop.f32.mrb[0].mxu0
  %v507 = vadd.f32 %v76, %v506
  %v508 = vpop.f32.mrb[0].mxu0
  %509 = vmatprep.mubr.f32.mxu0 0.0
  %510 = vmatmul.mubr.f32.gmra.mrb[0].mxu0 %v209
  %v511 = vpop.f32.mrb[0].mxu0
  %v512 = vadd.f32 %v76, %v511
  %v513 = vpop.f32.mrb[0].mxu0
  %514 = vmatprep.mubr.f32.mxu0 0.0
  %515 = vmatmul.mubr.f32.gmra.mrb[0].mxu0 %v212
  %v516 = vpop.f32.mrb[0].mxu0
  %v517 = vadd.f32 %v76, %v516
  %v518 = vpop.f32.mrb[0].mxu0
  %519 = vmatprep.mubr.f32.mxu0 0.0
  %520 = vmatmul.mubr.f32.gmra.mrb[0].mxu0 %v215
  %v521 = vpop.f32.mrb[0].mxu0
  %v522 = vadd.f32 %v76, %v521
  %v523 = vpop.f32.mrb[0].mxu0
  %524 = vmatprep.mubr.f32.mxu0 0.0
  %525 = vmatmul.mubr.f32.gmra.mrb[0].mxu0 %v218
  %v526 = vpop.f32.mrb[0].mxu0
  %v527 = vadd.f32 %v76, %v526
  %v528 = vpop.f32.mrb[0].mxu0
  %529 = vmatprep.mubr.f32.mxu0 0.0
  %530 = vmatmul.mubr.f32.gmra.mrb[0].mxu0 %v221
  %v531 = vpop.f32.mrb[0].mxu0
  %v532 = vadd.f32 %v76, %v531
  %v533 = vpop.f32.mrb[0].mxu0
  %534 = vmatprep.mubr.f32.mxu0 0.0
  %535 = vmatmul.mubr.f32.gmra.mrb[0].mxu0 %v224
  %v536 = vpop.f32.mrb[0].mxu0
  %v537 = vadd.f32 %v76, %v536
  %v538 = vpop.f32.mrb[0].mxu0
  %539 = vdwg.mxu0
  %v540 = vmax.f32 %v297, 0.0
  %v541 = vmax.f32 %v302, 0.0
  %v542 = vmax.f32 %v307, 0.0
  %v543 = vmax.f32 %v312, 0.0
  %v544 = vmax.f32 %v317, 0.0
  %v545 = vmax.f32 %v322, 0.0
  %v546 = vmax.f32 %v327, 0.0
  %v547 = vmax.f32 %v332, 0.0
  %v548 = vmax.f32 %v337, 0.0
  %v549 = vmax.f32 %v342, 0.0
  %v550 = vmax.f32 %v347, 0.0
  %v551 = vmax.f32 %v352, 0.0
  %v552 = vmax.f32 %v357, 0.0
  %v553 = vmax.f32 %v362, 0.0
  %v554 = vmax.f32 %v367, 0.0
  %v555 = vmax.f32 %v372, 0.0
  %v556 = vmax.f32 %v377, 0.0
  %v557 = vmax.f32 %v382, 0.0
  %v558 = vmax.f32 %v387, 0.0
  %v559 = vmax.f32 %v392, 0.0
  %v560 = vmax.f32 %v397, 0.0
  %v561 = vmax.f32 %v402, 0.0
  %v562 = vmax.f32 %v407, 0.0
  %v563 = vmax.f32 %v412, 0.0
  %v564 = vmax.f32 %v417, 0.0
  %v565 = vmax.f32 %v422, 0.0
  %v566 = vmax.f32 %v427, 0.0
  %v567 = vmax.f32 %v432, 0.0
  %v568 = vmax.f32 %v437, 0.0
  %v569 = vmax.f32 %v442, 0.0
  %v570 = vmax.f32 %v447, 0.0
  %v571 = vmax.f32 %v452, 0.0
  %v572 = vmax.f32 %v457, 0.0
  %v573 = vmax.f32 %v462, 0.0
  %v574 = vmax.f32 %v467, 0.0
  %v575 = vmax.f32 %v472, 0.0
  %v576 = vmax.f32 %v477, 0.0
  %v577 = vmax.f32 %v482, 0.0
  %v578 = vmax.f32 %v487, 0.0
  %v579 = vmax.f32 %v492, 0.0
  %v580 = vmax.f32 %v497, 0.0
  %v581 = vmax.f32 %v502, 0.0
  %v582 = vmax.f32 %v507, 0.0
  %v583 = vmax.f32 %v512, 0.0
  %v584 = vmax.f32 %v517, 0.0
  %v585 = vmax.f32 %v522, 0.0
  %v586 = vmax.f32 %v527, 0.0
  %v587 = vmax.f32 %v532, 0.0
  %v588 = vmax.f32 %v537, 0.0
  %s589 = scalar_lea.vmem %s0, 392
  %v590 = vld [vmem:[%s589] sm:$0xff]
  %v591 = vld [vmem:[%s589 + $0x8] sm:$0xff]
  %v592 = vld [vmem:[%s589 + $0x10] sm:$0xff]
  %v593 = vld [vmem:[%s589 + $0x18] sm:$0xff]
  %v594 = vld [vmem:[%s589 + $0x20] sm:$0xff]
  %v595 = vld [vmem:[%s589 + $0x28] sm:$0xff]
  %v596 = vld [vmem:[%s589 + $0x30] sm:$0xff]
  %v597 = vld [vmem:[%s589 + $0x38] sm:$0xff]
  %v598 = vld [vmem:[%s589 + $0x40] sm:$0xff]
  %v599 = vld [vmem:[%s589 + $0x48] sm:$0xff]
  %v600 = vld [vmem:[%s589 + $0x50] sm:$0xff]
  %v601 = vld [vmem:[%s589 + $0x58] sm:$0xff]
  %v602 = vld [vmem:[%s589 + $0x60] sm:$0xff]
  %v603 = vld [vmem:[%s589 + $0x68] sm:$0xff]
  %v604 = vld [vmem:[%s589 + $0x70] sm:$0xff]
  %v605 = vld [vmem:[%s589 + $0x78] sm:$0xff]
  %v606 = vld [vmem:[%s589 + $0x80] sm:$0xff]
  %v607 = vld [vmem:[%s589 + $0x88] sm:$0xff]
  %v608 = vld [vmem:[%s589 + $0x90] sm:$0xff]
  %v609 = vld [vmem:[%s589 + $0x98] sm:$0xff]
  %v610 = vld [vmem:[%s589 + $0xa0] sm:$0xff]
  %v611 = vld [vmem:[%s589 + $0xa8] sm:$0xff]
  %v612 = vld [vmem:[%s589 + $0xb0] sm:$0xff]
  %v613 = vld [vmem:[%s589 + $0xb8] sm:$0xff]
  %v614 = vld [vmem:[%s589 + $0xc0] sm:$0xff]
  %v615 = vld [vmem:[%s589 + $0xc8] sm:$0xff]
  %v616 = vld [vmem:[%s589 + $0xd0] sm:$0xff]
  %v617 = vld [vmem:[%s589 + $0xd8] sm:$0xff]
  %v618 = vld [vmem:[%s589 + $0xe0] sm:$0xff]
  %v619 = vld [vmem:[%s589 + $0xe8] sm:$0xff]
  %v620 = vld [vmem:[%s589 + $0xf0] sm:$0xff]
  %v621 = vld [vmem:[%s589 + $0xf8] sm:$0xff]
  %v622 = vld [vmem:[%s589 + $0x100] sm:$0xff]
  %v623 = vld [vmem:[%s589 + $0x108] sm:$0xff]
  %v624 = vld [vmem:[%s589 + $0x110] sm:$0xff]
  %v625 = vld [vmem:[%s589 + $0x118] sm:$0xff]
  %v626 = vld [vmem:[%s589 + $0x120] sm:$0xff]
  %v627 = vld [vmem:[%s589 + $0x128] sm:$0xff]
  %v628 = vld [vmem:[%s589 + $0x130] sm:$0xff]
  %v629 = vld [vmem:[%s589 + $0x138] sm:$0xff]
  %v630 = vld [vmem:[%s589 + $0x140] sm:$0xff]
  %v631 = vld [vmem:[%s589 + $0x148] sm:$0xff]
  %v632 = vld [vmem:[%s589 + $0x150] sm:$0xff]
  %v633 = vld [vmem:[%s589 + $0x158] sm:$0xff]
  %v634 = vld [vmem:[%s589 + $0x160] sm:$0xff]
  %v635 = vld [vmem:[%s589 + $0x168] sm:$0xff]
  %v636 = vld [vmem:[%s589 + $0x170] sm:$0xff]
  %v637 = vld [vmem:[%s589 + $0x178] sm:$0xff]
  %v638 = vld [vmem:[%s589 + $0x180] sm:$0xff]
  %v640 = vsel %vm78, %v590, 0
  %v643 = vsel %vm78, %v591, 0
  %v646 = vsel %vm78, %v592, 0
  %v649 = vsel %vm78, %v593, 0
  %v652 = vsel %vm78, %v594, 0
  %v655 = vsel %vm78, %v595, 0
  %v658 = vsel %vm78, %v596, 0
  %v661 = vsel %vm78, %v597, 0
  %v664 = vsel %vm78, %v598, 0
  %v667 = vsel %vm78, %v599, 0
  %v670 = vsel %vm78, %v600, 0
  %v673 = vsel %vm78, %v601, 0
  %v676 = vsel %vm78, %v602, 0
  %v679 = vsel %vm78, %v603, 0
  %v682 = vsel %vm78, %v604, 0
  %v685 = vsel %vm78, %v605, 0
  %v688 = vsel %vm78, %v606, 0
  %v691 = vsel %vm78, %v607, 0
  %v694 = vsel %vm78, %v608, 0
  %v697 = vsel %vm78, %v609, 0
  %v700 = vsel %vm78, %v610, 0
  %v703 = vsel %vm78, %v611, 0
  %v706 = vsel %vm78, %v612, 0
  %v709 = vsel %vm78, %v613, 0
  %v712 = vsel %vm78, %v614, 0
  %v715 = vsel %vm78, %v615, 0
  %v718 = vsel %vm78, %v616, 0
  %v721 = vsel %vm78, %v617, 0
  %v724 = vsel %vm78, %v618, 0
  %v727 = vsel %vm78, %v619, 0
  %v730 = vsel %vm78, %v620, 0
  %v733 = vsel %vm78, %v621, 0
  %v736 = vsel %vm78, %v622, 0
  %v739 = vsel %vm78, %v623, 0
  %v742 = vsel %vm78, %v624, 0
  %v745 = vsel %vm78, %v625, 0
  %v748 = vsel %vm78, %v626, 0
  %v751 = vsel %vm78, %v627, 0
  %v754 = vsel %vm78, %v628, 0
  %v757 = vsel %vm78, %v629, 0
  %v760 = vsel %vm78, %v630, 0
  %v763 = vsel %vm78, %v631, 0
  %v766 = vsel %vm78, %v632, 0
  %v769 = vsel %vm78, %v633, 0
  %v772 = vsel %vm78, %v634, 0
  %v775 = vsel %vm78, %v635, 0
  %v778 = vsel %vm78, %v636, 0
  %v781 = vsel %vm78, %v637, 0
  %v784 = vsel %vm78, %v638, 0
  %786 = vmatprep.subr.mxu0 0.0
  %787 = vmatpush1.msra.mxu0 %v69
  %788 = vmatprep.subr.mxu0 0.0
  %789 = vmatpush1.msra.mxu0 %v228
  %790 = vmatprep.subr.mxu0 0.0
  %791 = vmatpush1.msra.mxu0 0.0
  %792 = vmatprep.subr.mxu0 0.0
  %793 = vmatpush1.msra.mxu0 0.0
  %794 = vmatprep.subr.mxu0 0.0
  %795 = vmatpush1.msra.mxu0 0.0
  %796 = vmatprep.subr.mxu0 0.0
  %797 = vmatpush1.msra.mxu0 0.0
  %798 = vmatprep.subr.mxu0 0.0
  %799 = vmatpush1.msra.mxu0 0.0
  %800 = vmatprep.subr.mxu0 0.0
  %801 = vmatpush1.msra.mxu0 0.0
  %802 = vmatprep.subr.mxu0 0.0
  %803 = vmatpush1.msra.mxu0 0.0
  %804 = vmatprep.subr.mxu0 0.0
  %805 = vmatpush1.msra.mxu0 0.0
  %806 = vmatprep.subr.mxu0 0.0
  %807 = vmatpush1.msra.mxu0 0.0
  %808 = vmatprep.subr.mxu0 0.0
  %809 = vmatpush1.msra.mxu0 0.0
  %810 = vmatprep.subr.mxu0 0.0
  %811 = vmatpush1.msra.mxu0 0.0
  %812 = vmatprep.subr.mxu0 0.0
  %813 = vmatpush1.msra.mxu0 0.0
  %814 = vmatprep.subr.mxu0 0.0
  %815 = vmatpush1.msra.mxu0 0.0
  %816 = vmatprep.subr.mxu0 0.0
  %817 = vmatpush1.msra.mxu0 0.0
  %818 = vmatprep.subr.mxu0 0.0
  %819 = vmatpush1.msra.mxu0 0.0
  %820 = vmatprep.subr.mxu0 0.0
  %821 = vmatpush1.msra.mxu0 0.0
  %822 = vmatprep.subr.mxu0 0.0
  %823 = vmatpush1.msra.mxu0 0.0
  %824 = vmatprep.subr.mxu0 0.0
  %825 = vmatpush1.msra.mxu0 0.0
  %826 = vmatprep.subr.mxu0 0.0
  %827 = vmatpush1.msra.mxu0 0.0
  %828 = vmatprep.subr.mxu0 0.0
  %829 = vmatpush1.msra.mxu0 0.0
  %830 = vmatprep.subr.mxu0 0.0
  %831 = vmatpush1.msra.mxu0 0.0
  %832 = vmatprep.subr.mxu0 0.0
  %833 = vmatpush1.msra.mxu0 0.0
  %834 = vmatprep.subr.mxu0 0.0
  %835 = vmatpush1.msra.mxu0 0.0
  %836 = vmatprep.subr.mxu0 0.0
  %837 = vmatpush1.msra.mxu0 0.0
  %838 = vmatprep.subr.mxu0 0.0
  %839 = vmatpush1.msra.mxu0 0.0
  %840 = vmatprep.subr.mxu0 0.0
  %841 = vmatpush1.msra.mxu0 0.0
  %842 = vmatprep.subr.mxu0 0.0
  %843 = vmatpush1.msra.mxu0 0.0
  %844 = vmatprep.subr.mxu0 0.0
  %845 = vmatpush1.msra.mxu0 0.0
  %846 = vmatprep.subr.mxu0 0.0
  %847 = vmatpush1.msra.mxu0 0.0
  %848 = vmatprep.subr.mxu0 0.0
  %849 = vmatpush1.msra.mxu0 0.0
  %850 = vmatprep.mubr.f32.mxu0 0.0
  %851 = vmatmul.mubr.f32.gmra.mrb[0].mxu0 %v640
  %v852 = vpop.f32.mrb[0].mxu0
  %v853 = vadd.f32 %v76, %v852
  %v854 = vpop.f32.mrb[0].mxu0
  %855 = vmatprep.mubr.f32.mxu0 0.0
  %856 = vmatmul.mubr.f32.gmra.mrb[0].mxu0 %v643
  %v857 = vpop.f32.mrb[0].mxu0
  %v858 = vadd.f32 %v76, %v857
  %v859 = vpop.f32.mrb[0].mxu0
  %860 = vmatprep.mubr.f32.mxu0 0.0
  %861 = vmatmul.mubr.f32.gmra.mrb[0].mxu0 %v646
  %v862 = vpop.f32.mrb[0].mxu0
  %v863 = vadd.f32 %v76, %v862
  %v864 = vpop.f32.mrb[0].mxu0
  %865 = vmatprep.mubr.f32.mxu0 0.0
  %866 = vmatmul.mubr.f32.gmra.mrb[0].mxu0 %v649
  %v867 = vpop.f32.mrb[0].mxu0
  %v868 = vadd.f32 %v76, %v867
  %v869 = vpop.f32.mrb[0].mxu0
  %870 = vmatprep.mubr.f32.mxu0 0.0
  %871 = vmatmul.mubr.f32.gmra.mrb[0].mxu0 %v652
  %v872 = vpop.f32.mrb[0].mxu0
  %v873 = vadd.f32 %v76, %v872
  %v874 = vpop.f32.mrb[0].mxu0
  %875 = vmatprep.mubr.f32.mxu0 0.0
  %876 = vmatmul.mubr.f32.gmra.mrb[0].mxu0 %v655
  %v877 = vpop.f32.mrb[0].mxu0
  %v878 = vadd.f32 %v76, %v877
  %v879 = vpop.f32.mrb[0].mxu0
  %880 = vmatprep.mubr.f32.mxu0 0.0
  %881 = vmatmul.mubr.f32.gmra.mrb[0].mxu0 %v658
  %v882 = vpop.f32.mrb[0].mxu0
  %v883 = vadd.f32 %v76, %v882
  %v884 = vpop.f32.mrb[0].mxu0
  %885 = vmatprep.mubr.f32.mxu0 0.0
  %886 = vmatmul.mubr.f32.gmra.mrb[0].mxu0 %v661
  %v887 = vpop.f32.mrb[0].mxu0
  %v888 = vadd.f32 %v76, %v887
  %v889 = vpop.f32.mrb[0].mxu0
  %890 = vmatprep.mubr.f32.mxu0 0.0
  %891 = vmatmul.mubr.f32.gmra.mrb[0].mxu0 %v664
  %v892 = vpop.f32.mrb[0].mxu0
  %v893 = vadd.f32 %v76, %v892
  %v894 = vpop.f32.mrb[0].mxu0
  %895 = vmatprep.mubr.f32.mxu0 0.0
  %896 = vmatmul.mubr.f32.gmra.mrb[0].mxu0 %v667
  %v897 = vpop.f32.mrb[0].mxu0
  %v898 = vadd.f32 %v76, %v897
  %v899 = vpop.f32.mrb[0].mxu0
  %900 = vmatprep.mubr.f32.mxu0 0.0
  %901 = vmatmul.mubr.f32.gmra.mrb[0].mxu0 %v670
  %v902 = vpop.f32.mrb[0].mxu0
  %v903 = vadd.f32 %v76, %v902
  %v904 = vpop.f32.mrb[0].mxu0
  %905 = vmatprep.mubr.f32.mxu0 0.0
  %906 = vmatmul.mubr.f32.gmra.mrb[0].mxu0 %v673
  %v907 = vpop.f32.mrb[0].mxu0
  %v908 = vadd.f32 %v76, %v907
  %v909 = vpop.f32.mrb[0].mxu0
  %910 = vmatprep.mubr.f32.mxu0 0.0
  %911 = vmatmul.mubr.f32.gmra.mrb[0].mxu0 %v676
  %v912 = vpop.f32.mrb[0].mxu0
  %v913 = vadd.f32 %v76, %v912
  %v914 = vpop.f32.mrb[0].mxu0
  %915 = vmatprep.mubr.f32.mxu0 0.0
  %916 = vmatmul.mubr.f32.gmra.mrb[0].mxu0 %v679
  %v917 = vpop.f32.mrb[0].mxu0
  %v918 = vadd.f32 %v76, %v917
  %v919 = vpop.f32.mrb[0].mxu0
  %920 = vmatprep.mubr.f32.mxu0 0.0
  %921 = vmatmul.mubr.f32.gmra.mrb[0].mxu0 %v682
  %v922 = vpop.f32.mrb[0].mxu0
  %v923 = vadd.f32 %v76, %v922
  %v924 = vpop.f32.mrb[0].mxu0
  %925 = vmatprep.mubr.f32.mxu0 0.0
  %926 = vmatmul.mubr.f32.gmra.mrb[0].mxu0 %v685
  %v927 = vpop.f32.mrb[0].mxu0
  %v928 = vadd.f32 %v76, %v927
  %v929 = vpop.f32.mrb[0].mxu0
  %930 = vmatprep.mubr.f32.mxu0 0.0
  %931 = vmatmul.mubr.f32.gmra.mrb[0].mxu0 %v688
  %v932 = vpop.f32.mrb[0].mxu0
  %v933 = vadd.f32 %v76, %v932
  %v934 = vpop.f32.mrb[0].mxu0
  %935 = vmatprep.mubr.f32.mxu0 0.0
  %936 = vmatmul.mubr.f32.gmra.mrb[0].mxu0 %v691
  %v937 = vpop.f32.mrb[0].mxu0
  %v938 = vadd.f32 %v76, %v937
  %v939 = vpop.f32.mrb[0].mxu0
  %940 = vmatprep.mubr.f32.mxu0 0.0
  %941 = vmatmul.mubr.f32.gmra.mrb[0].mxu0 %v694
  %v942 = vpop.f32.mrb[0].mxu0
  %v943 = vadd.f32 %v76, %v942
  %v944 = vpop.f32.mrb[0].mxu0
  %945 = vmatprep.mubr.f32.mxu0 0.0
  %946 = vmatmul.mubr.f32.gmra.mrb[0].mxu0 %v697
  %v947 = vpop.f32.mrb[0].mxu0
  %v948 = vadd.f32 %v76, %v947
  %v949 = vpop.f32.mrb[0].mxu0
  %950 = vmatprep.mubr.f32.mxu0 0.0
  %951 = vmatmul.mubr.f32.gmra.mrb[0].mxu0 %v700
  %v952 = vpop.f32.mrb[0].mxu0
  %v953 = vadd.f32 %v76, %v952
  %v954 = vpop.f32.mrb[0].mxu0
  %955 = vmatprep.mubr.f32.mxu0 0.0
  %956 = vmatmul.mubr.f32.gmra.mrb[0].mxu0 %v703
  %v957 = vpop.f32.mrb[0].mxu0
  %v958 = vadd.f32 %v76, %v957
  %v959 = vpop.f32.mrb[0].mxu0
  %960 = vmatprep.mubr.f32.mxu0 0.0
  %961 = vmatmul.mubr.f32.gmra.mrb[0].mxu0 %v706
  %v962 = vpop.f32.mrb[0].mxu0
  %v963 = vadd.f32 %v76, %v962
  %v964 = vpop.f32.mrb[0].mxu0
  %965 = vmatprep.mubr.f32.mxu0 0.0
  %966 = vmatmul.mubr.f32.gmra.mrb[0].mxu0 %v709
  %v967 = vpop.f32.mrb[0].mxu0
  %v968 = vadd.f32 %v76, %v967
  %v969 = vpop.f32.mrb[0].mxu0
  %970 = vmatprep.mubr.f32.mxu0 0.0
  %971 = vmatmul.mubr.f32.gmra.mrb[0].mxu0 %v712
  %v972 = vpop.f32.mrb[0].mxu0
  %v973 = vadd.f32 %v76, %v972
  %v974 = vpop.f32.mrb[0].mxu0
  %975 = vmatprep.mubr.f32.mxu0 0.0
  %976 = vmatmul.mubr.f32.gmra.mrb[0].mxu0 %v715
  %v977 = vpop.f32.mrb[0].mxu0
  %v978 = vadd.f32 %v76, %v977
  %v979 = vpop.f32.mrb[0].mxu0
  %980 = vmatprep.mubr.f32.mxu0 0.0
  %981 = vmatmul.mubr.f32.gmra.mrb[0].mxu0 %v718
  %v982 = vpop.f32.mrb[0].mxu0
  %v983 = vadd.f32 %v76, %v982
  %v984 = vpop.f32.mrb[0].mxu0
  %985 = vmatprep.mubr.f32.mxu0 0.0
  %986 = vmatmul.mubr.f32.gmra.mrb[0].mxu0 %v721
  %v987 = vpop.f32.mrb[0].mxu0
  %v988 = vadd.f32 %v76, %v987
  %v989 = vpop.f32.mrb[0].mxu0
  %990 = vmatprep.mubr.f32.mxu0 0.0
  %991 = vmatmul.mubr.f32.gmra.mrb[0].mxu0 %v724
  %v992 = vpop.f32.mrb[0].mxu0
  %v993 = vadd.f32 %v76, %v992
  %v994 = vpop.f32.mrb[0].mxu0
  %995 = vmatprep.mubr.f32.mxu0 0.0
  %996 = vmatmul.mubr.f32.gmra.mrb[0].mxu0 %v727
  %v997 = vpop.f32.mrb[0].mxu0
  %v998 = vadd.f32 %v76, %v997
  %v999 = vpop.f32.mrb[0].mxu0
  %1000 = vmatprep.mubr.f32.mxu0 0.0
  %1001 = vmatmul.mubr.f32.gmra.mrb[0].mxu0 %v730
  %v1002 = vpop.f32.mrb[0].mxu0
  %v1003 = vadd.f32 %v76, %v1002
  %v1004 = vpop.f32.mrb[0].mxu0
  %1005 = vmatprep.mubr.f32.mxu0 0.0
  %1006 = vmatmul.mubr.f32.gmra.mrb[0].mxu0 %v733
  %v1007 = vpop.f32.mrb[0].mxu0
  %v1008 = vadd.f32 %v76, %v1007
  %v1009 = vpop.f32.mrb[0].mxu0
  %1010 = vmatprep.mubr.f32.mxu0 0.0
  %1011 = vmatmul.mubr.f32.gmra.mrb[0].mxu0 %v736
  %v1012 = vpop.f32.mrb[0].mxu0
  %v1013 = vadd.f32 %v76, %v1012
  %v1014 = vpop.f32.mrb[0].mxu0
  %1015 = vmatprep.mubr.f32.mxu0 0.0
  %1016 = vmatmul.mubr.f32.gmra.mrb[0].mxu0 %v739
  %v1017 = vpop.f32.mrb[0].mxu0
  %v1018 = vadd.f32 %v76, %v1017
  %v1019 = vpop.f32.mrb[0].mxu0
  %1020 = vmatprep.mubr.f32.mxu0 0.0
  %1021 = vmatmul.mubr.f32.gmra.mrb[0].mxu0 %v742
  %v1022 = vpop.f32.mrb[0].mxu0
  %v1023 = vadd.f32 %v76, %v1022
  %v1024 = vpop.f32.mrb[0].mxu0
  %1025 = vmatprep.mubr.f32.mxu0 0.0
  %1026 = vmatmul.mubr.f32.gmra.mrb[0].mxu0 %v745
  %v1027 = vpop.f32.mrb[0].mxu0
  %v1028 = vadd.f32 %v76, %v1027
  %v1029 = vpop.f32.mrb[0].mxu0
  %1030 = vmatprep.mubr.f32.mxu0 0.0
  %1031 = vmatmul.mubr.f32.gmra.mrb[0].mxu0 %v748
  %v1032 = vpop.f32.mrb[0].mxu0
  %v1033 = vadd.f32 %v76, %v1032
  %v1034 = vpop.f32.mrb[0].mxu0
  %1035 = vmatprep.mubr.f32.mxu0 0.0
  %1036 = vmatmul.mubr.f32.gmra.mrb[0].mxu0 %v751
  %v1037 = vpop.f32.mrb[0].mxu0
  %v1038 = vadd.f32 %v76, %v1037
  %v1039 = vpop.f32.mrb[0].mxu0
  %1040 = vmatprep.mubr.f32.mxu0 0.0
  %1041 = vmatmul.mubr.f32.gmra.mrb[0].mxu0 %v754
  %v1042 = vpop.f32.mrb[0].mxu0
  %v1043 = vadd.f32 %v76, %v1042
  %v1044 = vpop.f32.mrb[0].mxu0
  %1045 = vmatprep.mubr.f32.mxu0 0.0
  %1046 = vmatmul.mubr.f32.gmra.mrb[0].mxu0 %v757
  %v1047 = vpop.f32.mrb[0].mxu0
  %v1048 = vadd.f32 %v76, %v1047
  %v1049 = vpop.f32.mrb[0].mxu0
  %1050 = vmatprep.mubr.f32.mxu0 0.0
  %1051 = vmatmul.mubr.f32.gmra.mrb[0].mxu0 %v760
  %v1052 = vpop.f32.mrb[0].mxu0
  %v1053 = vadd.f32 %v76, %v1052
  %v1054 = vpop.f32.mrb[0].mxu0
  %1055 = vmatprep.mubr.f32.mxu0 0.0
  %1056 = vmatmul.mubr.f32.gmra.mrb[0].mxu0 %v763
  %v1057 = vpop.f32.mrb[0].mxu0
  %v1058 = vadd.f32 %v76, %v1057
  %v1059 = vpop.f32.mrb[0].mxu0
  %1060 = vmatprep.mubr.f32.mxu0 0.0
  %1061 = vmatmul.mubr.f32.gmra.mrb[0].mxu0 %v766
  %v1062 = vpop.f32.mrb[0].mxu0
  %v1063 = vadd.f32 %v76, %v1062
  %v1064 = vpop.f32.mrb[0].mxu0
  %1065 = vmatprep.mubr.f32.mxu0 0.0
  %1066 = vmatmul.mubr.f32.gmra.mrb[0].mxu0 %v769
  %v1067 = vpop.f32.mrb[0].mxu0
  %v1068 = vadd.f32 %v76, %v1067
  %v1069 = vpop.f32.mrb[0].mxu0
  %1070 = vmatprep.mubr.f32.mxu0 0.0
  %1071 = vmatmul.mubr.f32.gmra.mrb[0].mxu0 %v772
  %v1072 = vpop.f32.mrb[0].mxu0
  %v1073 = vadd.f32 %v76, %v1072
  %v1074 = vpop.f32.mrb[0].mxu0
  %1075 = vmatprep.mubr.f32.mxu0 0.0
  %1076 = vmatmul.mubr.f32.gmra.mrb[0].mxu0 %v775
  %v1077 = vpop.f32.mrb[0].mxu0
  %v1078 = vadd.f32 %v76, %v1077
  %v1079 = vpop.f32.mrb[0].mxu0
  %1080 = vmatprep.mubr.f32.mxu0 0.0
  %1081 = vmatmul.mubr.f32.gmra.mrb[0].mxu0 %v778
  %v1082 = vpop.f32.mrb[0].mxu0
  %v1083 = vadd.f32 %v76, %v1082
  %v1084 = vpop.f32.mrb[0].mxu0
  %1085 = vmatprep.mubr.f32.mxu0 0.0
  %1086 = vmatmul.mubr.f32.gmra.mrb[0].mxu0 %v781
  %v1087 = vpop.f32.mrb[0].mxu0
  %v1088 = vadd.f32 %v76, %v1087
  %v1089 = vpop.f32.mrb[0].mxu0
  %1090 = vmatprep.mubr.f32.mxu0 0.0
  %1091 = vmatmul.mubr.f32.gmra.mrb[0].mxu0 %v784
  %v1092 = vpop.f32.mrb[0].mxu0
  %v1093 = vadd.f32 %v76, %v1092
  %v1094 = vpop.f32.mrb[0].mxu0
  %1095 = vdwg.mxu0
  %v1096 = vmax.f32 %v853, 0.0
  %v1097 = vmax.f32 %v858, 0.0
  %v1098 = vmax.f32 %v863, 0.0
  %v1099 = vmax.f32 %v868, 0.0
  %v1100 = vmax.f32 %v873, 0.0
  %v1101 = vmax.f32 %v878, 0.0
  %v1102 = vmax.f32 %v883, 0.0
  %v1103 = vmax.f32 %v888, 0.0
  %v1104 = vmax.f32 %v893, 0.0
  %v1105 = vmax.f32 %v898, 0.0
  %v1106 = vmax.f32 %v903, 0.0
  %v1107 = vmax.f32 %v908, 0.0
  %v1108 = vmax.f32 %v913, 0.0
  %v1109 = vmax.f32 %v918, 0.0
  %v1110 = vmax.f32 %v923, 0.0
  %v1111 = vmax.f32 %v928, 0.0
  %v1112 = vmax.f32 %v933, 0.0
  %v1113 = vmax.f32 %v938, 0.0
  %v1114 = vmax.f32 %v943, 0.0
  %v1115 = vmax.f32 %v948, 0.0
  %v1116 = vmax.f32 %v953, 0.0
  %v1117 = vmax.f32 %v958, 0.0
  %v1118 = vmax.f32 %v963, 0.0
  %v1119 = vmax.f32 %v968, 0.0
  %v1120 = vmax.f32 %v973, 0.0
  %v1121 = vmax.f32 %v978, 0.0
  %v1122 = vmax.f32 %v983, 0.0
  %v1123 = vmax.f32 %v988, 0.0
  %v1124 = vmax.f32 %v993, 0.0
  %v1125 = vmax.f32 %v998, 0.0
  %v1126 = vmax.f32 %v1003, 0.0
  %v1127 = vmax.f32 %v1008, 0.0
  %v1128 = vmax.f32 %v1013, 0.0
  %v1129 = vmax.f32 %v1018, 0.0
  %v1130 = vmax.f32 %v1023, 0.0
  %v1131 = vmax.f32 %v1028, 0.0
  %v1132 = vmax.f32 %v1033, 0.0
  %v1133 = vmax.f32 %v1038, 0.0
  %v1134 = vmax.f32 %v1043, 0.0
  %v1135 = vmax.f32 %v1048, 0.0
  %v1136 = vmax.f32 %v1053, 0.0
  %v1137 = vmax.f32 %v1058, 0.0
  %v1138 = vmax.f32 %v1063, 0.0
  %v1139 = vmax.f32 %v1068, 0.0
  %v1140 = vmax.f32 %v1073, 0.0
  %v1141 = vmax.f32 %v1078, 0.0
  %v1142 = vmax.f32 %v1083, 0.0
  %v1143 = vmax.f32 %v1088, 0.0
  %v1144 = vmax.f32 %v1093, 0.0
  %v1145 = vmax.f32 %v540, %v1096
  %v1146 = vmax.f32 %v541, %v1097
  %v1147 = vmax.f32 %v542, %v1098
  %v1148 = vmax.f32 %v543, %v1099
  %v1149 = vmax.f32 %v544, %v1100
  %v1150 = vmax.f32 %v545, %v1101
  %v1151 = vmax.f32 %v546, %v1102
  %v1152 = vmax.f32 %v547, %v1103
  %v1153 = vmax.f32 %v548, %v1104
  %v1154 = vmax.f32 %v549, %v1105
  %v1155 = vmax.f32 %v550, %v1106
  %v1156 = vmax.f32 %v551, %v1107
  %v1157 = vmax.f32 %v552, %v1108
  %v1158 = vmax.f32 %v553, %v1109
  %v1159 = vmax.f32 %v554, %v1110
  %v1160 = vmax.f32 %v555, %v1111
  %v1161 = vmax.f32 %v556, %v1112
  %v1162 = vmax.f32 %v557, %v1113
  %v1163 = vmax.f32 %v558, %v1114
  %v1164 = vmax.f32 %v559, %v1115
  %v1165 = vmax.f32 %v560, %v1116
  %v1166 = vmax.f32 %v561, %v1117
  %v1167 = vmax.f32 %v562, %v1118
  %v1168 = vmax.f32 %v563, %v1119
  %v1169 = vmax.f32 %v564, %v1120
  %v1170 = vmax.f32 %v565, %v1121
  %v1171 = vmax.f32 %v566, %v1122
  %v1172 = vmax.f32 %v567, %v1123
  %v1173 = vmax.f32 %v568, %v1124
  %v1174 = vmax.f32 %v569, %v1125
  %v1175 = vmax.f32 %v570, %v1126
  %v1176 = vmax.f32 %v571, %v1127
  %v1177 = vmax.f32 %v572, %v1128
  %v1178 = vmax.f32 %v573, %v1129
  %v1179 = vmax.f32 %v574, %v1130
  %v1180 = vmax.f32 %v575, %v1131
  %v1181 = vmax.f32 %v576, %v1132
  %v1182 = vmax.f32 %v577, %v1133
  %v1183 = vmax.f32 %v578, %v1134
  %v1184 = vmax.f32 %v579, %v1135
  %v1185 = vmax.f32 %v580, %v1136
  %v1186 = vmax.f32 %v581, %v1137
  %v1187 = vmax.f32 %v582, %v1138
  %v1188 = vmax.f32 %v583, %v1139
  %v1189 = vmax.f32 %v584, %v1140
  %v1190 = vmax.f32 %v585, %v1141
  %v1191 = vmax.f32 %v586, %v1142
  %v1192 = vmax.f32 %v587, %v1143
  %v1193 = vmax.f32 %v588, %v1144
  %s1194 = scalar_lea.vmem %s0, 784
  %v1195 = vld [vmem:[%s1194] sm:$0xff]
  %v1196 = vld [vmem:[%s1194 + $0x8] sm:$0xff]
  %v1197 = vld [vmem:[%s1194 + $0x10] sm:$0xff]
  %v1198 = vld [vmem:[%s1194 + $0x18] sm:$0xff]
  %v1199 = vld [vmem:[%s1194 + $0x20] sm:$0xff]
  %v1200 = vld [vmem:[%s1194 + $0x28] sm:$0xff]
  %v1201 = vld [vmem:[%s1194 + $0x30] sm:$0xff]
  %v1202 = vld [vmem:[%s1194 + $0x38] sm:$0xff]
  %v1203 = vld [vmem:[%s1194 + $0x40] sm:$0xff]
  %v1204 = vld [vmem:[%s1194 + $0x48] sm:$0xff]
  %v1205 = vld [vmem:[%s1194 + $0x50] sm:$0xff]
  %v1206 = vld [vmem:[%s1194 + $0x58] sm:$0xff]
  %v1207 = vld [vmem:[%s1194 + $0x60] sm:$0xff]
  %v1208 = vld [vmem:[%s1194 + $0x68] sm:$0xff]
  %v1209 = vld [vmem:[%s1194 + $0x70] sm:$0xff]
  %v1210 = vld [vmem:[%s1194 + $0x78] sm:$0xff]
  %v1211 = vld [vmem:[%s1194 + $0x80] sm:$0xff]
  %v1212 = vld [vmem:[%s1194 + $0x88] sm:$0xff]
  %v1213 = vld [vmem:[%s1194 + $0x90] sm:$0xff]
  %v1214 = vld [vmem:[%s1194 + $0x98] sm:$0xff]
  %v1215 = vld [vmem:[%s1194 + $0xa0] sm:$0xff]
  %v1216 = vld [vmem:[%s1194 + $0xa8] sm:$0xff]
  %v1217 = vld [vmem:[%s1194 + $0xb0] sm:$0xff]
  %v1218 = vld [vmem:[%s1194 + $0xb8] sm:$0xff]
  %v1219 = vld [vmem:[%s1194 + $0xc0] sm:$0xff]
  %v1220 = vld [vmem:[%s1194 + $0xc8] sm:$0xff]
  %v1221 = vld [vmem:[%s1194 + $0xd0] sm:$0xff]
  %v1222 = vld [vmem:[%s1194 + $0xd8] sm:$0xff]
  %v1223 = vld [vmem:[%s1194 + $0xe0] sm:$0xff]
  %v1224 = vld [vmem:[%s1194 + $0xe8] sm:$0xff]
  %v1225 = vld [vmem:[%s1194 + $0xf0] sm:$0xff]
  %v1226 = vld [vmem:[%s1194 + $0xf8] sm:$0xff]
  %v1227 = vld [vmem:[%s1194 + $0x100] sm:$0xff]
  %v1228 = vld [vmem:[%s1194 + $0x108] sm:$0xff]
  %v1229 = vld [vmem:[%s1194 + $0x110] sm:$0xff]
  %v1230 = vld [vmem:[%s1194 + $0x118] sm:$0xff]
  %v1231 = vld [vmem:[%s1194 + $0x120] sm:$0xff]
  %v1232 = vld [vmem:[%s1194 + $0x128] sm:$0xff]
  %v1233 = vld [vmem:[%s1194 + $0x130] sm:$0xff]
  %v1234 = vld [vmem:[%s1194 + $0x138] sm:$0xff]
  %v1235 = vld [vmem:[%s1194 + $0x140] sm:$0xff]
  %v1236 = vld [vmem:[%s1194 + $0x148] sm:$0xff]
  %v1237 = vld [vmem:[%s1194 + $0x150] sm:$0xff]
  %v1238 = vld [vmem:[%s1194 + $0x158] sm:$0xff]
  %v1239 = vld [vmem:[%s1194 + $0x160] sm:$0xff]
  %v1240 = vld [vmem:[%s1194 + $0x168] sm:$0xff]
  %v1241 = vld [vmem:[%s1194 + $0x170] sm:$0xff]
  %v1242 = vld [vmem:[%s1194 + $0x178] sm:$0xff]
  %v1243 = vld [vmem:[%s1194 + $0x180] sm:$0xff]
  %v1245 = vsel %vm78, %v1195, 0
  %v1248 = vsel %vm78, %v1196, 0
  %v1251 = vsel %vm78, %v1197, 0
  %v1254 = vsel %vm78, %v1198, 0
  %v1257 = vsel %vm78, %v1199, 0
  %v1260 = vsel %vm78, %v1200, 0
  %v1263 = vsel %vm78, %v1201, 0
  %v1266 = vsel %vm78, %v1202, 0
  %v1269 = vsel %vm78, %v1203, 0
  %v1272 = vsel %vm78, %v1204, 0
  %v1275 = vsel %vm78, %v1205, 0
  %v1278 = vsel %vm78, %v1206, 0
  %v1281 = vsel %vm78, %v1207, 0
  %v1284 = vsel %vm78, %v1208, 0
  %v1287 = vsel %vm78, %v1209, 0
  %v1290 = vsel %vm78, %v1210, 0
  %v1293 = vsel %vm78, %v1211, 0
  %v1296 = vsel %vm78, %v1212, 0
  %v1299 = vsel %vm78, %v1213, 0
  %v1302 = vsel %vm78, %v1214, 0
  %v1305 = vsel %vm78, %v1215, 0
  %v1308 = vsel %vm78, %v1216, 0
  %v1311 = vsel %vm78, %v1217, 0
  %v1314 = vsel %vm78, %v1218, 0
  %v1317 = vsel %vm78, %v1219, 0
  %v1320 = vsel %vm78, %v1220, 0
  %v1323 = vsel %vm78, %v1221, 0
  %v1326 = vsel %vm78, %v1222, 0
  %v1329 = vsel %vm78, %v1223, 0
  %v1332 = vsel %vm78, %v1224, 0
  %v1335 = vsel %vm78, %v1225, 0
  %v1338 = vsel %vm78, %v1226, 0
  %v1341 = vsel %vm78, %v1227, 0
  %v1344 = vsel %vm78, %v1228, 0
  %v1347 = vsel %vm78, %v1229, 0
  %v1350 = vsel %vm78, %v1230, 0
  %v1353 = vsel %vm78, %v1231, 0
  %v1356 = vsel %vm78, %v1232, 0
  %v1359 = vsel %vm78, %v1233, 0
  %v1362 = vsel %vm78, %v1234, 0
  %v1365 = vsel %vm78, %v1235, 0
  %v1368 = vsel %vm78, %v1236, 0
  %v1371 = vsel %vm78, %v1237, 0
  %v1374 = vsel %vm78, %v1238, 0
  %v1377 = vsel %vm78, %v1239, 0
  %v1380 = vsel %vm78, %v1240, 0
  %v1383 = vsel %vm78, %v1241, 0
  %v1386 = vsel %vm78, %v1242, 0
  %v1389 = vsel %vm78, %v1243, 0
  %1391 = vmatprep.subr.mxu0 0.0
  %1392 = vmatpush1.msra.mxu0 %v69
  %1393 = vmatprep.subr.mxu0 0.0
  %1394 = vmatpush1.msra.mxu0 %v228
  %1395 = vmatprep.subr.mxu0 0.0
  %1396 = vmatpush1.msra.mxu0 0.0
  %1397 = vmatprep.subr.mxu0 0.0
  %1398 = vmatpush1.msra.mxu0 0.0
  %1399 = vmatprep.subr.mxu0 0.0
  %1400 = vmatpush1.msra.mxu0 0.0
  %1401 = vmatprep.subr.mxu0 0.0
  %1402 = vmatpush1.msra.mxu0 0.0
  %1403 = vmatprep.subr.mxu0 0.0
  %1404 = vmatpush1.msra.mxu0 0.0
  %1405 = vmatprep.subr.mxu0 0.0
  %1406 = vmatpush1.msra.mxu0 0.0
  %1407 = vmatprep.subr.mxu0 0.0
  %1408 = vmatpush1.msra.mxu0 0.0
  %1409 = vmatprep.subr.mxu0 0.0
  %1410 = vmatpush1.msra.mxu0 0.0
  %1411 = vmatprep.subr.mxu0 0.0
  %1412 = vmatpush1.msra.mxu0 0.0
  %1413 = vmatprep.subr.mxu0 0.0
  %1414 = vmatpush1.msra.mxu0 0.0
  %1415 = vmatprep.subr.mxu0 0.0
  %1416 = vmatpush1.msra.mxu0 0.0
  %1417 = vmatprep.subr.mxu0 0.0
  %1418 = vmatpush1.msra.mxu0 0.0
  %1419 = vmatprep.subr.mxu0 0.0
  %1420 = vmatpush1.msra.mxu0 0.0
  %1421 = vmatprep.subr.mxu0 0.0
  %1422 = vmatpush1.msra.mxu0 0.0
  %1423 = vmatprep.subr.mxu0 0.0
  %1424 = vmatpush1.msra.mxu0 0.0
  %1425 = vmatprep.subr.mxu0 0.0
  %1426 = vmatpush1.msra.mxu0 0.0
  %1427 = vmatprep.subr.mxu0 0.0
  %1428 = vmatpush1.msra.mxu0 0.0
  %1429 = vmatprep.subr.mxu0 0.0
  %1430 = vmatpush1.msra.mxu0 0.0
  %1431 = vmatprep.subr.mxu0 0.0
  %1432 = vmatpush1.msra.mxu0 0.0
  %1433 = vmatprep.subr.mxu0 0.0
  %1434 = vmatpush1.msra.mxu0 0.0
  %1435 = vmatprep.subr.mxu0 0.0
  %1436 = vmatpush1.msra.mxu0 0.0
  %1437 = vmatprep.subr.mxu0 0.0
  %1438 = vmatpush1.msra.mxu0 0.0
  %1439 = vmatprep.subr.mxu0 0.0
  %1440 = vmatpush1.msra.mxu0 0.0
  %1441 = vmatprep.subr.mxu0 0.0
  %1442 = vmatpush1.msra.mxu0 0.0
  %1443 = vmatprep.subr.mxu0 0.0
  %1444 = vmatpush1.msra.mxu0 0.0
  %1445 = vmatprep.subr.mxu0 0.0
  %1446 = vmatpush1.msra.mxu0 0.0
  %1447 = vmatprep.subr.mxu0 0.0
  %1448 = vmatpush1.msra.mxu0 0.0
  %1449 = vmatprep.subr.mxu0 0.0
  %1450 = vmatpush1.msra.mxu0 0.0
  %1451 = vmatprep.subr.mxu0 0.0
  %1452 = vmatpush1.msra.mxu0 0.0
  %1453 = vmatprep.subr.mxu0 0.0
  %1454 = vmatpush1.msra.mxu0 0.0
  %1455 = vmatprep.mubr.f32.mxu0 0.0
  %1456 = vmatmul.mubr.f32.gmra.mrb[0].mxu0 %v1245
  %v1457 = vpop.f32.mrb[0].mxu0
  %v1458 = vadd.f32 %v76, %v1457
  %v1459 = vpop.f32.mrb[0].mxu0
  %1460 = vmatprep.mubr.f32.mxu0 0.0
  %1461 = vmatmul.mubr.f32.gmra.mrb[0].mxu0 %v1248
  %v1462 = vpop.f32.mrb[0].mxu0
  %v1463 = vadd.f32 %v76, %v1462
  %v1464 = vpop.f32.mrb[0].mxu0
  %1465 = vmatprep.mubr.f32.mxu0 0.0
  %1466 = vmatmul.mubr.f32.gmra.mrb[0].mxu0 %v1251
  %v1467 = vpop.f32.mrb[0].mxu0
  %v1468 = vadd.f32 %v76, %v1467
  %v1469 = vpop.f32.mrb[0].mxu0
  %1470 = vmatprep.mubr.f32.mxu0 0.0
  %1471 = vmatmul.mubr.f32.gmra.mrb[0].mxu0 %v1254
  %v1472 = vpop.f32.mrb[0].mxu0
  %v1473 = vadd.f32 %v76, %v1472
  %v1474 = vpop.f32.mrb[0].mxu0
  %1475 = vmatprep.mubr.f32.mxu0 0.0
  %1476 = vmatmul.mubr.f32.gmra.mrb[0].mxu0 %v1257
  %v1477 = vpop.f32.mrb[0].mxu0
  %v1478 = vadd.f32 %v76, %v1477
  %v1479 = vpop.f32.mrb[0].mxu0
  %1480 = vmatprep.mubr.f32.mxu0 0.0
  %1481 = vmatmul.mubr.f32.gmra.mrb[0].mxu0 %v1260
  %v1482 = vpop.f32.mrb[0].mxu0
  %v1483 = vadd.f32 %v76, %v1482
  %v1484 = vpop.f32.mrb[0].mxu0
  %1485 = vmatprep.mubr.f32.mxu0 0.0
  %1486 = vmatmul.mubr.f32.gmra.mrb[0].mxu0 %v1263
  %v1487 = vpop.f32.mrb[0].mxu0
  %v1488 = vadd.f32 %v76, %v1487
  %v1489 = vpop.f32.mrb[0].mxu0
  %1490 = vmatprep.mubr.f32.mxu0 0.0
  %1491 = vmatmul.mubr.f32.gmra.mrb[0].mxu0 %v1266
  %v1492 = vpop.f32.mrb[0].mxu0
  %v1493 = vadd.f32 %v76, %v1492
  %v1494 = vpop.f32.mrb[0].mxu0
  %1495 = vmatprep.mubr.f32.mxu0 0.0
  %1496 = vmatmul.mubr.f32.gmra.mrb[0].mxu0 %v1269
  %v1497 = vpop.f32.mrb[0].mxu0
  %v1498 = vadd.f32 %v76, %v1497
  %v1499 = vpop.f32.mrb[0].mxu0
  %1500 = vmatprep.mubr.f32.mxu0 0.0
  %1501 = vmatmul.mubr.f32.gmra.mrb[0].mxu0 %v1272
  %v1502 = vpop.f32.mrb[0].mxu0
  %v1503 = vadd.f32 %v76, %v1502
  %v1504 = vpop.f32.mrb[0].mxu0
  %1505 = vmatprep.mubr.f32.mxu0 0.0
  %1506 = vmatmul.mubr.f32.gmra.mrb[0].mxu0 %v1275
  %v1507 = vpop.f32.mrb[0].mxu0
  %v1508 = vadd.f32 %v76, %v1507
  %v1509 = vpop.f32.mrb[0].mxu0
  %1510 = vmatprep.mubr.f32.mxu0 0.0
  %1511 = vmatmul.mubr.f32.gmra.mrb[0].mxu0 %v1278
  %v1512 = vpop.f32.mrb[0].mxu0
  %v1513 = vadd.f32 %v76, %v1512
  %v1514 = vpop.f32.mrb[0].mxu0
  %1515 = vmatprep.mubr.f32.mxu0 0.0
  %1516 = vmatmul.mubr.f32.gmra.mrb[0].mxu0 %v1281
  %v1517 = vpop.f32.mrb[0].mxu0
  %v1518 = vadd.f32 %v76, %v1517
  %v1519 = vpop.f32.mrb[0].mxu0
  %1520 = vmatprep.mubr.f32.mxu0 0.0
  %1521 = vmatmul.mubr.f32.gmra.mrb[0].mxu0 %v1284
  %v1522 = vpop.f32.mrb[0].mxu0
  %v1523 = vadd.f32 %v76, %v1522
  %v1524 = vpop.f32.mrb[0].mxu0
  %1525 = vmatprep.mubr.f32.mxu0 0.0
  %1526 = vmatmul.mubr.f32.gmra.mrb[0].mxu0 %v1287
  %v1527 = vpop.f32.mrb[0].mxu0
  %v1528 = vadd.f32 %v76, %v1527
  %v1529 = vpop.f32.mrb[0].mxu0
  %1530 = vmatprep.mubr.f32.mxu0 0.0
  %1531 = vmatmul.mubr.f32.gmra.mrb[0].mxu0 %v1290
  %v1532 = vpop.f32.mrb[0].mxu0
  %v1533 = vadd.f32 %v76, %v1532
  %v1534 = vpop.f32.mrb[0].mxu0
  %1535 = vmatprep.mubr.f32.mxu0 0.0
  %1536 = vmatmul.mubr.f32.gmra.mrb[0].mxu0 %v1293
  %v1537 = vpop.f32.mrb[0].mxu0
  %v1538 = vadd.f32 %v76, %v1537
  %v1539 = vpop.f32.mrb[0].mxu0
  %1540 = vmatprep.mubr.f32.mxu0 0.0
  %1541 = vmatmul.mubr.f32.gmra.mrb[0].mxu0 %v1296
  %v1542 = vpop.f32.mrb[0].mxu0
  %v1543 = vadd.f32 %v76, %v1542
  %v1544 = vpop.f32.mrb[0].mxu0
  %1545 = vmatprep.mubr.f32.mxu0 0.0
  %1546 = vmatmul.mubr.f32.gmra.mrb[0].mxu0 %v1299
  %v1547 = vpop.f32.mrb[0].mxu0
  %v1548 = vadd.f32 %v76, %v1547
  %v1549 = vpop.f32.mrb[0].mxu0
  %1550 = vmatprep.mubr.f32.mxu0 0.0
  %1551 = vmatmul.mubr.f32.gmra.mrb[0].mxu0 %v1302
  %v1552 = vpop.f32.mrb[0].mxu0
  %v1553 = vadd.f32 %v76, %v1552
  %v1554 = vpop.f32.mrb[0].mxu0
  %1555 = vmatprep.mubr.f32.mxu0 0.0
  %1556 = vmatmul.mubr.f32.gmra.mrb[0].mxu0 %v1305
  %v1557 = vpop.f32.mrb[0].mxu0
  %v1558 = vadd.f32 %v76, %v1557
  %v1559 = vpop.f32.mrb[0].mxu0
  %1560 = vmatprep.mubr.f32.mxu0 0.0
  %1561 = vmatmul.mubr.f32.gmra.mrb[0].mxu0 %v1308
  %v1562 = vpop.f32.mrb[0].mxu0
  %v1563 = vadd.f32 %v76, %v1562
  %v1564 = vpop.f32.mrb[0].mxu0
  %1565 = vmatprep.mubr.f32.mxu0 0.0
  %1566 = vmatmul.mubr.f32.gmra.mrb[0].mxu0 %v1311
  %v1567 = vpop.f32.mrb[0].mxu0
  %v1568 = vadd.f32 %v76, %v1567
  %v1569 = vpop.f32.mrb[0].mxu0
  %1570 = vmatprep.mubr.f32.mxu0 0.0
  %1571 = vmatmul.mubr.f32.gmra.mrb[0].mxu0 %v1314
  %v1572 = vpop.f32.mrb[0].mxu0
  %v1573 = vadd.f32 %v76, %v1572
  %v1574 = vpop.f32.mrb[0].mxu0
  %1575 = vmatprep.mubr.f32.mxu0 0.0
  %1576 = vmatmul.mubr.f32.gmra.mrb[0].mxu0 %v1317
  %v1577 = vpop.f32.mrb[0].mxu0
  %v1578 = vadd.f32 %v76, %v1577
  %v1579 = vpop.f32.mrb[0].mxu0
  %1580 = vmatprep.mubr.f32.mxu0 0.0
  %1581 = vmatmul.mubr.f32.gmra.mrb[0].mxu0 %v1320
  %v1582 = vpop.f32.mrb[0].mxu0
  %v1583 = vadd.f32 %v76, %v1582
  %v1584 = vpop.f32.mrb[0].mxu0
  %1585 = vmatprep.mubr.f32.mxu0 0.0
  %1586 = vmatmul.mubr.f32.gmra.mrb[0].mxu0 %v1323
  %v1587 = vpop.f32.mrb[0].mxu0
  %v1588 = vadd.f32 %v76, %v1587
  %v1589 = vpop.f32.mrb[0].mxu0
  %1590 = vmatprep.mubr.f32.mxu0 0.0
  %1591 = vmatmul.mubr.f32.gmra.mrb[0].mxu0 %v1326
  %v1592 = vpop.f32.mrb[0].mxu0
  %v1593 = vadd.f32 %v76, %v1592
  %v1594 = vpop.f32.mrb[0].mxu0
  %1595 = vmatprep.mubr.f32.mxu0 0.0
  %1596 = vmatmul.mubr.f32.gmra.mrb[0].mxu0 %v1329
  %v1597 = vpop.f32.mrb[0].mxu0
  %v1598 = vadd.f32 %v76, %v1597
  %v1599 = vpop.f32.mrb[0].mxu0
  %1600 = vmatprep.mubr.f32.mxu0 0.0
  %1601 = vmatmul.mubr.f32.gmra.mrb[0].mxu0 %v1332
  %v1602 = vpop.f32.mrb[0].mxu0
  %v1603 = vadd.f32 %v76, %v1602
  %v1604 = vpop.f32.mrb[0].mxu0
  %1605 = vmatprep.mubr.f32.mxu0 0.0
  %1606 = vmatmul.mubr.f32.gmra.mrb[0].mxu0 %v1335
  %v1607 = vpop.f32.mrb[0].mxu0
  %v1608 = vadd.f32 %v76, %v1607
  %v1609 = vpop.f32.mrb[0].mxu0
  %1610 = vmatprep.mubr.f32.mxu0 0.0
  %1611 = vmatmul.mubr.f32.gmra.mrb[0].mxu0 %v1338
  %v1612 = vpop.f32.mrb[0].mxu0
  %v1613 = vadd.f32 %v76, %v1612
  %v1614 = vpop.f32.mrb[0].mxu0
  %1615 = vmatprep.mubr.f32.mxu0 0.0
  %1616 = vmatmul.mubr.f32.gmra.mrb[0].mxu0 %v1341
  %v1617 = vpop.f32.mrb[0].mxu0
  %v1618 = vadd.f32 %v76, %v1617
  %v1619 = vpop.f32.mrb[0].mxu0
  %1620 = vmatprep.mubr.f32.mxu0 0.0
  %1621 = vmatmul.mubr.f32.gmra.mrb[0].mxu0 %v1344
  %v1622 = vpop.f32.mrb[0].mxu0
  %v1623 = vadd.f32 %v76, %v1622
  %v1624 = vpop.f32.mrb[0].mxu0
  %1625 = vmatprep.mubr.f32.mxu0 0.0
  %1626 = vmatmul.mubr.f32.gmra.mrb[0].mxu0 %v1347
  %v1627 = vpop.f32.mrb[0].mxu0
  %v1628 = vadd.f32 %v76, %v1627
  %v1629 = vpop.f32.mrb[0].mxu0
  %1630 = vmatprep.mubr.f32.mxu0 0.0
  %1631 = vmatmul.mubr.f32.gmra.mrb[0].mxu0 %v1350
  %v1632 = vpop.f32.mrb[0].mxu0
  %v1633 = vadd.f32 %v76, %v1632
  %v1634 = vpop.f32.mrb[0].mxu0
  %1635 = vmatprep.mubr.f32.mxu0 0.0
  %1636 = vmatmul.mubr.f32.gmra.mrb[0].mxu0 %v1353
  %v1637 = vpop.f32.mrb[0].mxu0
  %v1638 = vadd.f32 %v76, %v1637
  %v1639 = vpop.f32.mrb[0].mxu0
  %1640 = vmatprep.mubr.f32.mxu0 0.0
  %1641 = vmatmul.mubr.f32.gmra.mrb[0].mxu0 %v1356
  %v1642 = vpop.f32.mrb[0].mxu0
  %v1643 = vadd.f32 %v76, %v1642
  %v1644 = vpop.f32.mrb[0].mxu0
  %1645 = vmatprep.mubr.f32.mxu0 0.0
  %1646 = vmatmul.mubr.f32.gmra.mrb[0].mxu0 %v1359
  %v1647 = vpop.f32.mrb[0].mxu0
  %v1648 = vadd.f32 %v76, %v1647
  %v1649 = vpop.f32.mrb[0].mxu0
  %1650 = vmatprep.mubr.f32.mxu0 0.0
  %1651 = vmatmul.mubr.f32.gmra.mrb[0].mxu0 %v1362
  %v1652 = vpop.f32.mrb[0].mxu0
  %v1653 = vadd.f32 %v76, %v1652
  %v1654 = vpop.f32.mrb[0].mxu0
  %1655 = vmatprep.mubr.f32.mxu0 0.0
  %1656 = vmatmul.mubr.f32.gmra.mrb[0].mxu0 %v1365
  %v1657 = vpop.f32.mrb[0].mxu0
  %v1658 = vadd.f32 %v76, %v1657
  %v1659 = vpop.f32.mrb[0].mxu0
  %1660 = vmatprep.mubr.f32.mxu0 0.0
  %1661 = vmatmul.mubr.f32.gmra.mrb[0].mxu0 %v1368
  %v1662 = vpop.f32.mrb[0].mxu0
  %v1663 = vadd.f32 %v76, %v1662
  %v1664 = vpop.f32.mrb[0].mxu0
  %1665 = vmatprep.mubr.f32.mxu0 0.0
  %1666 = vmatmul.mubr.f32.gmra.mrb[0].mxu0 %v1371
  %v1667 = vpop.f32.mrb[0].mxu0
  %v1668 = vadd.f32 %v76, %v1667
  %v1669 = vpop.f32.mrb[0].mxu0
  %1670 = vmatprep.mubr.f32.mxu0 0.0
  %1671 = vmatmul.mubr.f32.gmra.mrb[0].mxu0 %v1374
  %v1672 = vpop.f32.mrb[0].mxu0
  %v1673 = vadd.f32 %v76, %v1672
  %v1674 = vpop.f32.mrb[0].mxu0
  %1675 = vmatprep.mubr.f32.mxu0 0.0
  %1676 = vmatmul.mubr.f32.gmra.mrb[0].mxu0 %v1377
  %v1677 = vpop.f32.mrb[0].mxu0
  %v1678 = vadd.f32 %v76, %v1677
  %v1679 = vpop.f32.mrb[0].mxu0
  %1680 = vmatprep.mubr.f32.mxu0 0.0
  %1681 = vmatmul.mubr.f32.gmra.mrb[0].mxu0 %v1380
  %v1682 = vpop.f32.mrb[0].mxu0
  %v1683 = vadd.f32 %v76, %v1682
  %v1684 = vpop.f32.mrb[0].mxu0
  %1685 = vmatprep.mubr.f32.mxu0 0.0
  %1686 = vmatmul.mubr.f32.gmra.mrb[0].mxu0 %v1383
  %v1687 = vpop.f32.mrb[0].mxu0
  %v1688 = vadd.f32 %v76, %v1687
  %v1689 = vpop.f32.mrb[0].mxu0
  %1690 = vmatprep.mubr.f32.mxu0 0.0
  %1691 = vmatmul.mubr.f32.gmra.mrb[0].mxu0 %v1386
  %v1692 = vpop.f32.mrb[0].mxu0
  %v1693 = vadd.f32 %v76, %v1692
  %v1694 = vpop.f32.mrb[0].mxu0
  %1695 = vmatprep.mubr.f32.mxu0 0.0
  %1696 = vmatmul.mubr.f32.gmra.mrb[0].mxu0 %v1389
  %v1697 = vpop.f32.mrb[0].mxu0
  %v1698 = vadd.f32 %v76, %v1697
  %v1699 = vpop.f32.mrb[0].mxu0
  %1700 = vdwg.mxu0
  %v1701 = vmax.f32 %v1458, 0.0
  %v1702 = vmax.f32 %v1463, 0.0
  %v1703 = vmax.f32 %v1468, 0.0
  %v1704 = vmax.f32 %v1473, 0.0
  %v1705 = vmax.f32 %v1478, 0.0
  %v1706 = vmax.f32 %v1483, 0.0
  %v1707 = vmax.f32 %v1488, 0.0
  %v1708 = vmax.f32 %v1493, 0.0
  %v1709 = vmax.f32 %v1498, 0.0
  %v1710 = vmax.f32 %v1503, 0.0
  %v1711 = vmax.f32 %v1508, 0.0
  %v1712 = vmax.f32 %v1513, 0.0
  %v1713 = vmax.f32 %v1518, 0.0
  %v1714 = vmax.f32 %v1523, 0.0
  %v1715 = vmax.f32 %v1528, 0.0
  %v1716 = vmax.f32 %v1533, 0.0
  %v1717 = vmax.f32 %v1538, 0.0
  %v1718 = vmax.f32 %v1543, 0.0
  %v1719 = vmax.f32 %v1548, 0.0
  %v1720 = vmax.f32 %v1553, 0.0
  %v1721 = vmax.f32 %v1558, 0.0
  %v1722 = vmax.f32 %v1563, 0.0
  %v1723 = vmax.f32 %v1568, 0.0
  %v1724 = vmax.f32 %v1573, 0.0
  %v1725 = vmax.f32 %v1578, 0.0
  %v1726 = vmax.f32 %v1583, 0.0
  %v1727 = vmax.f32 %v1588, 0.0
  %v1728 = vmax.f32 %v1593, 0.0
  %v1729 = vmax.f32 %v1598, 0.0
  %v1730 = vmax.f32 %v1603, 0.0
  %v1731 = vmax.f32 %v1608, 0.0
  %v1732 = vmax.f32 %v1613, 0.0
  %v1733 = vmax.f32 %v1618, 0.0
  %v1734 = vmax.f32 %v1623, 0.0
  %v1735 = vmax.f32 %v1628, 0.0
  %v1736 = vmax.f32 %v1633, 0.0
  %v1737 = vmax.f32 %v1638, 0.0
  %v1738 = vmax.f32 %v1643, 0.0
  %v1739 = vmax.f32 %v1648, 0.0
  %v1740 = vmax.f32 %v1653, 0.0
  %v1741 = vmax.f32 %v1658, 0.0
  %v1742 = vmax.f32 %v1663, 0.0
  %v1743 = vmax.f32 %v1668, 0.0
  %v1744 = vmax.f32 %v1673, 0.0
  %v1745 = vmax.f32 %v1678, 0.0
  %v1746 = vmax.f32 %v1683, 0.0
  %v1747 = vmax.f32 %v1688, 0.0
  %v1748 = vmax.f32 %v1693, 0.0
  %v1749 = vmax.f32 %v1698, 0.0
  %v1750 = vmax.f32 %v1145, %v1701
  %v1751 = vmax.f32 %v1146, %v1702
  %v1752 = vmax.f32 %v1147, %v1703
  %v1753 = vmax.f32 %v1148, %v1704
  %v1754 = vmax.f32 %v1149, %v1705
  %v1755 = vmax.f32 %v1150, %v1706
  %v1756 = vmax.f32 %v1151, %v1707
  %v1757 = vmax.f32 %v1152, %v1708
  %v1758 = vmax.f32 %v1153, %v1709
  %v1759 = vmax.f32 %v1154, %v1710
  %v1760 = vmax.f32 %v1155, %v1711
  %v1761 = vmax.f32 %v1156, %v1712
  %v1762 = vmax.f32 %v1157, %v1713
  %v1763 = vmax.f32 %v1158, %v1714
  %v1764 = vmax.f32 %v1159, %v1715
  %v1765 = vmax.f32 %v1160, %v1716
  %v1766 = vmax.f32 %v1161, %v1717
  %v1767 = vmax.f32 %v1162, %v1718
  %v1768 = vmax.f32 %v1163, %v1719
  %v1769 = vmax.f32 %v1164, %v1720
  %v1770 = vmax.f32 %v1165, %v1721
  %v1771 = vmax.f32 %v1166, %v1722
  %v1772 = vmax.f32 %v1167, %v1723
  %v1773 = vmax.f32 %v1168, %v1724
  %v1774 = vmax.f32 %v1169, %v1725
  %v1775 = vmax.f32 %v1170, %v1726
  %v1776 = vmax.f32 %v1171, %v1727
  %v1777 = vmax.f32 %v1172, %v1728
  %v1778 = vmax.f32 %v1173, %v1729
  %v1779 = vmax.f32 %v1174, %v1730
  %v1780 = vmax.f32 %v1175, %v1731
  %v1781 = vmax.f32 %v1176, %v1732
  %v1782 = vmax.f32 %v1177, %v1733
  %v1783 = vmax.f32 %v1178, %v1734
  %v1784 = vmax.f32 %v1179, %v1735
  %v1785 = vmax.f32 %v1180, %v1736
  %v1786 = vmax.f32 %v1181, %v1737
  %v1787 = vmax.f32 %v1182, %v1738
  %v1788 = vmax.f32 %v1183, %v1739
  %v1789 = vmax.f32 %v1184, %v1740
  %v1790 = vmax.f32 %v1185, %v1741
  %v1791 = vmax.f32 %v1186, %v1742
  %v1792 = vmax.f32 %v1187, %v1743
  %v1793 = vmax.f32 %v1188, %v1744
  %v1794 = vmax.f32 %v1189, %v1745
  %v1795 = vmax.f32 %v1190, %v1746
  %v1796 = vmax.f32 %v1191, %v1747
  %v1797 = vmax.f32 %v1192, %v1748
  %v1798 = vmax.f32 %v1193, %v1749
  %s1799 = scalar_lea.vmem %s0, 1176
  %v1800 = vld [vmem:[%s1799] sm:$0xff]
  %v1801 = vld [vmem:[%s1799 + $0x8] sm:$0xff]
  %v1802 = vld [vmem:[%s1799 + $0x10] sm:$0xff]
  %v1803 = vld [vmem:[%s1799 + $0x18] sm:$0xff]
  %v1804 = vld [vmem:[%s1799 + $0x20] sm:$0xff]
  %v1805 = vld [vmem:[%s1799 + $0x28] sm:$0xff]
  %v1806 = vld [vmem:[%s1799 + $0x30] sm:$0xff]
  %v1807 = vld [vmem:[%s1799 + $0x38] sm:$0xff]
  %v1808 = vld [vmem:[%s1799 + $0x40] sm:$0xff]
  %v1809 = vld [vmem:[%s1799 + $0x48] sm:$0xff]
  %v1810 = vld [vmem:[%s1799 + $0x50] sm:$0xff]
  %v1811 = vld [vmem:[%s1799 + $0x58] sm:$0xff]
  %v1812 = vld [vmem:[%s1799 + $0x60] sm:$0xff]
  %v1813 = vld [vmem:[%s1799 + $0x68] sm:$0xff]
  %v1814 = vld [vmem:[%s1799 + $0x70] sm:$0xff]
  %v1815 = vld [vmem:[%s1799 + $0x78] sm:$0xff]
  %v1816 = vld [vmem:[%s1799 + $0x80] sm:$0xff]
  %v1817 = vld [vmem:[%s1799 + $0x88] sm:$0xff]
  %v1818 = vld [vmem:[%s1799 + $0x90] sm:$0xff]
  %v1819 = vld [vmem:[%s1799 + $0x98] sm:$0xff]
  %v1820 = vld [vmem:[%s1799 + $0xa0] sm:$0xff]
  %v1821 = vld [vmem:[%s1799 + $0xa8] sm:$0xff]
  %v1822 = vld [vmem:[%s1799 + $0xb0] sm:$0xff]
  %v1823 = vld [vmem:[%s1799 + $0xb8] sm:$0xff]
  %v1824 = vld [vmem:[%s1799 + $0xc0] sm:$0xff]
  %v1825 = vld [vmem:[%s1799 + $0xc8] sm:$0xff]
  %v1826 = vld [vmem:[%s1799 + $0xd0] sm:$0xff]
  %v1827 = vld [vmem:[%s1799 + $0xd8] sm:$0xff]
  %v1828 = vld [vmem:[%s1799 + $0xe0] sm:$0xff]
  %v1829 = vld [vmem:[%s1799 + $0xe8] sm:$0xff]
  %v1830 = vld [vmem:[%s1799 + $0xf0] sm:$0xff]
  %v1831 = vld [vmem:[%s1799 + $0xf8] sm:$0xff]
  %v1832 = vld [vmem:[%s1799 + $0x100] sm:$0xff]
  %v1833 = vld [vmem:[%s1799 + $0x108] sm:$0xff]
  %v1834 = vld [vmem:[%s1799 + $0x110] sm:$0xff]
  %v1835 = vld [vmem:[%s1799 + $0x118] sm:$0xff]
  %v1836 = vld [vmem:[%s1799 + $0x120] sm:$0xff]
  %v1837 = vld [vmem:[%s1799 + $0x128] sm:$0xff]
  %v1838 = vld [vmem:[%s1799 + $0x130] sm:$0xff]
  %v1839 = vld [vmem:[%s1799 + $0x138] sm:$0xff]
  %v1840 = vld [vmem:[%s1799 + $0x140] sm:$0xff]
  %v1841 = vld [vmem:[%s1799 + $0x148] sm:$0xff]
  %v1842 = vld [vmem:[%s1799 + $0x150] sm:$0xff]
  %v1843 = vld [vmem:[%s1799 + $0x158] sm:$0xff]
  %v1844 = vld [vmem:[%s1799 + $0x160] sm:$0xff]
  %v1845 = vld [vmem:[%s1799 + $0x168] sm:$0xff]
  %v1846 = vld [vmem:[%s1799 + $0x170] sm:$0xff]
  %v1847 = vld [vmem:[%s1799 + $0x178] sm:$0xff]
  %v1848 = vld [vmem:[%s1799 + $0x180] sm:$0xff]
  %v1850 = vsel %vm78, %v1800, 0
  %v1853 = vsel %vm78, %v1801, 0
  %v1856 = vsel %vm78, %v1802, 0
  %v1859 = vsel %vm78, %v1803, 0
  %v1862 = vsel %vm78, %v1804, 0
  %v1865 = vsel %vm78, %v1805, 0
  %v1868 = vsel %vm78, %v1806, 0
  %v1871 = vsel %vm78, %v1807, 0
  %v1874 = vsel %vm78, %v1808, 0
  %v1877 = vsel %vm78, %v1809, 0
  %v1880 = vsel %vm78, %v1810, 0
  %v1883 = vsel %vm78, %v1811, 0
  %v1886 = vsel %vm78, %v1812, 0
  %v1889 = vsel %vm78, %v1813, 0
  %v1892 = vsel %vm78, %v1814, 0
  %v1895 = vsel %vm78, %v1815, 0
  %v1898 = vsel %vm78, %v1816, 0
  %v1901 = vsel %vm78, %v1817, 0
  %v1904 = vsel %vm78, %v1818, 0
  %v1907 = vsel %vm78, %v1819, 0
  %v1910 = vsel %vm78, %v1820, 0
  %v1913 = vsel %vm78, %v1821, 0
  %v1916 = vsel %vm78, %v1822, 0
  %v1919 = vsel %vm78, %v1823, 0
  %v1922 = vsel %vm78, %v1824, 0
  %v1925 = vsel %vm78, %v1825, 0
  %v1928 = vsel %vm78, %v1826, 0
  %v1931 = vsel %vm78, %v1827, 0
  %v1934 = vsel %vm78, %v1828, 0
  %v1937 = vsel %vm78, %v1829, 0
  %v1940 = vsel %vm78, %v1830, 0
  %v1943 = vsel %vm78, %v1831, 0
  %v1946 = vsel %vm78, %v1832, 0
  %v1949 = vsel %vm78, %v1833, 0
  %v1952 = vsel %vm78, %v1834, 0
  %v1955 = vsel %vm78, %v1835, 0
  %v1958 = vsel %vm78, %v1836, 0
  %v1961 = vsel %vm78, %v1837, 0
  %v1964 = vsel %vm78, %v1838, 0
  %v1967 = vsel %vm78, %v1839, 0
  %v1970 = vsel %vm78, %v1840, 0
  %v1973 = vsel %vm78, %v1841, 0
  %v1976 = vsel %vm78, %v1842, 0
  %v1979 = vsel %vm78, %v1843, 0
  %v1982 = vsel %vm78, %v1844, 0
  %v1985 = vsel %vm78, %v1845, 0
  %v1988 = vsel %vm78, %v1846, 0
  %v1991 = vsel %vm78, %v1847, 0
  %v1994 = vsel %vm78, %v1848, 0
  %1996 = vmatprep.subr.mxu0 0.0
  %1997 = vmatpush1.msra.mxu0 %v69
  %1998 = vmatprep.subr.mxu0 0.0
  %1999 = vmatpush1.msra.mxu0 %v228
  %2000 = vmatprep.subr.mxu0 0.0
  %2001 = vmatpush1.msra.mxu0 0.0
  %2002 = vmatprep.subr.mxu0 0.0
  %2003 = vmatpush1.msra.mxu0 0.0
  %2004 = vmatprep.subr.mxu0 0.0
  %2005 = vmatpush1.msra.mxu0 0.0
  %2006 = vmatprep.subr.mxu0 0.0
  %2007 = vmatpush1.msra.mxu0 0.0
  %2008 = vmatprep.subr.mxu0 0.0
  %2009 = vmatpush1.msra.mxu0 0.0
  %2010 = vmatprep.subr.mxu0 0.0
  %2011 = vmatpush1.msra.mxu0 0.0
  %2012 = vmatprep.subr.mxu0 0.0
  %2013 = vmatpush1.msra.mxu0 0.0
  %2014 = vmatprep.subr.mxu0 0.0
  %2015 = vmatpush1.msra.mxu0 0.0
  %2016 = vmatprep.subr.mxu0 0.0
  %2017 = vmatpush1.msra.mxu0 0.0
  %2018 = vmatprep.subr.mxu0 0.0
  %2019 = vmatpush1.msra.mxu0 0.0
  %2020 = vmatprep.subr.mxu0 0.0
  %2021 = vmatpush1.msra.mxu0 0.0
  %2022 = vmatprep.subr.mxu0 0.0
  %2023 = vmatpush1.msra.mxu0 0.0
  %2024 = vmatprep.subr.mxu0 0.0
  %2025 = vmatpush1.msra.mxu0 0.0
  %2026 = vmatprep.subr.mxu0 0.0
  %2027 = vmatpush1.msra.mxu0 0.0
  %2028 = vmatprep.subr.mxu0 0.0
  %2029 = vmatpush1.msra.mxu0 0.0
  %2030 = vmatprep.subr.mxu0 0.0
  %2031 = vmatpush1.msra.mxu0 0.0
  %2032 = vmatprep.subr.mxu0 0.0
  %2033 = vmatpush1.msra.mxu0 0.0
  %2034 = vmatprep.subr.mxu0 0.0
  %2035 = vmatpush1.msra.mxu0 0.0
  %2036 = vmatprep.subr.mxu0 0.0
  %2037 = vmatpush1.msra.mxu0 0.0
  %2038 = vmatprep.subr.mxu0 0.0
  %2039 = vmatpush1.msra.mxu0 0.0
  %2040 = vmatprep.subr.mxu0 0.0
  %2041 = vmatpush1.msra.mxu0 0.0
  %2042 = vmatprep.subr.mxu0 0.0
  %2043 = vmatpush1.msra.mxu0 0.0
  %2044 = vmatprep.subr.mxu0 0.0
  %2045 = vmatpush1.msra.mxu0 0.0
  %2046 = vmatprep.subr.mxu0 0.0
  %2047 = vmatpush1.msra.mxu0 0.0
  %2048 = vmatprep.subr.mxu0 0.0
  %2049 = vmatpush1.msra.mxu0 0.0
  %2050 = vmatprep.subr.mxu0 0.0
  %2051 = vmatpush1.msra.mxu0 0.0
  %2052 = vmatprep.subr.mxu0 0.0
  %2053 = vmatpush1.msra.mxu0 0.0
  %2054 = vmatprep.subr.mxu0 0.0
  %2055 = vmatpush1.msra.mxu0 0.0
  %2056 = vmatprep.subr.mxu0 0.0
  %2057 = vmatpush1.msra.mxu0 0.0
  %2058 = vmatprep.subr.mxu0 0.0
  %2059 = vmatpush1.msra.mxu0 0.0
  %2060 = vmatprep.mubr.f32.mxu0 0.0
  %2061 = vmatmul.mubr.f32.gmra.mrb[0].mxu0 %v1850
  %v2062 = vpop.f32.mrb[0].mxu0
  %v2063 = vadd.f32 %v76, %v2062
  %v2064 = vpop.f32.mrb[0].mxu0
  %2065 = vmatprep.mubr.f32.mxu0 0.0
  %2066 = vmatmul.mubr.f32.gmra.mrb[0].mxu0 %v1853
  %v2067 = vpop.f32.mrb[0].mxu0
  %v2068 = vadd.f32 %v76, %v2067
  %v2069 = vpop.f32.mrb[0].mxu0
  %2070 = vmatprep.mubr.f32.mxu0 0.0
  %2071 = vmatmul.mubr.f32.gmra.mrb[0].mxu0 %v1856
  %v2072 = vpop.f32.mrb[0].mxu0
  %v2073 = vadd.f32 %v76, %v2072
  %v2074 = vpop.f32.mrb[0].mxu0
  %2075 = vmatprep.mubr.f32.mxu0 0.0
  %2076 = vmatmul.mubr.f32.gmra.mrb[0].mxu0 %v1859
  %v2077 = vpop.f32.mrb[0].mxu0
  %v2078 = vadd.f32 %v76, %v2077
  %v2079 = vpop.f32.mrb[0].mxu0
  %2080 = vmatprep.mubr.f32.mxu0 0.0
  %2081 = vmatmul.mubr.f32.gmra.mrb[0].mxu0 %v1862
  %v2082 = vpop.f32.mrb[0].mxu0
  %v2083 = vadd.f32 %v76, %v2082
  %v2084 = vpop.f32.mrb[0].mxu0
  %2085 = vmatprep.mubr.f32.mxu0 0.0
  %2086 = vmatmul.mubr.f32.gmra.mrb[0].mxu0 %v1865
  %v2087 = vpop.f32.mrb[0].mxu0
  %v2088 = vadd.f32 %v76, %v2087
  %v2089 = vpop.f32.mrb[0].mxu0
  %2090 = vmatprep.mubr.f32.mxu0 0.0
  %2091 = vmatmul.mubr.f32.gmra.mrb[0].mxu0 %v1868
  %v2092 = vpop.f32.mrb[0].mxu0
  %v2093 = vadd.f32 %v76, %v2092
  %v2094 = vpop.f32.mrb[0].mxu0
  %2095 = vmatprep.mubr.f32.mxu0 0.0
  %2096 = vmatmul.mubr.f32.gmra.mrb[0].mxu0 %v1871
  %v2097 = vpop.f32.mrb[0].mxu0
  %v2098 = vadd.f32 %v76, %v2097
  %v2099 = vpop.f32.mrb[0].mxu0
  %2100 = vmatprep.mubr.f32.mxu0 0.0
  %2101 = vmatmul.mubr.f32.gmra.mrb[0].mxu0 %v1874
  %v2102 = vpop.f32.mrb[0].mxu0
  %v2103 = vadd.f32 %v76, %v2102
  %v2104 = vpop.f32.mrb[0].mxu0
  %2105 = vmatprep.mubr.f32.mxu0 0.0
  %2106 = vmatmul.mubr.f32.gmra.mrb[0].mxu0 %v1877
  %v2107 = vpop.f32.mrb[0].mxu0
  %v2108 = vadd.f32 %v76, %v2107
  %v2109 = vpop.f32.mrb[0].mxu0
  %2110 = vmatprep.mubr.f32.mxu0 0.0
  %2111 = vmatmul.mubr.f32.gmra.mrb[0].mxu0 %v1880
  %v2112 = vpop.f32.mrb[0].mxu0
  %v2113 = vadd.f32 %v76, %v2112
  %v2114 = vpop.f32.mrb[0].mxu0
  %2115 = vmatprep.mubr.f32.mxu0 0.0
  %2116 = vmatmul.mubr.f32.gmra.mrb[0].mxu0 %v1883
  %v2117 = vpop.f32.mrb[0].mxu0
  %v2118 = vadd.f32 %v76, %v2117
  %v2119 = vpop.f32.mrb[0].mxu0
  %2120 = vmatprep.mubr.f32.mxu0 0.0
  %2121 = vmatmul.mubr.f32.gmra.mrb[0].mxu0 %v1886
  %v2122 = vpop.f32.mrb[0].mxu0
  %v2123 = vadd.f32 %v76, %v2122
  %v2124 = vpop.f32.mrb[0].mxu0
  %2125 = vmatprep.mubr.f32.mxu0 0.0
  %2126 = vmatmul.mubr.f32.gmra.mrb[0].mxu0 %v1889
  %v2127 = vpop.f32.mrb[0].mxu0
  %v2128 = vadd.f32 %v76, %v2127
  %v2129 = vpop.f32.mrb[0].mxu0
  %2130 = vmatprep.mubr.f32.mxu0 0.0
  %2131 = vmatmul.mubr.f32.gmra.mrb[0].mxu0 %v1892
  %v2132 = vpop.f32.mrb[0].mxu0
  %v2133 = vadd.f32 %v76, %v2132
  %v2134 = vpop.f32.mrb[0].mxu0
  %2135 = vmatprep.mubr.f32.mxu0 0.0
  %2136 = vmatmul.mubr.f32.gmra.mrb[0].mxu0 %v1895
  %v2137 = vpop.f32.mrb[0].mxu0
  %v2138 = vadd.f32 %v76, %v2137
  %v2139 = vpop.f32.mrb[0].mxu0
  %2140 = vmatprep.mubr.f32.mxu0 0.0
  %2141 = vmatmul.mubr.f32.gmra.mrb[0].mxu0 %v1898
  %v2142 = vpop.f32.mrb[0].mxu0
  %v2143 = vadd.f32 %v76, %v2142
  %v2144 = vpop.f32.mrb[0].mxu0
  %2145 = vmatprep.mubr.f32.mxu0 0.0
  %2146 = vmatmul.mubr.f32.gmra.mrb[0].mxu0 %v1901
  %v2147 = vpop.f32.mrb[0].mxu0
  %v2148 = vadd.f32 %v76, %v2147
  %v2149 = vpop.f32.mrb[0].mxu0
  %2150 = vmatprep.mubr.f32.mxu0 0.0
  %2151 = vmatmul.mubr.f32.gmra.mrb[0].mxu0 %v1904
  %v2152 = vpop.f32.mrb[0].mxu0
  %v2153 = vadd.f32 %v76, %v2152
  %v2154 = vpop.f32.mrb[0].mxu0
  %2155 = vmatprep.mubr.f32.mxu0 0.0
  %2156 = vmatmul.mubr.f32.gmra.mrb[0].mxu0 %v1907
  %v2157 = vpop.f32.mrb[0].mxu0
  %v2158 = vadd.f32 %v76, %v2157
  %v2159 = vpop.f32.mrb[0].mxu0
  %2160 = vmatprep.mubr.f32.mxu0 0.0
  %2161 = vmatmul.mubr.f32.gmra.mrb[0].mxu0 %v1910
  %v2162 = vpop.f32.mrb[0].mxu0
  %v2163 = vadd.f32 %v76, %v2162
  %v2164 = vpop.f32.mrb[0].mxu0
  %2165 = vmatprep.mubr.f32.mxu0 0.0
  %2166 = vmatmul.mubr.f32.gmra.mrb[0].mxu0 %v1913
  %v2167 = vpop.f32.mrb[0].mxu0
  %v2168 = vadd.f32 %v76, %v2167
  %v2169 = vpop.f32.mrb[0].mxu0
  %2170 = vmatprep.mubr.f32.mxu0 0.0
  %2171 = vmatmul.mubr.f32.gmra.mrb[0].mxu0 %v1916
  %v2172 = vpop.f32.mrb[0].mxu0
  %v2173 = vadd.f32 %v76, %v2172
  %v2174 = vpop.f32.mrb[0].mxu0
  %2175 = vmatprep.mubr.f32.mxu0 0.0
  %2176 = vmatmul.mubr.f32.gmra.mrb[0].mxu0 %v1919
  %v2177 = vpop.f32.mrb[0].mxu0
  %v2178 = vadd.f32 %v76, %v2177
  %v2179 = vpop.f32.mrb[0].mxu0
  %2180 = vmatprep.mubr.f32.mxu0 0.0
  %2181 = vmatmul.mubr.f32.gmra.mrb[0].mxu0 %v1922
  %v2182 = vpop.f32.mrb[0].mxu0
  %v2183 = vadd.f32 %v76, %v2182
  %v2184 = vpop.f32.mrb[0].mxu0
  %2185 = vmatprep.mubr.f32.mxu0 0.0
  %2186 = vmatmul.mubr.f32.gmra.mrb[0].mxu0 %v1925
  %v2187 = vpop.f32.mrb[0].mxu0
  %v2188 = vadd.f32 %v76, %v2187
  %v2189 = vpop.f32.mrb[0].mxu0
  %2190 = vmatprep.mubr.f32.mxu0 0.0
  %2191 = vmatmul.mubr.f32.gmra.mrb[0].mxu0 %v1928
  %v2192 = vpop.f32.mrb[0].mxu0
  %v2193 = vadd.f32 %v76, %v2192
  %v2194 = vpop.f32.mrb[0].mxu0
  %2195 = vmatprep.mubr.f32.mxu0 0.0
  %2196 = vmatmul.mubr.f32.gmra.mrb[0].mxu0 %v1931
  %v2197 = vpop.f32.mrb[0].mxu0
  %v2198 = vadd.f32 %v76, %v2197
  %v2199 = vpop.f32.mrb[0].mxu0
  %2200 = vmatprep.mubr.f32.mxu0 0.0
  %2201 = vmatmul.mubr.f32.gmra.mrb[0].mxu0 %v1934
  %v2202 = vpop.f32.mrb[0].mxu0
  %v2203 = vadd.f32 %v76, %v2202
  %v2204 = vpop.f32.mrb[0].mxu0
  %2205 = vmatprep.mubr.f32.mxu0 0.0
  %2206 = vmatmul.mubr.f32.gmra.mrb[0].mxu0 %v1937
  %v2207 = vpop.f32.mrb[0].mxu0
  %v2208 = vadd.f32 %v76, %v2207
  %v2209 = vpop.f32.mrb[0].mxu0
  %2210 = vmatprep.mubr.f32.mxu0 0.0
  %2211 = vmatmul.mubr.f32.gmra.mrb[0].mxu0 %v1940
  %v2212 = vpop.f32.mrb[0].mxu0
  %v2213 = vadd.f32 %v76, %v2212
  %v2214 = vpop.f32.mrb[0].mxu0
  %2215 = vmatprep.mubr.f32.mxu0 0.0
  %2216 = vmatmul.mubr.f32.gmra.mrb[0].mxu0 %v1943
  %v2217 = vpop.f32.mrb[0].mxu0
  %v2218 = vadd.f32 %v76, %v2217
  %v2219 = vpop.f32.mrb[0].mxu0
  %2220 = vmatprep.mubr.f32.mxu0 0.0
  %2221 = vmatmul.mubr.f32.gmra.mrb[0].mxu0 %v1946
  %v2222 = vpop.f32.mrb[0].mxu0
  %v2223 = vadd.f32 %v76, %v2222
  %v2224 = vpop.f32.mrb[0].mxu0
  %2225 = vmatprep.mubr.f32.mxu0 0.0
  %2226 = vmatmul.mubr.f32.gmra.mrb[0].mxu0 %v1949
  %v2227 = vpop.f32.mrb[0].mxu0
  %v2228 = vadd.f32 %v76, %v2227
  %v2229 = vpop.f32.mrb[0].mxu0
  %2230 = vmatprep.mubr.f32.mxu0 0.0
  %2231 = vmatmul.mubr.f32.gmra.mrb[0].mxu0 %v1952
  %v2232 = vpop.f32.mrb[0].mxu0
  %v2233 = vadd.f32 %v76, %v2232
  %v2234 = vpop.f32.mrb[0].mxu0
  %2235 = vmatprep.mubr.f32.mxu0 0.0
  %2236 = vmatmul.mubr.f32.gmra.mrb[0].mxu0 %v1955
  %v2237 = vpop.f32.mrb[0].mxu0
  %v2238 = vadd.f32 %v76, %v2237
  %v2239 = vpop.f32.mrb[0].mxu0
  %2240 = vmatprep.mubr.f32.mxu0 0.0
  %2241 = vmatmul.mubr.f32.gmra.mrb[0].mxu0 %v1958
  %v2242 = vpop.f32.mrb[0].mxu0
  %v2243 = vadd.f32 %v76, %v2242
  %v2244 = vpop.f32.mrb[0].mxu0
  %2245 = vmatprep.mubr.f32.mxu0 0.0
  %2246 = vmatmul.mubr.f32.gmra.mrb[0].mxu0 %v1961
  %v2247 = vpop.f32.mrb[0].mxu0
  %v2248 = vadd.f32 %v76, %v2247
  %v2249 = vpop.f32.mrb[0].mxu0
  %2250 = vmatprep.mubr.f32.mxu0 0.0
  %2251 = vmatmul.mubr.f32.gmra.mrb[0].mxu0 %v1964
  %v2252 = vpop.f32.mrb[0].mxu0
  %v2253 = vadd.f32 %v76, %v2252
  %v2254 = vpop.f32.mrb[0].mxu0
  %2255 = vmatprep.mubr.f32.mxu0 0.0
  %2256 = vmatmul.mubr.f32.gmra.mrb[0].mxu0 %v1967
  %v2257 = vpop.f32.mrb[0].mxu0
  %v2258 = vadd.f32 %v76, %v2257
  %v2259 = vpop.f32.mrb[0].mxu0
  %2260 = vmatprep.mubr.f32.mxu0 0.0
  %2261 = vmatmul.mubr.f32.gmra.mrb[0].mxu0 %v1970
  %v2262 = vpop.f32.mrb[0].mxu0
  %v2263 = vadd.f32 %v76, %v2262
  %v2264 = vpop.f32.mrb[0].mxu0
  %2265 = vmatprep.mubr.f32.mxu0 0.0
  %2266 = vmatmul.mubr.f32.gmra.mrb[0].mxu0 %v1973
  %v2267 = vpop.f32.mrb[0].mxu0
  %v2268 = vadd.f32 %v76, %v2267
  %v2269 = vpop.f32.mrb[0].mxu0
  %2270 = vmatprep.mubr.f32.mxu0 0.0
  %2271 = vmatmul.mubr.f32.gmra.mrb[0].mxu0 %v1976
  %v2272 = vpop.f32.mrb[0].mxu0
  %v2273 = vadd.f32 %v76, %v2272
  %v2274 = vpop.f32.mrb[0].mxu0
  %2275 = vmatprep.mubr.f32.mxu0 0.0
  %2276 = vmatmul.mubr.f32.gmra.mrb[0].mxu0 %v1979
  %v2277 = vpop.f32.mrb[0].mxu0
  %v2278 = vadd.f32 %v76, %v2277
  %v2279 = vpop.f32.mrb[0].mxu0
  %2280 = vmatprep.mubr.f32.mxu0 0.0
  %2281 = vmatmul.mubr.f32.gmra.mrb[0].mxu0 %v1982
  %v2282 = vpop.f32.mrb[0].mxu0
  %v2283 = vadd.f32 %v76, %v2282
  %v2284 = vpop.f32.mrb[0].mxu0
  %2285 = vmatprep.mubr.f32.mxu0 0.0
  %2286 = vmatmul.mubr.f32.gmra.mrb[0].mxu0 %v1985
  %v2287 = vpop.f32.mrb[0].mxu0
  %v2288 = vadd.f32 %v76, %v2287
  %v2289 = vpop.f32.mrb[0].mxu0
  %2290 = vmatprep.mubr.f32.mxu0 0.0
  %2291 = vmatmul.mubr.f32.gmra.mrb[0].mxu0 %v1988
  %v2292 = vpop.f32.mrb[0].mxu0
  %v2293 = vadd.f32 %v76, %v2292
  %v2294 = vpop.f32.mrb[0].mxu0
  %2295 = vmatprep.mubr.f32.mxu0 0.0
  %2296 = vmatmul.mubr.f32.gmra.mrb[0].mxu0 %v1991
  %v2297 = vpop.f32.mrb[0].mxu0
  %v2298 = vadd.f32 %v76, %v2297
  %v2299 = vpop.f32.mrb[0].mxu0
  %2300 = vmatprep.mubr.f32.mxu0 0.0
  %2301 = vmatmul.mubr.f32.gmra.mrb[0].mxu0 %v1994
  %v2302 = vpop.f32.mrb[0].mxu0
  %v2303 = vadd.f32 %v76, %v2302
  %v2304 = vpop.f32.mrb[0].mxu0
  %2305 = vdwg.mxu0
  %v2306 = vmax.f32 %v2063, 0.0
  %v2307 = vmax.f32 %v2068, 0.0
  %v2308 = vmax.f32 %v2073, 0.0
  %v2309 = vmax.f32 %v2078, 0.0
  %v2310 = vmax.f32 %v2083, 0.0
  %v2311 = vmax.f32 %v2088, 0.0
  %v2312 = vmax.f32 %v2093, 0.0
  %v2313 = vmax.f32 %v2098, 0.0
  %v2314 = vmax.f32 %v2103, 0.0
  %v2315 = vmax.f32 %v2108, 0.0
  %v2316 = vmax.f32 %v2113, 0.0
  %v2317 = vmax.f32 %v2118, 0.0
  %v2318 = vmax.f32 %v2123, 0.0
  %v2319 = vmax.f32 %v2128, 0.0
  %v2320 = vmax.f32 %v2133, 0.0
  %v2321 = vmax.f32 %v2138, 0.0
  %v2322 = vmax.f32 %v2143, 0.0
  %v2323 = vmax.f32 %v2148, 0.0
  %v2324 = vmax.f32 %v2153, 0.0
  %v2325 = vmax.f32 %v2158, 0.0
  %v2326 = vmax.f32 %v2163, 0.0
  %v2327 = vmax.f32 %v2168, 0.0
  %v2328 = vmax.f32 %v2173, 0.0
  %v2329 = vmax.f32 %v2178, 0.0
  %v2330 = vmax.f32 %v2183, 0.0
  %v2331 = vmax.f32 %v2188, 0.0
  %v2332 = vmax.f32 %v2193, 0.0
  %v2333 = vmax.f32 %v2198, 0.0
  %v2334 = vmax.f32 %v2203, 0.0
  %v2335 = vmax.f32 %v2208, 0.0
  %v2336 = vmax.f32 %v2213, 0.0
  %v2337 = vmax.f32 %v2218, 0.0
  %v2338 = vmax.f32 %v2223, 0.0
  %v2339 = vmax.f32 %v2228, 0.0
  %v2340 = vmax.f32 %v2233, 0.0
  %v2341 = vmax.f32 %v2238, 0.0
  %v2342 = vmax.f32 %v2243, 0.0
  %v2343 = vmax.f32 %v2248, 0.0
  %v2344 = vmax.f32 %v2253, 0.0
  %v2345 = vmax.f32 %v2258, 0.0
  %v2346 = vmax.f32 %v2263, 0.0
  %v2347 = vmax.f32 %v2268, 0.0
  %v2348 = vmax.f32 %v2273, 0.0
  %v2349 = vmax.f32 %v2278, 0.0
  %v2350 = vmax.f32 %v2283, 0.0
  %v2351 = vmax.f32 %v2288, 0.0
  %v2352 = vmax.f32 %v2293, 0.0
  %v2353 = vmax.f32 %v2298, 0.0
  %v2354 = vmax.f32 %v2303, 0.0
  %v2355 = vmax.f32 %v1750, %v2306
  %v2356 = vmax.f32 %v1751, %v2307
  %v2357 = vmax.f32 %v1752, %v2308
  %v2358 = vmax.f32 %v1753, %v2309
  %v2359 = vmax.f32 %v1754, %v2310
  %v2360 = vmax.f32 %v1755, %v2311
  %v2361 = vmax.f32 %v1756, %v2312
  %v2362 = vmax.f32 %v1757, %v2313
  %v2363 = vmax.f32 %v1758, %v2314
  %v2364 = vmax.f32 %v1759, %v2315
  %v2365 = vmax.f32 %v1760, %v2316
  %v2366 = vmax.f32 %v1761, %v2317
  %v2367 = vmax.f32 %v1762, %v2318
  %v2368 = vmax.f32 %v1763, %v2319
  %v2369 = vmax.f32 %v1764, %v2320
  %v2370 = vmax.f32 %v1765, %v2321
  %v2371 = vmax.f32 %v1766, %v2322
  %v2372 = vmax.f32 %v1767, %v2323
  %v2373 = vmax.f32 %v1768, %v2324
  %v2374 = vmax.f32 %v1769, %v2325
  %v2375 = vmax.f32 %v1770, %v2326
  %v2376 = vmax.f32 %v1771, %v2327
  %v2377 = vmax.f32 %v1772, %v2328
  %v2378 = vmax.f32 %v1773, %v2329
  %v2379 = vmax.f32 %v1774, %v2330
  %v2380 = vmax.f32 %v1775, %v2331
  %v2381 = vmax.f32 %v1776, %v2332
  %v2382 = vmax.f32 %v1777, %v2333
  %v2383 = vmax.f32 %v1778, %v2334
  %v2384 = vmax.f32 %v1779, %v2335
  %v2385 = vmax.f32 %v1780, %v2336
  %v2386 = vmax.f32 %v1781, %v2337
  %v2387 = vmax.f32 %v1782, %v2338
  %v2388 = vmax.f32 %v1783, %v2339
  %v2389 = vmax.f32 %v1784, %v2340
  %v2390 = vmax.f32 %v1785, %v2341
  %v2391 = vmax.f32 %v1786, %v2342
  %v2392 = vmax.f32 %v1787, %v2343
  %v2393 = vmax.f32 %v1788, %v2344
  %v2394 = vmax.f32 %v1789, %v2345
  %v2395 = vmax.f32 %v1790, %v2346
  %v2396 = vmax.f32 %v1791, %v2347
  %v2397 = vmax.f32 %v1792, %v2348
  %v2398 = vmax.f32 %v1793, %v2349
  %v2399 = vmax.f32 %v1794, %v2350
  %v2400 = vmax.f32 %v1795, %v2351
  %v2401 = vmax.f32 %v1796, %v2352
  %v2402 = vmax.f32 %v1797, %v2353
  %v2403 = vmax.f32 %v1798, %v2354
  %v2404 = vadd.f32 %v2355, %v2356
  %v2405 = vadd.f32 %v2404, %v2357
  %v2406 = vadd.f32 %v2405, %v2358
  %v2407 = vadd.f32 %v2406, %v2359
  %v2408 = vadd.f32 %v2407, %v2360
  %v2409 = vadd.f32 %v2408, %v2361
  %v2410 = vadd.f32 %v2409, %v2362
  %v2411 = vadd.f32 %v2410, %v2363
  %v2412 = vadd.f32 %v2411, %v2364
  %v2413 = vadd.f32 %v2412, %v2365
  %v2414 = vadd.f32 %v2413, %v2366
  %v2415 = vadd.f32 %v2414, %v2367
  %v2416 = vadd.f32 %v2415, %v2368
  %v2417 = vadd.f32 %v2416, %v2369
  %v2418 = vadd.f32 %v2417, %v2370
  %v2419 = vadd.f32 %v2418, %v2371
  %v2420 = vadd.f32 %v2419, %v2372
  %v2421 = vadd.f32 %v2420, %v2373
  %v2422 = vadd.f32 %v2421, %v2374
  %v2423 = vadd.f32 %v2422, %v2375
  %v2424 = vadd.f32 %v2423, %v2376
  %v2425 = vadd.f32 %v2424, %v2377
  %v2426 = vadd.f32 %v2425, %v2378
  %v2427 = vadd.f32 %v2426, %v2379
  %v2428 = vadd.f32 %v2427, %v2380
  %v2429 = vadd.f32 %v2428, %v2381
  %v2430 = vadd.f32 %v2429, %v2382
  %v2431 = vadd.f32 %v2430, %v2383
  %v2432 = vadd.f32 %v2431, %v2384
  %v2433 = vadd.f32 %v2432, %v2385
  %v2434 = vadd.f32 %v2433, %v2386
  %v2435 = vadd.f32 %v2434, %v2387
  %v2436 = vadd.f32 %v2435, %v2388
  %v2437 = vadd.f32 %v2436, %v2389
  %v2438 = vadd.f32 %v2437, %v2390
  %v2439 = vadd.f32 %v2438, %v2391
  %v2440 = vadd.f32 %v2439, %v2392
  %v2441 = vadd.f32 %v2440, %v2393
  %v2442 = vadd.f32 %v2441, %v2394
  %v2443 = vadd.f32 %v2442, %v2395
  %v2444 = vadd.f32 %v2443, %v2396
  %v2445 = vadd.f32 %v2444, %v2397
  %v2446 = vadd.f32 %v2445, %v2398
  %v2447 = vadd.f32 %v2446, %v2399
  %v2448 = vadd.f32 %v2447, %v2400
  %v2449 = vadd.f32 %v2448, %v2401
  %v2450 = vadd.f32 %v2449, %v2402
  %v2451 = vadd.f32 %v2450, %v2403
  %v2452 = vrot.slane %v2451, 4
  %v2453 = vadd.f32 %v2451, %v2452
  %v2454 = vrot.slane %v2453, 2
  %v2455 = vadd.f32 %v2453, %v2454
  %v2456 = vrot.slane %v2455, 1
  %v2457 = vadd.f32 %v2455, %v2456
  %v2458 = vrcp.pop 392.0
  %v2459 = vmul.f32 %v2457, %v2458
  %v2460 = vsub.f32 %v2355, %v2459
  %v2461 = vsub.f32 %v2356, %v2459
  %v2462 = vsub.f32 %v2357, %v2459
  %v2463 = vsub.f32 %v2358, %v2459
  %v2464 = vsub.f32 %v2359, %v2459
  %v2465 = vsub.f32 %v2360, %v2459
  %v2466 = vsub.f32 %v2361, %v2459
  %v2467 = vsub.f32 %v2362, %v2459
  %v2468 = vsub.f32 %v2363, %v2459
  %v2469 = vsub.f32 %v2364, %v2459
  %v2470 = vsub.f32 %v2365, %v2459
  %v2471 = vsub.f32 %v2366, %v2459
  %v2472 = vsub.f32 %v2367, %v2459
  %v2473 = vsub.f32 %v2368, %v2459
  %v2474 = vsub.f32 %v2369, %v2459
  %v2475 = vsub.f32 %v2370, %v2459
  %v2476 = vsub.f32 %v2371, %v2459
  %v2477 = vsub.f32 %v2372, %v2459
  %v2478 = vsub.f32 %v2373, %v2459
  %v2479 = vsub.f32 %v2374, %v2459
  %v2480 = vsub.f32 %v2375, %v2459
  %v2481 = vsub.f32 %v2376, %v2459
  %v2482 = vsub.f32 %v2377, %v2459
  %v2483 = vsub.f32 %v2378, %v2459
  %v2484 = vsub.f32 %v2379, %v2459
  %v2485 = vsub.f32 %v2380, %v2459
  %v2486 = vsub.f32 %v2381, %v2459
  %v2487 = vsub.f32 %v2382, %v2459
  %v2488 = vsub.f32 %v2383, %v2459
  %v2489 = vsub.f32 %v2384, %v2459
  %v2490 = vsub.f32 %v2385, %v2459
  %v2491 = vsub.f32 %v2386, %v2459
  %v2492 = vsub.f32 %v2387, %v2459
  %v2493 = vsub.f32 %v2388, %v2459
  %v2494 = vsub.f32 %v2389, %v2459
  %v2495 = vsub.f32 %v2390, %v2459
  %v2496 = vsub.f32 %v2391, %v2459
  %v2497 = vsub.f32 %v2392, %v2459
  %v2498 = vsub.f32 %v2393, %v2459
  %v2499 = vsub.f32 %v2394, %v2459
  %v2500 = vsub.f32 %v2395, %v2459
  %v2501 = vsub.f32 %v2396, %v2459
  %v2502 = vsub.f32 %v2397, %v2459
  %v2503 = vsub.f32 %v2398, %v2459
  %v2504 = vsub.f32 %v2399, %v2459
  %v2505 = vsub.f32 %v2400, %v2459
  %v2506 = vsub.f32 %v2401, %v2459
  %v2507 = vsub.f32 %v2402, %v2459
  %v2508 = vsub.f32 %v2403, %v2459
  %v2509 = vmul.f32 %v2460, %v2460
  %v2510 = vmul.f32 %v2461, %v2461
  %v2511 = vmul.f32 %v2462, %v2462
  %v2512 = vmul.f32 %v2463, %v2463
  %v2513 = vmul.f32 %v2464, %v2464
  %v2514 = vmul.f32 %v2465, %v2465
  %v2515 = vmul.f32 %v2466, %v2466
  %v2516 = vmul.f32 %v2467, %v2467
  %v2517 = vmul.f32 %v2468, %v2468
  %v2518 = vmul.f32 %v2469, %v2469
  %v2519 = vmul.f32 %v2470, %v2470
  %v2520 = vmul.f32 %v2471, %v2471
  %v2521 = vmul.f32 %v2472, %v2472
  %v2522 = vmul.f32 %v2473, %v2473
  %v2523 = vmul.f32 %v2474, %v2474
  %v2524 = vmul.f32 %v2475, %v2475
  %v2525 = vmul.f32 %v2476, %v2476
  %v2526 = vmul.f32 %v2477, %v2477
  %v2527 = vmul.f32 %v2478, %v2478
  %v2528 = vmul.f32 %v2479, %v2479
  %v2529 = vmul.f32 %v2480, %v2480
  %v2530 = vmul.f32 %v2481, %v2481
  %v2531 = vmul.f32 %v2482, %v2482
  %v2532 = vmul.f32 %v2483, %v2483
  %v2533 = vmul.f32 %v2484, %v2484
  %v2534 = vmul.f32 %v2485, %v2485
  %v2535 = vmul.f32 %v2486, %v2486
  %v2536 = vmul.f32 %v2487, %v2487
  %v2537 = vmul.f32 %v2488, %v2488
  %v2538 = vmul.f32 %v2489, %v2489
  %v2539 = vmul.f32 %v2490, %v2490
  %v2540 = vmul.f32 %v2491, %v2491
  %v2541 = vmul.f32 %v2492, %v2492
  %v2542 = vmul.f32 %v2493, %v2493
  %v2543 = vmul.f32 %v2494, %v2494
  %v2544 = vmul.f32 %v2495, %v2495
  %v2545 = vmul.f32 %v2496, %v2496
  %v2546 = vmul.f32 %v2497, %v2497
  %v2547 = vmul.f32 %v2498, %v2498
  %v2548 = vmul.f32 %v2499, %v2499
  %v2549 = vmul.f32 %v2500, %v2500
  %v2550 = vmul.f32 %v2501, %v2501
  %v2551 = vmul.f32 %v2502, %v2502
  %v2552 = vmul.f32 %v2503, %v2503
  %v2553 = vmul.f32 %v2504, %v2504
  %v2554 = vmul.f32 %v2505, %v2505
  %v2555 = vmul.f32 %v2506, %v2506
  %v2556 = vmul.f32 %v2507, %v2507
  %v2557 = vmul.f32 %v2508, %v2508
  %v2558 = vadd.f32 %v2509, %v2510
  %v2559 = vadd.f32 %v2558, %v2511
  %v2560 = vadd.f32 %v2559, %v2512
  %v2561 = vadd.f32 %v2560, %v2513
  %v2562 = vadd.f32 %v2561, %v2514
  %v2563 = vadd.f32 %v2562, %v2515
  %v2564 = vadd.f32 %v2563, %v2516
  %v2565 = vadd.f32 %v2564, %v2517
  %v2566 = vadd.f32 %v2565, %v2518
  %v2567 = vadd.f32 %v2566, %v2519
  %v2568 = vadd.f32 %v2567, %v2520
  %v2569 = vadd.f32 %v2568, %v2521
  %v2570 = vadd.f32 %v2569, %v2522
  %v2571 = vadd.f32 %v2570, %v2523
  %v2572 = vadd.f32 %v2571, %v2524
  %v2573 = vadd.f32 %v2572, %v2525
  %v2574 = vadd.f32 %v2573, %v2526
  %v2575 = vadd.f32 %v2574, %v2527
  %v2576 = vadd.f32 %v2575, %v2528
  %v2577 = vadd.f32 %v2576, %v2529
  %v2578 = vadd.f32 %v2577, %v2530
  %v2579 = vadd.f32 %v2578, %v2531
  %v2580 = vadd.f32 %v2579, %v2532
  %v2581 = vadd.f32 %v2580, %v2533
  %v2582 = vadd.f32 %v2581, %v2534
  %v2583 = vadd.f32 %v2582, %v2535
  %v2584 = vadd.f32 %v2583, %v2536
  %v2585 = vadd.f32 %v2584, %v2537
  %v2586 = vadd.f32 %v2585, %v2538
  %v2587 = vadd.f32 %v2586, %v2539
  %v2588 = vadd.f32 %v2587, %v2540
  %v2589 = vadd.f32 %v2588, %v2541
  %v2590 = vadd.f32 %v2589, %v2542
  %v2591 = vadd.f32 %v2590, %v2543
  %v2592 = vadd.f32 %v2591, %v2544
  %v2593 = vadd.f32 %v2592, %v2545
  %v2594 = vadd.f32 %v2593, %v2546
  %v2595 = vadd.f32 %v2594, %v2547
  %v2596 = vadd.f32 %v2595, %v2548
  %v2597 = vadd.f32 %v2596, %v2549
  %v2598 = vadd.f32 %v2597, %v2550
  %v2599 = vadd.f32 %v2598, %v2551
  %v2600 = vadd.f32 %v2599, %v2552
  %v2601 = vadd.f32 %v2600, %v2553
  %v2602 = vadd.f32 %v2601, %v2554
  %v2603 = vadd.f32 %v2602, %v2555
  %v2604 = vadd.f32 %v2603, %v2556
  %v2605 = vadd.f32 %v2604, %v2557
  %v2606 = vrot.slane %v2605, 4
  %v2607 = vadd.f32 %v2605, %v2606
  %v2608 = vrot.slane %v2607, 2
  %v2609 = vadd.f32 %v2607, %v2608
  %v2610 = vrot.slane %v2609, 1
  %v2611 = vadd.f32 %v2609, %v2610
  %v2612 = vmul.f32 %v2611, %v2458
  %v2613 = vadd.f32 %v2612, 1e-05
  %v2614 = vrsqrt.pop %v2613
  %v2615 = vmul.f32 %v2460, %v2614
  %v2616 = vmul.f32 %v2461, %v2614
  %v2617 = vmul.f32 %v2462, %v2614
  %v2618 = vmul.f32 %v2463, %v2614
  %v2619 = vmul.f32 %v2464, %v2614
  %v2620 = vmul.f32 %v2465, %v2614
  %v2621 = vmul.f32 %v2466, %v2614
  %v2622 = vmul.f32 %v2467, %v2614
  %v2623 = vmul.f32 %v2468, %v2614
  %v2624 = vmul.f32 %v2469, %v2614
  %v2625 = vmul.f32 %v2470, %v2614
  %v2626 = vmul.f32 %v2471, %v2614
  %v2627 = vmul.f32 %v2472, %v2614
  %v2628 = vmul.f32 %v2473, %v2614
  %v2629 = vmul.f32 %v2474, %v2614
  %v2630 = vmul.f32 %v2475, %v2614
  %v2631 = vmul.f32 %v2476, %v2614
  %v2632 = vmul.f32 %v2477, %v2614
  %v2633 = vmul.f32 %v2478, %v2614
  %v2634 = vmul.f32 %v2479, %v2614
  %v2635 = vmul.f32 %v2480, %v2614
  %v2636 = vmul.f32 %v2481, %v2614
  %v2637 = vmul.f32 %v2482, %v2614
  %v2638 = vmul.f32 %v2483, %v2614
  %v2639 = vmul.f32 %v2484, %v2614
  %v2640 = vmul.f32 %v2485, %v2614
  %v2641 = vmul.f32 %v2486, %v2614
  %v2642 = vmul.f32 %v2487, %v2614
  %v2643 = vmul.f32 %v2488, %v2614
  %v2644 = vmul.f32 %v2489, %v2614
  %v2645 = vmul.f32 %v2490, %v2614
  %v2646 = vmul.f32 %v2491, %v2614
  %v2647 = vmul.f32 %v2492, %v2614
  %v2648 = vmul.f32 %v2493, %v2614
  %v2649 = vmul.f32 %v2494, %v2614
  %v2650 = vmul.f32 %v2495, %v2614
  %v2651 = vmul.f32 %v2496, %v2614
  %v2652 = vmul.f32 %v2497, %v2614
  %v2653 = vmul.f32 %v2498, %v2614
  %v2654 = vmul.f32 %v2499, %v2614
  %v2655 = vmul.f32 %v2500, %v2614
  %v2656 = vmul.f32 %v2501, %v2614
  %v2657 = vmul.f32 %v2502, %v2614
  %v2658 = vmul.f32 %v2503, %v2614
  %v2659 = vmul.f32 %v2504, %v2614
  %v2660 = vmul.f32 %v2505, %v2614
  %v2661 = vmul.f32 %v2506, %v2614
  %v2662 = vmul.f32 %v2507, %v2614
  %v2663 = vmul.f32 %v2508, %v2614
  %v2664 = vld [vmem:[%s3] sm:$0x1]
  %v2666 = vlaneseq
  %v2667 = vshrl.u32 %v2666, 7
  %v2668 = vsub.s32 0, %v2667
  %v2669 = vrot.slane %v2664, %v2668
  %v2671 = vmul.f32 %v2615, %v2669
  %v2672 = vmul.f32 %v2616, %v2669
  %v2673 = vmul.f32 %v2617, %v2669
  %v2674 = vmul.f32 %v2618, %v2669
  %v2675 = vmul.f32 %v2619, %v2669
  %v2676 = vmul.f32 %v2620, %v2669
  %v2677 = vmul.f32 %v2621, %v2669
  %v2678 = vmul.f32 %v2622, %v2669
  %v2679 = vmul.f32 %v2623, %v2669
  %v2680 = vmul.f32 %v2624, %v2669
  %v2681 = vmul.f32 %v2625, %v2669
  %v2682 = vmul.f32 %v2626, %v2669
  %v2683 = vmul.f32 %v2627, %v2669
  %v2684 = vmul.f32 %v2628, %v2669
  %v2685 = vmul.f32 %v2629, %v2669
  %v2686 = vmul.f32 %v2630, %v2669
  %v2687 = vmul.f32 %v2631, %v2669
  %v2688 = vmul.f32 %v2632, %v2669
  %v2689 = vmul.f32 %v2633, %v2669
  %v2690 = vmul.f32 %v2634, %v2669
  %v2691 = vmul.f32 %v2635, %v2669
  %v2692 = vmul.f32 %v2636, %v2669
  %v2693 = vmul.f32 %v2637, %v2669
  %v2694 = vmul.f32 %v2638, %v2669
  %v2695 = vmul.f32 %v2639, %v2669
  %v2696 = vmul.f32 %v2640, %v2669
  %v2697 = vmul.f32 %v2641, %v2669
  %v2698 = vmul.f32 %v2642, %v2669
  %v2699 = vmul.f32 %v2643, %v2669
  %v2700 = vmul.f32 %v2644, %v2669
  %v2701 = vmul.f32 %v2645, %v2669
  %v2702 = vmul.f32 %v2646, %v2669
  %v2703 = vmul.f32 %v2647, %v2669
  %v2704 = vmul.f32 %v2648, %v2669
  %v2705 = vmul.f32 %v2649, %v2669
  %v2706 = vmul.f32 %v2650, %v2669
  %v2707 = vmul.f32 %v2651, %v2669
  %v2708 = vmul.f32 %v2652, %v2669
  %v2709 = vmul.f32 %v2653, %v2669
  %v2710 = vmul.f32 %v2654, %v2669
  %v2711 = vmul.f32 %v2655, %v2669
  %v2712 = vmul.f32 %v2656, %v2669
  %v2713 = vmul.f32 %v2657, %v2669
  %v2714 = vmul.f32 %v2658, %v2669
  %v2715 = vmul.f32 %v2659, %v2669
  %v2716 = vmul.f32 %v2660, %v2669
  %v2717 = vmul.f32 %v2661, %v2669
  %v2718 = vmul.f32 %v2662, %v2669
  %v2719 = vmul.f32 %v2663, %v2669
  %v2720 = vld [vmem:[%s4] sm:$0x1]
  %v2722 = vlaneseq
  %v2723 = vshrl.u32 %v2722, 7
  %v2724 = vsub.s32 0, %v2723
  %v2725 = vrot.slane %v2720, %v2724
  %v2727 = vadd.f32 %v2671, %v2725
  %v2728 = vadd.f32 %v2672, %v2725
  %v2729 = vadd.f32 %v2673, %v2725
  %v2730 = vadd.f32 %v2674, %v2725
  %v2731 = vadd.f32 %v2675, %v2725
  %v2732 = vadd.f32 %v2676, %v2725
  %v2733 = vadd.f32 %v2677, %v2725
  %v2734 = vadd.f32 %v2678, %v2725
  %v2735 = vadd.f32 %v2679, %v2725
  %v2736 = vadd.f32 %v2680, %v2725
  %v2737 = vadd.f32 %v2681, %v2725
  %v2738 = vadd.f32 %v2682, %v2725
  %v2739 = vadd.f32 %v2683, %v2725
  %v2740 = vadd.f32 %v2684, %v2725
  %v2741 = vadd.f32 %v2685, %v2725
  %v2742 = vadd.f32 %v2686, %v2725
  %v2743 = vadd.f32 %v2687, %v2725
  %v2744 = vadd.f32 %v2688, %v2725
  %v2745 = vadd.f32 %v2689, %v2725
  %v2746 = vadd.f32 %v2690, %v2725
  %v2747 = vadd.f32 %v2691, %v2725
  %v2748 = vadd.f32 %v2692, %v2725
  %v2749 = vadd.f32 %v2693, %v2725
  %v2750 = vadd.f32 %v2694, %v2725
  %v2751 = vadd.f32 %v2695, %v2725
  %v2752 = vadd.f32 %v2696, %v2725
  %v2753 = vadd.f32 %v2697, %v2725
  %v2754 = vadd.f32 %v2698, %v2725
  %v2755 = vadd.f32 %v2699, %v2725
  %v2756 = vadd.f32 %v2700, %v2725
  %v2757 = vadd.f32 %v2701, %v2725
  %v2758 = vadd.f32 %v2702, %v2725
  %v2759 = vadd.f32 %v2703, %v2725
  %v2760 = vadd.f32 %v2704, %v2725
  %v2761 = vadd.f32 %v2705, %v2725
  %v2762 = vadd.f32 %v2706, %v2725
  %v2763 = vadd.f32 %v2707, %v2725
  %v2764 = vadd.f32 %v2708, %v2725
  %v2765 = vadd.f32 %v2709, %v2725
  %v2766 = vadd.f32 %v2710, %v2725
  %v2767 = vadd.f32 %v2711, %v2725
  %v2768 = vadd.f32 %v2712, %v2725
  %v2769 = vadd.f32 %v2713, %v2725
  %v2770 = vadd.f32 %v2714, %v2725
  %v2771 = vadd.f32 %v2715, %v2725
  %v2772 = vadd.f32 %v2716, %v2725
  %v2773 = vadd.f32 %v2717, %v2725
  %v2774 = vadd.f32 %v2718, %v2725
  %v2775 = vadd.f32 %v2719, %v2725
  %2776 = vst [vmem:[%s5] sm:$0xff] %v2727
  %2777 = vst [vmem:[%s5 + $0x8] sm:$0xff] %v2728
  %2778 = vst [vmem:[%s5 + $0x10] sm:$0xff] %v2729
  %2779 = vst [vmem:[%s5 + $0x18] sm:$0xff] %v2730
  %2780 = vst [vmem:[%s5 + $0x20] sm:$0xff] %v2731
  %2781 = vst [vmem:[%s5 + $0x28] sm:$0xff] %v2732
  %2782 = vst [vmem:[%s5 + $0x30] sm:$0xff] %v2733
  %2783 = vst [vmem:[%s5 + $0x38] sm:$0xff] %v2734
  %2784 = vst [vmem:[%s5 + $0x40] sm:$0xff] %v2735
  %2785 = vst [vmem:[%s5 + $0x48] sm:$0xff] %v2736
  %2786 = vst [vmem:[%s5 + $0x50] sm:$0xff] %v2737
  %2787 = vst [vmem:[%s5 + $0x58] sm:$0xff] %v2738
  %2788 = vst [vmem:[%s5 + $0x60] sm:$0xff] %v2739
  %2789 = vst [vmem:[%s5 + $0x68] sm:$0xff] %v2740
  %2790 = vst [vmem:[%s5 + $0x70] sm:$0xff] %v2741
  %2791 = vst [vmem:[%s5 + $0x78] sm:$0xff] %v2742
  %2792 = vst [vmem:[%s5 + $0x80] sm:$0xff] %v2743
  %2793 = vst [vmem:[%s5 + $0x88] sm:$0xff] %v2744
  %2794 = vst [vmem:[%s5 + $0x90] sm:$0xff] %v2745
  %2795 = vst [vmem:[%s5 + $0x98] sm:$0xff] %v2746
  %2796 = vst [vmem:[%s5 + $0xa0] sm:$0xff] %v2747
  %2797 = vst [vmem:[%s5 + $0xa8] sm:$0xff] %v2748
  %2798 = vst [vmem:[%s5 + $0xb0] sm:$0xff] %v2749
  %2799 = vst [vmem:[%s5 + $0xb8] sm:$0xff] %v2750
  %2800 = vst [vmem:[%s5 + $0xc0] sm:$0xff] %v2751
  %2801 = vst [vmem:[%s5 + $0xc8] sm:$0xff] %v2752
  %2802 = vst [vmem:[%s5 + $0xd0] sm:$0xff] %v2753
  %2803 = vst [vmem:[%s5 + $0xd8] sm:$0xff] %v2754
  %2804 = vst [vmem:[%s5 + $0xe0] sm:$0xff] %v2755
  %2805 = vst [vmem:[%s5 + $0xe8] sm:$0xff] %v2756
  %2806 = vst [vmem:[%s5 + $0xf0] sm:$0xff] %v2757
  %2807 = vst [vmem:[%s5 + $0xf8] sm:$0xff] %v2758
  %2808 = vst [vmem:[%s5 + $0x100] sm:$0xff] %v2759
  %2809 = vst [vmem:[%s5 + $0x108] sm:$0xff] %v2760
  %2810 = vst [vmem:[%s5 + $0x110] sm:$0xff] %v2761
  %2811 = vst [vmem:[%s5 + $0x118] sm:$0xff] %v2762
  %2812 = vst [vmem:[%s5 + $0x120] sm:$0xff] %v2763
  %2813 = vst [vmem:[%s5 + $0x128] sm:$0xff] %v2764
  %2814 = vst [vmem:[%s5 + $0x130] sm:$0xff] %v2765
  %2815 = vst [vmem:[%s5 + $0x138] sm:$0xff] %v2766
  %2816 = vst [vmem:[%s5 + $0x140] sm:$0xff] %v2767
  %2817 = vst [vmem:[%s5 + $0x148] sm:$0xff] %v2768
  %2818 = vst [vmem:[%s5 + $0x150] sm:$0xff] %v2769
  %2819 = vst [vmem:[%s5 + $0x158] sm:$0xff] %v2770
  %2820 = vst [vmem:[%s5 + $0x160] sm:$0xff] %v2771
  %2821 = vst [vmem:[%s5 + $0x168] sm:$0xff] %v2772
  %2822 = vst [vmem:[%s5 + $0x170] sm:$0xff] %v2773
  %2823 = vst [vmem:[%s5 + $0x178] sm:$0xff] %v2774
  %2824 = vst [vmem:[%s5 + $0x180] sm:$0xff] %v2775
  // Predicated region
  $region22: #{crnn_forward.5} parent=0 // pred_check
    _
  $region23: #{crnn_forward.5} parent=0 // pred_check_branch
    %2826 = sbr.rel (0) target = $region25
  $region24: #{crnn_forward.5} parent=0 // pred_region
    _
  $region25: #{crnn_forward.5} parent=0 // pred_fallthru
    _
  // Predicated region
  $region26: #{crnn_forward.5} parent=0 // pred_check
    _
  $region27: #{crnn_forward.5} parent=0 // pred_check_branch
    %2828 = sbr.rel (0) target = $region29
  $region28: #{crnn_forward.5} parent=0 // pred_region
    _
  $region29: #{crnn_forward.5} parent=0 // pred_fallthru
    _

// kernel: crnn_forward.6
$region0: #{crnn_forward.6}
  #allocation0 [shape = 'u32[]', space=smem, size = 0x4, offset = 0x4, fixed_abs, tag = 'smem constant byte address 0x4 - core index']
  #allocation1 [shape = 'u32[144,128]{1,0:T(1,128)}', space=vmem, size = 0x12000, scoped, tag = 'internal scratch']
  %s0 = inlined_call_operand.vmem [shape: f32[4,72,144], index: 0, kind: input, shape index: {}]
  %s1 = inlined_call_operand.vmem [shape: f32[144,128], index: 1, kind: input, shape index: {}]
  %s2 = inlined_call_operand.vmem [shape: f32[1,128], index: 2, kind: input, shape index: {}]
  %s3 = inlined_call_operand.vmem [shape: f32[1,128], index: 3, kind: input, shape index: {}]
  %s4 = inlined_call_operand.vmem [shape: f32[1,128], index: 4, kind: input, shape index: {}]
  %s5 = inlined_call_operand.vmem [shape: f32[72,128], index: 5, kind: output, shape index: {}]
  %s6 = sld [smem:[#allocation0]]
  $region30: #{crnn_forward.6} parent=0
    _
  %s8 = ssub.s32 1, %s6
  %s9 = scalar_select 0, %s8, %s6
  // Predicated region
  $region2: #{crnn_forward.6} parent=0 // pred_check
    _
  $region3: #{crnn_forward.6} parent=0 // pred_check_branch
    %11 = sbr.rel (0) target = $region5
  $region4: #{crnn_forward.6} parent=0 // pred_region
    _
  $region5: #{crnn_forward.6} parent=0 // pred_fallthru
    _
  // Predicated region
  $region6: #{crnn_forward.6} parent=0 // pred_check
    _
  $region7: #{crnn_forward.6} parent=0 // pred_check_branch
    %13 = sbr.rel (0) target = $region9
  $region8: #{crnn_forward.6} parent=0 // pred_region
    _
  $region9: #{crnn_forward.6} parent=0 // pred_fallthru
    _
  // Predicated region
  $region10: #{crnn_forward.6} parent=0 // pred_check
    _
  $region11: #{crnn_forward.6} parent=0 // pred_check_branch
    %15 = sbr.rel (0) target = $region13
  $region12: #{crnn_forward.6} parent=0 // pred_region
    _
  $region13: #{crnn_forward.6} parent=0 // pred_fallthru
    _
  // Predicated region
  $region14: #{crnn_forward.6} parent=0 // pred_check
    _
  $region15: #{crnn_forward.6} parent=0 // pred_check_branch
    %17 = sbr.rel (0) target = $region17
  $region16: #{crnn_forward.6} parent=0 // pred_region
    _
  $region17: #{crnn_forward.6} parent=0 // pred_fallthru
    _
  // Predicated region
  $region18: #{crnn_forward.6} parent=0 // pred_check
    _
  $region19: #{crnn_forward.6} parent=0 // pred_check_branch
    %19 = sbr.rel (0) target = $region21
  $region20: #{crnn_forward.6} parent=0 // pred_region
    _
  $region21: #{crnn_forward.6} parent=0 // pred_fallthru
    _
  %v20 = vld [vmem:[%s0] sm:$0xff]
  %v21 = vld [vmem:[%s0 + $0x8] sm:$0xff]
  %v22 = vld [vmem:[%s0 + $0x10] sm:$0xff]
  %v23 = vld [vmem:[%s0 + $0x18] sm:$0xff]
  %v24 = vld [vmem:[%s0 + $0x20] sm:$0xff]
  %v25 = vld [vmem:[%s0 + $0x28] sm:$0xff]
  %v26 = vld [vmem:[%s0 + $0x30] sm:$0xff]
  %v27 = vld [vmem:[%s0 + $0x38] sm:$0xff]
  %v28 = vld [vmem:[%s0 + $0x40] sm:$0xff]
  %v29 = vld [vmem:[%s0 + $0x48] sm:$0xff]
  %v30 = vld [vmem:[%s0 + $0x50] sm:$0xff]
  %v31 = vld [vmem:[%s0 + $0x58] sm:$0xff]
  %v32 = vld [vmem:[%s0 + $0x60] sm:$0xff]
  %v33 = vld [vmem:[%s0 + $0x68] sm:$0xff]
  %v34 = vld [vmem:[%s0 + $0x70] sm:$0xff]
  %v35 = vld [vmem:[%s0 + $0x78] sm:$0xff]
  %v36 = vld [vmem:[%s0 + $0x80] sm:$0xff]
  %v37 = vld [vmem:[%s0 + $0x88] sm:$0xff]
  %v38 = vld [vmem:[%s1] sm:$0xff]
  %v39 = vld [vmem:[%s1 + $0x8] sm:$0xff]
  %v40 = vld [vmem:[%s1 + $0x10] sm:$0xff]
  %v41 = vld [vmem:[%s1 + $0x18] sm:$0xff]
  %v42 = vld [vmem:[%s1 + $0x20] sm:$0xff]
  %v43 = vld [vmem:[%s1 + $0x28] sm:$0xff]
  %v44 = vld [vmem:[%s1 + $0x30] sm:$0xff]
  %v45 = vld [vmem:[%s1 + $0x38] sm:$0xff]
  %v46 = vld [vmem:[%s1 + $0x40] sm:$0xff]
  %v47 = vld [vmem:[%s1 + $0x48] sm:$0xff]
  %v48 = vld [vmem:[%s1 + $0x50] sm:$0xff]
  %v49 = vld [vmem:[%s1 + $0x58] sm:$0xff]
  %v50 = vld [vmem:[%s1 + $0x60] sm:$0xff]
  %v51 = vld [vmem:[%s1 + $0x68] sm:$0xff]
  %v52 = vld [vmem:[%s1 + $0x70] sm:$0xff]
  %v53 = vld [vmem:[%s1 + $0x78] sm:$0xff]
  %v54 = vld [vmem:[%s1 + $0x80] sm:$0xff]
  %v55 = vld [vmem:[%s1 + $0x88] sm:$0xff]
  %v56 = vld [vmem:[%s2] sm:$0x1]
  %v58 = vlaneseq
  %v59 = vshrl.u32 %v58, 7
  %v60 = vsub.s32 0, %v59
  %v61 = vrot.slane %v56, %v60
  %vm63 = vcmask 130048
  %v65 = vsel %vm63, %v21, 0
  %v68 = vsel %vm63, %v23, 0
  %v71 = vsel %vm63, %v25, 0
  %v74 = vsel %vm63, %v27, 0
  %v77 = vsel %vm63, %v29, 0
  %v80 = vsel %vm63, %v31, 0
  %v83 = vsel %vm63, %v33, 0
  %v86 = vsel %vm63, %v35, 0
  %v89 = vsel %vm63, %v37, 0
  %91 = vmatprep.subr.mxu0 0.0
  %92 = vmatpush1.msra.mxu0 %v38
  %93 = vmatprep.subr.mxu0 0.0
  %94 = vmatpush1.msra.mxu0 %v39
  %95 = vmatprep.subr.mxu0 0.0
  %96 = vmatpush1.msra.mxu0 %v40
  %97 = vmatprep.subr.mxu0 0.0
  %98 = vmatpush1.msra.mxu0 %v41
  %99 = vmatprep.subr.mxu0 0.0
  %100 = vmatpush1.msra.mxu0 %v42
  %101 = vmatprep.subr.mxu0 0.0
  %102 = vmatpush1.msra.mxu0 %v43
  %103 = vmatprep.subr.mxu0 0.0
  %104 = vmatpush1.msra.mxu0 %v44
  %105 = vmatprep.subr.mxu0 0.0
  %106 = vmatpush1.msra.mxu0 %v45
  %107 = vmatprep.subr.mxu0 0.0
  %108 = vmatpush1.msra.mxu0 %v46
  %109 = vmatprep.subr.mxu0 0.0
  %110 = vmatpush1.msra.mxu0 %v47
  %111 = vmatprep.subr.mxu0 0.0
  %112 = vmatpush1.msra.mxu0 %v48
  %113 = vmatprep.subr.mxu0 0.0
  %114 = vmatpush1.msra.mxu0 %v49
  %115 = vmatprep.subr.mxu0 0.0
  %116 = vmatpush1.msra.mxu0 %v50
  %117 = vmatprep.subr.mxu0 0.0
  %118 = vmatpush1.msra.mxu0 %v51
  %119 = vmatprep.subr.mxu0 0.0
  %120 = vmatpush1.msra.mxu0 %v52
  %121 = vmatprep.subr.mxu0 0.0
  %122 = vmatpush1.msra.mxu0 %v53
  %123 = vmatprep.subr.mxu0 0.0
  %124 = vmatpush1.msra.mxu0 %v54
  %125 = vmatprep.subr.mxu0 0.0
  %126 = vmatpush1.msra.mxu0 %v55
  %127 = vmatprep.subr.mxu0 0.0
  %128 = vmatpush1.msra.mxu0 0.0
  %129 = vmatprep.subr.mxu0 0.0
  %130 = vmatpush1.msra.mxu0 0.0
  %131 = vmatprep.subr.mxu0 0.0
  %132 = vmatpush1.msra.mxu0 0.0
  %133 = vmatprep.subr.mxu0 0.0
  %134 = vmatpush1.msra.mxu0 0.0
  %135 = vmatprep.subr.mxu0 0.0
  %136 = vmatpush1.msra.mxu0 0.0
  %137 = vmatprep.subr.mxu0 0.0
  %138 = vmatpush1.msra.mxu0 0.0
  %139 = vmatprep.subr.mxu0 0.0
  %140 = vmatpush1.msra.mxu0 0.0
  %141 = vmatprep.subr.mxu0 0.0
  %142 = vmatpush1.msra.mxu0 0.0
  %143 = vmatprep.subr.mxu0 0.0
  %144 = vmatpush1.msra.mxu0 0.0
  %145 = vmatprep.subr.mxu0 0.0
  %146 = vmatpush1.msra.mxu0 0.0
  %147 = vmatprep.subr.mxu0 0.0
  %148 = vmatpush1.msra.mxu0 0.0
  %149 = vmatprep.subr.mxu0 0.0
  %150 = vmatpush1.msra.mxu0 0.0
  %151 = vmatprep.subr.mxu0 0.0
  %152 = vmatpush1.msra.mxu0 0.0
  %153 = vmatprep.subr.mxu0 0.0
  %154 = vmatpush1.msra.mxu0 0.0
  %155 = vmatprep.mubr.f32.mxu0 %v65
  %156 = vmatmul.mubr.f32.gmra.mrb[0].mxu0 %v20
  %v157 = vpop.f32.mrb[0].mxu0
  %v158 = vadd.f32 %v61, %v157
  %v159 = vpop.f32.mrb[0].mxu0
  %160 = vmatprep.mubr.f32.mxu0 %v68
  %161 = vmatmul.mubr.f32.gmra.mrb[0].mxu0 %v22
  %v162 = vpop.f32.mrb[0].mxu0
  %v163 = vadd.f32 %v61, %v162
  %v164 = vpop.f32.mrb[0].mxu0
  %165 = vmatprep.mubr.f32.mxu0 %v71
  %166 = vmatmul.mubr.f32.gmra.mrb[0].mxu0 %v24
  %v167 = vpop.f32.mrb[0].mxu0
  %v168 = vadd.f32 %v61, %v167
  %v169 = vpop.f32.mrb[0].mxu0
  %170 = vmatprep.mubr.f32.mxu0 %v74
  %171 = vmatmul.mubr.f32.gmra.mrb[0].mxu0 %v26
  %v172 = vpop.f32.mrb[0].mxu0
  %v173 = vadd.f32 %v61, %v172
  %v174 = vpop.f32.mrb[0].mxu0
  %175 = vmatprep.mubr.f32.mxu0 %v77
  %176 = vmatmul.mubr.f32.gmra.mrb[0].mxu0 %v28
  %v177 = vpop.f32.mrb[0].mxu0
  %v178 = vadd.f32 %v61, %v177
  %v179 = vpop.f32.mrb[0].mxu0
  %180 = vmatprep.mubr.f32.mxu0 %v80
  %181 = vmatmul.mubr.f32.gmra.mrb[0].mxu0 %v30
  %v182 = vpop.f32.mrb[0].mxu0
  %v183 = vadd.f32 %v61, %v182
  %v184 = vpop.f32.mrb[0].mxu0
  %185 = vmatprep.mubr.f32.mxu0 %v83
  %186 = vmatmul.mubr.f32.gmra.mrb[0].mxu0 %v32
  %v187 = vpop.f32.mrb[0].mxu0
  %v188 = vadd.f32 %v61, %v187
  %v189 = vpop.f32.mrb[0].mxu0
  %190 = vmatprep.mubr.f32.mxu0 %v86
  %191 = vmatmul.mubr.f32.gmra.mrb[0].mxu0 %v34
  %v192 = vpop.f32.mrb[0].mxu0
  %v193 = vadd.f32 %v61, %v192
  %v194 = vpop.f32.mrb[0].mxu0
  %195 = vmatprep.mubr.f32.mxu0 %v89
  %196 = vmatmul.mubr.f32.gmra.mrb[0].mxu0 %v36
  %v197 = vpop.f32.mrb[0].mxu0
  %v198 = vadd.f32 %v61, %v197
  %v199 = vpop.f32.mrb[0].mxu0
  %200 = vdwg.mxu0
  %v201 = vmax.f32 %v158, 0.0
  %v202 = vmax.f32 %v163, 0.0
  %v203 = vmax.f32 %v168, 0.0
  %v204 = vmax.f32 %v173, 0.0
  %v205 = vmax.f32 %v178, 0.0
  %v206 = vmax.f32 %v183, 0.0
  %v207 = vmax.f32 %v188, 0.0
  %v208 = vmax.f32 %v193, 0.0
  %v209 = vmax.f32 %v198, 0.0
  %s210 = scalar_lea.vmem %s0, 144
  %v211 = vld [vmem:[%s210] sm:$0xff]
  %v212 = vld [vmem:[%s210 + $0x8] sm:$0xff]
  %v213 = vld [vmem:[%s210 + $0x10] sm:$0xff]
  %v214 = vld [vmem:[%s210 + $0x18] sm:$0xff]
  %v215 = vld [vmem:[%s210 + $0x20] sm:$0xff]
  %v216 = vld [vmem:[%s210 + $0x28] sm:$0xff]
  %v217 = vld [vmem:[%s210 + $0x30] sm:$0xff]
  %v218 = vld [vmem:[%s210 + $0x38] sm:$0xff]
  %v219 = vld [vmem:[%s210 + $0x40] sm:$0xff]
  %v220 = vld [vmem:[%s210 + $0x48] sm:$0xff]
  %v221 = vld [vmem:[%s210 + $0x50] sm:$0xff]
  %v222 = vld [vmem:[%s210 + $0x58] sm:$0xff]
  %v223 = vld [vmem:[%s210 + $0x60] sm:$0xff]
  %v224 = vld [vmem:[%s210 + $0x68] sm:$0xff]
  %v225 = vld [vmem:[%s210 + $0x70] sm:$0xff]
  %v226 = vld [vmem:[%s210 + $0x78] sm:$0xff]
  %v227 = vld [vmem:[%s210 + $0x80] sm:$0xff]
  %v228 = vld [vmem:[%s210 + $0x88] sm:$0xff]
  %v230 = vsel %vm63, %v212, 0
  %v233 = vsel %vm63, %v214, 0
  %v236 = vsel %vm63, %v216, 0
  %v239 = vsel %vm63, %v218, 0
  %v242 = vsel %vm63, %v220, 0
  %v245 = vsel %vm63, %v222, 0
  %v248 = vsel %vm63, %v224, 0
  %v251 = vsel %vm63, %v226, 0
  %v254 = vsel %vm63, %v228, 0
  %256 = vmatprep.subr.mxu0 0.0
  %257 = vmatpush1.msra.mxu0 %v38
  %258 = vmatprep.subr.mxu0 0.0
  %259 = vmatpush1.msra.mxu0 %v39
  %260 = vmatprep.subr.mxu0 0.0
  %261 = vmatpush1.msra.mxu0 %v40
  %262 = vmatprep.subr.mxu0 0.0
  %263 = vmatpush1.msra.mxu0 %v41
  %264 = vmatprep.subr.mxu0 0.0
  %265 = vmatpush1.msra.mxu0 %v42
  %266 = vmatprep.subr.mxu0 0.0
  %267 = vmatpush1.msra.mxu0 %v43
  %268 = vmatprep.subr.mxu0 0.0
  %269 = vmatpush1.msra.mxu0 %v44
  %270 = vmatprep.subr.mxu0 0.0
  %271 = vmatpush1.msra.mxu0 %v45
  %272 = vmatprep.subr.mxu0 0.0
  %273 = vmatpush1.msra.mxu0 %v46
  %274 = vmatprep.subr.mxu0 0.0
  %275 = vmatpush1.msra.mxu0 %v47
  %276 = vmatprep.subr.mxu0 0.0
  %277 = vmatpush1.msra.mxu0 %v48
  %278 = vmatprep.subr.mxu0 0.0
  %279 = vmatpush1.msra.mxu0 %v49
  %280 = vmatprep.subr.mxu0 0.0
  %281 = vmatpush1.msra.mxu0 %v50
  %282 = vmatprep.subr.mxu0 0.0
  %283 = vmatpush1.msra.mxu0 %v51
  %284 = vmatprep.subr.mxu0 0.0
  %285 = vmatpush1.msra.mxu0 %v52
  %286 = vmatprep.subr.mxu0 0.0
  %287 = vmatpush1.msra.mxu0 %v53
  %288 = vmatprep.subr.mxu0 0.0
  %289 = vmatpush1.msra.mxu0 %v54
  %290 = vmatprep.subr.mxu0 0.0
  %291 = vmatpush1.msra.mxu0 %v55
  %292 = vmatprep.subr.mxu0 0.0
  %293 = vmatpush1.msra.mxu0 0.0
  %294 = vmatprep.subr.mxu0 0.0
  %295 = vmatpush1.msra.mxu0 0.0
  %296 = vmatprep.subr.mxu0 0.0
  %297 = vmatpush1.msra.mxu0 0.0
  %298 = vmatprep.subr.mxu0 0.0
  %299 = vmatpush1.msra.mxu0 0.0
  %300 = vmatprep.subr.mxu0 0.0
  %301 = vmatpush1.msra.mxu0 0.0
  %302 = vmatprep.subr.mxu0 0.0
  %303 = vmatpush1.msra.mxu0 0.0
  %304 = vmatprep.subr.mxu0 0.0
  %305 = vmatpush1.msra.mxu0 0.0
  %306 = vmatprep.subr.mxu0 0.0
  %307 = vmatpush1.msra.mxu0 0.0
  %308 = vmatprep.subr.mxu0 0.0
  %309 = vmatpush1.msra.mxu0 0.0
  %310 = vmatprep.subr.mxu0 0.0
  %311 = vmatpush1.msra.mxu0 0.0
  %312 = vmatprep.subr.mxu0 0.0
  %313 = vmatpush1.msra.mxu0 0.0
  %314 = vmatprep.subr.mxu0 0.0
  %315 = vmatpush1.msra.mxu0 0.0
  %316 = vmatprep.subr.mxu0 0.0
  %317 = vmatpush1.msra.mxu0 0.0
  %318 = vmatprep.subr.mxu0 0.0
  %319 = vmatpush1.msra.mxu0 0.0
  %320 = vmatprep.mubr.f32.mxu0 %v230
  %321 = vmatmul.mubr.f32.gmra.mrb[0].mxu0 %v211
  %v322 = vpop.f32.mrb[0].mxu0
  %v323 = vadd.f32 %v61, %v322
  %v324 = vpop.f32.mrb[0].mxu0
  %325 = vmatprep.mubr.f32.mxu0 %v233
  %326 = vmatmul.mubr.f32.gmra.mrb[0].mxu0 %v213
  %v327 = vpop.f32.mrb[0].mxu0
  %v328 = vadd.f32 %v61, %v327
  %v329 = vpop.f32.mrb[0].mxu0
  %330 = vmatprep.mubr.f32.mxu0 %v236
  %331 = vmatmul.mubr.f32.gmra.mrb[0].mxu0 %v215
  %v332 = vpop.f32.mrb[0].mxu0
  %v333 = vadd.f32 %v61, %v332
  %v334 = vpop.f32.mrb[0].mxu0
  %335 = vmatprep.mubr.f32.mxu0 %v239
  %336 = vmatmul.mubr.f32.gmra.mrb[0].mxu0 %v217
  %v337 = vpop.f32.mrb[0].mxu0
  %v338 = vadd.f32 %v61, %v337
  %v339 = vpop.f32.mrb[0].mxu0
  %340 = vmatprep.mubr.f32.mxu0 %v242
  %341 = vmatmul.mubr.f32.gmra.mrb[0].mxu0 %v219
  %v342 = vpop.f32.mrb[0].mxu0
  %v343 = vadd.f32 %v61, %v342
  %v344 = vpop.f32.mrb[0].mxu0
  %345 = vmatprep.mubr.f32.mxu0 %v245
  %346 = vmatmul.mubr.f32.gmra.mrb[0].mxu0 %v221
  %v347 = vpop.f32.mrb[0].mxu0
  %v348 = vadd.f32 %v61, %v347
  %v349 = vpop.f32.mrb[0].mxu0
  %350 = vmatprep.mubr.f32.mxu0 %v248
  %351 = vmatmul.mubr.f32.gmra.mrb[0].mxu0 %v223
  %v352 = vpop.f32.mrb[0].mxu0
  %v353 = vadd.f32 %v61, %v352
  %v354 = vpop.f32.mrb[0].mxu0
  %355 = vmatprep.mubr.f32.mxu0 %v251
  %356 = vmatmul.mubr.f32.gmra.mrb[0].mxu0 %v225
  %v357 = vpop.f32.mrb[0].mxu0
  %v358 = vadd.f32 %v61, %v357
  %v359 = vpop.f32.mrb[0].mxu0
  %360 = vmatprep.mubr.f32.mxu0 %v254
  %361 = vmatmul.mubr.f32.gmra.mrb[0].mxu0 %v227
  %v362 = vpop.f32.mrb[0].mxu0
  %v363 = vadd.f32 %v61, %v362
  %v364 = vpop.f32.mrb[0].mxu0
  %365 = vdwg.mxu0
  %v366 = vmax.f32 %v323, 0.0
  %v367 = vmax.f32 %v328, 0.0
  %v368 = vmax.f32 %v333, 0.0
  %v369 = vmax.f32 %v338, 0.0
  %v370 = vmax.f32 %v343, 0.0
  %v371 = vmax.f32 %v348, 0.0
  %v372 = vmax.f32 %v353, 0.0
  %v373 = vmax.f32 %v358, 0.0
  %v374 = vmax.f32 %v363, 0.0
  %v375 = vmax.f32 %v201, %v366
  %v376 = vmax.f32 %v202, %v367
  %v377 = vmax.f32 %v203, %v368
  %v378 = vmax.f32 %v204, %v369
  %v379 = vmax.f32 %v205, %v370
  %v380 = vmax.f32 %v206, %v371
  %v381 = vmax.f32 %v207, %v372
  %v382 = vmax.f32 %v208, %v373
  %v383 = vmax.f32 %v209, %v374
  %s384 = scalar_lea.vmem %s0, 288
  %v385 = vld [vmem:[%s384] sm:$0xff]
  %v386 = vld [vmem:[%s384 + $0x8] sm:$0xff]
  %v387 = vld [vmem:[%s384 + $0x10] sm:$0xff]
  %v388 = vld [vmem:[%s384 + $0x18] sm:$0xff]
  %v389 = vld [vmem:[%s384 + $0x20] sm:$0xff]
  %v390 = vld [vmem:[%s384 + $0x28] sm:$0xff]
  %v391 = vld [vmem:[%s384 + $0x30] sm:$0xff]
  %v392 = vld [vmem:[%s384 + $0x38] sm:$0xff]
  %v393 = vld [vmem:[%s384 + $0x40] sm:$0xff]
  %v394 = vld [vmem:[%s384 + $0x48] sm:$0xff]
  %v395 = vld [vmem:[%s384 + $0x50] sm:$0xff]
  %v396 = vld [vmem:[%s384 + $0x58] sm:$0xff]
  %v397 = vld [vmem:[%s384 + $0x60] sm:$0xff]
  %v398 = vld [vmem:[%s384 + $0x68] sm:$0xff]
  %v399 = vld [vmem:[%s384 + $0x70] sm:$0xff]
  %v400 = vld [vmem:[%s384 + $0x78] sm:$0xff]
  %v401 = vld [vmem:[%s384 + $0x80] sm:$0xff]
  %v402 = vld [vmem:[%s384 + $0x88] sm:$0xff]
  %v404 = vsel %vm63, %v386, 0
  %v407 = vsel %vm63, %v388, 0
  %v410 = vsel %vm63, %v390, 0
  %v413 = vsel %vm63, %v392, 0
  %v416 = vsel %vm63, %v394, 0
  %v419 = vsel %vm63, %v396, 0
  %v422 = vsel %vm63, %v398, 0
  %v425 = vsel %vm63, %v400, 0
  %v428 = vsel %vm63, %v402, 0
  %430 = vmatprep.subr.mxu0 0.0
  %431 = vmatpush1.msra.mxu0 %v38
  %432 = vmatprep.subr.mxu0 0.0
  %433 = vmatpush1.msra.mxu0 %v39
  %434 = vmatprep.subr.mxu0 0.0
  %435 = vmatpush1.msra.mxu0 %v40
  %436 = vmatprep.subr.mxu0 0.0
  %437 = vmatpush1.msra.mxu0 %v41
  %438 = vmatprep.subr.mxu0 0.0
  %439 = vmatpush1.msra.mxu0 %v42
  %440 = vmatprep.subr.mxu0 0.0
  %441 = vmatpush1.msra.mxu0 %v43
  %442 = vmatprep.subr.mxu0 0.0
  %443 = vmatpush1.msra.mxu0 %v44
  %444 = vmatprep.subr.mxu0 0.0
  %445 = vmatpush1.msra.mxu0 %v45
  %446 = vmatprep.subr.mxu0 0.0
  %447 = vmatpush1.msra.mxu0 %v46
  %448 = vmatprep.subr.mxu0 0.0
  %449 = vmatpush1.msra.mxu0 %v47
  %450 = vmatprep.subr.mxu0 0.0
  %451 = vmatpush1.msra.mxu0 %v48
  %452 = vmatprep.subr.mxu0 0.0
  %453 = vmatpush1.msra.mxu0 %v49
  %454 = vmatprep.subr.mxu0 0.0
  %455 = vmatpush1.msra.mxu0 %v50
  %456 = vmatprep.subr.mxu0 0.0
  %457 = vmatpush1.msra.mxu0 %v51
  %458 = vmatprep.subr.mxu0 0.0
  %459 = vmatpush1.msra.mxu0 %v52
  %460 = vmatprep.subr.mxu0 0.0
  %461 = vmatpush1.msra.mxu0 %v53
  %462 = vmatprep.subr.mxu0 0.0
  %463 = vmatpush1.msra.mxu0 %v54
  %464 = vmatprep.subr.mxu0 0.0
  %465 = vmatpush1.msra.mxu0 %v55
  %466 = vmatprep.subr.mxu0 0.0
  %467 = vmatpush1.msra.mxu0 0.0
  %468 = vmatprep.subr.mxu0 0.0
  %469 = vmatpush1.msra.mxu0 0.0
  %470 = vmatprep.subr.mxu0 0.0
  %471 = vmatpush1.msra.mxu0 0.0
  %472 = vmatprep.subr.mxu0 0.0
  %473 = vmatpush1.msra.mxu0 0.0
  %474 = vmatprep.subr.mxu0 0.0
  %475 = vmatpush1.msra.mxu0 0.0
  %476 = vmatprep.subr.mxu0 0.0
  %477 = vmatpush1.msra.mxu0 0.0
  %478 = vmatprep.subr.mxu0 0.0
  %479 = vmatpush1.msra.mxu0 0.0
  %480 = vmatprep.subr.mxu0 0.0
  %481 = vmatpush1.msra.mxu0 0.0
  %482 = vmatprep.subr.mxu0 0.0
  %483 = vmatpush1.msra.mxu0 0.0
  %484 = vmatprep.subr.mxu0 0.0
  %485 = vmatpush1.msra.mxu0 0.0
  %486 = vmatprep.subr.mxu0 0.0
  %487 = vmatpush1.msra.mxu0 0.0
  %488 = vmatprep.subr.mxu0 0.0
  %489 = vmatpush1.msra.mxu0 0.0
  %490 = vmatprep.subr.mxu0 0.0
  %491 = vmatpush1.msra.mxu0 0.0
  %492 = vmatprep.subr.mxu0 0.0
  %493 = vmatpush1.msra.mxu0 0.0
  %494 = vmatprep.mubr.f32.mxu0 %v404
  %495 = vmatmul.mubr.f32.gmra.mrb[0].mxu0 %v385
  %v496 = vpop.f32.mrb[0].mxu0
  %v497 = vadd.f32 %v61, %v496
  %v498 = vpop.f32.mrb[0].mxu0
  %499 = vmatprep.mubr.f32.mxu0 %v407
  %500 = vmatmul.mubr.f32.gmra.mrb[0].mxu0 %v387
  %v501 = vpop.f32.mrb[0].mxu0
  %v502 = vadd.f32 %v61, %v501
  %v503 = vpop.f32.mrb[0].mxu0
  %504 = vmatprep.mubr.f32.mxu0 %v410
  %505 = vmatmul.mubr.f32.gmra.mrb[0].mxu0 %v389
  %v506 = vpop.f32.mrb[0].mxu0
  %v507 = vadd.f32 %v61, %v506
  %v508 = vpop.f32.mrb[0].mxu0
  %509 = vmatprep.mubr.f32.mxu0 %v413
  %510 = vmatmul.mubr.f32.gmra.mrb[0].mxu0 %v391
  %v511 = vpop.f32.mrb[0].mxu0
  %v512 = vadd.f32 %v61, %v511
  %v513 = vpop.f32.mrb[0].mxu0
  %514 = vmatprep.mubr.f32.mxu0 %v416
  %515 = vmatmul.mubr.f32.gmra.mrb[0].mxu0 %v393
  %v516 = vpop.f32.mrb[0].mxu0
  %v517 = vadd.f32 %v61, %v516
  %v518 = vpop.f32.mrb[0].mxu0
  %519 = vmatprep.mubr.f32.mxu0 %v419
  %520 = vmatmul.mubr.f32.gmra.mrb[0].mxu0 %v395
  %v521 = vpop.f32.mrb[0].mxu0
  %v522 = vadd.f32 %v61, %v521
  %v523 = vpop.f32.mrb[0].mxu0
  %524 = vmatprep.mubr.f32.mxu0 %v422
  %525 = vmatmul.mubr.f32.gmra.mrb[0].mxu0 %v397
  %v526 = vpop.f32.mrb[0].mxu0
  %v527 = vadd.f32 %v61, %v526
  %v528 = vpop.f32.mrb[0].mxu0
  %529 = vmatprep.mubr.f32.mxu0 %v425
  %530 = vmatmul.mubr.f32.gmra.mrb[0].mxu0 %v399
  %v531 = vpop.f32.mrb[0].mxu0
  %v532 = vadd.f32 %v61, %v531
  %v533 = vpop.f32.mrb[0].mxu0
  %534 = vmatprep.mubr.f32.mxu0 %v428
  %535 = vmatmul.mubr.f32.gmra.mrb[0].mxu0 %v401
  %v536 = vpop.f32.mrb[0].mxu0
  %v537 = vadd.f32 %v61, %v536
  %v538 = vpop.f32.mrb[0].mxu0
  %539 = vdwg.mxu0
  %v540 = vmax.f32 %v497, 0.0
  %v541 = vmax.f32 %v502, 0.0
  %v542 = vmax.f32 %v507, 0.0
  %v543 = vmax.f32 %v512, 0.0
  %v544 = vmax.f32 %v517, 0.0
  %v545 = vmax.f32 %v522, 0.0
  %v546 = vmax.f32 %v527, 0.0
  %v547 = vmax.f32 %v532, 0.0
  %v548 = vmax.f32 %v537, 0.0
  %v549 = vmax.f32 %v375, %v540
  %v550 = vmax.f32 %v376, %v541
  %v551 = vmax.f32 %v377, %v542
  %v552 = vmax.f32 %v378, %v543
  %v553 = vmax.f32 %v379, %v544
  %v554 = vmax.f32 %v380, %v545
  %v555 = vmax.f32 %v381, %v546
  %v556 = vmax.f32 %v382, %v547
  %v557 = vmax.f32 %v383, %v548
  %s558 = scalar_lea.vmem %s0, 432
  %v559 = vld [vmem:[%s558] sm:$0xff]
  %v560 = vld [vmem:[%s558 + $0x8] sm:$0xff]
  %v561 = vld [vmem:[%s558 + $0x10] sm:$0xff]
  %v562 = vld [vmem:[%s558 + $0x18] sm:$0xff]
  %v563 = vld [vmem:[%s558 + $0x20] sm:$0xff]
  %v564 = vld [vmem:[%s558 + $0x28] sm:$0xff]
  %v565 = vld [vmem:[%s558 + $0x30] sm:$0xff]
  %v566 = vld [vmem:[%s558 + $0x38] sm:$0xff]
  %v567 = vld [vmem:[%s558 + $0x40] sm:$0xff]
  %v568 = vld [vmem:[%s558 + $0x48] sm:$0xff]
  %v569 = vld [vmem:[%s558 + $0x50] sm:$0xff]
  %v570 = vld [vmem:[%s558 + $0x58] sm:$0xff]
  %v571 = vld [vmem:[%s558 + $0x60] sm:$0xff]
  %v572 = vld [vmem:[%s558 + $0x68] sm:$0xff]
  %v573 = vld [vmem:[%s558 + $0x70] sm:$0xff]
  %v574 = vld [vmem:[%s558 + $0x78] sm:$0xff]
  %v575 = vld [vmem:[%s558 + $0x80] sm:$0xff]
  %v576 = vld [vmem:[%s558 + $0x88] sm:$0xff]
  %v578 = vsel %vm63, %v560, 0
  %v581 = vsel %vm63, %v562, 0
  %v584 = vsel %vm63, %v564, 0
  %v587 = vsel %vm63, %v566, 0
  %v590 = vsel %vm63, %v568, 0
  %v593 = vsel %vm63, %v570, 0
  %v596 = vsel %vm63, %v572, 0
  %v599 = vsel %vm63, %v574, 0
  %v602 = vsel %vm63, %v576, 0
  %604 = vmatprep.subr.mxu0 0.0
  %605 = vmatpush1.msra.mxu0 %v38
  %606 = vmatprep.subr.mxu0 0.0
  %607 = vmatpush1.msra.mxu0 %v39
  %608 = vmatprep.subr.mxu0 0.0
  %609 = vmatpush1.msra.mxu0 %v40
  %610 = vmatprep.subr.mxu0 0.0
  %611 = vmatpush1.msra.mxu0 %v41
  %612 = vmatprep.subr.mxu0 0.0
  %613 = vmatpush1.msra.mxu0 %v42
  %614 = vmatprep.subr.mxu0 0.0
  %615 = vmatpush1.msra.mxu0 %v43
  %616 = vmatprep.subr.mxu0 0.0
  %617 = vmatpush1.msra.mxu0 %v44
  %618 = vmatprep.subr.mxu0 0.0
  %619 = vmatpush1.msra.mxu0 %v45
  %620 = vmatprep.subr.mxu0 0.0
  %621 = vmatpush1.msra.mxu0 %v46
  %622 = vmatprep.subr.mxu0 0.0
  %623 = vmatpush1.msra.mxu0 %v47
  %624 = vmatprep.subr.mxu0 0.0
  %625 = vmatpush1.msra.mxu0 %v48
  %626 = vmatprep.subr.mxu0 0.0
  %627 = vmatpush1.msra.mxu0 %v49
  %628 = vmatprep.subr.mxu0 0.0
  %629 = vmatpush1.msra.mxu0 %v50
  %630 = vmatprep.subr.mxu0 0.0
  %631 = vmatpush1.msra.mxu0 %v51
  %632 = vmatprep.subr.mxu0 0.0
  %633 = vmatpush1.msra.mxu0 %v52
  %634 = vmatprep.subr.mxu0 0.0
  %635 = vmatpush1.msra.mxu0 %v53
  %636 = vmatprep.subr.mxu0 0.0
  %637 = vmatpush1.msra.mxu0 %v54
  %638 = vmatprep.subr.mxu0 0.0
  %639 = vmatpush1.msra.mxu0 %v55
  %640 = vmatprep.subr.mxu0 0.0
  %641 = vmatpush1.msra.mxu0 0.0
  %642 = vmatprep.subr.mxu0 0.0
  %643 = vmatpush1.msra.mxu0 0.0
  %644 = vmatprep.subr.mxu0 0.0
  %645 = vmatpush1.msra.mxu0 0.0
  %646 = vmatprep.subr.mxu0 0.0
  %647 = vmatpush1.msra.mxu0 0.0
  %648 = vmatprep.subr.mxu0 0.0
  %649 = vmatpush1.msra.mxu0 0.0
  %650 = vmatprep.subr.mxu0 0.0
  %651 = vmatpush1.msra.mxu0 0.0
  %652 = vmatprep.subr.mxu0 0.0
  %653 = vmatpush1.msra.mxu0 0.0
  %654 = vmatprep.subr.mxu0 0.0
  %655 = vmatpush1.msra.mxu0 0.0
  %656 = vmatprep.subr.mxu0 0.0
  %657 = vmatpush1.msra.mxu0 0.0
  %658 = vmatprep.subr.mxu0 0.0
  %659 = vmatpush1.msra.mxu0 0.0
  %660 = vmatprep.subr.mxu0 0.0
  %661 = vmatpush1.msra.mxu0 0.0
  %662 = vmatprep.subr.mxu0 0.0
  %663 = vmatpush1.msra.mxu0 0.0
  %664 = vmatprep.subr.mxu0 0.0
  %665 = vmatpush1.msra.mxu0 0.0
  %666 = vmatprep.subr.mxu0 0.0
  %667 = vmatpush1.msra.mxu0 0.0
  %668 = vmatprep.mubr.f32.mxu0 %v578
  %669 = vmatmul.mubr.f32.gmra.mrb[0].mxu0 %v559
  %v670 = vpop.f32.mrb[0].mxu0
  %v671 = vadd.f32 %v61, %v670
  %v672 = vpop.f32.mrb[0].mxu0
  %673 = vmatprep.mubr.f32.mxu0 %v581
  %674 = vmatmul.mubr.f32.gmra.mrb[0].mxu0 %v561
  %v675 = vpop.f32.mrb[0].mxu0
  %v676 = vadd.f32 %v61, %v675
  %v677 = vpop.f32.mrb[0].mxu0
  %678 = vmatprep.mubr.f32.mxu0 %v584
  %679 = vmatmul.mubr.f32.gmra.mrb[0].mxu0 %v563
  %v680 = vpop.f32.mrb[0].mxu0
  %v681 = vadd.f32 %v61, %v680
  %v682 = vpop.f32.mrb[0].mxu0
  %683 = vmatprep.mubr.f32.mxu0 %v587
  %684 = vmatmul.mubr.f32.gmra.mrb[0].mxu0 %v565
  %v685 = vpop.f32.mrb[0].mxu0
  %v686 = vadd.f32 %v61, %v685
  %v687 = vpop.f32.mrb[0].mxu0
  %688 = vmatprep.mubr.f32.mxu0 %v590
  %689 = vmatmul.mubr.f32.gmra.mrb[0].mxu0 %v567
  %v690 = vpop.f32.mrb[0].mxu0
  %v691 = vadd.f32 %v61, %v690
  %v692 = vpop.f32.mrb[0].mxu0
  %693 = vmatprep.mubr.f32.mxu0 %v593
  %694 = vmatmul.mubr.f32.gmra.mrb[0].mxu0 %v569
  %v695 = vpop.f32.mrb[0].mxu0
  %v696 = vadd.f32 %v61, %v695
  %v697 = vpop.f32.mrb[0].mxu0
  %698 = vmatprep.mubr.f32.mxu0 %v596
  %699 = vmatmul.mubr.f32.gmra.mrb[0].mxu0 %v571
  %v700 = vpop.f32.mrb[0].mxu0
  %v701 = vadd.f32 %v61, %v700
  %v702 = vpop.f32.mrb[0].mxu0
  %703 = vmatprep.mubr.f32.mxu0 %v599
  %704 = vmatmul.mubr.f32.gmra.mrb[0].mxu0 %v573
  %v705 = vpop.f32.mrb[0].mxu0
  %v706 = vadd.f32 %v61, %v705
  %v707 = vpop.f32.mrb[0].mxu0
  %708 = vmatprep.mubr.f32.mxu0 %v602
  %709 = vmatmul.mubr.f32.gmra.mrb[0].mxu0 %v575
  %v710 = vpop.f32.mrb[0].mxu0
  %v711 = vadd.f32 %v61, %v710
  %v712 = vpop.f32.mrb[0].mxu0
  %713 = vdwg.mxu0
  %v714 = vmax.f32 %v671, 0.0
  %v715 = vmax.f32 %v676, 0.0
  %v716 = vmax.f32 %v681, 0.0
  %v717 = vmax.f32 %v686, 0.0
  %v718 = vmax.f32 %v691, 0.0
  %v719 = vmax.f32 %v696, 0.0
  %v720 = vmax.f32 %v701, 0.0
  %v721 = vmax.f32 %v706, 0.0
  %v722 = vmax.f32 %v711, 0.0
  %v723 = vmax.f32 %v549, %v714
  %v724 = vmax.f32 %v550, %v715
  %v725 = vmax.f32 %v551, %v716
  %v726 = vmax.f32 %v552, %v717
  %v727 = vmax.f32 %v553, %v718
  %v728 = vmax.f32 %v554, %v719
  %v729 = vmax.f32 %v555, %v720
  %v730 = vmax.f32 %v556, %v721
  %v731 = vmax.f32 %v557, %v722
  %v732 = vadd.f32 %v723, %v724
  %v733 = vadd.f32 %v732, %v725
  %v734 = vadd.f32 %v733, %v726
  %v735 = vadd.f32 %v734, %v727
  %v736 = vadd.f32 %v735, %v728
  %v737 = vadd.f32 %v736, %v729
  %v738 = vadd.f32 %v737, %v730
  %v739 = vadd.f32 %v738, %v731
  %v740 = vrot.slane %v739, 4
  %v741 = vadd.f32 %v739, %v740
  %v742 = vrot.slane %v741, 2
  %v743 = vadd.f32 %v741, %v742
  %v744 = vrot.slane %v743, 1
  %v745 = vadd.f32 %v743, %v744
  %v746 = vrcp.pop 72.0
  %v747 = vmul.f32 %v745, %v746
  %v748 = vsub.f32 %v723, %v747
  %v749 = vsub.f32 %v724, %v747
  %v750 = vsub.f32 %v725, %v747
  %v751 = vsub.f32 %v726, %v747
  %v752 = vsub.f32 %v727, %v747
  %v753 = vsub.f32 %v728, %v747
  %v754 = vsub.f32 %v729, %v747
  %v755 = vsub.f32 %v730, %v747
  %v756 = vsub.f32 %v731, %v747
  %v757 = vmul.f32 %v748, %v748
  %v758 = vmul.f32 %v749, %v749
  %v759 = vmul.f32 %v750, %v750
  %v760 = vmul.f32 %v751, %v751
  %v761 = vmul.f32 %v752, %v752
  %v762 = vmul.f32 %v753, %v753
  %v763 = vmul.f32 %v754, %v754
  %v764 = vmul.f32 %v755, %v755
  %v765 = vmul.f32 %v756, %v756
  %v766 = vadd.f32 %v757, %v758
  %v767 = vadd.f32 %v766, %v759
  %v768 = vadd.f32 %v767, %v760
  %v769 = vadd.f32 %v768, %v761
  %v770 = vadd.f32 %v769, %v762
  %v771 = vadd.f32 %v770, %v763
  %v772 = vadd.f32 %v771, %v764
  %v773 = vadd.f32 %v772, %v765
  %v774 = vrot.slane %v773, 4
  %v775 = vadd.f32 %v773, %v774
  %v776 = vrot.slane %v775, 2
  %v777 = vadd.f32 %v775, %v776
  %v778 = vrot.slane %v777, 1
  %v779 = vadd.f32 %v777, %v778
  %v780 = vmul.f32 %v779, %v746
  %v781 = vadd.f32 %v780, 1e-05
  %v782 = vrsqrt.pop %v781
  %v783 = vmul.f32 %v748, %v782
  %v784 = vmul.f32 %v749, %v782
  %v785 = vmul.f32 %v750, %v782
  %v786 = vmul.f32 %v751, %v782
  %v787 = vmul.f32 %v752, %v782
  %v788 = vmul.f32 %v753, %v782
  %v789 = vmul.f32 %v754, %v782
  %v790 = vmul.f32 %v755, %v782
  %v791 = vmul.f32 %v756, %v782
  %v792 = vld [vmem:[%s3] sm:$0x1]
  %v794 = vlaneseq
  %v795 = vshrl.u32 %v794, 7
  %v796 = vsub.s32 0, %v795
  %v797 = vrot.slane %v792, %v796
  %v799 = vmul.f32 %v783, %v797
  %v800 = vmul.f32 %v784, %v797
  %v801 = vmul.f32 %v785, %v797
  %v802 = vmul.f32 %v786, %v797
  %v803 = vmul.f32 %v787, %v797
  %v804 = vmul.f32 %v788, %v797
  %v805 = vmul.f32 %v789, %v797
  %v806 = vmul.f32 %v790, %v797
  %v807 = vmul.f32 %v791, %v797
  %v808 = vld [vmem:[%s4] sm:$0x1]
  %v810 = vlaneseq
  %v811 = vshrl.u32 %v810, 7
  %v812 = vsub.s32 0, %v811
  %v813 = vrot.slane %v808, %v812
  %v815 = vadd.f32 %v799, %v813
  %v816 = vadd.f32 %v800, %v813
  %v817 = vadd.f32 %v801, %v813
  %v818 = vadd.f32 %v802, %v813
  %v819 = vadd.f32 %v803, %v813
  %v820 = vadd.f32 %v804, %v813
  %v821 = vadd.f32 %v805, %v813
  %v822 = vadd.f32 %v806, %v813
  %v823 = vadd.f32 %v807, %v813
  %824 = vst [vmem:[%s5] sm:$0xff] %v815
  %825 = vst [vmem:[%s5 + $0x8] sm:$0xff] %v816
  %826 = vst [vmem:[%s5 + $0x10] sm:$0xff] %v817
  %827 = vst [vmem:[%s5 + $0x18] sm:$0xff] %v818
  %828 = vst [vmem:[%s5 + $0x20] sm:$0xff] %v819
  %829 = vst [vmem:[%s5 + $0x28] sm:$0xff] %v820
  %830 = vst [vmem:[%s5 + $0x30] sm:$0xff] %v821
  %831 = vst [vmem:[%s5 + $0x38] sm:$0xff] %v822
  %832 = vst [vmem:[%s5 + $0x40] sm:$0xff] %v823
  // Predicated region
  $region22: #{crnn_forward.6} parent=0 // pred_check
    _
  $region23: #{crnn_forward.6} parent=0 // pred_check_branch
    %834 = sbr.rel (0) target = $region25
  $region24: #{crnn_forward.6} parent=0 // pred_region
    _
  $region25: #{crnn_forward.6} parent=0 // pred_fallthru
    _
  // Predicated region
  $region26: #{crnn_forward.6} parent=0 // pred_check
    _
  $region27: #{crnn_forward.6} parent=0 // pred_check_branch
    %836 = sbr.rel (0) target = $region29
  $region28: #{crnn_forward.6} parent=0 // pred_region
    _
  $region29: #{crnn_forward.6} parent=0 // pred_fallthru
    _

// kernel: crnn_forward.7
$region0: #{crnn_forward.7}
  #allocation0 [shape = 'u32[]', space=smem, size = 0x4, offset = 0x4, fixed_abs, tag = 'smem constant byte address 0x4 - core index']
  #allocation1 [shape = 'u32[144,128]{1,0:T(1,128)}', space=vmem, size = 0x12000, scoped, tag = 'internal scratch']
  %s0 = inlined_call_operand.vmem [shape: f32[16,2,288], index: 0, kind: input, shape index: {}]
  %s1 = inlined_call_operand.vmem [shape: f32[288,128], index: 1, kind: input, shape index: {}]
  %s2 = inlined_call_operand.vmem [shape: f32[1,128], index: 2, kind: input, shape index: {}]
  %s3 = inlined_call_operand.vmem [shape: f32[1,128], index: 3, kind: input, shape index: {}]
  %s4 = inlined_call_operand.vmem [shape: f32[1,128], index: 4, kind: input, shape index: {}]
  %s5 = inlined_call_operand.vmem [shape: f32[2,128], index: 5, kind: output, shape index: {}]
  %s6 = sld [smem:[#allocation0]]
  $region30: #{crnn_forward.7} parent=0
    _
  %s8 = ssub.s32 1, %s6
  %s9 = scalar_select 0, %s8, %s6
  // Predicated region
  $region2: #{crnn_forward.7} parent=0 // pred_check
    _
  $region3: #{crnn_forward.7} parent=0 // pred_check_branch
    %11 = sbr.rel (0) target = $region5
  $region4: #{crnn_forward.7} parent=0 // pred_region
    _
  $region5: #{crnn_forward.7} parent=0 // pred_fallthru
    _
  // Predicated region
  $region6: #{crnn_forward.7} parent=0 // pred_check
    _
  $region7: #{crnn_forward.7} parent=0 // pred_check_branch
    %13 = sbr.rel (0) target = $region9
  $region8: #{crnn_forward.7} parent=0 // pred_region
    _
  $region9: #{crnn_forward.7} parent=0 // pred_fallthru
    _
  // Predicated region
  $region10: #{crnn_forward.7} parent=0 // pred_check
    _
  $region11: #{crnn_forward.7} parent=0 // pred_check_branch
    %15 = sbr.rel (0) target = $region13
  $region12: #{crnn_forward.7} parent=0 // pred_region
    _
  $region13: #{crnn_forward.7} parent=0 // pred_fallthru
    _
  // Predicated region
  $region14: #{crnn_forward.7} parent=0 // pred_check
    _
  $region15: #{crnn_forward.7} parent=0 // pred_check_branch
    %17 = sbr.rel (0) target = $region17
  $region16: #{crnn_forward.7} parent=0 // pred_region
    _
  $region17: #{crnn_forward.7} parent=0 // pred_fallthru
    _
  // Predicated region
  $region18: #{crnn_forward.7} parent=0 // pred_check
    _
  $region19: #{crnn_forward.7} parent=0 // pred_check_branch
    %19 = sbr.rel (0) target = $region21
  $region20: #{crnn_forward.7} parent=0 // pred_region
    _
  $region21: #{crnn_forward.7} parent=0 // pred_fallthru
    _
  %v20 = vld [vmem:[%s0] sm:$0x3f]
  %v21 = vld [vmem:[%s1] sm:$0xff]
  %v22 = vld [vmem:[%s1 + $0x8] sm:$0xff]
  %v23 = vld [vmem:[%s1 + $0x10] sm:$0xff]
  %v24 = vld [vmem:[%s1 + $0x18] sm:$0xff]
  %v25 = vld [vmem:[%s1 + $0x20] sm:$0xff]
  %v26 = vld [vmem:[%s1 + $0x28] sm:$0xff]
  %v27 = vld [vmem:[%s1 + $0x30] sm:$0xff]
  %v28 = vld [vmem:[%s1 + $0x38] sm:$0xff]
  %v29 = vld [vmem:[%s1 + $0x40] sm:$0xff]
  %v30 = vld [vmem:[%s1 + $0x48] sm:$0xff]
  %v31 = vld [vmem:[%s1 + $0x50] sm:$0xff]
  %v32 = vld [vmem:[%s1 + $0x58] sm:$0xff]
  %v33 = vld [vmem:[%s1 + $0x60] sm:$0xff]
  %v34 = vld [vmem:[%s1 + $0x68] sm:$0xff]
  %v35 = vld [vmem:[%s1 + $0x70] sm:$0xff]
  %v36 = vld [vmem:[%s1 + $0x78] sm:$0xff]
  %v37 = vld [vmem:[%s1 + $0x80] sm:$0xff]
  %v38 = vld [vmem:[%s1 + $0x88] sm:$0xff]
  %v39 = vld [vmem:[%s1 + $0x90] sm:$0xff]
  %v40 = vld [vmem:[%s1 + $0x98] sm:$0xff]
  %v41 = vld [vmem:[%s1 + $0xa0] sm:$0xff]
  %v42 = vld [vmem:[%s1 + $0xa8] sm:$0xff]
  %v43 = vld [vmem:[%s1 + $0xb0] sm:$0xff]
  %v44 = vld [vmem:[%s1 + $0xb8] sm:$0xff]
  %v45 = vld [vmem:[%s1 + $0xc0] sm:$0xff]
  %v46 = vld [vmem:[%s1 + $0xc8] sm:$0xff]
  %v47 = vld [vmem:[%s1 + $0xd0] sm:$0xff]
  %v48 = vld [vmem:[%s1 + $0xd8] sm:$0xff]
  %v49 = vld [vmem:[%s1 + $0xe0] sm:$0xff]
  %v50 = vld [vmem:[%s1 + $0xe8] sm:$0xff]
  %v51 = vld [vmem:[%s1 + $0xf0] sm:$0xff]
  %v52 = vld [vmem:[%s1 + $0xf8] sm:$0xff]
  %v53 = vld [vmem:[%s1 + $0x100] sm:$0xff]
  %v54 = vld [vmem:[%s1 + $0x108] sm:$0xff]
  %v55 = vld [vmem:[%s1 + $0x110] sm:$0xff]
  %v56 = vld [vmem:[%s1 + $0x118] sm:$0xff]
  %v57 = vld [vmem:[%s2] sm:$0x1]
  %v59 = vlaneseq
  %v60 = vshrl.u32 %v59, 7
  %v61 = vsub.s32 0, %v60
  %v62 = vrot.slane %v57, %v61
  %v65 = vcombine.high %v20, %v20
  %v67 = vunpack.c.l.s4 1983009808
  %v68 = vunpack.c.0.s8 %v67
  %v69 = vlaneseq
  %v70 = vshrl.u32 %v69, 7
  %v71 = vsub.s32 %v68, %v70
  %v72 = vrot.slane %v20, %v71
  %v74 = vunpack.c.l.s4 1983009808
  %v75 = vunpack.c.0.s8 %v74
  %v76 = vlaneseq
  %v77 = vshrl.u32 %v76, 7
  %v78 = vsub.s32 %v75, %v77
  %v79 = vrot.slane %v65, %v78
  %v80 = vcombine.high %v72, %v72
  %vm83 = vcmask 261120
  %v84 = vsel %vm83, %v79, 0
  %86 = vmatprep.subr.mxu0 0.0
  %87 = vmatpush1.msra.mxu0 %v21
  %88 = vmatprep.subr.mxu0 0.0
  %89 = vmatpush1.msra.mxu0 %v22
  %90 = vmatprep.subr.mxu0 0.0
  %91 = vmatpush1.msra.mxu0 %v23
  %92 = vmatprep.subr.mxu0 0.0
  %93 = vmatpush1.msra.mxu0 %v24
  %94 = vmatprep.subr.mxu0 0.0
  %95 = vmatpush1.msra.mxu0 %v25
  %96 = vmatprep.subr.mxu0 0.0
  %97 = vmatpush1.msra.mxu0 %v26
  %98 = vmatprep.subr.mxu0 0.0
  %99 = vmatpush1.msra.mxu0 %v27
  %100 = vmatprep.subr.mxu0 0.0
  %101 = vmatpush1.msra.mxu0 %v28
  %102 = vmatprep.subr.mxu0 0.0
  %103 = vmatpush1.msra.mxu0 %v29
  %104 = vmatprep.subr.mxu0 0.0
  %105 = vmatpush1.msra.mxu0 %v30
  %106 = vmatprep.subr.mxu0 0.0
  %107 = vmatpush1.msra.mxu0 %v31
  %108 = vmatprep.subr.mxu0 0.0
  %109 = vmatpush1.msra.mxu0 %v32
  %110 = vmatprep.subr.mxu0 0.0
  %111 = vmatpush1.msra.mxu0 %v33
  %112 = vmatprep.subr.mxu0 0.0
  %113 = vmatpush1.msra.mxu0 %v34
  %114 = vmatprep.subr.mxu0 0.0
  %115 = vmatpush1.msra.mxu0 %v35
  %116 = vmatprep.subr.mxu0 0.0
  %117 = vmatpush1.msra.mxu0 %v36
  %118 = vmatprep.subr.mxu0 0.0
  %119 = vmatpush1.msra.mxu0 %v37
  %120 = vmatprep.subr.mxu0 0.0
  %121 = vmatpush1.msra.mxu0 %v38
  %122 = vmatprep.subr.mxu0 0.0
  %123 = vmatpush1.msra.mxu0 %v39
  %124 = vmatprep.subr.mxu0 0.0
  %125 = vmatpush1.msra.mxu0 %v40
  %126 = vmatprep.subr.mxu0 0.0
  %127 = vmatpush1.msra.mxu0 %v41
  %128 = vmatprep.subr.mxu0 0.0
  %129 = vmatpush1.msra.mxu0 %v42
  %130 = vmatprep.subr.mxu0 0.0
  %131 = vmatpush1.msra.mxu0 %v43
  %132 = vmatprep.subr.mxu0 0.0
  %133 = vmatpush1.msra.mxu0 %v44
  %134 = vmatprep.subr.mxu0 0.0
  %135 = vmatpush1.msra.mxu0 %v45
  %136 = vmatprep.subr.mxu0 0.0
  %137 = vmatpush1.msra.mxu0 %v46
  %138 = vmatprep.subr.mxu0 0.0
  %139 = vmatpush1.msra.mxu0 %v47
  %140 = vmatprep.subr.mxu0 0.0
  %141 = vmatpush1.msra.mxu0 %v48
  %142 = vmatprep.subr.mxu0 0.0
  %143 = vmatpush1.msra.mxu0 %v49
  %144 = vmatprep.subr.mxu0 0.0
  %145 = vmatpush1.msra.mxu0 %v50
  %146 = vmatprep.subr.mxu0 0.0
  %147 = vmatpush1.msra.mxu0 %v51
  %148 = vmatprep.subr.mxu0 0.0
  %149 = vmatpush1.msra.mxu0 %v52
  %150 = vmatprep.mubr.f32.mxu0 %v80
  %151 = vmatmul.mubr.f32.gmra.mrb[0].mxu0 %v72
  %v152 = vpop.f32.mrb[0].mxu0
  %v153 = vadd.f32 %v62, %v152
  %v154 = vpop.f32.mrb[0].mxu0
  %155 = vdwg.mxu0
  %156 = vmatprep.subr.mxu0 0.0
  %157 = vmatpush1.msra.mxu0 %v53
  %158 = vmatprep.subr.mxu0 0.0
  %159 = vmatpush1.msra.mxu0 %v54
  %160 = vmatprep.subr.mxu0 0.0
  %161 = vmatpush1.msra.mxu0 %v55
  %162 = vmatprep.subr.mxu0 0.0
  %163 = vmatpush1.msra.mxu0 %v56
  %164 = vmatprep.subr.mxu0 0.0
  %165 = vmatpush1.msra.mxu0 0.0
  %166 = vmatprep.subr.mxu0 0.0
  %167 = vmatpush1.msra.mxu0 0.0
  %168 = vmatprep.subr.mxu0 0.0
  %169 = vmatpush1.msra.mxu0 0.0
  %170 = vmatprep.subr.mxu0 0.0
  %171 = vmatpush1.msra.mxu0 0.0
  %172 = vmatprep.subr.mxu0 0.0
  %173 = vmatpush1.msra.mxu0 0.0
  %174 = vmatprep.subr.mxu0 0.0
  %175 = vmatpush1.msra.mxu0 0.0
  %176 = vmatprep.subr.mxu0 0.0
  %177 = vmatpush1.msra.mxu0 0.0
  %178 = vmatprep.subr.mxu0 0.0
  %179 = vmatpush1.msra.mxu0 0.0
  %180 = vmatprep.subr.mxu0 0.0
  %181 = vmatpush1.msra.mxu0 0.0
  %182 = vmatprep.subr.mxu0 0.0
  %183 = vmatpush1.msra.mxu0 0.0
  %184 = vmatprep.subr.mxu0 0.0
  %185 = vmatpush1.msra.mxu0 0.0
  %186 = vmatprep.subr.mxu0 0.0
  %187 = vmatpush1.msra.mxu0 0.0
  %188 = vmatprep.subr.mxu0 0.0
  %189 = vmatpush1.msra.mxu0 0.0
  %190 = vmatprep.subr.mxu0 0.0
  %191 = vmatpush1.msra.mxu0 0.0
  %192 = vmatprep.subr.mxu0 0.0
  %193 = vmatpush1.msra.mxu0 0.0
  %194 = vmatprep.subr.mxu0 0.0
  %195 = vmatpush1.msra.mxu0 0.0
  %196 = vmatprep.subr.mxu0 0.0
  %197 = vmatpush1.msra.mxu0 0.0
  %198 = vmatprep.subr.mxu0 0.0
  %199 = vmatpush1.msra.mxu0 0.0
  %200 = vmatprep.subr.mxu0 0.0
  %201 = vmatpush1.msra.mxu0 0.0
  %202 = vmatprep.subr.mxu0 0.0
  %203 = vmatpush1.msra.mxu0 0.0
  %204 = vmatprep.subr.mxu0 0.0
  %205 = vmatpush1.msra.mxu0 0.0
  %206 = vmatprep.subr.mxu0 0.0
  %207 = vmatpush1.msra.mxu0 0.0
  %208 = vmatprep.subr.mxu0 0.0
  %209 = vmatpush1.msra.mxu0 0.0
  %210 = vmatprep.subr.mxu0 0.0
  %211 = vmatpush1.msra.mxu0 0.0
  %212 = vmatprep.subr.mxu0 0.0
  %213 = vmatpush1.msra.mxu0 0.0
  %214 = vmatprep.subr.mxu0 0.0
  %215 = vmatpush1.msra.mxu0 0.0
  %216 = vmatprep.subr.mxu0 0.0
  %217 = vmatpush1.msra.mxu0 0.0
  %218 = vmatprep.subr.mxu0 0.0
  %219 = vmatpush1.msra.mxu0 0.0
  %220 = vmatprep.mubr.f32.mxu0 0.0
  %221 = vmatmul.mubr.f32.gmra.mrb[0].mxu0 %v84
  %v222 = vpop.f32.mrb[0].mxu0
  %v223 = vadd.f32 %v153, %v222
  %v224 = vpop.f32.mrb[0].mxu0
  %225 = vdwg.mxu0
  %v226 = vmax.f32 %v223, 0.0
  %s227 = scalar_lea.vmem %s0, 6
  %v228 = vld [vmem:[%s227] sm:$0x3f]
  %v230 = vcombine.high %v228, %v228
  %v232 = vunpack.c.l.s4 1983009808
  %v233 = vunpack.c.0.s8 %v232
  %v234 = vlaneseq
  %v235 = vshrl.u32 %v234, 7
  %v236 = vsub.s32 %v233, %v235
  %v237 = vrot.slane %v228, %v236
  %v239 = vunpack.c.l.s4 1983009808
  %v240 = vunpack.c.0.s8 %v239
  %v241 = vlaneseq
  %v242 = vshrl.u32 %v241, 7
  %v243 = vsub.s32 %v240, %v242
  %v244 = vrot.slane %v230, %v243
  %v245 = vcombine.high %v237, %v237
  %v248 = vsel %vm83, %v244, 0
  %250 = vmatprep.subr.mxu0 0.0
  %251 = vmatpush1.msra.mxu0 %v21
  %252 = vmatprep.subr.mxu0 0.0
  %253 = vmatpush1.msra.mxu0 %v22
  %254 = vmatprep.subr.mxu0 0.0
  %255 = vmatpush1.msra.mxu0 %v23
  %256 = vmatprep.subr.mxu0 0.0
  %257 = vmatpush1.msra.mxu0 %v24
  %258 = vmatprep.subr.mxu0 0.0
  %259 = vmatpush1.msra.mxu0 %v25
  %260 = vmatprep.subr.mxu0 0.0
  %261 = vmatpush1.msra.mxu0 %v26
  %262 = vmatprep.subr.mxu0 0.0
  %263 = vmatpush1.msra.mxu0 %v27
  %264 = vmatprep.subr.mxu0 0.0
  %265 = vmatpush1.msra.mxu0 %v28
  %266 = vmatprep.subr.mxu0 0.0
  %267 = vmatpush1.msra.mxu0 %v29
  %268 = vmatprep.subr.mxu0 0.0
  %269 = vmatpush1.msra.mxu0 %v30
  %270 = vmatprep.subr.mxu0 0.0
  %271 = vmatpush1.msra.mxu0 %v31
  %272 = vmatprep.subr.mxu0 0.0
  %273 = vmatpush1.msra.mxu0 %v32
  %274 = vmatprep.subr.mxu0 0.0
  %275 = vmatpush1.msra.mxu0 %v33
  %276 = vmatprep.subr.mxu0 0.0
  %277 = vmatpush1.msra.mxu0 %v34
  %278 = vmatprep.subr.mxu0 0.0
  %279 = vmatpush1.msra.mxu0 %v35
  %280 = vmatprep.subr.mxu0 0.0
  %281 = vmatpush1.msra.mxu0 %v36
  %282 = vmatprep.subr.mxu0 0.0
  %283 = vmatpush1.msra.mxu0 %v37
  %284 = vmatprep.subr.mxu0 0.0
  %285 = vmatpush1.msra.mxu0 %v38
  %286 = vmatprep.subr.mxu0 0.0
  %287 = vmatpush1.msra.mxu0 %v39
  %288 = vmatprep.subr.mxu0 0.0
  %289 = vmatpush1.msra.mxu0 %v40
  %290 = vmatprep.subr.mxu0 0.0
  %291 = vmatpush1.msra.mxu0 %v41
  %292 = vmatprep.subr.mxu0 0.0
  %293 = vmatpush1.msra.mxu0 %v42
  %294 = vmatprep.subr.mxu0 0.0
  %295 = vmatpush1.msra.mxu0 %v43
  %296 = vmatprep.subr.mxu0 0.0
  %297 = vmatpush1.msra.mxu0 %v44
  %298 = vmatprep.subr.mxu0 0.0
  %299 = vmatpush1.msra.mxu0 %v45
  %300 = vmatprep.subr.mxu0 0.0
  %301 = vmatpush1.msra.mxu0 %v46
  %302 = vmatprep.subr.mxu0 0.0
  %303 = vmatpush1.msra.mxu0 %v47
  %304 = vmatprep.subr.mxu0 0.0
  %305 = vmatpush1.msra.mxu0 %v48
  %306 = vmatprep.subr.mxu0 0.0
  %307 = vmatpush1.msra.mxu0 %v49
  %308 = vmatprep.subr.mxu0 0.0
  %309 = vmatpush1.msra.mxu0 %v50
  %310 = vmatprep.subr.mxu0 0.0
  %311 = vmatpush1.msra.mxu0 %v51
  %312 = vmatprep.subr.mxu0 0.0
  %313 = vmatpush1.msra.mxu0 %v52
  %314 = vmatprep.mubr.f32.mxu0 %v245
  %315 = vmatmul.mubr.f32.gmra.mrb[0].mxu0 %v237
  %v316 = vpop.f32.mrb[0].mxu0
  %v317 = vadd.f32 %v62, %v316
  %v318 = vpop.f32.mrb[0].mxu0
  %319 = vdwg.mxu0
  %320 = vmatprep.subr.mxu0 0.0
  %321 = vmatpush1.msra.mxu0 %v53
  %322 = vmatprep.subr.mxu0 0.0
  %323 = vmatpush1.msra.mxu0 %v54
  %324 = vmatprep.subr.mxu0 0.0
  %325 = vmatpush1.msra.mxu0 %v55
  %326 = vmatprep.subr.mxu0 0.0
  %327 = vmatpush1.msra.mxu0 %v56
  %328 = vmatprep.subr.mxu0 0.0
  %329 = vmatpush1.msra.mxu0 0.0
  %330 = vmatprep.subr.mxu0 0.0
  %331 = vmatpush1.msra.mxu0 0.0
  %332 = vmatprep.subr.mxu0 0.0
  %333 = vmatpush1.msra.mxu0 0.0
  %334 = vmatprep.subr.mxu0 0.0
  %335 = vmatpush1.msra.mxu0 0.0
  %336 = vmatprep.subr.mxu0 0.0
  %337 = vmatpush1.msra.mxu0 0.0
  %338 = vmatprep.subr.mxu0 0.0
  %339 = vmatpush1.msra.mxu0 0.0
  %340 = vmatprep.subr.mxu0 0.0
  %341 = vmatpush1.msra.mxu0 0.0
  %342 = vmatprep.subr.mxu0 0.0
  %343 = vmatpush1.msra.mxu0 0.0
  %344 = vmatprep.subr.mxu0 0.0
  %345 = vmatpush1.msra.mxu0 0.0
  %346 = vmatprep.subr.mxu0 0.0
  %347 = vmatpush1.msra.mxu0 0.0
  %348 = vmatprep.subr.mxu0 0.0
  %349 = vmatpush1.msra.mxu0 0.0
  %350 = vmatprep.subr.mxu0 0.0
  %351 = vmatpush1.msra.mxu0 0.0
  %352 = vmatprep.subr.mxu0 0.0
  %353 = vmatpush1.msra.mxu0 0.0
  %354 = vmatprep.subr.mxu0 0.0
  %355 = vmatpush1.msra.mxu0 0.0
  %356 = vmatprep.subr.mxu0 0.0
  %357 = vmatpush1.msra.mxu0 0.0
  %358 = vmatprep.subr.mxu0 0.0
  %359 = vmatpush1.msra.mxu0 0.0
  %360 = vmatprep.subr.mxu0 0.0
  %361 = vmatpush1.msra.mxu0 0.0
  %362 = vmatprep.subr.mxu0 0.0
  %363 = vmatpush1.msra.mxu0 0.0
  %364 = vmatprep.subr.mxu0 0.0
  %365 = vmatpush1.msra.mxu0 0.0
  %366 = vmatprep.subr.mxu0 0.0
  %367 = vmatpush1.msra.mxu0 0.0
  %368 = vmatprep.subr.mxu0 0.0
  %369 = vmatpush1.msra.mxu0 0.0
  %370 = vmatprep.subr.mxu0 0.0
  %371 = vmatpush1.msra.mxu0 0.0
  %372 = vmatprep.subr.mxu0 0.0
  %373 = vmatpush1.msra.mxu0 0.0
  %374 = vmatprep.subr.mxu0 0.0
  %375 = vmatpush1.msra.mxu0 0.0
  %376 = vmatprep.subr.mxu0 0.0
  %377 = vmatpush1.msra.mxu0 0.0
  %378 = vmatprep.subr.mxu0 0.0
  %379 = vmatpush1.msra.mxu0 0.0
  %380 = vmatprep.subr.mxu0 0.0
  %381 = vmatpush1.msra.mxu0 0.0
  %382 = vmatprep.subr.mxu0 0.0
  %383 = vmatpush1.msra.mxu0 0.0
  %384 = vmatprep.mubr.f32.mxu0 0.0
  %385 = vmatmul.mubr.f32.gmra.mrb[0].mxu0 %v248
  %v386 = vpop.f32.mrb[0].mxu0
  %v387 = vadd.f32 %v317, %v386
  %v388 = vpop.f32.mrb[0].mxu0
  %389 = vdwg.mxu0
  %v390 = vmax.f32 %v387, 0.0
  %v391 = vmax.f32 %v226, %v390
  %s392 = scalar_lea.vmem %s0, 12
  %v393 = vld [vmem:[%s392] sm:$0x3f]
  %v395 = vcombine.high %v393, %v393
  %v397 = vunpack.c.l.s4 1983009808
  %v398 = vunpack.c.0.s8 %v397
  %v399 = vlaneseq
  %v400 = vshrl.u32 %v399, 7
  %v401 = vsub.s32 %v398, %v400
  %v402 = vrot.slane %v393, %v401
  %v404 = vunpack.c.l.s4 1983009808
  %v405 = vunpack.c.0.s8 %v404
  %v406 = vlaneseq
  %v407 = vshrl.u32 %v406, 7
  %v408 = vsub.s32 %v405, %v407
  %v409 = vrot.slane %v395, %v408
  %v410 = vcombine.high %v402, %v402
  %v413 = vsel %vm83, %v409, 0
  %415 = vmatprep.subr.mxu0 0.0
  %416 = vmatpush1.msra.mxu0 %v21
  %417 = vmatprep.subr.mxu0 0.0
  %418 = vmatpush1.msra.mxu0 %v22
  %419 = vmatprep.subr.mxu0 0.0
  %420 = vmatpush1.msra.mxu0 %v23
  %421 = vmatprep.subr.mxu0 0.0
  %422 = vmatpush1.msra.mxu0 %v24
  %423 = vmatprep.subr.mxu0 0.0
  %424 = vmatpush1.msra.mxu0 %v25
  %425 = vmatprep.subr.mxu0 0.0
  %426 = vmatpush1.msra.mxu0 %v26
  %427 = vmatprep.subr.mxu0 0.0
  %428 = vmatpush1.msra.mxu0 %v27
  %429 = vmatprep.subr.mxu0 0.0
  %430 = vmatpush1.msra.mxu0 %v28
  %431 = vmatprep.subr.mxu0 0.0
  %432 = vmatpush1.msra.mxu0 %v29
  %433 = vmatprep.subr.mxu0 0.0
  %434 = vmatpush1.msra.mxu0 %v30
  %435 = vmatprep.subr.mxu0 0.0
  %436 = vmatpush1.msra.mxu0 %v31
  %437 = vmatprep.subr.mxu0 0.0
  %438 = vmatpush1.msra.mxu0 %v32
  %439 = vmatprep.subr.mxu0 0.0
  %440 = vmatpush1.msra.mxu0 %v33
  %441 = vmatprep.subr.mxu0 0.0
  %442 = vmatpush1.msra.mxu0 %v34
  %443 = vmatprep.subr.mxu0 0.0
  %444 = vmatpush1.msra.mxu0 %v35
  %445 = vmatprep.subr.mxu0 0.0
  %446 = vmatpush1.msra.mxu0 %v36
  %447 = vmatprep.subr.mxu0 0.0
  %448 = vmatpush1.msra.mxu0 %v37
  %449 = vmatprep.subr.mxu0 0.0
  %450 = vmatpush1.msra.mxu0 %v38
  %451 = vmatprep.subr.mxu0 0.0
  %452 = vmatpush1.msra.mxu0 %v39
  %453 = vmatprep.subr.mxu0 0.0
  %454 = vmatpush1.msra.mxu0 %v40
  %455 = vmatprep.subr.mxu0 0.0
  %456 = vmatpush1.msra.mxu0 %v41
  %457 = vmatprep.subr.mxu0 0.0
  %458 = vmatpush1.msra.mxu0 %v42
  %459 = vmatprep.subr.mxu0 0.0
  %460 = vmatpush1.msra.mxu0 %v43
  %461 = vmatprep.subr.mxu0 0.0
  %462 = vmatpush1.msra.mxu0 %v44
  %463 = vmatprep.subr.mxu0 0.0
  %464 = vmatpush1.msra.mxu0 %v45
  %465 = vmatprep.subr.mxu0 0.0
  %466 = vmatpush1.msra.mxu0 %v46
  %467 = vmatprep.subr.mxu0 0.0
  %468 = vmatpush1.msra.mxu0 %v47
  %469 = vmatprep.subr.mxu0 0.0
  %470 = vmatpush1.msra.mxu0 %v48
  %471 = vmatprep.subr.mxu0 0.0
  %472 = vmatpush1.msra.mxu0 %v49
  %473 = vmatprep.subr.mxu0 0.0
  %474 = vmatpush1.msra.mxu0 %v50
  %475 = vmatprep.subr.mxu0 0.0
  %476 = vmatpush1.msra.mxu0 %v51
  %477 = vmatprep.subr.mxu0 0.0
  %478 = vmatpush1.msra.mxu0 %v52
  %479 = vmatprep.mubr.f32.mxu0 %v410
  %480 = vmatmul.mubr.f32.gmra.mrb[0].mxu0 %v402
  %v481 = vpop.f32.mrb[0].mxu0
  %v482 = vadd.f32 %v62, %v481
  %v483 = vpop.f32.mrb[0].mxu0
  %484 = vdwg.mxu0
  %485 = vmatprep.subr.mxu0 0.0
  %486 = vmatpush1.msra.mxu0 %v53
  %487 = vmatprep.subr.mxu0 0.0
  %488 = vmatpush1.msra.mxu0 %v54
  %489 = vmatprep.subr.mxu0 0.0
  %490 = vmatpush1.msra.mxu0 %v55
  %491 = vmatprep.subr.mxu0 0.0
  %492 = vmatpush1.msra.mxu0 %v56
  %493 = vmatprep.subr.mxu0 0.0
  %494 = vmatpush1.msra.mxu0 0.0
  %495 = vmatprep.subr.mxu0 0.0
  %496 = vmatpush1.msra.mxu0 0.0
  %497 = vmatprep.subr.mxu0 0.0
  %498 = vmatpush1.msra.mxu0 0.0
  %499 = vmatprep.subr.mxu0 0.0
  %500 = vmatpush1.msra.mxu0 0.0
  %501 = vmatprep.subr.mxu0 0.0
  %502 = vmatpush1.msra.mxu0 0.0
  %503 = vmatprep.subr.mxu0 0.0
  %504 = vmatpush1.msra.mxu0 0.0
  %505 = vmatprep.subr.mxu0 0.0
  %506 = vmatpush1.msra.mxu0 0.0
  %507 = vmatprep.subr.mxu0 0.0
  %508 = vmatpush1.msra.mxu0 0.0
  %509 = vmatprep.subr.mxu0 0.0
  %510 = vmatpush1.msra.mxu0 0.0
  %511 = vmatprep.subr.mxu0 0.0
  %512 = vmatpush1.msra.mxu0 0.0
  %513 = vmatprep.subr.mxu0 0.0
  %514 = vmatpush1.msra.mxu0 0.0
  %515 = vmatprep.subr.mxu0 0.0
  %516 = vmatpush1.msra.mxu0 0.0
  %517 = vmatprep.subr.mxu0 0.0
  %518 = vmatpush1.msra.mxu0 0.0
  %519 = vmatprep.subr.mxu0 0.0
  %520 = vmatpush1.msra.mxu0 0.0
  %521 = vmatprep.subr.mxu0 0.0
  %522 = vmatpush1.msra.mxu0 0.0
  %523 = vmatprep.subr.mxu0 0.0
  %524 = vmatpush1.msra.mxu0 0.0
  %525 = vmatprep.subr.mxu0 0.0
  %526 = vmatpush1.msra.mxu0 0.0
  %527 = vmatprep.subr.mxu0 0.0
  %528 = vmatpush1.msra.mxu0 0.0
  %529 = vmatprep.subr.mxu0 0.0
  %530 = vmatpush1.msra.mxu0 0.0
  %531 = vmatprep.subr.mxu0 0.0
  %532 = vmatpush1.msra.mxu0 0.0
  %533 = vmatprep.subr.mxu0 0.0
  %534 = vmatpush1.msra.mxu0 0.0
  %535 = vmatprep.subr.mxu0 0.0
  %536 = vmatpush1.msra.mxu0 0.0
  %537 = vmatprep.subr.mxu0 0.0
  %538 = vmatpush1.msra.mxu0 0.0
  %539 = vmatprep.subr.mxu0 0.0
  %540 = vmatpush1.msra.mxu0 0.0
  %541 = vmatprep.subr.mxu0 0.0
  %542 = vmatpush1.msra.mxu0 0.0
  %543 = vmatprep.subr.mxu0 0.0
  %544 = vmatpush1.msra.mxu0 0.0
  %545 = vmatprep.subr.mxu0 0.0
  %546 = vmatpush1.msra.mxu0 0.0
  %547 = vmatprep.subr.mxu0 0.0
  %548 = vmatpush1.msra.mxu0 0.0
  %549 = vmatprep.mubr.f32.mxu0 0.0
  %550 = vmatmul.mubr.f32.gmra.mrb[0].mxu0 %v413
  %v551 = vpop.f32.mrb[0].mxu0
  %v552 = vadd.f32 %v482, %v551
  %v553 = vpop.f32.mrb[0].mxu0
  %554 = vdwg.mxu0
  %v555 = vmax.f32 %v552, 0.0
  %v556 = vmax.f32 %v391, %v555
  %s557 = scalar_lea.vmem %s0, 18
  %v558 = vld [vmem:[%s557] sm:$0x3f]
  %v560 = vcombine.high %v558, %v558
  %v562 = vunpack.c.l.s4 1983009808
  %v563 = vunpack.c.0.s8 %v562
  %v564 = vlaneseq
  %v565 = vshrl.u32 %v564, 7
  %v566 = vsub.s32 %v563, %v565
  %v567 = vrot.slane %v558, %v566
  %v569 = vunpack.c.l.s4 1983009808
  %v570 = vunpack.c.0.s8 %v569
  %v571 = vlaneseq
  %v572 = vshrl.u32 %v571, 7
  %v573 = vsub.s32 %v570, %v572
  %v574 = vrot.slane %v560, %v573
  %v575 = vcombine.high %v567, %v567
  %v578 = vsel %vm83, %v574, 0
  %580 = vmatprep.subr.mxu0 0.0
  %581 = vmatpush1.msra.mxu0 %v21
  %582 = vmatprep.subr.mxu0 0.0
  %583 = vmatpush1.msra.mxu0 %v22
  %584 = vmatprep.subr.mxu0 0.0
  %585 = vmatpush1.msra.mxu0 %v23
  %586 = vmatprep.subr.mxu0 0.0
  %587 = vmatpush1.msra.mxu0 %v24
  %588 = vmatprep.subr.mxu0 0.0
  %589 = vmatpush1.msra.mxu0 %v25
  %590 = vmatprep.subr.mxu0 0.0
  %591 = vmatpush1.msra.mxu0 %v26
  %592 = vmatprep.subr.mxu0 0.0
  %593 = vmatpush1.msra.mxu0 %v27
  %594 = vmatprep.subr.mxu0 0.0
  %595 = vmatpush1.msra.mxu0 %v28
  %596 = vmatprep.subr.mxu0 0.0
  %597 = vmatpush1.msra.mxu0 %v29
  %598 = vmatprep.subr.mxu0 0.0
  %599 = vmatpush1.msra.mxu0 %v30
  %600 = vmatprep.subr.mxu0 0.0
  %601 = vmatpush1.msra.mxu0 %v31
  %602 = vmatprep.subr.mxu0 0.0
  %603 = vmatpush1.msra.mxu0 %v32
  %604 = vmatprep.subr.mxu0 0.0
  %605 = vmatpush1.msra.mxu0 %v33
  %606 = vmatprep.subr.mxu0 0.0
  %607 = vmatpush1.msra.mxu0 %v34
  %608 = vmatprep.subr.mxu0 0.0
  %609 = vmatpush1.msra.mxu0 %v35
  %610 = vmatprep.subr.mxu0 0.0
  %611 = vmatpush1.msra.mxu0 %v36
  %612 = vmatprep.subr.mxu0 0.0
  %613 = vmatpush1.msra.mxu0 %v37
  %614 = vmatprep.subr.mxu0 0.0
  %615 = vmatpush1.msra.mxu0 %v38
  %616 = vmatprep.subr.mxu0 0.0
  %617 = vmatpush1.msra.mxu0 %v39
  %618 = vmatprep.subr.mxu0 0.0
  %619 = vmatpush1.msra.mxu0 %v40
  %620 = vmatprep.subr.mxu0 0.0
  %621 = vmatpush1.msra.mxu0 %v41
  %622 = vmatprep.subr.mxu0 0.0
  %623 = vmatpush1.msra.mxu0 %v42
  %624 = vmatprep.subr.mxu0 0.0
  %625 = vmatpush1.msra.mxu0 %v43
  %626 = vmatprep.subr.mxu0 0.0
  %627 = vmatpush1.msra.mxu0 %v44
  %628 = vmatprep.subr.mxu0 0.0
  %629 = vmatpush1.msra.mxu0 %v45
  %630 = vmatprep.subr.mxu0 0.0
  %631 = vmatpush1.msra.mxu0 %v46
  %632 = vmatprep.subr.mxu0 0.0
  %633 = vmatpush1.msra.mxu0 %v47
  %634 = vmatprep.subr.mxu0 0.0
  %635 = vmatpush1.msra.mxu0 %v48
  %636 = vmatprep.subr.mxu0 0.0
  %637 = vmatpush1.msra.mxu0 %v49
  %638 = vmatprep.subr.mxu0 0.0
  %639 = vmatpush1.msra.mxu0 %v50
  %640 = vmatprep.subr.mxu0 0.0
  %641 = vmatpush1.msra.mxu0 %v51
  %642 = vmatprep.subr.mxu0 0.0
  %643 = vmatpush1.msra.mxu0 %v52
  %644 = vmatprep.mubr.f32.mxu0 %v575
  %645 = vmatmul.mubr.f32.gmra.mrb[0].mxu0 %v567
  %v646 = vpop.f32.mrb[0].mxu0
  %v647 = vadd.f32 %v62, %v646
  %v648 = vpop.f32.mrb[0].mxu0
  %649 = vdwg.mxu0
  %650 = vmatprep.subr.mxu0 0.0
  %651 = vmatpush1.msra.mxu0 %v53
  %652 = vmatprep.subr.mxu0 0.0
  %653 = vmatpush1.msra.mxu0 %v54
  %654 = vmatprep.subr.mxu0 0.0
  %655 = vmatpush1.msra.mxu0 %v55
  %656 = vmatprep.subr.mxu0 0.0
  %657 = vmatpush1.msra.mxu0 %v56
  %658 = vmatprep.subr.mxu0 0.0
  %659 = vmatpush1.msra.mxu0 0.0
  %660 = vmatprep.subr.mxu0 0.0
  %661 = vmatpush1.msra.mxu0 0.0
  %662 = vmatprep.subr.mxu0 0.0
  %663 = vmatpush1.msra.mxu0 0.0
  %664 = vmatprep.subr.mxu0 0.0
  %665 = vmatpush1.msra.mxu0 0.0
  %666 = vmatprep.subr.mxu0 0.0
  %667 = vmatpush1.msra.mxu0 0.0
  %668 = vmatprep.subr.mxu0 0.0
  %669 = vmatpush1.msra.mxu0 0.0
  %670 = vmatprep.subr.mxu0 0.0
  %671 = vmatpush1.msra.mxu0 0.0
  %672 = vmatprep.subr.mxu0 0.0
  %673 = vmatpush1.msra.mxu0 0.0
  %674 = vmatprep.subr.mxu0 0.0
  %675 = vmatpush1.msra.mxu0 0.0
  %676 = vmatprep.subr.mxu0 0.0
  %677 = vmatpush1.msra.mxu0 0.0
  %678 = vmatprep.subr.mxu0 0.0
  %679 = vmatpush1.msra.mxu0 0.0
  %680 = vmatprep.subr.mxu0 0.0
  %681 = vmatpush1.msra.mxu0 0.0
  %682 = vmatprep.subr.mxu0 0.0
  %683 = vmatpush1.msra.mxu0 0.0
  %684 = vmatprep.subr.mxu0 0.0
  %685 = vmatpush1.msra.mxu0 0.0
  %686 = vmatprep.subr.mxu0 0.0
  %687 = vmatpush1.msra.mxu0 0.0
  %688 = vmatprep.subr.mxu0 0.0
  %689 = vmatpush1.msra.mxu0 0.0
  %690 = vmatprep.subr.mxu0 0.0
  %691 = vmatpush1.msra.mxu0 0.0
  %692 = vmatprep.subr.mxu0 0.0
  %693 = vmatpush1.msra.mxu0 0.0
  %694 = vmatprep.subr.mxu0 0.0
  %695 = vmatpush1.msra.mxu0 0.0
  %696 = vmatprep.subr.mxu0 0.0
  %697 = vmatpush1.msra.mxu0 0.0
  %698 = vmatprep.subr.mxu0 0.0
  %699 = vmatpush1.msra.mxu0 0.0
  %700 = vmatprep.subr.mxu0 0.0
  %701 = vmatpush1.msra.mxu0 0.0
  %702 = vmatprep.subr.mxu0 0.0
  %703 = vmatpush1.msra.mxu0 0.0
  %704 = vmatprep.subr.mxu0 0.0
  %705 = vmatpush1.msra.mxu0 0.0
  %706 = vmatprep.subr.mxu0 0.0
  %707 = vmatpush1.msra.mxu0 0.0
  %708 = vmatprep.subr.mxu0 0.0
  %709 = vmatpush1.msra.mxu0 0.0
  %710 = vmatprep.subr.mxu0 0.0
  %711 = vmatpush1.msra.mxu0 0.0
  %712 = vmatprep.subr.mxu0 0.0
  %713 = vmatpush1.msra.mxu0 0.0
  %714 = vmatprep.mubr.f32.mxu0 0.0
  %715 = vmatmul.mubr.f32.gmra.mrb[0].mxu0 %v578
  %v716 = vpop.f32.mrb[0].mxu0
  %v717 = vadd.f32 %v647, %v716
  %v718 = vpop.f32.mrb[0].mxu0
  %719 = vdwg.mxu0
  %v720 = vmax.f32 %v717, 0.0
  %v721 = vmax.f32 %v556, %v720
  %s722 = scalar_lea.vmem %s0, 24
  %v723 = vld [vmem:[%s722] sm:$0x3f]
  %v725 = vcombine.high %v723, %v723
  %v727 = vunpack.c.l.s4 1983009808
  %v728 = vunpack.c.0.s8 %v727
  %v729 = vlaneseq
  %v730 = vshrl.u32 %v729, 7
  %v731 = vsub.s32 %v728, %v730
  %v732 = vrot.slane %v723, %v731
  %v734 = vunpack.c.l.s4 1983009808
  %v735 = vunpack.c.0.s8 %v734
  %v736 = vlaneseq
  %v737 = vshrl.u32 %v736, 7
  %v738 = vsub.s32 %v735, %v737
  %v739 = vrot.slane %v725, %v738
  %v740 = vcombine.high %v732, %v732
  %v743 = vsel %vm83, %v739, 0
  %745 = vmatprep.subr.mxu0 0.0
  %746 = vmatpush1.msra.mxu0 %v21
  %747 = vmatprep.subr.mxu0 0.0
  %748 = vmatpush1.msra.mxu0 %v22
  %749 = vmatprep.subr.mxu0 0.0
  %750 = vmatpush1.msra.mxu0 %v23
  %751 = vmatprep.subr.mxu0 0.0
  %752 = vmatpush1.msra.mxu0 %v24
  %753 = vmatprep.subr.mxu0 0.0
  %754 = vmatpush1.msra.mxu0 %v25
  %755 = vmatprep.subr.mxu0 0.0
  %756 = vmatpush1.msra.mxu0 %v26
  %757 = vmatprep.subr.mxu0 0.0
  %758 = vmatpush1.msra.mxu0 %v27
  %759 = vmatprep.subr.mxu0 0.0
  %760 = vmatpush1.msra.mxu0 %v28
  %761 = vmatprep.subr.mxu0 0.0
  %762 = vmatpush1.msra.mxu0 %v29
  %763 = vmatprep.subr.mxu0 0.0
  %764 = vmatpush1.msra.mxu0 %v30
  %765 = vmatprep.subr.mxu0 0.0
  %766 = vmatpush1.msra.mxu0 %v31
  %767 = vmatprep.subr.mxu0 0.0
  %768 = vmatpush1.msra.mxu0 %v32
  %769 = vmatprep.subr.mxu0 0.0
  %770 = vmatpush1.msra.mxu0 %v33
  %771 = vmatprep.subr.mxu0 0.0
  %772 = vmatpush1.msra.mxu0 %v34
  %773 = vmatprep.subr.mxu0 0.0
  %774 = vmatpush1.msra.mxu0 %v35
  %775 = vmatprep.subr.mxu0 0.0
  %776 = vmatpush1.msra.mxu0 %v36
  %777 = vmatprep.subr.mxu0 0.0
  %778 = vmatpush1.msra.mxu0 %v37
  %779 = vmatprep.subr.mxu0 0.0
  %780 = vmatpush1.msra.mxu0 %v38
  %781 = vmatprep.subr.mxu0 0.0
  %782 = vmatpush1.msra.mxu0 %v39
  %783 = vmatprep.subr.mxu0 0.0
  %784 = vmatpush1.msra.mxu0 %v40
  %785 = vmatprep.subr.mxu0 0.0
  %786 = vmatpush1.msra.mxu0 %v41
  %787 = vmatprep.subr.mxu0 0.0
  %788 = vmatpush1.msra.mxu0 %v42
  %789 = vmatprep.subr.mxu0 0.0
  %790 = vmatpush1.msra.mxu0 %v43
  %791 = vmatprep.subr.mxu0 0.0
  %792 = vmatpush1.msra.mxu0 %v44
  %793 = vmatprep.subr.mxu0 0.0
  %794 = vmatpush1.msra.mxu0 %v45
  %795 = vmatprep.subr.mxu0 0.0
  %796 = vmatpush1.msra.mxu0 %v46
  %797 = vmatprep.subr.mxu0 0.0
  %798 = vmatpush1.msra.mxu0 %v47
  %799 = vmatprep.subr.mxu0 0.0
  %800 = vmatpush1.msra.mxu0 %v48
  %801 = vmatprep.subr.mxu0 0.0
  %802 = vmatpush1.msra.mxu0 %v49
  %803 = vmatprep.subr.mxu0 0.0
  %804 = vmatpush1.msra.mxu0 %v50
  %805 = vmatprep.subr.mxu0 0.0
  %806 = vmatpush1.msra.mxu0 %v51
  %807 = vmatprep.subr.mxu0 0.0
  %808 = vmatpush1.msra.mxu0 %v52
  %809 = vmatprep.mubr.f32.mxu0 %v740
  %810 = vmatmul.mubr.f32.gmra.mrb[0].mxu0 %v732
  %v811 = vpop.f32.mrb[0].mxu0
  %v812 = vadd.f32 %v62, %v811
  %v813 = vpop.f32.mrb[0].mxu0
  %814 = vdwg.mxu0
  %815 = vmatprep.subr.mxu0 0.0
  %816 = vmatpush1.msra.mxu0 %v53
  %817 = vmatprep.subr.mxu0 0.0
  %818 = vmatpush1.msra.mxu0 %v54
  %819 = vmatprep.subr.mxu0 0.0
  %820 = vmatpush1.msra.mxu0 %v55
  %821 = vmatprep.subr.mxu0 0.0
  %822 = vmatpush1.msra.mxu0 %v56
  %823 = vmatprep.subr.mxu0 0.0
  %824 = vmatpush1.msra.mxu0 0.0
  %825 = vmatprep.subr.mxu0 0.0
  %826 = vmatpush1.msra.mxu0 0.0
  %827 = vmatprep.subr.mxu0 0.0
  %828 = vmatpush1.msra.mxu0 0.0
  %829 = vmatprep.subr.mxu0 0.0
  %830 = vmatpush1.msra.mxu0 0.0
  %831 = vmatprep.subr.mxu0 0.0
  %832 = vmatpush1.msra.mxu0 0.0
  %833 = vmatprep.subr.mxu0 0.0
  %834 = vmatpush1.msra.mxu0 0.0
  %835 = vmatprep.subr.mxu0 0.0
  %836 = vmatpush1.msra.mxu0 0.0
  %837 = vmatprep.subr.mxu0 0.0
  %838 = vmatpush1.msra.mxu0 0.0
  %839 = vmatprep.subr.mxu0 0.0
  %840 = vmatpush1.msra.mxu0 0.0
  %841 = vmatprep.subr.mxu0 0.0
  %842 = vmatpush1.msra.mxu0 0.0
  %843 = vmatprep.subr.mxu0 0.0
  %844 = vmatpush1.msra.mxu0 0.0
  %845 = vmatprep.subr.mxu0 0.0
  %846 = vmatpush1.msra.mxu0 0.0
  %847 = vmatprep.subr.mxu0 0.0
  %848 = vmatpush1.msra.mxu0 0.0
  %849 = vmatprep.subr.mxu0 0.0
  %850 = vmatpush1.msra.mxu0 0.0
  %851 = vmatprep.subr.mxu0 0.0
  %852 = vmatpush1.msra.mxu0 0.0
  %853 = vmatprep.subr.mxu0 0.0
  %854 = vmatpush1.msra.mxu0 0.0
  %855 = vmatprep.subr.mxu0 0.0
  %856 = vmatpush1.msra.mxu0 0.0
  %857 = vmatprep.subr.mxu0 0.0
  %858 = vmatpush1.msra.mxu0 0.0
  %859 = vmatprep.subr.mxu0 0.0
  %860 = vmatpush1.msra.mxu0 0.0
  %861 = vmatprep.subr.mxu0 0.0
  %862 = vmatpush1.msra.mxu0 0.0
  %863 = vmatprep.subr.mxu0 0.0
  %864 = vmatpush1.msra.mxu0 0.0
  %865 = vmatprep.subr.mxu0 0.0
  %866 = vmatpush1.msra.mxu0 0.0
  %867 = vmatprep.subr.mxu0 0.0
  %868 = vmatpush1.msra.mxu0 0.0
  %869 = vmatprep.subr.mxu0 0.0
  %870 = vmatpush1.msra.mxu0 0.0
  %871 = vmatprep.subr.mxu0 0.0
  %872 = vmatpush1.msra.mxu0 0.0
  %873 = vmatprep.subr.mxu0 0.0
  %874 = vmatpush1.msra.mxu0 0.0
  %875 = vmatprep.subr.mxu0 0.0
  %876 = vmatpush1.msra.mxu0 0.0
  %877 = vmatprep.subr.mxu0 0.0
  %878 = vmatpush1.msra.mxu0 0.0
  %879 = vmatprep.mubr.f32.mxu0 0.0
  %880 = vmatmul.mubr.f32.gmra.mrb[0].mxu0 %v743
  %v881 = vpop.f32.mrb[0].mxu0
  %v882 = vadd.f32 %v812, %v881
  %v883 = vpop.f32.mrb[0].mxu0
  %884 = vdwg.mxu0
  %v885 = vmax.f32 %v882, 0.0
  %v886 = vmax.f32 %v721, %v885
  %s887 = scalar_lea.vmem %s0, 30
  %v888 = vld [vmem:[%s887] sm:$0x3f]
  %v890 = vcombine.high %v888, %v888
  %v892 = vunpack.c.l.s4 1983009808
  %v893 = vunpack.c.0.s8 %v892
  %v894 = vlaneseq
  %v895 = vshrl.u32 %v894, 7
  %v896 = vsub.s32 %v893, %v895
  %v897 = vrot.slane %v888, %v896
  %v899 = vunpack.c.l.s4 1983009808
  %v900 = vunpack.c.0.s8 %v899
  %v901 = vlaneseq
  %v902 = vshrl.u32 %v901, 7
  %v903 = vsub.s32 %v900, %v902
  %v904 = vrot.slane %v890, %v903
  %v905 = vcombine.high %v897, %v897
  %v908 = vsel %vm83, %v904, 0
  %910 = vmatprep.subr.mxu0 0.0
  %911 = vmatpush1.msra.mxu0 %v21
  %912 = vmatprep.subr.mxu0 0.0
  %913 = vmatpush1.msra.mxu0 %v22
  %914 = vmatprep.subr.mxu0 0.0
  %915 = vmatpush1.msra.mxu0 %v23
  %916 = vmatprep.subr.mxu0 0.0
  %917 = vmatpush1.msra.mxu0 %v24
  %918 = vmatprep.subr.mxu0 0.0
  %919 = vmatpush1.msra.mxu0 %v25
  %920 = vmatprep.subr.mxu0 0.0
  %921 = vmatpush1.msra.mxu0 %v26
  %922 = vmatprep.subr.mxu0 0.0
  %923 = vmatpush1.msra.mxu0 %v27
  %924 = vmatprep.subr.mxu0 0.0
  %925 = vmatpush1.msra.mxu0 %v28
  %926 = vmatprep.subr.mxu0 0.0
  %927 = vmatpush1.msra.mxu0 %v29
  %928 = vmatprep.subr.mxu0 0.0
  %929 = vmatpush1.msra.mxu0 %v30
  %930 = vmatprep.subr.mxu0 0.0
  %931 = vmatpush1.msra.mxu0 %v31
  %932 = vmatprep.subr.mxu0 0.0
  %933 = vmatpush1.msra.mxu0 %v32
  %934 = vmatprep.subr.mxu0 0.0
  %935 = vmatpush1.msra.mxu0 %v33
  %936 = vmatprep.subr.mxu0 0.0
  %937 = vmatpush1.msra.mxu0 %v34
  %938 = vmatprep.subr.mxu0 0.0
  %939 = vmatpush1.msra.mxu0 %v35
  %940 = vmatprep.subr.mxu0 0.0
  %941 = vmatpush1.msra.mxu0 %v36
  %942 = vmatprep.subr.mxu0 0.0
  %943 = vmatpush1.msra.mxu0 %v37
  %944 = vmatprep.subr.mxu0 0.0
  %945 = vmatpush1.msra.mxu0 %v38
  %946 = vmatprep.subr.mxu0 0.0
  %947 = vmatpush1.msra.mxu0 %v39
  %948 = vmatprep.subr.mxu0 0.0
  %949 = vmatpush1.msra.mxu0 %v40
  %950 = vmatprep.subr.mxu0 0.0
  %951 = vmatpush1.msra.mxu0 %v41
  %952 = vmatprep.subr.mxu0 0.0
  %953 = vmatpush1.msra.mxu0 %v42
  %954 = vmatprep.subr.mxu0 0.0
  %955 = vmatpush1.msra.mxu0 %v43
  %956 = vmatprep.subr.mxu0 0.0
  %957 = vmatpush1.msra.mxu0 %v44
  %958 = vmatprep.subr.mxu0 0.0
  %959 = vmatpush1.msra.mxu0 %v45
  %960 = vmatprep.subr.mxu0 0.0
  %961 = vmatpush1.msra.mxu0 %v46
  %962 = vmatprep.subr.mxu0 0.0
  %963 = vmatpush1.msra.mxu0 %v47
  %964 = vmatprep.subr.mxu0 0.0
  %965 = vmatpush1.msra.mxu0 %v48
  %966 = vmatprep.subr.mxu0 0.0
  %967 = vmatpush1.msra.mxu0 %v49
  %968 = vmatprep.subr.mxu0 0.0
  %969 = vmatpush1.msra.mxu0 %v50
  %970 = vmatprep.subr.mxu0 0.0
  %971 = vmatpush1.msra.mxu0 %v51
  %972 = vmatprep.subr.mxu0 0.0
  %973 = vmatpush1.msra.mxu0 %v52
  %974 = vmatprep.mubr.f32.mxu0 %v905
  %975 = vmatmul.mubr.f32.gmra.mrb[0].mxu0 %v897
  %v976 = vpop.f32.mrb[0].mxu0
  %v977 = vadd.f32 %v62, %v976
  %v978 = vpop.f32.mrb[0].mxu0
  %979 = vdwg.mxu0
  %980 = vmatprep.subr.mxu0 0.0
  %981 = vmatpush1.msra.mxu0 %v53
  %982 = vmatprep.subr.mxu0 0.0
  %983 = vmatpush1.msra.mxu0 %v54
  %984 = vmatprep.subr.mxu0 0.0
  %985 = vmatpush1.msra.mxu0 %v55
  %986 = vmatprep.subr.mxu0 0.0
  %987 = vmatpush1.msra.mxu0 %v56
  %988 = vmatprep.subr.mxu0 0.0
  %989 = vmatpush1.msra.mxu0 0.0
  %990 = vmatprep.subr.mxu0 0.0
  %991 = vmatpush1.msra.mxu0 0.0
  %992 = vmatprep.subr.mxu0 0.0
  %993 = vmatpush1.msra.mxu0 0.0
  %994 = vmatprep.subr.mxu0 0.0
  %995 = vmatpush1.msra.mxu0 0.0
  %996 = vmatprep.subr.mxu0 0.0
  %997 = vmatpush1.msra.mxu0 0.0
  %998 = vmatprep.subr.mxu0 0.0
  %999 = vmatpush1.msra.mxu0 0.0
  %1000 = vmatprep.subr.mxu0 0.0
  %1001 = vmatpush1.msra.mxu0 0.0
  %1002 = vmatprep.subr.mxu0 0.0
  %1003 = vmatpush1.msra.mxu0 0.0
  %1004 = vmatprep.subr.mxu0 0.0
  %1005 = vmatpush1.msra.mxu0 0.0
  %1006 = vmatprep.subr.mxu0 0.0
  %1007 = vmatpush1.msra.mxu0 0.0
  %1008 = vmatprep.subr.mxu0 0.0
  %1009 = vmatpush1.msra.mxu0 0.0
  %1010 = vmatprep.subr.mxu0 0.0
  %1011 = vmatpush1.msra.mxu0 0.0
  %1012 = vmatprep.subr.mxu0 0.0
  %1013 = vmatpush1.msra.mxu0 0.0
  %1014 = vmatprep.subr.mxu0 0.0
  %1015 = vmatpush1.msra.mxu0 0.0
  %1016 = vmatprep.subr.mxu0 0.0
  %1017 = vmatpush1.msra.mxu0 0.0
  %1018 = vmatprep.subr.mxu0 0.0
  %1019 = vmatpush1.msra.mxu0 0.0
  %1020 = vmatprep.subr.mxu0 0.0
  %1021 = vmatpush1.msra.mxu0 0.0
  %1022 = vmatprep.subr.mxu0 0.0
  %1023 = vmatpush1.msra.mxu0 0.0
  %1024 = vmatprep.subr.mxu0 0.0
  %1025 = vmatpush1.msra.mxu0 0.0
  %1026 = vmatprep.subr.mxu0 0.0
  %1027 = vmatpush1.msra.mxu0 0.0
  %1028 = vmatprep.subr.mxu0 0.0
  %1029 = vmatpush1.msra.mxu0 0.0
  %1030 = vmatprep.subr.mxu0 0.0
  %1031 = vmatpush1.msra.mxu0 0.0
  %1032 = vmatprep.subr.mxu0 0.0
  %1033 = vmatpush1.msra.mxu0 0.0
  %1034 = vmatprep.subr.mxu0 0.0
  %1035 = vmatpush1.msra.mxu0 0.0
  %1036 = vmatprep.subr.mxu0 0.0
  %1037 = vmatpush1.msra.mxu0 0.0
  %1038 = vmatprep.subr.mxu0 0.0
  %1039 = vmatpush1.msra.mxu0 0.0
  %1040 = vmatprep.subr.mxu0 0.0
  %1041 = vmatpush1.msra.mxu0 0.0
  %1042 = vmatprep.subr.mxu0 0.0
  %1043 = vmatpush1.msra.mxu0 0.0
  %1044 = vmatprep.mubr.f32.mxu0 0.0
  %1045 = vmatmul.mubr.f32.gmra.mrb[0].mxu0 %v908
  %v1046 = vpop.f32.mrb[0].mxu0
  %v1047 = vadd.f32 %v977, %v1046
  %v1048 = vpop.f32.mrb[0].mxu0
  %1049 = vdwg.mxu0
  %v1050 = vmax.f32 %v1047, 0.0
  %v1051 = vmax.f32 %v886, %v1050
  %s1052 = scalar_lea.vmem %s0, 36
  %v1053 = vld [vmem:[%s1052] sm:$0x3f]
  %v1055 = vcombine.high %v1053, %v1053
  %v1057 = vunpack.c.l.s4 1983009808
  %v1058 = vunpack.c.0.s8 %v1057
  %v1059 = vlaneseq
  %v1060 = vshrl.u32 %v1059, 7
  %v1061 = vsub.s32 %v1058, %v1060
  %v1062 = vrot.slane %v1053, %v1061
  %v1064 = vunpack.c.l.s4 1983009808
  %v1065 = vunpack.c.0.s8 %v1064
  %v1066 = vlaneseq
  %v1067 = vshrl.u32 %v1066, 7
  %v1068 = vsub.s32 %v1065, %v1067
  %v1069 = vrot.slane %v1055, %v1068
  %v1070 = vcombine.high %v1062, %v1062
  %v1073 = vsel %vm83, %v1069, 0
  %1075 = vmatprep.subr.mxu0 0.0
  %1076 = vmatpush1.msra.mxu0 %v21
  %1077 = vmatprep.subr.mxu0 0.0
  %1078 = vmatpush1.msra.mxu0 %v22
  %1079 = vmatprep.subr.mxu0 0.0
  %1080 = vmatpush1.msra.mxu0 %v23
  %1081 = vmatprep.subr.mxu0 0.0
  %1082 = vmatpush1.msra.mxu0 %v24
  %1083 = vmatprep.subr.mxu0 0.0
  %1084 = vmatpush1.msra.mxu0 %v25
  %1085 = vmatprep.subr.mxu0 0.0
  %1086 = vmatpush1.msra.mxu0 %v26
  %1087 = vmatprep.subr.mxu0 0.0
  %1088 = vmatpush1.msra.mxu0 %v27
  %1089 = vmatprep.subr.mxu0 0.0
  %1090 = vmatpush1.msra.mxu0 %v28
  %1091 = vmatprep.subr.mxu0 0.0
  %1092 = vmatpush1.msra.mxu0 %v29
  %1093 = vmatprep.subr.mxu0 0.0
  %1094 = vmatpush1.msra.mxu0 %v30
  %1095 = vmatprep.subr.mxu0 0.0
  %1096 = vmatpush1.msra.mxu0 %v31
  %1097 = vmatprep.subr.mxu0 0.0
  %1098 = vmatpush1.msra.mxu0 %v32
  %1099 = vmatprep.subr.mxu0 0.0
  %1100 = vmatpush1.msra.mxu0 %v33
  %1101 = vmatprep.subr.mxu0 0.0
  %1102 = vmatpush1.msra.mxu0 %v34
  %1103 = vmatprep.subr.mxu0 0.0
  %1104 = vmatpush1.msra.mxu0 %v35
  %1105 = vmatprep.subr.mxu0 0.0
  %1106 = vmatpush1.msra.mxu0 %v36
  %1107 = vmatprep.subr.mxu0 0.0
  %1108 = vmatpush1.msra.mxu0 %v37
  %1109 = vmatprep.subr.mxu0 0.0
  %1110 = vmatpush1.msra.mxu0 %v38
  %1111 = vmatprep.subr.mxu0 0.0
  %1112 = vmatpush1.msra.mxu0 %v39
  %1113 = vmatprep.subr.mxu0 0.0
  %1114 = vmatpush1.msra.mxu0 %v40
  %1115 = vmatprep.subr.mxu0 0.0
  %1116 = vmatpush1.msra.mxu0 %v41
  %1117 = vmatprep.subr.mxu0 0.0
  %1118 = vmatpush1.msra.mxu0 %v42
  %1119 = vmatprep.subr.mxu0 0.0
  %1120 = vmatpush1.msra.mxu0 %v43
  %1121 = vmatprep.subr.mxu0 0.0
  %1122 = vmatpush1.msra.mxu0 %v44
  %1123 = vmatprep.subr.mxu0 0.0
  %1124 = vmatpush1.msra.mxu0 %v45
  %1125 = vmatprep.subr.mxu0 0.0
  %1126 = vmatpush1.msra.mxu0 %v46
  %1127 = vmatprep.subr.mxu0 0.0
  %1128 = vmatpush1.msra.mxu0 %v47
  %1129 = vmatprep.subr.mxu0 0.0
  %1130 = vmatpush1.msra.mxu0 %v48
  %1131 = vmatprep.subr.mxu0 0.0
  %1132 = vmatpush1.msra.mxu0 %v49
  %1133 = vmatprep.subr.mxu0 0.0
  %1134 = vmatpush1.msra.mxu0 %v50
  %1135 = vmatprep.subr.mxu0 0.0
  %1136 = vmatpush1.msra.mxu0 %v51
  %1137 = vmatprep.subr.mxu0 0.0
  %1138 = vmatpush1.msra.mxu0 %v52
  %1139 = vmatprep.mubr.f32.mxu0 %v1070
  %1140 = vmatmul.mubr.f32.gmra.mrb[0].mxu0 %v1062
  %v1141 = vpop.f32.mrb[0].mxu0
  %v1142 = vadd.f32 %v62, %v1141
  %v1143 = vpop.f32.mrb[0].mxu0
  %1144 = vdwg.mxu0
  %1145 = vmatprep.subr.mxu0 0.0
  %1146 = vmatpush1.msra.mxu0 %v53
  %1147 = vmatprep.subr.mxu0 0.0
  %1148 = vmatpush1.msra.mxu0 %v54
  %1149 = vmatprep.subr.mxu0 0.0
  %1150 = vmatpush1.msra.mxu0 %v55
  %1151 = vmatprep.subr.mxu0 0.0
  %1152 = vmatpush1.msra.mxu0 %v56
  %1153 = vmatprep.subr.mxu0 0.0
  %1154 = vmatpush1.msra.mxu0 0.0
  %1155 = vmatprep.subr.mxu0 0.0
  %1156 = vmatpush1.msra.mxu0 0.0
  %1157 = vmatprep.subr.mxu0 0.0
  %1158 = vmatpush1.msra.mxu0 0.0
  %1159 = vmatprep.subr.mxu0 0.0
  %1160 = vmatpush1.msra.mxu0 0.0
  %1161 = vmatprep.subr.mxu0 0.0
  %1162 = vmatpush1.msra.mxu0 0.0
  %1163 = vmatprep.subr.mxu0 0.0
  %1164 = vmatpush1.msra.mxu0 0.0
  %1165 = vmatprep.subr.mxu0 0.0
  %1166 = vmatpush1.msra.mxu0 0.0
  %1167 = vmatprep.subr.mxu0 0.0
  %1168 = vmatpush1.msra.mxu0 0.0
  %1169 = vmatprep.subr.mxu0 0.0
  %1170 = vmatpush1.msra.mxu0 0.0
  %1171 = vmatprep.subr.mxu0 0.0
  %1172 = vmatpush1.msra.mxu0 0.0
  %1173 = vmatprep.subr.mxu0 0.0
  %1174 = vmatpush1.msra.mxu0 0.0
  %1175 = vmatprep.subr.mxu0 0.0
  %1176 = vmatpush1.msra.mxu0 0.0
  %1177 = vmatprep.subr.mxu0 0.0
  %1178 = vmatpush1.msra.mxu0 0.0
  %1179 = vmatprep.subr.mxu0 0.0
  %1180 = vmatpush1.msra.mxu0 0.0
  %1181 = vmatprep.subr.mxu0 0.0
  %1182 = vmatpush1.msra.mxu0 0.0
  %1183 = vmatprep.subr.mxu0 0.0
  %1184 = vmatpush1.msra.mxu0 0.0
  %1185 = vmatprep.subr.mxu0 0.0
  %1186 = vmatpush1.msra.mxu0 0.0
  %1187 = vmatprep.subr.mxu0 0.0
  %1188 = vmatpush1.msra.mxu0 0.0
  %1189 = vmatprep.subr.mxu0 0.0
  %1190 = vmatpush1.msra.mxu0 0.0
  %1191 = vmatprep.subr.mxu0 0.0
  %1192 = vmatpush1.msra.mxu0 0.0
  %1193 = vmatprep.subr.mxu0 0.0
  %1194 = vmatpush1.msra.mxu0 0.0
  %1195 = vmatprep.subr.mxu0 0.0
  %1196 = vmatpush1.msra.mxu0 0.0
  %1197 = vmatprep.subr.mxu0 0.0
  %1198 = vmatpush1.msra.mxu0 0.0
  %1199 = vmatprep.subr.mxu0 0.0
  %1200 = vmatpush1.msra.mxu0 0.0
  %1201 = vmatprep.subr.mxu0 0.0
  %1202 = vmatpush1.msra.mxu0 0.0
  %1203 = vmatprep.subr.mxu0 0.0
  %1204 = vmatpush1.msra.mxu0 0.0
  %1205 = vmatprep.subr.mxu0 0.0
  %1206 = vmatpush1.msra.mxu0 0.0
  %1207 = vmatprep.subr.mxu0 0.0
  %1208 = vmatpush1.msra.mxu0 0.0
  %1209 = vmatprep.mubr.f32.mxu0 0.0
  %1210 = vmatmul.mubr.f32.gmra.mrb[0].mxu0 %v1073
  %v1211 = vpop.f32.mrb[0].mxu0
  %v1212 = vadd.f32 %v1142, %v1211
  %v1213 = vpop.f32.mrb[0].mxu0
  %1214 = vdwg.mxu0
  %v1215 = vmax.f32 %v1212, 0.0
  %v1216 = vmax.f32 %v1051, %v1215
  %s1217 = scalar_lea.vmem %s0, 42
  %v1218 = vld [vmem:[%s1217] sm:$0x3f]
  %v1220 = vcombine.high %v1218, %v1218
  %v1222 = vunpack.c.l.s4 1983009808
  %v1223 = vunpack.c.0.s8 %v1222
  %v1224 = vlaneseq
  %v1225 = vshrl.u32 %v1224, 7
  %v1226 = vsub.s32 %v1223, %v1225
  %v1227 = vrot.slane %v1218, %v1226
  %v1229 = vunpack.c.l.s4 1983009808
  %v1230 = vunpack.c.0.s8 %v1229
  %v1231 = vlaneseq
  %v1232 = vshrl.u32 %v1231, 7
  %v1233 = vsub.s32 %v1230, %v1232
  %v1234 = vrot.slane %v1220, %v1233
  %v1235 = vcombine.high %v1227, %v1227
  %v1238 = vsel %vm83, %v1234, 0
  %1240 = vmatprep.subr.mxu0 0.0
  %1241 = vmatpush1.msra.mxu0 %v21
  %1242 = vmatprep.subr.mxu0 0.0
  %1243 = vmatpush1.msra.mxu0 %v22
  %1244 = vmatprep.subr.mxu0 0.0
  %1245 = vmatpush1.msra.mxu0 %v23
  %1246 = vmatprep.subr.mxu0 0.0
  %1247 = vmatpush1.msra.mxu0 %v24
  %1248 = vmatprep.subr.mxu0 0.0
  %1249 = vmatpush1.msra.mxu0 %v25
  %1250 = vmatprep.subr.mxu0 0.0
  %1251 = vmatpush1.msra.mxu0 %v26
  %1252 = vmatprep.subr.mxu0 0.0
  %1253 = vmatpush1.msra.mxu0 %v27
  %1254 = vmatprep.subr.mxu0 0.0
  %1255 = vmatpush1.msra.mxu0 %v28
  %1256 = vmatprep.subr.mxu0 0.0
  %1257 = vmatpush1.msra.mxu0 %v29
  %1258 = vmatprep.subr.mxu0 0.0
  %1259 = vmatpush1.msra.mxu0 %v30
  %1260 = vmatprep.subr.mxu0 0.0
  %1261 = vmatpush1.msra.mxu0 %v31
  %1262 = vmatprep.subr.mxu0 0.0
  %1263 = vmatpush1.msra.mxu0 %v32
  %1264 = vmatprep.subr.mxu0 0.0
  %1265 = vmatpush1.msra.mxu0 %v33
  %1266 = vmatprep.subr.mxu0 0.0
  %1267 = vmatpush1.msra.mxu0 %v34
  %1268 = vmatprep.subr.mxu0 0.0
  %1269 = vmatpush1.msra.mxu0 %v35
  %1270 = vmatprep.subr.mxu0 0.0
  %1271 = vmatpush1.msra.mxu0 %v36
  %1272 = vmatprep.subr.mxu0 0.0
  %1273 = vmatpush1.msra.mxu0 %v37
  %1274 = vmatprep.subr.mxu0 0.0
  %1275 = vmatpush1.msra.mxu0 %v38
  %1276 = vmatprep.subr.mxu0 0.0
  %1277 = vmatpush1.msra.mxu0 %v39
  %1278 = vmatprep.subr.mxu0 0.0
  %1279 = vmatpush1.msra.mxu0 %v40
  %1280 = vmatprep.subr.mxu0 0.0
  %1281 = vmatpush1.msra.mxu0 %v41
  %1282 = vmatprep.subr.mxu0 0.0
  %1283 = vmatpush1.msra.mxu0 %v42
  %1284 = vmatprep.subr.mxu0 0.0
  %1285 = vmatpush1.msra.mxu0 %v43
  %1286 = vmatprep.subr.mxu0 0.0
  %1287 = vmatpush1.msra.mxu0 %v44
  %1288 = vmatprep.subr.mxu0 0.0
  %1289 = vmatpush1.msra.mxu0 %v45
  %1290 = vmatprep.subr.mxu0 0.0
  %1291 = vmatpush1.msra.mxu0 %v46
  %1292 = vmatprep.subr.mxu0 0.0
  %1293 = vmatpush1.msra.mxu0 %v47
  %1294 = vmatprep.subr.mxu0 0.0
  %1295 = vmatpush1.msra.mxu0 %v48
  %1296 = vmatprep.subr.mxu0 0.0
  %1297 = vmatpush1.msra.mxu0 %v49
  %1298 = vmatprep.subr.mxu0 0.0
  %1299 = vmatpush1.msra.mxu0 %v50
  %1300 = vmatprep.subr.mxu0 0.0
  %1301 = vmatpush1.msra.mxu0 %v51
  %1302 = vmatprep.subr.mxu0 0.0
  %1303 = vmatpush1.msra.mxu0 %v52
  %1304 = vmatprep.mubr.f32.mxu0 %v1235
  %1305 = vmatmul.mubr.f32.gmra.mrb[0].mxu0 %v1227
  %v1306 = vpop.f32.mrb[0].mxu0
  %v1307 = vadd.f32 %v62, %v1306
  %v1308 = vpop.f32.mrb[0].mxu0
  %1309 = vdwg.mxu0
  %1310 = vmatprep.subr.mxu0 0.0
  %1311 = vmatpush1.msra.mxu0 %v53
  %1312 = vmatprep.subr.mxu0 0.0
  %1313 = vmatpush1.msra.mxu0 %v54
  %1314 = vmatprep.subr.mxu0 0.0
  %1315 = vmatpush1.msra.mxu0 %v55
  %1316 = vmatprep.subr.mxu0 0.0
  %1317 = vmatpush1.msra.mxu0 %v56
  %1318 = vmatprep.subr.mxu0 0.0
  %1319 = vmatpush1.msra.mxu0 0.0
  %1320 = vmatprep.subr.mxu0 0.0
  %1321 = vmatpush1.msra.mxu0 0.0
  %1322 = vmatprep.subr.mxu0 0.0
  %1323 = vmatpush1.msra.mxu0 0.0
  %1324 = vmatprep.subr.mxu0 0.0
  %1325 = vmatpush1.msra.mxu0 0.0
  %1326 = vmatprep.subr.mxu0 0.0
  %1327 = vmatpush1.msra.mxu0 0.0
  %1328 = vmatprep.subr.mxu0 0.0
  %1329 = vmatpush1.msra.mxu0 0.0
  %1330 = vmatprep.subr.mxu0 0.0
  %1331 = vmatpush1.msra.mxu0 0.0
  %1332 = vmatprep.subr.mxu0 0.0
  %1333 = vmatpush1.msra.mxu0 0.0
  %1334 = vmatprep.subr.mxu0 0.0
  %1335 = vmatpush1.msra.mxu0 0.0
  %1336 = vmatprep.subr.mxu0 0.0
  %1337 = vmatpush1.msra.mxu0 0.0
  %1338 = vmatprep.subr.mxu0 0.0
  %1339 = vmatpush1.msra.mxu0 0.0
  %1340 = vmatprep.subr.mxu0 0.0
  %1341 = vmatpush1.msra.mxu0 0.0
  %1342 = vmatprep.subr.mxu0 0.0
  %1343 = vmatpush1.msra.mxu0 0.0
  %1344 = vmatprep.subr.mxu0 0.0
  %1345 = vmatpush1.msra.mxu0 0.0
  %1346 = vmatprep.subr.mxu0 0.0
  %1347 = vmatpush1.msra.mxu0 0.0
  %1348 = vmatprep.subr.mxu0 0.0
  %1349 = vmatpush1.msra.mxu0 0.0
  %1350 = vmatprep.subr.mxu0 0.0
  %1351 = vmatpush1.msra.mxu0 0.0
  %1352 = vmatprep.subr.mxu0 0.0
  %1353 = vmatpush1.msra.mxu0 0.0
  %1354 = vmatprep.subr.mxu0 0.0
  %1355 = vmatpush1.msra.mxu0 0.0
  %1356 = vmatprep.subr.mxu0 0.0
  %1357 = vmatpush1.msra.mxu0 0.0
  %1358 = vmatprep.subr.mxu0 0.0
  %1359 = vmatpush1.msra.mxu0 0.0
  %1360 = vmatprep.subr.mxu0 0.0
  %1361 = vmatpush1.msra.mxu0 0.0
  %1362 = vmatprep.subr.mxu0 0.0
  %1363 = vmatpush1.msra.mxu0 0.0
  %1364 = vmatprep.subr.mxu0 0.0
  %1365 = vmatpush1.msra.mxu0 0.0
  %1366 = vmatprep.subr.mxu0 0.0
  %1367 = vmatpush1.msra.mxu0 0.0
  %1368 = vmatprep.subr.mxu0 0.0
  %1369 = vmatpush1.msra.mxu0 0.0
  %1370 = vmatprep.subr.mxu0 0.0
  %1371 = vmatpush1.msra.mxu0 0.0
  %1372 = vmatprep.subr.mxu0 0.0
  %1373 = vmatpush1.msra.mxu0 0.0
  %1374 = vmatprep.mubr.f32.mxu0 0.0
  %1375 = vmatmul.mubr.f32.gmra.mrb[0].mxu0 %v1238
  %v1376 = vpop.f32.mrb[0].mxu0
  %v1377 = vadd.f32 %v1307, %v1376
  %v1378 = vpop.f32.mrb[0].mxu0
  %1379 = vdwg.mxu0
  %v1380 = vmax.f32 %v1377, 0.0
  %v1381 = vmax.f32 %v1216, %v1380
  %s1382 = scalar_lea.vmem %s0, 48
  %v1383 = vld [vmem:[%s1382] sm:$0x3f]
  %v1385 = vcombine.high %v1383, %v1383
  %v1387 = vunpack.c.l.s4 1983009808
  %v1388 = vunpack.c.0.s8 %v1387
  %v1389 = vlaneseq
  %v1390 = vshrl.u32 %v1389, 7
  %v1391 = vsub.s32 %v1388, %v1390
  %v1392 = vrot.slane %v1383, %v1391
  %v1394 = vunpack.c.l.s4 1983009808
  %v1395 = vunpack.c.0.s8 %v1394
  %v1396 = vlaneseq
  %v1397 = vshrl.u32 %v1396, 7
  %v1398 = vsub.s32 %v1395, %v1397
  %v1399 = vrot.slane %v1385, %v1398
  %v1400 = vcombine.high %v1392, %v1392
  %v1403 = vsel %vm83, %v1399, 0
  %1405 = vmatprep.subr.mxu0 0.0
  %1406 = vmatpush1.msra.mxu0 %v21
  %1407 = vmatprep.subr.mxu0 0.0
  %1408 = vmatpush1.msra.mxu0 %v22
  %1409 = vmatprep.subr.mxu0 0.0
  %1410 = vmatpush1.msra.mxu0 %v23
  %1411 = vmatprep.subr.mxu0 0.0
  %1412 = vmatpush1.msra.mxu0 %v24
  %1413 = vmatprep.subr.mxu0 0.0
  %1414 = vmatpush1.msra.mxu0 %v25
  %1415 = vmatprep.subr.mxu0 0.0
  %1416 = vmatpush1.msra.mxu0 %v26
  %1417 = vmatprep.subr.mxu0 0.0
  %1418 = vmatpush1.msra.mxu0 %v27
  %1419 = vmatprep.subr.mxu0 0.0
  %1420 = vmatpush1.msra.mxu0 %v28
  %1421 = vmatprep.subr.mxu0 0.0
  %1422 = vmatpush1.msra.mxu0 %v29
  %1423 = vmatprep.subr.mxu0 0.0
  %1424 = vmatpush1.msra.mxu0 %v30
  %1425 = vmatprep.subr.mxu0 0.0
  %1426 = vmatpush1.msra.mxu0 %v31
  %1427 = vmatprep.subr.mxu0 0.0
  %1428 = vmatpush1.msra.mxu0 %v32
  %1429 = vmatprep.subr.mxu0 0.0
  %1430 = vmatpush1.msra.mxu0 %v33
  %1431 = vmatprep.subr.mxu0 0.0
  %1432 = vmatpush1.msra.mxu0 %v34
  %1433 = vmatprep.subr.mxu0 0.0
  %1434 = vmatpush1.msra.mxu0 %v35
  %1435 = vmatprep.subr.mxu0 0.0
  %1436 = vmatpush1.msra.mxu0 %v36
  %1437 = vmatprep.subr.mxu0 0.0
  %1438 = vmatpush1.msra.mxu0 %v37
  %1439 = vmatprep.subr.mxu0 0.0
  %1440 = vmatpush1.msra.mxu0 %v38
  %1441 = vmatprep.subr.mxu0 0.0
  %1442 = vmatpush1.msra.mxu0 %v39
  %1443 = vmatprep.subr.mxu0 0.0
  %1444 = vmatpush1.msra.mxu0 %v40
  %1445 = vmatprep.subr.mxu0 0.0
  %1446 = vmatpush1.msra.mxu0 %v41
  %1447 = vmatprep.subr.mxu0 0.0
  %1448 = vmatpush1.msra.mxu0 %v42
  %1449 = vmatprep.subr.mxu0 0.0
  %1450 = vmatpush1.msra.mxu0 %v43
  %1451 = vmatprep.subr.mxu0 0.0
  %1452 = vmatpush1.msra.mxu0 %v44
  %1453 = vmatprep.subr.mxu0 0.0
  %1454 = vmatpush1.msra.mxu0 %v45
  %1455 = vmatprep.subr.mxu0 0.0
  %1456 = vmatpush1.msra.mxu0 %v46
  %1457 = vmatprep.subr.mxu0 0.0
  %1458 = vmatpush1.msra.mxu0 %v47
  %1459 = vmatprep.subr.mxu0 0.0
  %1460 = vmatpush1.msra.mxu0 %v48
  %1461 = vmatprep.subr.mxu0 0.0
  %1462 = vmatpush1.msra.mxu0 %v49
  %1463 = vmatprep.subr.mxu0 0.0
  %1464 = vmatpush1.msra.mxu0 %v50
  %1465 = vmatprep.subr.mxu0 0.0
  %1466 = vmatpush1.msra.mxu0 %v51
  %1467 = vmatprep.subr.mxu0 0.0
  %1468 = vmatpush1.msra.mxu0 %v52
  %1469 = vmatprep.mubr.f32.mxu0 %v1400
  %1470 = vmatmul.mubr.f32.gmra.mrb[0].mxu0 %v1392
  %v1471 = vpop.f32.mrb[0].mxu0
  %v1472 = vadd.f32 %v62, %v1471
  %v1473 = vpop.f32.mrb[0].mxu0
  %1474 = vdwg.mxu0
  %1475 = vmatprep.subr.mxu0 0.0
  %1476 = vmatpush1.msra.mxu0 %v53
  %1477 = vmatprep.subr.mxu0 0.0
  %1478 = vmatpush1.msra.mxu0 %v54
  %1479 = vmatprep.subr.mxu0 0.0
  %1480 = vmatpush1.msra.mxu0 %v55
  %1481 = vmatprep.subr.mxu0 0.0
  %1482 = vmatpush1.msra.mxu0 %v56
  %1483 = vmatprep.subr.mxu0 0.0
  %1484 = vmatpush1.msra.mxu0 0.0
  %1485 = vmatprep.subr.mxu0 0.0
  %1486 = vmatpush1.msra.mxu0 0.0
  %1487 = vmatprep.subr.mxu0 0.0
  %1488 = vmatpush1.msra.mxu0 0.0
  %1489 = vmatprep.subr.mxu0 0.0
  %1490 = vmatpush1.msra.mxu0 0.0
  %1491 = vmatprep.subr.mxu0 0.0
  %1492 = vmatpush1.msra.mxu0 0.0
  %1493 = vmatprep.subr.mxu0 0.0
  %1494 = vmatpush1.msra.mxu0 0.0
  %1495 = vmatprep.subr.mxu0 0.0
  %1496 = vmatpush1.msra.mxu0 0.0
  %1497 = vmatprep.subr.mxu0 0.0
  %1498 = vmatpush1.msra.mxu0 0.0
  %1499 = vmatprep.subr.mxu0 0.0
  %1500 = vmatpush1.msra.mxu0 0.0
  %1501 = vmatprep.subr.mxu0 0.0
  %1502 = vmatpush1.msra.mxu0 0.0
  %1503 = vmatprep.subr.mxu0 0.0
  %1504 = vmatpush1.msra.mxu0 0.0
  %1505 = vmatprep.subr.mxu0 0.0
  %1506 = vmatpush1.msra.mxu0 0.0
  %1507 = vmatprep.subr.mxu0 0.0
  %1508 = vmatpush1.msra.mxu0 0.0
  %1509 = vmatprep.subr.mxu0 0.0
  %1510 = vmatpush1.msra.mxu0 0.0
  %1511 = vmatprep.subr.mxu0 0.0
  %1512 = vmatpush1.msra.mxu0 0.0
  %1513 = vmatprep.subr.mxu0 0.0
  %1514 = vmatpush1.msra.mxu0 0.0
  %1515 = vmatprep.subr.mxu0 0.0
  %1516 = vmatpush1.msra.mxu0 0.0
  %1517 = vmatprep.subr.mxu0 0.0
  %1518 = vmatpush1.msra.mxu0 0.0
  %1519 = vmatprep.subr.mxu0 0.0
  %1520 = vmatpush1.msra.mxu0 0.0
  %1521 = vmatprep.subr.mxu0 0.0
  %1522 = vmatpush1.msra.mxu0 0.0
  %1523 = vmatprep.subr.mxu0 0.0
  %1524 = vmatpush1.msra.mxu0 0.0
  %1525 = vmatprep.subr.mxu0 0.0
  %1526 = vmatpush1.msra.mxu0 0.0
  %1527 = vmatprep.subr.mxu0 0.0
  %1528 = vmatpush1.msra.mxu0 0.0
  %1529 = vmatprep.subr.mxu0 0.0
  %1530 = vmatpush1.msra.mxu0 0.0
  %1531 = vmatprep.subr.mxu0 0.0
  %1532 = vmatpush1.msra.mxu0 0.0
  %1533 = vmatprep.subr.mxu0 0.0
  %1534 = vmatpush1.msra.mxu0 0.0
  %1535 = vmatprep.subr.mxu0 0.0
  %1536 = vmatpush1.msra.mxu0 0.0
  %1537 = vmatprep.subr.mxu0 0.0
  %1538 = vmatpush1.msra.mxu0 0.0
  %1539 = vmatprep.mubr.f32.mxu0 0.0
  %1540 = vmatmul.mubr.f32.gmra.mrb[0].mxu0 %v1403
  %v1541 = vpop.f32.mrb[0].mxu0
  %v1542 = vadd.f32 %v1472, %v1541
  %v1543 = vpop.f32.mrb[0].mxu0
  %1544 = vdwg.mxu0
  %v1545 = vmax.f32 %v1542, 0.0
  %v1546 = vmax.f32 %v1381, %v1545
  %s1547 = scalar_lea.vmem %s0, 54
  %v1548 = vld [vmem:[%s1547] sm:$0x3f]
  %v1550 = vcombine.high %v1548, %v1548
  %v1552 = vunpack.c.l.s4 1983009808
  %v1553 = vunpack.c.0.s8 %v1552
  %v1554 = vlaneseq
  %v1555 = vshrl.u32 %v1554, 7
  %v1556 = vsub.s32 %v1553, %v1555
  %v1557 = vrot.slane %v1548, %v1556
  %v1559 = vunpack.c.l.s4 1983009808
  %v1560 = vunpack.c.0.s8 %v1559
  %v1561 = vlaneseq
  %v1562 = vshrl.u32 %v1561, 7
  %v1563 = vsub.s32 %v1560, %v1562
  %v1564 = vrot.slane %v1550, %v1563
  %v1565 = vcombine.high %v1557, %v1557
  %v1568 = vsel %vm83, %v1564, 0
  %1570 = vmatprep.subr.mxu0 0.0
  %1571 = vmatpush1.msra.mxu0 %v21
  %1572 = vmatprep.subr.mxu0 0.0
  %1573 = vmatpush1.msra.mxu0 %v22
  %1574 = vmatprep.subr.mxu0 0.0
  %1575 = vmatpush1.msra.mxu0 %v23
  %1576 = vmatprep.subr.mxu0 0.0
  %1577 = vmatpush1.msra.mxu0 %v24
  %1578 = vmatprep.subr.mxu0 0.0
  %1579 = vmatpush1.msra.mxu0 %v25
  %1580 = vmatprep.subr.mxu0 0.0
  %1581 = vmatpush1.msra.mxu0 %v26
  %1582 = vmatprep.subr.mxu0 0.0
  %1583 = vmatpush1.msra.mxu0 %v27
  %1584 = vmatprep.subr.mxu0 0.0
  %1585 = vmatpush1.msra.mxu0 %v28
  %1586 = vmatprep.subr.mxu0 0.0
  %1587 = vmatpush1.msra.mxu0 %v29
  %1588 = vmatprep.subr.mxu0 0.0
  %1589 = vmatpush1.msra.mxu0 %v30
  %1590 = vmatprep.subr.mxu0 0.0
  %1591 = vmatpush1.msra.mxu0 %v31
  %1592 = vmatprep.subr.mxu0 0.0
  %1593 = vmatpush1.msra.mxu0 %v32
  %1594 = vmatprep.subr.mxu0 0.0
  %1595 = vmatpush1.msra.mxu0 %v33
  %1596 = vmatprep.subr.mxu0 0.0
  %1597 = vmatpush1.msra.mxu0 %v34
  %1598 = vmatprep.subr.mxu0 0.0
  %1599 = vmatpush1.msra.mxu0 %v35
  %1600 = vmatprep.subr.mxu0 0.0
  %1601 = vmatpush1.msra.mxu0 %v36
  %1602 = vmatprep.subr.mxu0 0.0
  %1603 = vmatpush1.msra.mxu0 %v37
  %1604 = vmatprep.subr.mxu0 0.0
  %1605 = vmatpush1.msra.mxu0 %v38
  %1606 = vmatprep.subr.mxu0 0.0
  %1607 = vmatpush1.msra.mxu0 %v39
  %1608 = vmatprep.subr.mxu0 0.0
  %1609 = vmatpush1.msra.mxu0 %v40
  %1610 = vmatprep.subr.mxu0 0.0
  %1611 = vmatpush1.msra.mxu0 %v41
  %1612 = vmatprep.subr.mxu0 0.0
  %1613 = vmatpush1.msra.mxu0 %v42
  %1614 = vmatprep.subr.mxu0 0.0
  %1615 = vmatpush1.msra.mxu0 %v43
  %1616 = vmatprep.subr.mxu0 0.0
  %1617 = vmatpush1.msra.mxu0 %v44
  %1618 = vmatprep.subr.mxu0 0.0
  %1619 = vmatpush1.msra.mxu0 %v45
  %1620 = vmatprep.subr.mxu0 0.0
  %1621 = vmatpush1.msra.mxu0 %v46
  %1622 = vmatprep.subr.mxu0 0.0
  %1623 = vmatpush1.msra.mxu0 %v47
  %1624 = vmatprep.subr.mxu0 0.0
  %1625 = vmatpush1.msra.mxu0 %v48
  %1626 = vmatprep.subr.mxu0 0.0
  %1627 = vmatpush1.msra.mxu0 %v49
  %1628 = vmatprep.subr.mxu0 0.0
  %1629 = vmatpush1.msra.mxu0 %v50
  %1630 = vmatprep.subr.mxu0 0.0
  %1631 = vmatpush1.msra.mxu0 %v51
  %1632 = vmatprep.subr.mxu0 0.0
  %1633 = vmatpush1.msra.mxu0 %v52
  %1634 = vmatprep.mubr.f32.mxu0 %v1565
  %1635 = vmatmul.mubr.f32.gmra.mrb[0].mxu0 %v1557
  %v1636 = vpop.f32.mrb[0].mxu0
  %v1637 = vadd.f32 %v62, %v1636
  %v1638 = vpop.f32.mrb[0].mxu0
  %1639 = vdwg.mxu0
  %1640 = vmatprep.subr.mxu0 0.0
  %1641 = vmatpush1.msra.mxu0 %v53
  %1642 = vmatprep.subr.mxu0 0.0
  %1643 = vmatpush1.msra.mxu0 %v54
  %1644 = vmatprep.subr.mxu0 0.0
  %1645 = vmatpush1.msra.mxu0 %v55
  %1646 = vmatprep.subr.mxu0 0.0
  %1647 = vmatpush1.msra.mxu0 %v56
  %1648 = vmatprep.subr.mxu0 0.0
  %1649 = vmatpush1.msra.mxu0 0.0
  %1650 = vmatprep.subr.mxu0 0.0
  %1651 = vmatpush1.msra.mxu0 0.0
  %1652 = vmatprep.subr.mxu0 0.0
  %1653 = vmatpush1.msra.mxu0 0.0
  %1654 = vmatprep.subr.mxu0 0.0
  %1655 = vmatpush1.msra.mxu0 0.0
  %1656 = vmatprep.subr.mxu0 0.0
  %1657 = vmatpush1.msra.mxu0 0.0
  %1658 = vmatprep.subr.mxu0 0.0
  %1659 = vmatpush1.msra.mxu0 0.0
  %1660 = vmatprep.subr.mxu0 0.0
  %1661 = vmatpush1.msra.mxu0 0.0
  %1662 = vmatprep.subr.mxu0 0.0
  %1663 = vmatpush1.msra.mxu0 0.0
  %1664 = vmatprep.subr.mxu0 0.0
  %1665 = vmatpush1.msra.mxu0 0.0
  %1666 = vmatprep.subr.mxu0 0.0
  %1667 = vmatpush1.msra.mxu0 0.0
  %1668 = vmatprep.subr.mxu0 0.0
  %1669 = vmatpush1.msra.mxu0 0.0
  %1670 = vmatprep.subr.mxu0 0.0
  %1671 = vmatpush1.msra.mxu0 0.0
  %1672 = vmatprep.subr.mxu0 0.0
  %1673 = vmatpush1.msra.mxu0 0.0
  %1674 = vmatprep.subr.mxu0 0.0
  %1675 = vmatpush1.msra.mxu0 0.0
  %1676 = vmatprep.subr.mxu0 0.0
  %1677 = vmatpush1.msra.mxu0 0.0
  %1678 = vmatprep.subr.mxu0 0.0
  %1679 = vmatpush1.msra.mxu0 0.0
  %1680 = vmatprep.subr.mxu0 0.0
  %1681 = vmatpush1.msra.mxu0 0.0
  %1682 = vmatprep.subr.mxu0 0.0
  %1683 = vmatpush1.msra.mxu0 0.0
  %1684 = vmatprep.subr.mxu0 0.0
  %1685 = vmatpush1.msra.mxu0 0.0
  %1686 = vmatprep.subr.mxu0 0.0
  %1687 = vmatpush1.msra.mxu0 0.0
  %1688 = vmatprep.subr.mxu0 0.0
  %1689 = vmatpush1.msra.mxu0 0.0
  %1690 = vmatprep.subr.mxu0 0.0
  %1691 = vmatpush1.msra.mxu0 0.0
  %1692 = vmatprep.subr.mxu0 0.0
  %1693 = vmatpush1.msra.mxu0 0.0
  %1694 = vmatprep.subr.mxu0 0.0
  %1695 = vmatpush1.msra.mxu0 0.0
  %1696 = vmatprep.subr.mxu0 0.0
  %1697 = vmatpush1.msra.mxu0 0.0
  %1698 = vmatprep.subr.mxu0 0.0
  %1699 = vmatpush1.msra.mxu0 0.0
  %1700 = vmatprep.subr.mxu0 0.0
  %1701 = vmatpush1.msra.mxu0 0.0
  %1702 = vmatprep.subr.mxu0 0.0
  %1703 = vmatpush1.msra.mxu0 0.0
  %1704 = vmatprep.mubr.f32.mxu0 0.0
  %1705 = vmatmul.mubr.f32.gmra.mrb[0].mxu0 %v1568
  %v1706 = vpop.f32.mrb[0].mxu0
  %v1707 = vadd.f32 %v1637, %v1706
  %v1708 = vpop.f32.mrb[0].mxu0
  %1709 = vdwg.mxu0
  %v1710 = vmax.f32 %v1707, 0.0
  %v1711 = vmax.f32 %v1546, %v1710
  %s1712 = scalar_lea.vmem %s0, 60
  %v1713 = vld [vmem:[%s1712] sm:$0x3f]
  %v1715 = vcombine.high %v1713, %v1713
  %v1717 = vunpack.c.l.s4 1983009808
  %v1718 = vunpack.c.0.s8 %v1717
  %v1719 = vlaneseq
  %v1720 = vshrl.u32 %v1719, 7
  %v1721 = vsub.s32 %v1718, %v1720
  %v1722 = vrot.slane %v1713, %v1721
  %v1724 = vunpack.c.l.s4 1983009808
  %v1725 = vunpack.c.0.s8 %v1724
  %v1726 = vlaneseq
  %v1727 = vshrl.u32 %v1726, 7
  %v1728 = vsub.s32 %v1725, %v1727
  %v1729 = vrot.slane %v1715, %v1728
  %v1730 = vcombine.high %v1722, %v1722
  %v1733 = vsel %vm83, %v1729, 0
  %1735 = vmatprep.subr.mxu0 0.0
  %1736 = vmatpush1.msra.mxu0 %v21
  %1737 = vmatprep.subr.mxu0 0.0
  %1738 = vmatpush1.msra.mxu0 %v22
  %1739 = vmatprep.subr.mxu0 0.0
  %1740 = vmatpush1.msra.mxu0 %v23
  %1741 = vmatprep.subr.mxu0 0.0
  %1742 = vmatpush1.msra.mxu0 %v24
  %1743 = vmatprep.subr.mxu0 0.0
  %1744 = vmatpush1.msra.mxu0 %v25
  %1745 = vmatprep.subr.mxu0 0.0
  %1746 = vmatpush1.msra.mxu0 %v26
  %1747 = vmatprep.subr.mxu0 0.0
  %1748 = vmatpush1.msra.mxu0 %v27
  %1749 = vmatprep.subr.mxu0 0.0
  %1750 = vmatpush1.msra.mxu0 %v28
  %1751 = vmatprep.subr.mxu0 0.0
  %1752 = vmatpush1.msra.mxu0 %v29
  %1753 = vmatprep.subr.mxu0 0.0
  %1754 = vmatpush1.msra.mxu0 %v30
  %1755 = vmatprep.subr.mxu0 0.0
  %1756 = vmatpush1.msra.mxu0 %v31
  %1757 = vmatprep.subr.mxu0 0.0
  %1758 = vmatpush1.msra.mxu0 %v32
  %1759 = vmatprep.subr.mxu0 0.0
  %1760 = vmatpush1.msra.mxu0 %v33
  %1761 = vmatprep.subr.mxu0 0.0
  %1762 = vmatpush1.msra.mxu0 %v34
  %1763 = vmatprep.subr.mxu0 0.0
  %1764 = vmatpush1.msra.mxu0 %v35
  %1765 = vmatprep.subr.mxu0 0.0
  %1766 = vmatpush1.msra.mxu0 %v36
  %1767 = vmatprep.subr.mxu0 0.0
  %1768 = vmatpush1.msra.mxu0 %v37
  %1769 = vmatprep.subr.mxu0 0.0
  %1770 = vmatpush1.msra.mxu0 %v38
  %1771 = vmatprep.subr.mxu0 0.0
  %1772 = vmatpush1.msra.mxu0 %v39
  %1773 = vmatprep.subr.mxu0 0.0
  %1774 = vmatpush1.msra.mxu0 %v40
  %1775 = vmatprep.subr.mxu0 0.0
  %1776 = vmatpush1.msra.mxu0 %v41
  %1777 = vmatprep.subr.mxu0 0.0
  %1778 = vmatpush1.msra.mxu0 %v42
  %1779 = vmatprep.subr.mxu0 0.0
  %1780 = vmatpush1.msra.mxu0 %v43
  %1781 = vmatprep.subr.mxu0 0.0
  %1782 = vmatpush1.msra.mxu0 %v44
  %1783 = vmatprep.subr.mxu0 0.0
  %1784 = vmatpush1.msra.mxu0 %v45
  %1785 = vmatprep.subr.mxu0 0.0
  %1786 = vmatpush1.msra.mxu0 %v46
  %1787 = vmatprep.subr.mxu0 0.0
  %1788 = vmatpush1.msra.mxu0 %v47
  %1789 = vmatprep.subr.mxu0 0.0
  %1790 = vmatpush1.msra.mxu0 %v48
  %1791 = vmatprep.subr.mxu0 0.0
  %1792 = vmatpush1.msra.mxu0 %v49
  %1793 = vmatprep.subr.mxu0 0.0
  %1794 = vmatpush1.msra.mxu0 %v50
  %1795 = vmatprep.subr.mxu0 0.0
  %1796 = vmatpush1.msra.mxu0 %v51
  %1797 = vmatprep.subr.mxu0 0.0
  %1798 = vmatpush1.msra.mxu0 %v52
  %1799 = vmatprep.mubr.f32.mxu0 %v1730
  %1800 = vmatmul.mubr.f32.gmra.mrb[0].mxu0 %v1722
  %v1801 = vpop.f32.mrb[0].mxu0
  %v1802 = vadd.f32 %v62, %v1801
  %v1803 = vpop.f32.mrb[0].mxu0
  %1804 = vdwg.mxu0
  %1805 = vmatprep.subr.mxu0 0.0
  %1806 = vmatpush1.msra.mxu0 %v53
  %1807 = vmatprep.subr.mxu0 0.0
  %1808 = vmatpush1.msra.mxu0 %v54
  %1809 = vmatprep.subr.mxu0 0.0
  %1810 = vmatpush1.msra.mxu0 %v55
  %1811 = vmatprep.subr.mxu0 0.0
  %1812 = vmatpush1.msra.mxu0 %v56
  %1813 = vmatprep.subr.mxu0 0.0
  %1814 = vmatpush1.msra.mxu0 0.0
  %1815 = vmatprep.subr.mxu0 0.0
  %1816 = vmatpush1.msra.mxu0 0.0
  %1817 = vmatprep.subr.mxu0 0.0
  %1818 = vmatpush1.msra.mxu0 0.0
  %1819 = vmatprep.subr.mxu0 0.0
  %1820 = vmatpush1.msra.mxu0 0.0
  %1821 = vmatprep.subr.mxu0 0.0
  %1822 = vmatpush1.msra.mxu0 0.0
  %1823 = vmatprep.subr.mxu0 0.0
  %1824 = vmatpush1.msra.mxu0 0.0
  %1825 = vmatprep.subr.mxu0 0.0
  %1826 = vmatpush1.msra.mxu0 0.0
  %1827 = vmatprep.subr.mxu0 0.0
  %1828 = vmatpush1.msra.mxu0 0.0
  %1829 = vmatprep.subr.mxu0 0.0
  %1830 = vmatpush1.msra.mxu0 0.0
  %1831 = vmatprep.subr.mxu0 0.0
  %1832 = vmatpush1.msra.mxu0 0.0
  %1833 = vmatprep.subr.mxu0 0.0
  %1834 = vmatpush1.msra.mxu0 0.0
  %1835 = vmatprep.subr.mxu0 0.0
  %1836 = vmatpush1.msra.mxu0 0.0
  %1837 = vmatprep.subr.mxu0 0.0
  %1838 = vmatpush1.msra.mxu0 0.0
  %1839 = vmatprep.subr.mxu0 0.0
  %1840 = vmatpush1.msra.mxu0 0.0
  %1841 = vmatprep.subr.mxu0 0.0
  %1842 = vmatpush1.msra.mxu0 0.0
  %1843 = vmatprep.subr.mxu0 0.0
  %1844 = vmatpush1.msra.mxu0 0.0
  %1845 = vmatprep.subr.mxu0 0.0
  %1846 = vmatpush1.msra.mxu0 0.0
  %1847 = vmatprep.subr.mxu0 0.0
  %1848 = vmatpush1.msra.mxu0 0.0
  %1849 = vmatprep.subr.mxu0 0.0
  %1850 = vmatpush1.msra.mxu0 0.0
  %1851 = vmatprep.subr.mxu0 0.0
  %1852 = vmatpush1.msra.mxu0 0.0
  %1853 = vmatprep.subr.mxu0 0.0
  %1854 = vmatpush1.msra.mxu0 0.0
  %1855 = vmatprep.subr.mxu0 0.0
  %1856 = vmatpush1.msra.mxu0 0.0
  %1857 = vmatprep.subr.mxu0 0.0
  %1858 = vmatpush1.msra.mxu0 0.0
  %1859 = vmatprep.subr.mxu0 0.0
  %1860 = vmatpush1.msra.mxu0 0.0
  %1861 = vmatprep.subr.mxu0 0.0
  %1862 = vmatpush1.msra.mxu0 0.0
  %1863 = vmatprep.subr.mxu0 0.0
  %1864 = vmatpush1.msra.mxu0 0.0
  %1865 = vmatprep.subr.mxu0 0.0
  %1866 = vmatpush1.msra.mxu0 0.0
  %1867 = vmatprep.subr.mxu0 0.0
  %1868 = vmatpush1.msra.mxu0 0.0
  %1869 = vmatprep.mubr.f32.mxu0 0.0
  %1870 = vmatmul.mubr.f32.gmra.mrb[0].mxu0 %v1733
  %v1871 = vpop.f32.mrb[0].mxu0
  %v1872 = vadd.f32 %v1802, %v1871
  %v1873 = vpop.f32.mrb[0].mxu0
  %1874 = vdwg.mxu0
  %v1875 = vmax.f32 %v1872, 0.0
  %v1876 = vmax.f32 %v1711, %v1875
  %s1877 = scalar_lea.vmem %s0, 66
  %v1878 = vld [vmem:[%s1877] sm:$0x3f]
  %v1880 = vcombine.high %v1878, %v1878
  %v1882 = vunpack.c.l.s4 1983009808
  %v1883 = vunpack.c.0.s8 %v1882
  %v1884 = vlaneseq
  %v1885 = vshrl.u32 %v1884, 7
  %v1886 = vsub.s32 %v1883, %v1885
  %v1887 = vrot.slane %v1878, %v1886
  %v1889 = vunpack.c.l.s4 1983009808
  %v1890 = vunpack.c.0.s8 %v1889
  %v1891 = vlaneseq
  %v1892 = vshrl.u32 %v1891, 7
  %v1893 = vsub.s32 %v1890, %v1892
  %v1894 = vrot.slane %v1880, %v1893
  %v1895 = vcombine.high %v1887, %v1887
  %v1898 = vsel %vm83, %v1894, 0
  %1900 = vmatprep.subr.mxu0 0.0
  %1901 = vmatpush1.msra.mxu0 %v21
  %1902 = vmatprep.subr.mxu0 0.0
  %1903 = vmatpush1.msra.mxu0 %v22
  %1904 = vmatprep.subr.mxu0 0.0
  %1905 = vmatpush1.msra.mxu0 %v23
  %1906 = vmatprep.subr.mxu0 0.0
  %1907 = vmatpush1.msra.mxu0 %v24
  %1908 = vmatprep.subr.mxu0 0.0
  %1909 = vmatpush1.msra.mxu0 %v25
  %1910 = vmatprep.subr.mxu0 0.0
  %1911 = vmatpush1.msra.mxu0 %v26
  %1912 = vmatprep.subr.mxu0 0.0
  %1913 = vmatpush1.msra.mxu0 %v27
  %1914 = vmatprep.subr.mxu0 0.0
  %1915 = vmatpush1.msra.mxu0 %v28
  %1916 = vmatprep.subr.mxu0 0.0
  %1917 = vmatpush1.msra.mxu0 %v29
  %1918 = vmatprep.subr.mxu0 0.0
  %1919 = vmatpush1.msra.mxu0 %v30
  %1920 = vmatprep.subr.mxu0 0.0
  %1921 = vmatpush1.msra.mxu0 %v31
  %1922 = vmatprep.subr.mxu0 0.0
  %1923 = vmatpush1.msra.mxu0 %v32
  %1924 = vmatprep.subr.mxu0 0.0
  %1925 = vmatpush1.msra.mxu0 %v33
  %1926 = vmatprep.subr.mxu0 0.0
  %1927 = vmatpush1.msra.mxu0 %v34
  %1928 = vmatprep.subr.mxu0 0.0
  %1929 = vmatpush1.msra.mxu0 %v35
  %1930 = vmatprep.subr.mxu0 0.0
  %1931 = vmatpush1.msra.mxu0 %v36
  %1932 = vmatprep.subr.mxu0 0.0
  %1933 = vmatpush1.msra.mxu0 %v37
  %1934 = vmatprep.subr.mxu0 0.0
  %1935 = vmatpush1.msra.mxu0 %v38
  %1936 = vmatprep.subr.mxu0 0.0
  %1937 = vmatpush1.msra.mxu0 %v39
  %1938 = vmatprep.subr.mxu0 0.0
  %1939 = vmatpush1.msra.mxu0 %v40
  %1940 = vmatprep.subr.mxu0 0.0
  %1941 = vmatpush1.msra.mxu0 %v41
  %1942 = vmatprep.subr.mxu0 0.0
  %1943 = vmatpush1.msra.mxu0 %v42
  %1944 = vmatprep.subr.mxu0 0.0
  %1945 = vmatpush1.msra.mxu0 %v43
  %1946 = vmatprep.subr.mxu0 0.0
  %1947 = vmatpush1.msra.mxu0 %v44
  %1948 = vmatprep.subr.mxu0 0.0
  %1949 = vmatpush1.msra.mxu0 %v45
  %1950 = vmatprep.subr.mxu0 0.0
  %1951 = vmatpush1.msra.mxu0 %v46
  %1952 = vmatprep.subr.mxu0 0.0
  %1953 = vmatpush1.msra.mxu0 %v47
  %1954 = vmatprep.subr.mxu0 0.0
  %1955 = vmatpush1.msra.mxu0 %v48
  %1956 = vmatprep.subr.mxu0 0.0
  %1957 = vmatpush1.msra.mxu0 %v49
  %1958 = vmatprep.subr.mxu0 0.0
  %1959 = vmatpush1.msra.mxu0 %v50
  %1960 = vmatprep.subr.mxu0 0.0
  %1961 = vmatpush1.msra.mxu0 %v51
  %1962 = vmatprep.subr.mxu0 0.0
  %1963 = vmatpush1.msra.mxu0 %v52
  %1964 = vmatprep.mubr.f32.mxu0 %v1895
  %1965 = vmatmul.mubr.f32.gmra.mrb[0].mxu0 %v1887
  %v1966 = vpop.f32.mrb[0].mxu0
  %v1967 = vadd.f32 %v62, %v1966
  %v1968 = vpop.f32.mrb[0].mxu0
  %1969 = vdwg.mxu0
  %1970 = vmatprep.subr.mxu0 0.0
  %1971 = vmatpush1.msra.mxu0 %v53
  %1972 = vmatprep.subr.mxu0 0.0
  %1973 = vmatpush1.msra.mxu0 %v54
  %1974 = vmatprep.subr.mxu0 0.0
  %1975 = vmatpush1.msra.mxu0 %v55
  %1976 = vmatprep.subr.mxu0 0.0
  %1977 = vmatpush1.msra.mxu0 %v56
  %1978 = vmatprep.subr.mxu0 0.0
  %1979 = vmatpush1.msra.mxu0 0.0
  %1980 = vmatprep.subr.mxu0 0.0
  %1981 = vmatpush1.msra.mxu0 0.0
  %1982 = vmatprep.subr.mxu0 0.0
  %1983 = vmatpush1.msra.mxu0 0.0
  %1984 = vmatprep.subr.mxu0 0.0
  %1985 = vmatpush1.msra.mxu0 0.0
  %1986 = vmatprep.subr.mxu0 0.0
  %1987 = vmatpush1.msra.mxu0 0.0
  %1988 = vmatprep.subr.mxu0 0.0
  %1989 = vmatpush1.msra.mxu0 0.0
  %1990 = vmatprep.subr.mxu0 0.0
  %1991 = vmatpush1.msra.mxu0 0.0
  %1992 = vmatprep.subr.mxu0 0.0
  %1993 = vmatpush1.msra.mxu0 0.0
  %1994 = vmatprep.subr.mxu0 0.0
  %1995 = vmatpush1.msra.mxu0 0.0
  %1996 = vmatprep.subr.mxu0 0.0
  %1997 = vmatpush1.msra.mxu0 0.0
  %1998 = vmatprep.subr.mxu0 0.0
  %1999 = vmatpush1.msra.mxu0 0.0
  %2000 = vmatprep.subr.mxu0 0.0
  %2001 = vmatpush1.msra.mxu0 0.0
  %2002 = vmatprep.subr.mxu0 0.0
  %2003 = vmatpush1.msra.mxu0 0.0
  %2004 = vmatprep.subr.mxu0 0.0
  %2005 = vmatpush1.msra.mxu0 0.0
  %2006 = vmatprep.subr.mxu0 0.0
  %2007 = vmatpush1.msra.mxu0 0.0
  %2008 = vmatprep.subr.mxu0 0.0
  %2009 = vmatpush1.msra.mxu0 0.0
  %2010 = vmatprep.subr.mxu0 0.0
  %2011 = vmatpush1.msra.mxu0 0.0
  %2012 = vmatprep.subr.mxu0 0.0
  %2013 = vmatpush1.msra.mxu0 0.0
  %2014 = vmatprep.subr.mxu0 0.0
  %2015 = vmatpush1.msra.mxu0 0.0
  %2016 = vmatprep.subr.mxu0 0.0
  %2017 = vmatpush1.msra.mxu0 0.0
  %2018 = vmatprep.subr.mxu0 0.0
  %2019 = vmatpush1.msra.mxu0 0.0
  %2020 = vmatprep.subr.mxu0 0.0
  %2021 = vmatpush1.msra.mxu0 0.0
  %2022 = vmatprep.subr.mxu0 0.0
  %2023 = vmatpush1.msra.mxu0 0.0
  %2024 = vmatprep.subr.mxu0 0.0
  %2025 = vmatpush1.msra.mxu0 0.0
  %2026 = vmatprep.subr.mxu0 0.0
  %2027 = vmatpush1.msra.mxu0 0.0
  %2028 = vmatprep.subr.mxu0 0.0
  %2029 = vmatpush1.msra.mxu0 0.0
  %2030 = vmatprep.subr.mxu0 0.0
  %2031 = vmatpush1.msra.mxu0 0.0
  %2032 = vmatprep.subr.mxu0 0.0
  %2033 = vmatpush1.msra.mxu0 0.0
  %2034 = vmatprep.mubr.f32.mxu0 0.0
  %2035 = vmatmul.mubr.f32.gmra.mrb[0].mxu0 %v1898
  %v2036 = vpop.f32.mrb[0].mxu0
  %v2037 = vadd.f32 %v1967, %v2036
  %v2038 = vpop.f32.mrb[0].mxu0
  %2039 = vdwg.mxu0
  %v2040 = vmax.f32 %v2037, 0.0
  %v2041 = vmax.f32 %v1876, %v2040
  %s2042 = scalar_lea.vmem %s0, 72
  %v2043 = vld [vmem:[%s2042] sm:$0x3f]
  %v2045 = vcombine.high %v2043, %v2043
  %v2047 = vunpack.c.l.s4 1983009808
  %v2048 = vunpack.c.0.s8 %v2047
  %v2049 = vlaneseq
  %v2050 = vshrl.u32 %v2049, 7
  %v2051 = vsub.s32 %v2048, %v2050
  %v2052 = vrot.slane %v2043, %v2051
  %v2054 = vunpack.c.l.s4 1983009808
  %v2055 = vunpack.c.0.s8 %v2054
  %v2056 = vlaneseq
  %v2057 = vshrl.u32 %v2056, 7
  %v2058 = vsub.s32 %v2055, %v2057
  %v2059 = vrot.slane %v2045, %v2058
  %v2060 = vcombine.high %v2052, %v2052
  %v2063 = vsel %vm83, %v2059, 0
  %2065 = vmatprep.subr.mxu0 0.0
  %2066 = vmatpush1.msra.mxu0 %v21
  %2067 = vmatprep.subr.mxu0 0.0
  %2068 = vmatpush1.msra.mxu0 %v22
  %2069 = vmatprep.subr.mxu0 0.0
  %2070 = vmatpush1.msra.mxu0 %v23
  %2071 = vmatprep.subr.mxu0 0.0
  %2072 = vmatpush1.msra.mxu0 %v24
  %2073 = vmatprep.subr.mxu0 0.0
  %2074 = vmatpush1.msra.mxu0 %v25
  %2075 = vmatprep.subr.mxu0 0.0
  %2076 = vmatpush1.msra.mxu0 %v26
  %2077 = vmatprep.subr.mxu0 0.0
  %2078 = vmatpush1.msra.mxu0 %v27
  %2079 = vmatprep.subr.mxu0 0.0
  %2080 = vmatpush1.msra.mxu0 %v28
  %2081 = vmatprep.subr.mxu0 0.0
  %2082 = vmatpush1.msra.mxu0 %v29
  %2083 = vmatprep.subr.mxu0 0.0
  %2084 = vmatpush1.msra.mxu0 %v30
  %2085 = vmatprep.subr.mxu0 0.0
  %2086 = vmatpush1.msra.mxu0 %v31
  %2087 = vmatprep.subr.mxu0 0.0
  %2088 = vmatpush1.msra.mxu0 %v32
  %2089 = vmatprep.subr.mxu0 0.0
  %2090 = vmatpush1.msra.mxu0 %v33
  %2091 = vmatprep.subr.mxu0 0.0
  %2092 = vmatpush1.msra.mxu0 %v34
  %2093 = vmatprep.subr.mxu0 0.0
  %2094 = vmatpush1.msra.mxu0 %v35
  %2095 = vmatprep.subr.mxu0 0.0
  %2096 = vmatpush1.msra.mxu0 %v36
  %2097 = vmatprep.subr.mxu0 0.0
  %2098 = vmatpush1.msra.mxu0 %v37
  %2099 = vmatprep.subr.mxu0 0.0
  %2100 = vmatpush1.msra.mxu0 %v38
  %2101 = vmatprep.subr.mxu0 0.0
  %2102 = vmatpush1.msra.mxu0 %v39
  %2103 = vmatprep.subr.mxu0 0.0
  %2104 = vmatpush1.msra.mxu0 %v40
  %2105 = vmatprep.subr.mxu0 0.0
  %2106 = vmatpush1.msra.mxu0 %v41
  %2107 = vmatprep.subr.mxu0 0.0
  %2108 = vmatpush1.msra.mxu0 %v42
  %2109 = vmatprep.subr.mxu0 0.0
  %2110 = vmatpush1.msra.mxu0 %v43
  %2111 = vmatprep.subr.mxu0 0.0
  %2112 = vmatpush1.msra.mxu0 %v44
  %2113 = vmatprep.subr.mxu0 0.0
  %2114 = vmatpush1.msra.mxu0 %v45
  %2115 = vmatprep.subr.mxu0 0.0
  %2116 = vmatpush1.msra.mxu0 %v46
  %2117 = vmatprep.subr.mxu0 0.0
  %2118 = vmatpush1.msra.mxu0 %v47
  %2119 = vmatprep.subr.mxu0 0.0
  %2120 = vmatpush1.msra.mxu0 %v48
  %2121 = vmatprep.subr.mxu0 0.0
  %2122 = vmatpush1.msra.mxu0 %v49
  %2123 = vmatprep.subr.mxu0 0.0
  %2124 = vmatpush1.msra.mxu0 %v50
  %2125 = vmatprep.subr.mxu0 0.0
  %2126 = vmatpush1.msra.mxu0 %v51
  %2127 = vmatprep.subr.mxu0 0.0
  %2128 = vmatpush1.msra.mxu0 %v52
  %2129 = vmatprep.mubr.f32.mxu0 %v2060
  %2130 = vmatmul.mubr.f32.gmra.mrb[0].mxu0 %v2052
  %v2131 = vpop.f32.mrb[0].mxu0
  %v2132 = vadd.f32 %v62, %v2131
  %v2133 = vpop.f32.mrb[0].mxu0
  %2134 = vdwg.mxu0
  %2135 = vmatprep.subr.mxu0 0.0
  %2136 = vmatpush1.msra.mxu0 %v53
  %2137 = vmatprep.subr.mxu0 0.0
  %2138 = vmatpush1.msra.mxu0 %v54
  %2139 = vmatprep.subr.mxu0 0.0
  %2140 = vmatpush1.msra.mxu0 %v55
  %2141 = vmatprep.subr.mxu0 0.0
  %2142 = vmatpush1.msra.mxu0 %v56
  %2143 = vmatprep.subr.mxu0 0.0
  %2144 = vmatpush1.msra.mxu0 0.0
  %2145 = vmatprep.subr.mxu0 0.0
  %2146 = vmatpush1.msra.mxu0 0.0
  %2147 = vmatprep.subr.mxu0 0.0
  %2148 = vmatpush1.msra.mxu0 0.0
  %2149 = vmatprep.subr.mxu0 0.0
  %2150 = vmatpush1.msra.mxu0 0.0
  %2151 = vmatprep.subr.mxu0 0.0
  %2152 = vmatpush1.msra.mxu0 0.0
  %2153 = vmatprep.subr.mxu0 0.0
  %2154 = vmatpush1.msra.mxu0 0.0
  %2155 = vmatprep.subr.mxu0 0.0
  %2156 = vmatpush1.msra.mxu0 0.0
  %2157 = vmatprep.subr.mxu0 0.0
  %2158 = vmatpush1.msra.mxu0 0.0
  %2159 = vmatprep.subr.mxu0 0.0
  %2160 = vmatpush1.msra.mxu0 0.0
  %2161 = vmatprep.subr.mxu0 0.0
  %2162 = vmatpush1.msra.mxu0 0.0
  %2163 = vmatprep.subr.mxu0 0.0
  %2164 = vmatpush1.msra.mxu0 0.0
  %2165 = vmatprep.subr.mxu0 0.0
  %2166 = vmatpush1.msra.mxu0 0.0
  %2167 = vmatprep.subr.mxu0 0.0
  %2168 = vmatpush1.msra.mxu0 0.0
  %2169 = vmatprep.subr.mxu0 0.0
  %2170 = vmatpush1.msra.mxu0 0.0
  %2171 = vmatprep.subr.mxu0 0.0
  %2172 = vmatpush1.msra.mxu0 0.0
  %2173 = vmatprep.subr.mxu0 0.0
  %2174 = vmatpush1.msra.mxu0 0.0
  %2175 = vmatprep.subr.mxu0 0.0
  %2176 = vmatpush1.msra.mxu0 0.0
  %2177 = vmatprep.subr.mxu0 0.0
  %2178 = vmatpush1.msra.mxu0 0.0
  %2179 = vmatprep.subr.mxu0 0.0
  %2180 = vmatpush1.msra.mxu0 0.0
  %2181 = vmatprep.subr.mxu0 0.0
  %2182 = vmatpush1.msra.mxu0 0.0
  %2183 = vmatprep.subr.mxu0 0.0
  %2184 = vmatpush1.msra.mxu0 0.0
  %2185 = vmatprep.subr.mxu0 0.0
  %2186 = vmatpush1.msra.mxu0 0.0
  %2187 = vmatprep.subr.mxu0 0.0
  %2188 = vmatpush1.msra.mxu0 0.0
  %2189 = vmatprep.subr.mxu0 0.0
  %2190 = vmatpush1.msra.mxu0 0.0
  %2191 = vmatprep.subr.mxu0 0.0
  %2192 = vmatpush1.msra.mxu0 0.0
  %2193 = vmatprep.subr.mxu0 0.0
  %2194 = vmatpush1.msra.mxu0 0.0
  %2195 = vmatprep.subr.mxu0 0.0
  %2196 = vmatpush1.msra.mxu0 0.0
  %2197 = vmatprep.subr.mxu0 0.0
  %2198 = vmatpush1.msra.mxu0 0.0
  %2199 = vmatprep.mubr.f32.mxu0 0.0
  %2200 = vmatmul.mubr.f32.gmra.mrb[0].mxu0 %v2063
  %v2201 = vpop.f32.mrb[0].mxu0
  %v2202 = vadd.f32 %v2132, %v2201
  %v2203 = vpop.f32.mrb[0].mxu0
  %2204 = vdwg.mxu0
  %v2205 = vmax.f32 %v2202, 0.0
  %v2206 = vmax.f32 %v2041, %v2205
  %s2207 = scalar_lea.vmem %s0, 78
  %v2208 = vld [vmem:[%s2207] sm:$0x3f]
  %v2210 = vcombine.high %v2208, %v2208
  %v2212 = vunpack.c.l.s4 1983009808
  %v2213 = vunpack.c.0.s8 %v2212
  %v2214 = vlaneseq
  %v2215 = vshrl.u32 %v2214, 7
  %v2216 = vsub.s32 %v2213, %v2215
  %v2217 = vrot.slane %v2208, %v2216
  %v2219 = vunpack.c.l.s4 1983009808
  %v2220 = vunpack.c.0.s8 %v2219
  %v2221 = vlaneseq
  %v2222 = vshrl.u32 %v2221, 7
  %v2223 = vsub.s32 %v2220, %v2222
  %v2224 = vrot.slane %v2210, %v2223
  %v2225 = vcombine.high %v2217, %v2217
  %v2228 = vsel %vm83, %v2224, 0
  %2230 = vmatprep.subr.mxu0 0.0
  %2231 = vmatpush1.msra.mxu0 %v21
  %2232 = vmatprep.subr.mxu0 0.0
  %2233 = vmatpush1.msra.mxu0 %v22
  %2234 = vmatprep.subr.mxu0 0.0
  %2235 = vmatpush1.msra.mxu0 %v23
  %2236 = vmatprep.subr.mxu0 0.0
  %2237 = vmatpush1.msra.mxu0 %v24
  %2238 = vmatprep.subr.mxu0 0.0
  %2239 = vmatpush1.msra.mxu0 %v25
  %2240 = vmatprep.subr.mxu0 0.0
  %2241 = vmatpush1.msra.mxu0 %v26
  %2242 = vmatprep.subr.mxu0 0.0
  %2243 = vmatpush1.msra.mxu0 %v27
  %2244 = vmatprep.subr.mxu0 0.0
  %2245 = vmatpush1.msra.mxu0 %v28
  %2246 = vmatprep.subr.mxu0 0.0
  %2247 = vmatpush1.msra.mxu0 %v29
  %2248 = vmatprep.subr.mxu0 0.0
  %2249 = vmatpush1.msra.mxu0 %v30
  %2250 = vmatprep.subr.mxu0 0.0
  %2251 = vmatpush1.msra.mxu0 %v31
  %2252 = vmatprep.subr.mxu0 0.0
  %2253 = vmatpush1.msra.mxu0 %v32
  %2254 = vmatprep.subr.mxu0 0.0
  %2255 = vmatpush1.msra.mxu0 %v33
  %2256 = vmatprep.subr.mxu0 0.0
  %2257 = vmatpush1.msra.mxu0 %v34
  %2258 = vmatprep.subr.mxu0 0.0
  %2259 = vmatpush1.msra.mxu0 %v35
  %2260 = vmatprep.subr.mxu0 0.0
  %2261 = vmatpush1.msra.mxu0 %v36
  %2262 = vmatprep.subr.mxu0 0.0
  %2263 = vmatpush1.msra.mxu0 %v37
  %2264 = vmatprep.subr.mxu0 0.0
  %2265 = vmatpush1.msra.mxu0 %v38
  %2266 = vmatprep.subr.mxu0 0.0
  %2267 = vmatpush1.msra.mxu0 %v39
  %2268 = vmatprep.subr.mxu0 0.0
  %2269 = vmatpush1.msra.mxu0 %v40
  %2270 = vmatprep.subr.mxu0 0.0
  %2271 = vmatpush1.msra.mxu0 %v41
  %2272 = vmatprep.subr.mxu0 0.0
  %2273 = vmatpush1.msra.mxu0 %v42
  %2274 = vmatprep.subr.mxu0 0.0
  %2275 = vmatpush1.msra.mxu0 %v43
  %2276 = vmatprep.subr.mxu0 0.0
  %2277 = vmatpush1.msra.mxu0 %v44
  %2278 = vmatprep.subr.mxu0 0.0
  %2279 = vmatpush1.msra.mxu0 %v45
  %2280 = vmatprep.subr.mxu0 0.0
  %2281 = vmatpush1.msra.mxu0 %v46
  %2282 = vmatprep.subr.mxu0 0.0
  %2283 = vmatpush1.msra.mxu0 %v47
  %2284 = vmatprep.subr.mxu0 0.0
  %2285 = vmatpush1.msra.mxu0 %v48
  %2286 = vmatprep.subr.mxu0 0.0
  %2287 = vmatpush1.msra.mxu0 %v49
  %2288 = vmatprep.subr.mxu0 0.0
  %2289 = vmatpush1.msra.mxu0 %v50
  %2290 = vmatprep.subr.mxu0 0.0
  %2291 = vmatpush1.msra.mxu0 %v51
  %2292 = vmatprep.subr.mxu0 0.0
  %2293 = vmatpush1.msra.mxu0 %v52
  %2294 = vmatprep.mubr.f32.mxu0 %v2225
  %2295 = vmatmul.mubr.f32.gmra.mrb[0].mxu0 %v2217
  %v2296 = vpop.f32.mrb[0].mxu0
  %v2297 = vadd.f32 %v62, %v2296
  %v2298 = vpop.f32.mrb[0].mxu0
  %2299 = vdwg.mxu0
  %2300 = vmatprep.subr.mxu0 0.0
  %2301 = vmatpush1.msra.mxu0 %v53
  %2302 = vmatprep.subr.mxu0 0.0
  %2303 = vmatpush1.msra.mxu0 %v54
  %2304 = vmatprep.subr.mxu0 0.0
  %2305 = vmatpush1.msra.mxu0 %v55
  %2306 = vmatprep.subr.mxu0 0.0
  %2307 = vmatpush1.msra.mxu0 %v56
  %2308 = vmatprep.subr.mxu0 0.0
  %2309 = vmatpush1.msra.mxu0 0.0
  %2310 = vmatprep.subr.mxu0 0.0
  %2311 = vmatpush1.msra.mxu0 0.0
  %2312 = vmatprep.subr.mxu0 0.0
  %2313 = vmatpush1.msra.mxu0 0.0
  %2314 = vmatprep.subr.mxu0 0.0
  %2315 = vmatpush1.msra.mxu0 0.0
  %2316 = vmatprep.subr.mxu0 0.0
  %2317 = vmatpush1.msra.mxu0 0.0
  %2318 = vmatprep.subr.mxu0 0.0
  %2319 = vmatpush1.msra.mxu0 0.0
  %2320 = vmatprep.subr.mxu0 0.0
  %2321 = vmatpush1.msra.mxu0 0.0
  %2322 = vmatprep.subr.mxu0 0.0
  %2323 = vmatpush1.msra.mxu0 0.0
  %2324 = vmatprep.subr.mxu0 0.0
  %2325 = vmatpush1.msra.mxu0 0.0
  %2326 = vmatprep.subr.mxu0 0.0
  %2327 = vmatpush1.msra.mxu0 0.0
  %2328 = vmatprep.subr.mxu0 0.0
  %2329 = vmatpush1.msra.mxu0 0.0
  %2330 = vmatprep.subr.mxu0 0.0
  %2331 = vmatpush1.msra.mxu0 0.0
  %2332 = vmatprep.subr.mxu0 0.0
  %2333 = vmatpush1.msra.mxu0 0.0
  %2334 = vmatprep.subr.mxu0 0.0
  %2335 = vmatpush1.msra.mxu0 0.0
  %2336 = vmatprep.subr.mxu0 0.0
  %2337 = vmatpush1.msra.mxu0 0.0
  %2338 = vmatprep.subr.mxu0 0.0
  %2339 = vmatpush1.msra.mxu0 0.0
  %2340 = vmatprep.subr.mxu0 0.0
  %2341 = vmatpush1.msra.mxu0 0.0
  %2342 = vmatprep.subr.mxu0 0.0
  %2343 = vmatpush1.msra.mxu0 0.0
  %2344 = vmatprep.subr.mxu0 0.0
  %2345 = vmatpush1.msra.mxu0 0.0
  %2346 = vmatprep.subr.mxu0 0.0
  %2347 = vmatpush1.msra.mxu0 0.0
  %2348 = vmatprep.subr.mxu0 0.0
  %2349 = vmatpush1.msra.mxu0 0.0
  %2350 = vmatprep.subr.mxu0 0.0
  %2351 = vmatpush1.msra.mxu0 0.0
  %2352 = vmatprep.subr.mxu0 0.0
  %2353 = vmatpush1.msra.mxu0 0.0
  %2354 = vmatprep.subr.mxu0 0.0
  %2355 = vmatpush1.msra.mxu0 0.0
  %2356 = vmatprep.subr.mxu0 0.0
  %2357 = vmatpush1.msra.mxu0 0.0
  %2358 = vmatprep.subr.mxu0 0.0
  %2359 = vmatpush1.msra.mxu0 0.0
  %2360 = vmatprep.subr.mxu0 0.0
  %2361 = vmatpush1.msra.mxu0 0.0
  %2362 = vmatprep.subr.mxu0 0.0
  %2363 = vmatpush1.msra.mxu0 0.0
  %2364 = vmatprep.mubr.f32.mxu0 0.0
  %2365 = vmatmul.mubr.f32.gmra.mrb[0].mxu0 %v2228
  %v2366 = vpop.f32.mrb[0].mxu0
  %v2367 = vadd.f32 %v2297, %v2366
  %v2368 = vpop.f32.mrb[0].mxu0
  %2369 = vdwg.mxu0
  %v2370 = vmax.f32 %v2367, 0.0
  %v2371 = vmax.f32 %v2206, %v2370
  %s2372 = scalar_lea.vmem %s0, 84
  %v2373 = vld [vmem:[%s2372] sm:$0x3f]
  %v2375 = vcombine.high %v2373, %v2373
  %v2377 = vunpack.c.l.s4 1983009808
  %v2378 = vunpack.c.0.s8 %v2377
  %v2379 = vlaneseq
  %v2380 = vshrl.u32 %v2379, 7
  %v2381 = vsub.s32 %v2378, %v2380
  %v2382 = vrot.slane %v2373, %v2381
  %v2384 = vunpack.c.l.s4 1983009808
  %v2385 = vunpack.c.0.s8 %v2384
  %v2386 = vlaneseq
  %v2387 = vshrl.u32 %v2386, 7
  %v2388 = vsub.s32 %v2385, %v2387
  %v2389 = vrot.slane %v2375, %v2388
  %v2390 = vcombine.high %v2382, %v2382
  %v2393 = vsel %vm83, %v2389, 0
  %2395 = vmatprep.subr.mxu0 0.0
  %2396 = vmatpush1.msra.mxu0 %v21
  %2397 = vmatprep.subr.mxu0 0.0
  %2398 = vmatpush1.msra.mxu0 %v22
  %2399 = vmatprep.subr.mxu0 0.0
  %2400 = vmatpush1.msra.mxu0 %v23
  %2401 = vmatprep.subr.mxu0 0.0
  %2402 = vmatpush1.msra.mxu0 %v24
  %2403 = vmatprep.subr.mxu0 0.0
  %2404 = vmatpush1.msra.mxu0 %v25
  %2405 = vmatprep.subr.mxu0 0.0
  %2406 = vmatpush1.msra.mxu0 %v26
  %2407 = vmatprep.subr.mxu0 0.0
  %2408 = vmatpush1.msra.mxu0 %v27
  %2409 = vmatprep.subr.mxu0 0.0
  %2410 = vmatpush1.msra.mxu0 %v28
  %2411 = vmatprep.subr.mxu0 0.0
  %2412 = vmatpush1.msra.mxu0 %v29
  %2413 = vmatprep.subr.mxu0 0.0
  %2414 = vmatpush1.msra.mxu0 %v30
  %2415 = vmatprep.subr.mxu0 0.0
  %2416 = vmatpush1.msra.mxu0 %v31
  %2417 = vmatprep.subr.mxu0 0.0
  %2418 = vmatpush1.msra.mxu0 %v32
  %2419 = vmatprep.subr.mxu0 0.0
  %2420 = vmatpush1.msra.mxu0 %v33
  %2421 = vmatprep.subr.mxu0 0.0
  %2422 = vmatpush1.msra.mxu0 %v34
  %2423 = vmatprep.subr.mxu0 0.0
  %2424 = vmatpush1.msra.mxu0 %v35
  %2425 = vmatprep.subr.mxu0 0.0
  %2426 = vmatpush1.msra.mxu0 %v36
  %2427 = vmatprep.subr.mxu0 0.0
  %2428 = vmatpush1.msra.mxu0 %v37
  %2429 = vmatprep.subr.mxu0 0.0
  %2430 = vmatpush1.msra.mxu0 %v38
  %2431 = vmatprep.subr.mxu0 0.0
  %2432 = vmatpush1.msra.mxu0 %v39
  %2433 = vmatprep.subr.mxu0 0.0
  %2434 = vmatpush1.msra.mxu0 %v40
  %2435 = vmatprep.subr.mxu0 0.0
  %2436 = vmatpush1.msra.mxu0 %v41
  %2437 = vmatprep.subr.mxu0 0.0
  %2438 = vmatpush1.msra.mxu0 %v42
  %2439 = vmatprep.subr.mxu0 0.0
  %2440 = vmatpush1.msra.mxu0 %v43
  %2441 = vmatprep.subr.mxu0 0.0
  %2442 = vmatpush1.msra.mxu0 %v44
  %2443 = vmatprep.subr.mxu0 0.0
  %2444 = vmatpush1.msra.mxu0 %v45
  %2445 = vmatprep.subr.mxu0 0.0
  %2446 = vmatpush1.msra.mxu0 %v46
  %2447 = vmatprep.subr.mxu0 0.0
  %2448 = vmatpush1.msra.mxu0 %v47
  %2449 = vmatprep.subr.mxu0 0.0
  %2450 = vmatpush1.msra.mxu0 %v48
  %2451 = vmatprep.subr.mxu0 0.0
  %2452 = vmatpush1.msra.mxu0 %v49
  %2453 = vmatprep.subr.mxu0 0.0
  %2454 = vmatpush1.msra.mxu0 %v50
  %2455 = vmatprep.subr.mxu0 0.0
  %2456 = vmatpush1.msra.mxu0 %v51
  %2457 = vmatprep.subr.mxu0 0.0
  %2458 = vmatpush1.msra.mxu0 %v52
  %2459 = vmatprep.mubr.f32.mxu0 %v2390
  %2460 = vmatmul.mubr.f32.gmra.mrb[0].mxu0 %v2382
  %v2461 = vpop.f32.mrb[0].mxu0
  %v2462 = vadd.f32 %v62, %v2461
  %v2463 = vpop.f32.mrb[0].mxu0
  %2464 = vdwg.mxu0
  %2465 = vmatprep.subr.mxu0 0.0
  %2466 = vmatpush1.msra.mxu0 %v53
  %2467 = vmatprep.subr.mxu0 0.0
  %2468 = vmatpush1.msra.mxu0 %v54
  %2469 = vmatprep.subr.mxu0 0.0
  %2470 = vmatpush1.msra.mxu0 %v55
  %2471 = vmatprep.subr.mxu0 0.0
  %2472 = vmatpush1.msra.mxu0 %v56
  %2473 = vmatprep.subr.mxu0 0.0
  %2474 = vmatpush1.msra.mxu0 0.0
  %2475 = vmatprep.subr.mxu0 0.0
  %2476 = vmatpush1.msra.mxu0 0.0
  %2477 = vmatprep.subr.mxu0 0.0
  %2478 = vmatpush1.msra.mxu0 0.0
  %2479 = vmatprep.subr.mxu0 0.0
  %2480 = vmatpush1.msra.mxu0 0.0
  %2481 = vmatprep.subr.mxu0 0.0
  %2482 = vmatpush1.msra.mxu0 0.0
  %2483 = vmatprep.subr.mxu0 0.0
  %2484 = vmatpush1.msra.mxu0 0.0
  %2485 = vmatprep.subr.mxu0 0.0
  %2486 = vmatpush1.msra.mxu0 0.0
  %2487 = vmatprep.subr.mxu0 0.0
  %2488 = vmatpush1.msra.mxu0 0.0
  %2489 = vmatprep.subr.mxu0 0.0
  %2490 = vmatpush1.msra.mxu0 0.0
  %2491 = vmatprep.subr.mxu0 0.0
  %2492 = vmatpush1.msra.mxu0 0.0
  %2493 = vmatprep.subr.mxu0 0.0
  %2494 = vmatpush1.msra.mxu0 0.0
  %2495 = vmatprep.subr.mxu0 0.0
  %2496 = vmatpush1.msra.mxu0 0.0
  %2497 = vmatprep.subr.mxu0 0.0
  %2498 = vmatpush1.msra.mxu0 0.0
  %2499 = vmatprep.subr.mxu0 0.0
  %2500 = vmatpush1.msra.mxu0 0.0
  %2501 = vmatprep.subr.mxu0 0.0
  %2502 = vmatpush1.msra.mxu0 0.0
  %2503 = vmatprep.subr.mxu0 0.0
  %2504 = vmatpush1.msra.mxu0 0.0
  %2505 = vmatprep.subr.mxu0 0.0
  %2506 = vmatpush1.msra.mxu0 0.0
  %2507 = vmatprep.subr.mxu0 0.0
  %2508 = vmatpush1.msra.mxu0 0.0
  %2509 = vmatprep.subr.mxu0 0.0
  %2510 = vmatpush1.msra.mxu0 0.0
  %2511 = vmatprep.subr.mxu0 0.0
  %2512 = vmatpush1.msra.mxu0 0.0
  %2513 = vmatprep.subr.mxu0 0.0
  %2514 = vmatpush1.msra.mxu0 0.0
  %2515 = vmatprep.subr.mxu0 0.0
  %2516 = vmatpush1.msra.mxu0 0.0
  %2517 = vmatprep.subr.mxu0 0.0
  %2518 = vmatpush1.msra.mxu0 0.0
  %2519 = vmatprep.subr.mxu0 0.0
  %2520 = vmatpush1.msra.mxu0 0.0
  %2521 = vmatprep.subr.mxu0 0.0
  %2522 = vmatpush1.msra.mxu0 0.0
  %2523 = vmatprep.subr.mxu0 0.0
  %2524 = vmatpush1.msra.mxu0 0.0
  %2525 = vmatprep.subr.mxu0 0.0
  %2526 = vmatpush1.msra.mxu0 0.0
  %2527 = vmatprep.subr.mxu0 0.0
  %2528 = vmatpush1.msra.mxu0 0.0
  %2529 = vmatprep.mubr.f32.mxu0 0.0
  %2530 = vmatmul.mubr.f32.gmra.mrb[0].mxu0 %v2393
  %v2531 = vpop.f32.mrb[0].mxu0
  %v2532 = vadd.f32 %v2462, %v2531
  %v2533 = vpop.f32.mrb[0].mxu0
  %2534 = vdwg.mxu0
  %v2535 = vmax.f32 %v2532, 0.0
  %v2536 = vmax.f32 %v2371, %v2535
  %s2537 = scalar_lea.vmem %s0, 90
  %v2538 = vld [vmem:[%s2537] sm:$0x3f]
  %v2540 = vcombine.high %v2538, %v2538
  %v2542 = vunpack.c.l.s4 1983009808
  %v2543 = vunpack.c.0.s8 %v2542
  %v2544 = vlaneseq
  %v2545 = vshrl.u32 %v2544, 7
  %v2546 = vsub.s32 %v2543, %v2545
  %v2547 = vrot.slane %v2538, %v2546
  %v2549 = vunpack.c.l.s4 1983009808
  %v2550 = vunpack.c.0.s8 %v2549
  %v2551 = vlaneseq
  %v2552 = vshrl.u32 %v2551, 7
  %v2553 = vsub.s32 %v2550, %v2552
  %v2554 = vrot.slane %v2540, %v2553
  %v2555 = vcombine.high %v2547, %v2547
  %v2558 = vsel %vm83, %v2554, 0
  %2560 = vmatprep.subr.mxu0 0.0
  %2561 = vmatpush1.msra.mxu0 %v21
  %2562 = vmatprep.subr.mxu0 0.0
  %2563 = vmatpush1.msra.mxu0 %v22
  %2564 = vmatprep.subr.mxu0 0.0
  %2565 = vmatpush1.msra.mxu0 %v23
  %2566 = vmatprep.subr.mxu0 0.0
  %2567 = vmatpush1.msra.mxu0 %v24
  %2568 = vmatprep.subr.mxu0 0.0
  %2569 = vmatpush1.msra.mxu0 %v25
  %2570 = vmatprep.subr.mxu0 0.0
  %2571 = vmatpush1.msra.mxu0 %v26
  %2572 = vmatprep.subr.mxu0 0.0
  %2573 = vmatpush1.msra.mxu0 %v27
  %2574 = vmatprep.subr.mxu0 0.0
  %2575 = vmatpush1.msra.mxu0 %v28
  %2576 = vmatprep.subr.mxu0 0.0
  %2577 = vmatpush1.msra.mxu0 %v29
  %2578 = vmatprep.subr.mxu0 0.0
  %2579 = vmatpush1.msra.mxu0 %v30
  %2580 = vmatprep.subr.mxu0 0.0
  %2581 = vmatpush1.msra.mxu0 %v31
  %2582 = vmatprep.subr.mxu0 0.0
  %2583 = vmatpush1.msra.mxu0 %v32
  %2584 = vmatprep.subr.mxu0 0.0
  %2585 = vmatpush1.msra.mxu0 %v33
  %2586 = vmatprep.subr.mxu0 0.0
  %2587 = vmatpush1.msra.mxu0 %v34
  %2588 = vmatprep.subr.mxu0 0.0
  %2589 = vmatpush1.msra.mxu0 %v35
  %2590 = vmatprep.subr.mxu0 0.0
  %2591 = vmatpush1.msra.mxu0 %v36
  %2592 = vmatprep.subr.mxu0 0.0
  %2593 = vmatpush1.msra.mxu0 %v37
  %2594 = vmatprep.subr.mxu0 0.0
  %2595 = vmatpush1.msra.mxu0 %v38
  %2596 = vmatprep.subr.mxu0 0.0
  %2597 = vmatpush1.msra.mxu0 %v39
  %2598 = vmatprep.subr.mxu0 0.0
  %2599 = vmatpush1.msra.mxu0 %v40
  %2600 = vmatprep.subr.mxu0 0.0
  %2601 = vmatpush1.msra.mxu0 %v41
  %2602 = vmatprep.subr.mxu0 0.0
  %2603 = vmatpush1.msra.mxu0 %v42
  %2604 = vmatprep.subr.mxu0 0.0
  %2605 = vmatpush1.msra.mxu0 %v43
  %2606 = vmatprep.subr.mxu0 0.0
  %2607 = vmatpush1.msra.mxu0 %v44
  %2608 = vmatprep.subr.mxu0 0.0
  %2609 = vmatpush1.msra.mxu0 %v45
  %2610 = vmatprep.subr.mxu0 0.0
  %2611 = vmatpush1.msra.mxu0 %v46
  %2612 = vmatprep.subr.mxu0 0.0
  %2613 = vmatpush1.msra.mxu0 %v47
  %2614 = vmatprep.subr.mxu0 0.0
  %2615 = vmatpush1.msra.mxu0 %v48
  %2616 = vmatprep.subr.mxu0 0.0
  %2617 = vmatpush1.msra.mxu0 %v49
  %2618 = vmatprep.subr.mxu0 0.0
  %2619 = vmatpush1.msra.mxu0 %v50
  %2620 = vmatprep.subr.mxu0 0.0
  %2621 = vmatpush1.msra.mxu0 %v51
  %2622 = vmatprep.subr.mxu0 0.0
  %2623 = vmatpush1.msra.mxu0 %v52
  %2624 = vmatprep.mubr.f32.mxu0 %v2555
  %2625 = vmatmul.mubr.f32.gmra.mrb[0].mxu0 %v2547
  %v2626 = vpop.f32.mrb[0].mxu0
  %v2627 = vadd.f32 %v62, %v2626
  %v2628 = vpop.f32.mrb[0].mxu0
  %2629 = vdwg.mxu0
  %2630 = vmatprep.subr.mxu0 0.0
  %2631 = vmatpush1.msra.mxu0 %v53
  %2632 = vmatprep.subr.mxu0 0.0
  %2633 = vmatpush1.msra.mxu0 %v54
  %2634 = vmatprep.subr.mxu0 0.0
  %2635 = vmatpush1.msra.mxu0 %v55
  %2636 = vmatprep.subr.mxu0 0.0
  %2637 = vmatpush1.msra.mxu0 %v56
  %2638 = vmatprep.subr.mxu0 0.0
  %2639 = vmatpush1.msra.mxu0 0.0
  %2640 = vmatprep.subr.mxu0 0.0
  %2641 = vmatpush1.msra.mxu0 0.0
  %2642 = vmatprep.subr.mxu0 0.0
  %2643 = vmatpush1.msra.mxu0 0.0
  %2644 = vmatprep.subr.mxu0 0.0
  %2645 = vmatpush1.msra.mxu0 0.0
  %2646 = vmatprep.subr.mxu0 0.0
  %2647 = vmatpush1.msra.mxu0 0.0
  %2648 = vmatprep.subr.mxu0 0.0
  %2649 = vmatpush1.msra.mxu0 0.0
  %2650 = vmatprep.subr.mxu0 0.0
  %2651 = vmatpush1.msra.mxu0 0.0
  %2652 = vmatprep.subr.mxu0 0.0
  %2653 = vmatpush1.msra.mxu0 0.0
  %2654 = vmatprep.subr.mxu0 0.0
  %2655 = vmatpush1.msra.mxu0 0.0
  %2656 = vmatprep.subr.mxu0 0.0
  %2657 = vmatpush1.msra.mxu0 0.0
  %2658 = vmatprep.subr.mxu0 0.0
  %2659 = vmatpush1.msra.mxu0 0.0
  %2660 = vmatprep.subr.mxu0 0.0
  %2661 = vmatpush1.msra.mxu0 0.0
  %2662 = vmatprep.subr.mxu0 0.0
  %2663 = vmatpush1.msra.mxu0 0.0
  %2664 = vmatprep.subr.mxu0 0.0
  %2665 = vmatpush1.msra.mxu0 0.0
  %2666 = vmatprep.subr.mxu0 0.0
  %2667 = vmatpush1.msra.mxu0 0.0
  %2668 = vmatprep.subr.mxu0 0.0
  %2669 = vmatpush1.msra.mxu0 0.0
  %2670 = vmatprep.subr.mxu0 0.0
  %2671 = vmatpush1.msra.mxu0 0.0
  %2672 = vmatprep.subr.mxu0 0.0
  %2673 = vmatpush1.msra.mxu0 0.0
  %2674 = vmatprep.subr.mxu0 0.0
  %2675 = vmatpush1.msra.mxu0 0.0
  %2676 = vmatprep.subr.mxu0 0.0
  %2677 = vmatpush1.msra.mxu0 0.0
  %2678 = vmatprep.subr.mxu0 0.0
  %2679 = vmatpush1.msra.mxu0 0.0
  %2680 = vmatprep.subr.mxu0 0.0
  %2681 = vmatpush1.msra.mxu0 0.0
  %2682 = vmatprep.subr.mxu0 0.0
  %2683 = vmatpush1.msra.mxu0 0.0
  %2684 = vmatprep.subr.mxu0 0.0
  %2685 = vmatpush1.msra.mxu0 0.0
  %2686 = vmatprep.subr.mxu0 0.0
  %2687 = vmatpush1.msra.mxu0 0.0
  %2688 = vmatprep.subr.mxu0 0.0
  %2689 = vmatpush1.msra.mxu0 0.0
  %2690 = vmatprep.subr.mxu0 0.0
  %2691 = vmatpush1.msra.mxu0 0.0
  %2692 = vmatprep.subr.mxu0 0.0
  %2693 = vmatpush1.msra.mxu0 0.0
  %2694 = vmatprep.mubr.f32.mxu0 0.0
  %2695 = vmatmul.mubr.f32.gmra.mrb[0].mxu0 %v2558
  %v2696 = vpop.f32.mrb[0].mxu0
  %v2697 = vadd.f32 %v2627, %v2696
  %v2698 = vpop.f32.mrb[0].mxu0
  %2699 = vdwg.mxu0
  %v2700 = vmax.f32 %v2697, 0.0
  %v2701 = vmax.f32 %v2536, %v2700
  %vm2702 = vcmask 1041408
  %v2703 = vsel %vm2702, %v2701, 0.0
  %v2704 = vrot.slane %v2703, 4
  %v2705 = vadd.f32 %v2703, %v2704
  %v2706 = vrot.slane %v2705, 2
  %v2707 = vadd.f32 %v2705, %v2706
  %v2708 = vrot.slane %v2707, 1
  %v2709 = vadd.f32 %v2707, %v2708
  %v2710 = vrcp.pop 2.0
  %v2711 = vmul.f32 %v2709, %v2710
  %v2712 = vsub.f32 %v2701, %v2711
  %v2713 = vmul.f32 %v2712, %v2712
  %v2714 = vsel %vm2702, %v2713, 0.0
  %v2715 = vrot.slane %v2714, 4
  %v2716 = vadd.f32 %v2714, %v2715
  %v2717 = vrot.slane %v2716, 2
  %v2718 = vadd.f32 %v2716, %v2717
  %v2719 = vrot.slane %v2718, 1
  %v2720 = vadd.f32 %v2718, %v2719
  %v2721 = vmul.f32 %v2720, %v2710
  %v2722 = vadd.f32 %v2721, 1e-05
  %v2723 = vrsqrt.pop %v2722
  %v2724 = vmul.f32 %v2712, %v2723
  %v2725 = vld [vmem:[%s3] sm:$0x1]
  %v2727 = vlaneseq
  %v2728 = vshrl.u32 %v2727, 7
  %v2729 = vsub.s32 0, %v2728
  %v2730 = vrot.slane %v2725, %v2729
  %v2732 = vmul.f32 %v2724, %v2730
  %v2733 = vld [vmem:[%s4] sm:$0x1]
  %v2735 = vlaneseq
  %v2736 = vshrl.u32 %v2735, 7
  %v2737 = vsub.s32 0, %v2736
  %v2738 = vrot.slane %v2733, %v2737
  %v2740 = vadd.f32 %v2732, %v2738
  %2741 = vst [vmem:[%s5] sm:$0x3] %v2740
  // Predicated region
  $region22: #{crnn_forward.7} parent=0 // pred_check
    _
  $region23: #{crnn_forward.7} parent=0 // pred_check_branch
    %2743 = sbr.rel (0) target = $region25
  $region24: #{crnn_forward.7} parent=0 // pred_region
    _
  $region25: #{crnn_forward.7} parent=0 // pred_fallthru
    _
  // Predicated region
  $region26: #{crnn_forward.7} parent=0 // pred_check
    _
  $region27: #{crnn_forward.7} parent=0 // pred_check_branch
    %2745 = sbr.rel (0) target = $region29
  $region28: #{crnn_forward.7} parent=0 // pred_region
    _
  $region29: #{crnn_forward.7} parent=0 // pred_fallthru
    _

// kernel: crnn_forward.8
$region0: #{crnn_forward.8}
  #allocation0 [shape = 'u32[]', space=smem, size = 0x4, offset = 0x4, fixed_abs, tag = 'smem constant byte address 0x4 - core index']
  #allocation1 [shape = 'u32[144,128]{1,0:T(1,128)}', space=vmem, size = 0x12000, scoped, tag = 'internal scratch']
  %s0 = inlined_call_operand.vmem [shape: f32[15,2,128], index: 0, kind: input, shape index: {}]
  %s1 = inlined_call_operand.vmem [shape: f32[2,128,256], index: 1, kind: input, shape index: {}]
  %s2 = inlined_call_operand.vmem [shape: f32[2,64,256], index: 2, kind: input, shape index: {}]
  %s3 = inlined_call_operand.vmem [shape: f32[2,1,256], index: 3, kind: input, shape index: {}]
  %s4 = inlined_call_operand.vmem [shape: f32[15,2,128], index: 4, kind: output, shape index: {}]
  %s5 = sld [smem:[#allocation0]]
  $region40: #{crnn_forward.8} parent=0
    _
  %s7 = ssub.s32 1, %s5
  %s8 = scalar_select 0, %s7, %s5
  // Predicated region
  $region2: #{crnn_forward.8} parent=0 // pred_check
    _
  $region3: #{crnn_forward.8} parent=0 // pred_check_branch
    %10 = sbr.rel (0) target = $region5
  $region4: #{crnn_forward.8} parent=0 // pred_region
    _
  $region5: #{crnn_forward.8} parent=0 // pred_fallthru
    _
  // Predicated region
  $region6: #{crnn_forward.8} parent=0 // pred_check
    _
  $region7: #{crnn_forward.8} parent=0 // pred_check_branch
    %12 = sbr.rel (0) target = $region9
  $region8: #{crnn_forward.8} parent=0 // pred_region
    _
  $region9: #{crnn_forward.8} parent=0 // pred_fallthru
    _
  // Predicated region
  $region10: #{crnn_forward.8} parent=0 // pred_check
    _
  $region11: #{crnn_forward.8} parent=0 // pred_check_branch
    %14 = sbr.rel (0) target = $region13
  $region12: #{crnn_forward.8} parent=0 // pred_region
    _
  $region13: #{crnn_forward.8} parent=0 // pred_fallthru
    _
  // Predicated region
  $region14: #{crnn_forward.8} parent=0 // pred_check
    _
  $region15: #{crnn_forward.8} parent=0 // pred_check_branch
    %16 = sbr.rel (0) target = $region17
  $region16: #{crnn_forward.8} parent=0 // pred_region
    _
  $region17: #{crnn_forward.8} parent=0 // pred_fallthru
    _
  %v17 = vld [vmem:[%s0] sm:$0x3]
  %v18 = vld [vmem:[%s0 + $0x2] sm:$0x3]
  %v19 = vld [vmem:[%s0 + $0x4] sm:$0x3]
  %v20 = vld [vmem:[%s0 + $0x6] sm:$0x3]
  %v21 = vld [vmem:[%s0 + $0x8] sm:$0x3]
  %v22 = vld [vmem:[%s0 + $0xa] sm:$0x3]
  %v23 = vld [vmem:[%s0 + $0xc] sm:$0x3]
  %v24 = vld [vmem:[%s0 + $0xe] sm:$0x3]
  %v25 = vld [vmem:[%s0 + $0x10] sm:$0x3]
  %v26 = vld [vmem:[%s0 + $0x12] sm:$0x3]
  %v27 = vld [vmem:[%s0 + $0x14] sm:$0x3]
  %v28 = vld [vmem:[%s0 + $0x16] sm:$0x3]
  %v29 = vld [vmem:[%s0 + $0x18] sm:$0x3]
  %v30 = vld [vmem:[%s0 + $0x1a] sm:$0x3]
  %v31 = vld [vmem:[%s0 + $0x1c] sm:$0x3]
  %32 = vst [vmem:[%s4] sm:$0x3] %v17
  %33 = vst [vmem:[%s4 + $0x2] sm:$0x3] %v18
  %34 = vst [vmem:[%s4 + $0x4] sm:$0x3] %v19
  %35 = vst [vmem:[%s4 + $0x6] sm:$0x3] %v20
  %36 = vst [vmem:[%s4 + $0x8] sm:$0x3] %v21
  %37 = vst [vmem:[%s4 + $0xa] sm:$0x3] %v22
  %38 = vst [vmem:[%s4 + $0xc] sm:$0x3] %v23
  %39 = vst [vmem:[%s4 + $0xe] sm:$0x3] %v24
  %40 = vst [vmem:[%s4 + $0x10] sm:$0x3] %v25
  %41 = vst [vmem:[%s4 + $0x12] sm:$0x3] %v26
  %42 = vst [vmem:[%s4 + $0x14] sm:$0x3] %v27
  %43 = vst [vmem:[%s4 + $0x16] sm:$0x3] %v28
  %44 = vst [vmem:[%s4 + $0x18] sm:$0x3] %v29
  %45 = vst [vmem:[%s4 + $0x1a] sm:$0x3] %v30
  %46 = vst [vmem:[%s4 + $0x1c] sm:$0x3] %v31
  loop: start=0, step=1, limit=15
  $region18: #{crnn_forward.8} parent=0 // loop_pre_header
    _
  $region19: #{crnn_forward.8} parent=0 // loop_header
    %s48 = sphi 0, %s52
    %p49 = scmp.ge.s32.totalorder %s48, 15
    %v53 = vphi 0.0, %v289
    %v54 = vphi 0.0, %v287
  $region20: #{crnn_forward.8} parent=0 // loop_header_branch
    %51 = sbr.rel (%p49) target = $region24
  $region21: #{crnn_forward.8} parent=0 // loop_body
    %s55 = smul.u32 %s48, 2
    %s56 = scalar_lea.vmem %s4, %s55
    %v57 = vld [vmem:[%s56] sm:$0x3]
    %v58 = vld [vmem:[%s1] sm:$0xff]
    %v59 = vld [vmem:[%s1 + $0x8] sm:$0xff]
    %v60 = vld [vmem:[%s1 + $0x10] sm:$0xff]
    %v61 = vld [vmem:[%s1 + $0x18] sm:$0xff]
    %v62 = vld [vmem:[%s1 + $0x20] sm:$0xff]
    %v63 = vld [vmem:[%s1 + $0x28] sm:$0xff]
    %v64 = vld [vmem:[%s1 + $0x30] sm:$0xff]
    %v65 = vld [vmem:[%s1 + $0x38] sm:$0xff]
    %v66 = vld [vmem:[%s1 + $0x40] sm:$0xff]
    %v67 = vld [vmem:[%s1 + $0x48] sm:$0xff]
    %v68 = vld [vmem:[%s1 + $0x50] sm:$0xff]
    %v69 = vld [vmem:[%s1 + $0x58] sm:$0xff]
    %v70 = vld [vmem:[%s1 + $0x60] sm:$0xff]
    %v71 = vld [vmem:[%s1 + $0x68] sm:$0xff]
    %v72 = vld [vmem:[%s1 + $0x70] sm:$0xff]
    %v73 = vld [vmem:[%s1 + $0x78] sm:$0xff]
    %v74 = vld [vmem:[%s1 + $0x80] sm:$0xff]
    %v75 = vld [vmem:[%s1 + $0x88] sm:$0xff]
    %v76 = vld [vmem:[%s1 + $0x90] sm:$0xff]
    %v77 = vld [vmem:[%s1 + $0x98] sm:$0xff]
    %v78 = vld [vmem:[%s1 + $0xa0] sm:$0xff]
    %v79 = vld [vmem:[%s1 + $0xa8] sm:$0xff]
    %v80 = vld [vmem:[%s1 + $0xb0] sm:$0xff]
    %v81 = vld [vmem:[%s1 + $0xb8] sm:$0xff]
    %v82 = vld [vmem:[%s1 + $0xc0] sm:$0xff]
    %v83 = vld [vmem:[%s1 + $0xc8] sm:$0xff]
    %v84 = vld [vmem:[%s1 + $0xd0] sm:$0xff]
    %v85 = vld [vmem:[%s1 + $0xd8] sm:$0xff]
    %v86 = vld [vmem:[%s1 + $0xe0] sm:$0xff]
    %v87 = vld [vmem:[%s1 + $0xe8] sm:$0xff]
    %v88 = vld [vmem:[%s1 + $0xf0] sm:$0xff]
    %v89 = vld [vmem:[%s1 + $0xf8] sm:$0xff]
    %v90 = vld [vmem:[%s2] sm:$0xff]
    %v91 = vld [vmem:[%s2 + $0x8] sm:$0xff]
    %v92 = vld [vmem:[%s2 + $0x10] sm:$0xff]
    %v93 = vld [vmem:[%s2 + $0x18] sm:$0xff]
    %v94 = vld [vmem:[%s2 + $0x20] sm:$0xff]
    %v95 = vld [vmem:[%s2 + $0x28] sm:$0xff]
    %v96 = vld [vmem:[%s2 + $0x30] sm:$0xff]
    %v97 = vld [vmem:[%s2 + $0x38] sm:$0xff]
    %v98 = vld [vmem:[%s2 + $0x40] sm:$0xff]
    %v99 = vld [vmem:[%s2 + $0x48] sm:$0xff]
    %v100 = vld [vmem:[%s2 + $0x50] sm:$0xff]
    %v101 = vld [vmem:[%s2 + $0x58] sm:$0xff]
    %v102 = vld [vmem:[%s2 + $0x60] sm:$0xff]
    %v103 = vld [vmem:[%s2 + $0x68] sm:$0xff]
    %v104 = vld [vmem:[%s2 + $0x70] sm:$0xff]
    %v105 = vld [vmem:[%s2 + $0x78] sm:$0xff]
    %107 = vrot.lane.b32.xlu0 %v53, 64
    %v108 = vpop.permute.xlu0 %107
    %vm109 = vcmask 523264
    %v110 = vsel %vm109, %v108, 0
    %112 = vmatprep.subr.mxu0 %v91
    %113 = vmatpush1.msra.mxu0 %v90
    %114 = vmatprep.subr.mxu0 %v93
    %115 = vmatpush1.msra.mxu0 %v92
    %116 = vmatprep.subr.mxu0 %v95
    %117 = vmatpush1.msra.mxu0 %v94
    %118 = vmatprep.subr.mxu0 %v97
    %119 = vmatpush1.msra.mxu0 %v96
    %120 = vmatprep.subr.mxu0 %v99
    %121 = vmatpush1.msra.mxu0 %v98
    %122 = vmatprep.subr.mxu0 %v101
    %123 = vmatpush1.msra.mxu0 %v100
    %124 = vmatprep.subr.mxu0 %v103
    %125 = vmatpush1.msra.mxu0 %v102
    %126 = vmatprep.subr.mxu0 %v105
    %127 = vmatpush1.msra.mxu0 %v104
    %128 = vmatprep.subr.mxu0 0.0
    %129 = vmatpush1.msra.mxu0 0.0
    %130 = vmatprep.subr.mxu0 0.0
    %131 = vmatpush1.msra.mxu0 0.0
    %132 = vmatprep.subr.mxu0 0.0
    %133 = vmatpush1.msra.mxu0 0.0
    %134 = vmatprep.subr.mxu0 0.0
    %135 = vmatpush1.msra.mxu0 0.0
    %136 = vmatprep.subr.mxu0 0.0
    %137 = vmatpush1.msra.mxu0 0.0
    %138 = vmatprep.subr.mxu0 0.0
    %139 = vmatpush1.msra.mxu0 0.0
    %140 = vmatprep.subr.mxu0 0.0
    %141 = vmatpush1.msra.mxu0 0.0
    %142 = vmatprep.subr.mxu0 0.0
    %143 = vmatpush1.msra.mxu0 0.0
    %144 = vmatprep.subr.mxu0 0.0
    %145 = vmatpush1.msra.mxu0 0.0
    %146 = vmatprep.subr.mxu0 0.0
    %147 = vmatpush1.msra.mxu0 0.0
    %148 = vmatprep.subr.mxu0 0.0
    %149 = vmatpush1.msra.mxu0 0.0
    %150 = vmatprep.subr.mxu0 0.0
    %151 = vmatpush1.msra.mxu0 0.0
    %152 = vmatprep.subr.mxu0 0.0
    %153 = vmatpush1.msra.mxu0 0.0
    %154 = vmatprep.subr.mxu0 0.0
    %155 = vmatpush1.msra.mxu0 0.0
    %156 = vmatprep.subr.mxu0 0.0
    %157 = vmatpush1.msra.mxu0 0.0
    %158 = vmatprep.subr.mxu0 0.0
    %159 = vmatpush1.msra.mxu0 0.0
    %160 = vmatprep.subr.mxu0 0.0
    %161 = vmatpush1.msra.mxu0 0.0
    %162 = vmatprep.subr.mxu0 0.0
    %163 = vmatpush1.msra.mxu0 0.0
    %164 = vmatprep.subr.mxu0 0.0
    %165 = vmatpush1.msra.mxu0 0.0
    %166 = vmatprep.subr.mxu0 0.0
    %167 = vmatpush1.msra.mxu0 0.0
    %168 = vmatprep.subr.mxu0 0.0
    %169 = vmatpush1.msra.mxu0 0.0
    %170 = vmatprep.subr.mxu0 0.0
    %171 = vmatpush1.msra.mxu0 0.0
    %172 = vmatprep.subr.mxu0 0.0
    %173 = vmatpush1.msra.mxu0 0.0
    %174 = vmatprep.subr.mxu0 0.0
    %175 = vmatpush1.msra.mxu0 0.0
    %176 = vmatprep.mubr.f32.mxu0 0.0
    %177 = vmatmul.mubr.f32.gmra.mrb[0].mxu0 %v110
    %v178 = vpop.f32.mrb[0].mxu0
    %v179 = vadd.f32 0.0, %v178
    %v180 = vpop.f32.mrb[0].mxu0
    %v181 = vadd.f32 0.0, %v180
    %182 = vdwg.mxu0
    %183 = vmatprep.subr.mxu0 %v59
    %184 = vmatpush1.msra.mxu0 %v58
    %185 = vmatprep.subr.mxu0 %v61
    %186 = vmatpush1.msra.mxu0 %v60
    %187 = vmatprep.subr.mxu0 %v63
    %188 = vmatpush1.msra.mxu0 %v62
    %189 = vmatprep.subr.mxu0 %v65
    %190 = vmatpush1.msra.mxu0 %v64
    %191 = vmatprep.subr.mxu0 %v67
    %192 = vmatpush1.msra.mxu0 %v66
    %193 = vmatprep.subr.mxu0 %v69
    %194 = vmatpush1.msra.mxu0 %v68
    %195 = vmatprep.subr.mxu0 %v71
    %196 = vmatpush1.msra.mxu0 %v70
    %197 = vmatprep.subr.mxu0 %v73
    %198 = vmatpush1.msra.mxu0 %v72
    %199 = vmatprep.subr.mxu0 %v75
    %200 = vmatpush1.msra.mxu0 %v74
    %201 = vmatprep.subr.mxu0 %v77
    %202 = vmatpush1.msra.mxu0 %v76
    %203 = vmatprep.subr.mxu0 %v79
    %204 = vmatpush1.msra.mxu0 %v78
    %205 = vmatprep.subr.mxu0 %v81
    %206 = vmatpush1.msra.mxu0 %v80
    %207 = vmatprep.subr.mxu0 %v83
    %208 = vmatpush1.msra.mxu0 %v82
    %209 = vmatprep.subr.mxu0 %v85
    %210 = vmatpush1.msra.mxu0 %v84
    %211 = vmatprep.subr.mxu0 %v87
    %212 = vmatpush1.msra.mxu0 %v86
    %213 = vmatprep.subr.mxu0 %v89
    %214 = vmatpush1.msra.mxu0 %v88
    %215 = vmatprep.subr.mxu0 0.0
    %216 = vmatpush1.msra.mxu0 0.0
    %217 = vmatprep.subr.mxu0 0.0
    %218 = vmatpush1.msra.mxu0 0.0
    %219 = vmatprep.subr.mxu0 0.0
    %220 = vmatpush1.msra.mxu0 0.0
    %221 = vmatprep.subr.mxu0 0.0
    %222 = vmatpush1.msra.mxu0 0.0
    %223 = vmatprep.subr.mxu0 0.0
    %224 = vmatpush1.msra.mxu0 0.0
    %225 = vmatprep.subr.mxu0 0.0
    %226 = vmatpush1.msra.mxu0 0.0
    %227 = vmatprep.subr.mxu0 0.0
    %228 = vmatpush1.msra.mxu0 0.0
    %229 = vmatprep.subr.mxu0 0.0
    %230 = vmatpush1.msra.mxu0 0.0
    %231 = vmatprep.subr.mxu0 0.0
    %232 = vmatpush1.msra.mxu0 0.0
    %233 = vmatprep.subr.mxu0 0.0
    %234 = vmatpush1.msra.mxu0 0.0
    %235 = vmatprep.subr.mxu0 0.0
    %236 = vmatpush1.msra.mxu0 0.0
    %237 = vmatprep.subr.mxu0 0.0
    %238 = vmatpush1.msra.mxu0 0.0
    %239 = vmatprep.subr.mxu0 0.0
    %240 = vmatpush1.msra.mxu0 0.0
    %241 = vmatprep.subr.mxu0 0.0
    %242 = vmatpush1.msra.mxu0 0.0
    %243 = vmatprep.subr.mxu0 0.0
    %244 = vmatpush1.msra.mxu0 0.0
    %245 = vmatprep.subr.mxu0 0.0
    %246 = vmatpush1.msra.mxu0 0.0
    %247 = vmatprep.mubr.f32.mxu0 0.0
    %248 = vmatmul.mubr.f32.gmra.mrb[0].mxu0 %v57
    %v249 = vpop.f32.mrb[0].mxu0
    %v250 = vadd.f32 %v179, %v249
    %v251 = vpop.f32.mrb[0].mxu0
    %v252 = vadd.f32 %v181, %v251
    %253 = vdwg.mxu0
    %v254 = vld [vmem:[%s3] sm:$0x3]
    %v256 = vlaneseq
    %v257 = vshrl.u32 %v256, 7
    %v258 = vsub.s32 0, %v257
    %v259 = vrot.slane %v254, %v258
    %v260 = vlaneseq
    %v261 = vshrl.u32 %v260, 7
    %v262 = vsub.s32 1, %v261
    %v263 = vrot.slane %v254, %v262
    %v266 = vadd.f32 %v250, %v259
    %v267 = vadd.f32 %v252, %v263
    %v268 = vsub.f32 0.0, %v266
    %v269 = vmul.f32 %v268, 1.442695
    %v270 = vpow.pop %v269
    %v271 = vadd.f32 %v270, 1.0
    %v272 = vrcp.pop %v271
    %v273 = vmul.f32 1.0, %v272
    %v274 = vtanh.pop %v267
    %v275 = vsub.f32 0.0, %v267
    %v276 = vmul.f32 %v275, 1.442695
    %v277 = vpow.pop %v276
    %v278 = vadd.f32 %v277, 1.0
    %v279 = vrcp.pop %v278
    %v280 = vmul.f32 1.0, %v279
    %v281 = vmul.f32 %v273, %v54
    %v282 = vmul.f32 %v273, %v274
    %284 = vrot.lane.b32.xlu0 %v282, 64
    %v285 = vpop.permute.xlu0 %284
    %v287 = vadd.f32 %v281, %v285
    %v288 = vtanh.pop %v287
    %v289 = vmul.f32 %v280, %v288
    %291 = vrot.lane.b32.xlu0 %v289, 64
    %v292 = vpop.permute.xlu0 %291
    %v294 = vsel %vm109, %v292, 0.0
    %295 = vst [vmem:[%s56] sm:$0x3] %v294
  $region22: #{crnn_forward.8} parent=0 // loop_footer
    %s52 = sadd.s32 1, %s48
  $region23: #{crnn_forward.8} parent=0 // loop_footer_branch
    %47 = sbr.rel target = $region19
  $region24: #{crnn_forward.8} parent=0 // loop_exit
    _
  loop: start=0, step=1, limit=15
  $region25: #{crnn_forward.8} parent=0 // loop_pre_header
    _
  $region26: #{crnn_forward.8} parent=0 // loop_header
    %s297 = sphi 0, %s301
    %p298 = scmp.ge.s32.totalorder %s297, 15
    %v302 = vphi 0.0, %v541
    %v303 = vphi 0.0, %v539
  $region27: #{crnn_forward.8} parent=0 // loop_header_branch
    %300 = sbr.rel (%p298) target = $region31
  $region28: #{crnn_forward.8} parent=0 // loop_body
    %s304 = smul.u32 %s297, 2
    %s305 = scalar_lea.vmem %s4, %s304
    %v306 = vld [vmem:[%s305] sm:$0x3]
    %s307 = scalar_lea.vmem %s1, 256
    %v308 = vld [vmem:[%s307] sm:$0xff]
    %v309 = vld [vmem:[%s307 + $0x8] sm:$0xff]
    %v310 = vld [vmem:[%s307 + $0x10] sm:$0xff]
    %v311 = vld [vmem:[%s307 + $0x18] sm:$0xff]
    %v312 = vld [vmem:[%s307 + $0x20] sm:$0xff]
    %v313 = vld [vmem:[%s307 + $0x28] sm:$0xff]
    %v314 = vld [vmem:[%s307 + $0x30] sm:$0xff]
    %v315 = vld [vmem:[%s307 + $0x38] sm:$0xff]
    %v316 = vld [vmem:[%s307 + $0x40] sm:$0xff]
    %v317 = vld [vmem:[%s307 + $0x48] sm:$0xff]
    %v318 = vld [vmem:[%s307 + $0x50] sm:$0xff]
    %v319 = vld [vmem:[%s307 + $0x58] sm:$0xff]
    %v320 = vld [vmem:[%s307 + $0x60] sm:$0xff]
    %v321 = vld [vmem:[%s307 + $0x68] sm:$0xff]
    %v322 = vld [vmem:[%s307 + $0x70] sm:$0xff]
    %v323 = vld [vmem:[%s307 + $0x78] sm:$0xff]
    %v324 = vld [vmem:[%s307 + $0x80] sm:$0xff]
    %v325 = vld [vmem:[%s307 + $0x88] sm:$0xff]
    %v326 = vld [vmem:[%s307 + $0x90] sm:$0xff]
    %v327 = vld [vmem:[%s307 + $0x98] sm:$0xff]
    %v328 = vld [vmem:[%s307 + $0xa0] sm:$0xff]
    %v329 = vld [vmem:[%s307 + $0xa8] sm:$0xff]
    %v330 = vld [vmem:[%s307 + $0xb0] sm:$0xff]
    %v331 = vld [vmem:[%s307 + $0xb8] sm:$0xff]
    %v332 = vld [vmem:[%s307 + $0xc0] sm:$0xff]
    %v333 = vld [vmem:[%s307 + $0xc8] sm:$0xff]
    %v334 = vld [vmem:[%s307 + $0xd0] sm:$0xff]
    %v335 = vld [vmem:[%s307 + $0xd8] sm:$0xff]
    %v336 = vld [vmem:[%s307 + $0xe0] sm:$0xff]
    %v337 = vld [vmem:[%s307 + $0xe8] sm:$0xff]
    %v338 = vld [vmem:[%s307 + $0xf0] sm:$0xff]
    %v339 = vld [vmem:[%s307 + $0xf8] sm:$0xff]
    %s340 = scalar_lea.vmem %s2, 128
    %v341 = vld [vmem:[%s340] sm:$0xff]
    %v342 = vld [vmem:[%s340 + $0x8] sm:$0xff]
    %v343 = vld [vmem:[%s340 + $0x10] sm:$0xff]
    %v344 = vld [vmem:[%s340 + $0x18] sm:$0xff]
    %v345 = vld [vmem:[%s340 + $0x20] sm:$0xff]
    %v346 = vld [vmem:[%s340 + $0x28] sm:$0xff]
    %v347 = vld [vmem:[%s340 + $0x30] sm:$0xff]
    %v348 = vld [vmem:[%s340 + $0x38] sm:$0xff]
    %v349 = vld [vmem:[%s340 + $0x40] sm:$0xff]
    %v350 = vld [vmem:[%s340 + $0x48] sm:$0xff]
    %v351 = vld [vmem:[%s340 + $0x50] sm:$0xff]
    %v352 = vld [vmem:[%s340 + $0x58] sm:$0xff]
    %v353 = vld [vmem:[%s340 + $0x60] sm:$0xff]
    %v354 = vld [vmem:[%s340 + $0x68] sm:$0xff]
    %v355 = vld [vmem:[%s340 + $0x70] sm:$0xff]
    %v356 = vld [vmem:[%s340 + $0x78] sm:$0xff]
    %358 = vrot.lane.b32.xlu0 %v302, 64
    %v359 = vpop.permute.xlu0 %358
    %vm360 = vcmask 523264
    %v361 = vsel %vm360, %v359, 0
    %363 = vmatprep.subr.mxu0 %v342
    %364 = vmatpush1.msra.mxu0 %v341
    %365 = vmatprep.subr.mxu0 %v344
    %366 = vmatpush1.msra.mxu0 %v343
    %367 = vmatprep.subr.mxu0 %v346
    %368 = vmatpush1.msra.mxu0 %v345
    %369 = vmatprep.subr.mxu0 %v348
    %370 = vmatpush1.msra.mxu0 %v347
    %371 = vmatprep.subr.mxu0 %v350
    %372 = vmatpush1.msra.mxu0 %v349
    %373 = vmatprep.subr.mxu0 %v352
    %374 = vmatpush1.msra.mxu0 %v351
    %375 = vmatprep.subr.mxu0 %v354
    %376 = vmatpush1.msra.mxu0 %v353
    %377 = vmatprep.subr.mxu0 %v356
    %378 = vmatpush1.msra.mxu0 %v355
    %379 = vmatprep.subr.mxu0 0.0
    %380 = vmatpush1.msra.mxu0 0.0
    %381 = vmatprep.subr.mxu0 0.0
    %382 = vmatpush1.msra.mxu0 0.0
    %383 = vmatprep.subr.mxu0 0.0
    %384 = vmatpush1.msra.mxu0 0.0
    %385 = vmatprep.subr.mxu0 0.0
    %386 = vmatpush1.msra.mxu0 0.0
    %387 = vmatprep.subr.mxu0 0.0
    %388 = vmatpush1.msra.mxu0 0.0
    %389 = vmatprep.subr.mxu0 0.0
    %390 = vmatpush1.msra.mxu0 0.0
    %391 = vmatprep.subr.mxu0 0.0
    %392 = vmatpush1.msra.mxu0 0.0
    %393 = vmatprep.subr.mxu0 0.0
    %394 = vmatpush1.msra.mxu0 0.0
    %395 = vmatprep.subr.mxu0 0.0
    %396 = vmatpush1.msra.mxu0 0.0
    %397 = vmatprep.subr.mxu0 0.0
    %398 = vmatpush1.msra.mxu0 0.0
    %399 = vmatprep.subr.mxu0 0.0
    %400 = vmatpush1.msra.mxu0 0.0
    %401 = vmatprep.subr.mxu0 0.0
    %402 = vmatpush1.msra.mxu0 0.0
    %403 = vmatprep.subr.mxu0 0.0
    %404 = vmatpush1.msra.mxu0 0.0
    %405 = vmatprep.subr.mxu0 0.0
    %406 = vmatpush1.msra.mxu0 0.0
    %407 = vmatprep.subr.mxu0 0.0
    %408 = vmatpush1.msra.mxu0 0.0
    %409 = vmatprep.subr.mxu0 0.0
    %410 = vmatpush1.msra.mxu0 0.0
    %411 = vmatprep.subr.mxu0 0.0
    %412 = vmatpush1.msra.mxu0 0.0
    %413 = vmatprep.subr.mxu0 0.0
    %414 = vmatpush1.msra.mxu0 0.0
    %415 = vmatprep.subr.mxu0 0.0
    %416 = vmatpush1.msra.mxu0 0.0
    %417 = vmatprep.subr.mxu0 0.0
    %418 = vmatpush1.msra.mxu0 0.0
    %419 = vmatprep.subr.mxu0 0.0
    %420 = vmatpush1.msra.mxu0 0.0
    %421 = vmatprep.subr.mxu0 0.0
    %422 = vmatpush1.msra.mxu0 0.0
    %423 = vmatprep.subr.mxu0 0.0
    %424 = vmatpush1.msra.mxu0 0.0
    %425 = vmatprep.subr.mxu0 0.0
    %426 = vmatpush1.msra.mxu0 0.0
    %427 = vmatprep.mubr.f32.mxu0 0.0
    %428 = vmatmul.mubr.f32.gmra.mrb[0].mxu0 %v361
    %v429 = vpop.f32.mrb[0].mxu0
    %v430 = vadd.f32 0.0, %v429
    %v431 = vpop.f32.mrb[0].mxu0
    %v432 = vadd.f32 0.0, %v431
    %433 = vdwg.mxu0
    %434 = vmatprep.subr.mxu0 %v309
    %435 = vmatpush1.msra.mxu0 %v308
    %436 = vmatprep.subr.mxu0 %v311
    %437 = vmatpush1.msra.mxu0 %v310
    %438 = vmatprep.subr.mxu0 %v313
    %439 = vmatpush1.msra.mxu0 %v312
    %440 = vmatprep.subr.mxu0 %v315
    %441 = vmatpush1.msra.mxu0 %v314
    %442 = vmatprep.subr.mxu0 %v317
    %443 = vmatpush1.msra.mxu0 %v316
    %444 = vmatprep.subr.mxu0 %v319
    %445 = vmatpush1.msra.mxu0 %v318
    %446 = vmatprep.subr.mxu0 %v321
    %447 = vmatpush1.msra.mxu0 %v320
    %448 = vmatprep.subr.mxu0 %v323
    %449 = vmatpush1.msra.mxu0 %v322
    %450 = vmatprep.subr.mxu0 %v325
    %451 = vmatpush1.msra.mxu0 %v324
    %452 = vmatprep.subr.mxu0 %v327
    %453 = vmatpush1.msra.mxu0 %v326
    %454 = vmatprep.subr.mxu0 %v329
    %455 = vmatpush1.msra.mxu0 %v328
    %456 = vmatprep.subr.mxu0 %v331
    %457 = vmatpush1.msra.mxu0 %v330
    %458 = vmatprep.subr.mxu0 %v333
    %459 = vmatpush1.msra.mxu0 %v332
    %460 = vmatprep.subr.mxu0 %v335
    %461 = vmatpush1.msra.mxu0 %v334
    %462 = vmatprep.subr.mxu0 %v337
    %463 = vmatpush1.msra.mxu0 %v336
    %464 = vmatprep.subr.mxu0 %v339
    %465 = vmatpush1.msra.mxu0 %v338
    %466 = vmatprep.subr.mxu0 0.0
    %467 = vmatpush1.msra.mxu0 0.0
    %468 = vmatprep.subr.mxu0 0.0
    %469 = vmatpush1.msra.mxu0 0.0
    %470 = vmatprep.subr.mxu0 0.0
    %471 = vmatpush1.msra.mxu0 0.0
    %472 = vmatprep.subr.mxu0 0.0
    %473 = vmatpush1.msra.mxu0 0.0
    %474 = vmatprep.subr.mxu0 0.0
    %475 = vmatpush1.msra.mxu0 0.0
    %476 = vmatprep.subr.mxu0 0.0
    %477 = vmatpush1.msra.mxu0 0.0
    %478 = vmatprep.subr.mxu0 0.0
    %479 = vmatpush1.msra.mxu0 0.0
    %480 = vmatprep.subr.mxu0 0.0
    %481 = vmatpush1.msra.mxu0 0.0
    %482 = vmatprep.subr.mxu0 0.0
    %483 = vmatpush1.msra.mxu0 0.0
    %484 = vmatprep.subr.mxu0 0.0
    %485 = vmatpush1.msra.mxu0 0.0
    %486 = vmatprep.subr.mxu0 0.0
    %487 = vmatpush1.msra.mxu0 0.0
    %488 = vmatprep.subr.mxu0 0.0
    %489 = vmatpush1.msra.mxu0 0.0
    %490 = vmatprep.subr.mxu0 0.0
    %491 = vmatpush1.msra.mxu0 0.0
    %492 = vmatprep.subr.mxu0 0.0
    %493 = vmatpush1.msra.mxu0 0.0
    %494 = vmatprep.subr.mxu0 0.0
    %495 = vmatpush1.msra.mxu0 0.0
    %496 = vmatprep.subr.mxu0 0.0
    %497 = vmatpush1.msra.mxu0 0.0
    %498 = vmatprep.mubr.f32.mxu0 0.0
    %499 = vmatmul.mubr.f32.gmra.mrb[0].mxu0 %v306
    %v500 = vpop.f32.mrb[0].mxu0
    %v501 = vadd.f32 %v430, %v500
    %v502 = vpop.f32.mrb[0].mxu0
    %v503 = vadd.f32 %v432, %v502
    %504 = vdwg.mxu0
    %s505 = scalar_lea.vmem %s3, 2
    %v506 = vld [vmem:[%s505] sm:$0x3]
    %v508 = vlaneseq
    %v509 = vshrl.u32 %v508, 7
    %v510 = vsub.s32 0, %v509
    %v511 = vrot.slane %v506, %v510
    %v512 = vlaneseq
    %v513 = vshrl.u32 %v512, 7
    %v514 = vsub.s32 1, %v513
    %v515 = vrot.slane %v506, %v514
    %v518 = vadd.f32 %v501, %v511
    %v519 = vadd.f32 %v503, %v515
    %v520 = vsub.f32 0.0, %v518
    %v521 = vmul.f32 %v520, 1.442695
    %v522 = vpow.pop %v521
    %v523 = vadd.f32 %v522, 1.0
    %v524 = vrcp.pop %v523
    %v525 = vmul.f32 1.0, %v524
    %v526 = vtanh.pop %v519
    %v527 = vsub.f32 0.0, %v519
    %v528 = vmul.f32 %v527, 1.442695
    %v529 = vpow.pop %v528
    %v530 = vadd.f32 %v529, 1.0
    %v531 = vrcp.pop %v530
    %v532 = vmul.f32 1.0, %v531
    %v533 = vmul.f32 %v525, %v303
    %v534 = vmul.f32 %v525, %v526
    %536 = vrot.lane.b32.xlu0 %v534, 64
    %v537 = vpop.permute.xlu0 %536
    %v539 = vadd.f32 %v533, %v537
    %v540 = vtanh.pop %v539
    %v541 = vmul.f32 %v532, %v540
    %543 = vrot.lane.b32.xlu0 %v541, 64
    %v544 = vpop.permute.xlu0 %543
    %v546 = vsel %vm360, %v544, 0.0
    %547 = vst [vmem:[%s305] sm:$0x3] %v546
  $region29: #{crnn_forward.8} parent=0 // loop_footer
    %s301 = sadd.s32 1, %s297
  $region30: #{crnn_forward.8} parent=0 // loop_footer_branch
    %296 = sbr.rel target = $region26
  $region31: #{crnn_forward.8} parent=0 // loop_exit
    _
  // Predicated region
  $region32: #{crnn_forward.8} parent=0 // pred_check
    _
  $region33: #{crnn_forward.8} parent=0 // pred_check_branch
    %549 = sbr.rel (0) target = $region35
  $region34: #{crnn_forward.8} parent=0 // pred_region
    _
  $region35: #{crnn_forward.8} parent=0 // pred_fallthru
    _
  // Predicated region
  $region36: #{crnn_forward.8} parent=0 // pred_check
    _
  $region37: #{crnn_forward.8} parent=0 // pred_check_branch
    %551 = sbr.rel (0) target = $region39
  $region38: #{crnn_forward.8} parent=0 // pred_region
    _
  $region39: #{crnn_forward.8} parent=0 // pred_fallthru
    _

// kernel: crnn_forward.9
$region0: #{crnn_forward.9}
  #allocation0 [shape = 'u32[]', space=smem, size = 0x4, offset = 0x4, fixed_abs, tag = 'smem constant byte address 0x4 - core index']
  #allocation1 [shape = 'u32[144,128]{1,0:T(1,128)}', space=vmem, size = 0x12000, scoped, tag = 'internal scratch']
  %s0 = inlined_call_operand.vmem [shape: f32[2,1024], index: 0, kind: input, shape index: {}]
  %s1 = inlined_call_operand.vmem [shape: f32[1024,128], index: 1, kind: input, shape index: {}]
  %s2 = inlined_call_operand.vmem [shape: f32[1,128], index: 2, kind: input, shape index: {}]
  %s3 = inlined_call_operand.vmem [shape: f32[2,128], index: 3, kind: input, shape index: {}]
  %s4 = inlined_call_operand.vmem [shape: f32[128,128], index: 4, kind: input, shape index: {}]
  %s5 = inlined_call_operand.vmem [shape: f32[1,128], index: 5, kind: input, shape index: {}]
  %s6 = inlined_call_operand.hbm [shape: f32[2,128], index: 6, kind: output, shape index: {}]
  %s7 = sld [smem:[#allocation0]]
  $region34: #{crnn_forward.9} parent=0
    _
  %s9 = ssub.s32 1, %s7
  %s10 = scalar_select 0, %s9, %s7
  $region1: #{crnn_forward.9} parent=0
    #allocation2 [shape = 'u8[1024]{0}', space=vmem, size = 0x400, scoped, tag = 'output window, operand 0, single buffered']
    #allocation3 [shape = 's32[1]{0}', space=sflag, size = 0x4, scoped, tag = 'scoped memory for crnn_forward.9']
    %11 = vsyncpa [#allocation3], 0
    // Predicated region
    $region2: #{crnn_forward.9} parent=1 // pred_check
      _
    $region3: #{crnn_forward.9} parent=1 // pred_check_branch
      %13 = sbr.rel (0) target = $region5
    $region4: #{crnn_forward.9} parent=1 // pred_region
      _
    $region5: #{crnn_forward.9} parent=1 // pred_fallthru
      _
    // Predicated region
    $region6: #{crnn_forward.9} parent=1 // pred_check
      _
    $region7: #{crnn_forward.9} parent=1 // pred_check_branch
      %15 = sbr.rel (0) target = $region9
    $region8: #{crnn_forward.9} parent=1 // pred_region
      _
    $region9: #{crnn_forward.9} parent=1 // pred_fallthru
      _
    // Predicated region
    $region10: #{crnn_forward.9} parent=1 // pred_check
      _
    $region11: #{crnn_forward.9} parent=1 // pred_check_branch
      %17 = sbr.rel (0) target = $region13
    $region12: #{crnn_forward.9} parent=1 // pred_region
      _
    $region13: #{crnn_forward.9} parent=1 // pred_fallthru
      _
    // Predicated region
    $region14: #{crnn_forward.9} parent=1 // pred_check
      _
    $region15: #{crnn_forward.9} parent=1 // pred_check_branch
      %19 = sbr.rel (0) target = $region17
    $region16: #{crnn_forward.9} parent=1 // pred_region
      _
    $region17: #{crnn_forward.9} parent=1 // pred_fallthru
      _
    // Predicated region
    $region18: #{crnn_forward.9} parent=1 // pred_check
      _
    $region19: #{crnn_forward.9} parent=1 // pred_check_branch
      %21 = sbr.rel (0) target = $region21
    $region20: #{crnn_forward.9} parent=1 // pred_region
      _
    $region21: #{crnn_forward.9} parent=1 // pred_fallthru
      _
    // Predicated region
    $region22: #{crnn_forward.9} parent=1 // pred_check
      _
    $region23: #{crnn_forward.9} parent=1 // pred_check_branch
      %23 = sbr.rel (0) target = $region25
    $region24: #{crnn_forward.9} parent=1 // pred_region
      _
    $region25: #{crnn_forward.9} parent=1 // pred_fallthru
      _
    %v24 = vld [vmem:[%s0] sm:$0xff]
    %v25 = vld [vmem:[%s0 + $0x8] sm:$0xff]
    %v26 = vld [vmem:[%s1] sm:$0xff]
    %v27 = vld [vmem:[%s1 + $0x8] sm:$0xff]
    %v28 = vld [vmem:[%s1 + $0x10] sm:$0xff]
    %v29 = vld [vmem:[%s1 + $0x18] sm:$0xff]
    %v30 = vld [vmem:[%s1 + $0x20] sm:$0xff]
    %v31 = vld [vmem:[%s1 + $0x28] sm:$0xff]
    %v32 = vld [vmem:[%s1 + $0x30] sm:$0xff]
    %v33 = vld [vmem:[%s1 + $0x38] sm:$0xff]
    %v34 = vld [vmem:[%s1 + $0x40] sm:$0xff]
    %v35 = vld [vmem:[%s1 + $0x48] sm:$0xff]
    %v36 = vld [vmem:[%s1 + $0x50] sm:$0xff]
    %v37 = vld [vmem:[%s1 + $0x58] sm:$0xff]
    %v38 = vld [vmem:[%s1 + $0x60] sm:$0xff]
    %v39 = vld [vmem:[%s1 + $0x68] sm:$0xff]
    %v40 = vld [vmem:[%s1 + $0x70] sm:$0xff]
    %v41 = vld [vmem:[%s1 + $0x78] sm:$0xff]
    %v42 = vld [vmem:[%s1 + $0x80] sm:$0xff]
    %v43 = vld [vmem:[%s1 + $0x88] sm:$0xff]
    %v44 = vld [vmem:[%s1 + $0x90] sm:$0xff]
    %v45 = vld [vmem:[%s1 + $0x98] sm:$0xff]
    %v46 = vld [vmem:[%s1 + $0xa0] sm:$0xff]
    %v47 = vld [vmem:[%s1 + $0xa8] sm:$0xff]
    %v48 = vld [vmem:[%s1 + $0xb0] sm:$0xff]
    %v49 = vld [vmem:[%s1 + $0xb8] sm:$0xff]
    %v50 = vld [vmem:[%s1 + $0xc0] sm:$0xff]
    %v51 = vld [vmem:[%s1 + $0xc8] sm:$0xff]
    %v52 = vld [vmem:[%s1 + $0xd0] sm:$0xff]
    %v53 = vld [vmem:[%s1 + $0xd8] sm:$0xff]
    %v54 = vld [vmem:[%s1 + $0xe0] sm:$0xff]
    %v55 = vld [vmem:[%s1 + $0xe8] sm:$0xff]
    %v56 = vld [vmem:[%s1 + $0xf0] sm:$0xff]
    %v57 = vld [vmem:[%s1 + $0xf8] sm:$0xff]
    %v58 = vld [vmem:[%s1 + $0x100] sm:$0xff]
    %v59 = vld [vmem:[%s1 + $0x108] sm:$0xff]
    %v60 = vld [vmem:[%s1 + $0x110] sm:$0xff]
    %v61 = vld [vmem:[%s1 + $0x118] sm:$0xff]
    %v62 = vld [vmem:[%s1 + $0x120] sm:$0xff]
    %v63 = vld [vmem:[%s1 + $0x128] sm:$0xff]
    %v64 = vld [vmem:[%s1 + $0x130] sm:$0xff]
    %v65 = vld [vmem:[%s1 + $0x138] sm:$0xff]
    %v66 = vld [vmem:[%s1 + $0x140] sm:$0xff]
    %v67 = vld [vmem:[%s1 + $0x148] sm:$0xff]
    %v68 = vld [vmem:[%s1 + $0x150] sm:$0xff]
    %v69 = vld [vmem:[%s1 + $0x158] sm:$0xff]
    %v70 = vld [vmem:[%s1 + $0x160] sm:$0xff]
    %v71 = vld [vmem:[%s1 + $0x168] sm:$0xff]
    %v72 = vld [vmem:[%s1 + $0x170] sm:$0xff]
    %v73 = vld [vmem:[%s1 + $0x178] sm:$0xff]
    %v74 = vld [vmem:[%s1 + $0x180] sm:$0xff]
    %v75 = vld [vmem:[%s1 + $0x188] sm:$0xff]
    %v76 = vld [vmem:[%s1 + $0x190] sm:$0xff]
    %v77 = vld [vmem:[%s1 + $0x198] sm:$0xff]
    %v78 = vld [vmem:[%s1 + $0x1a0] sm:$0xff]
    %v79 = vld [vmem:[%s1 + $0x1a8] sm:$0xff]
    %v80 = vld [vmem:[%s1 + $0x1b0] sm:$0xff]
    %v81 = vld [vmem:[%s1 + $0x1b8] sm:$0xff]
    %v82 = vld [vmem:[%s1 + $0x1c0] sm:$0xff]
    %v83 = vld [vmem:[%s1 + $0x1c8] sm:$0xff]
    %v84 = vld [vmem:[%s1 + $0x1d0] sm:$0xff]
    %v85 = vld [vmem:[%s1 + $0x1d8] sm:$0xff]
    %v86 = vld [vmem:[%s1 + $0x1e0] sm:$0xff]
    %v87 = vld [vmem:[%s1 + $0x1e8] sm:$0xff]
    %v88 = vld [vmem:[%s1 + $0x1f0] sm:$0xff]
    %v89 = vld [vmem:[%s1 + $0x1f8] sm:$0xff]
    %v90 = vld [vmem:[%s1 + $0x200] sm:$0xff]
    %v91 = vld [vmem:[%s1 + $0x208] sm:$0xff]
    %v92 = vld [vmem:[%s1 + $0x210] sm:$0xff]
    %v93 = vld [vmem:[%s1 + $0x218] sm:$0xff]
    %v94 = vld [vmem:[%s1 + $0x220] sm:$0xff]
    %v95 = vld [vmem:[%s1 + $0x228] sm:$0xff]
    %v96 = vld [vmem:[%s1 + $0x230] sm:$0xff]
    %v97 = vld [vmem:[%s1 + $0x238] sm:$0xff]
    %v98 = vld [vmem:[%s1 + $0x240] sm:$0xff]
    %v99 = vld [vmem:[%s1 + $0x248] sm:$0xff]
    %v100 = vld [vmem:[%s1 + $0x250] sm:$0xff]
    %v101 = vld [vmem:[%s1 + $0x258] sm:$0xff]
    %v102 = vld [vmem:[%s1 + $0x260] sm:$0xff]
    %v103 = vld [vmem:[%s1 + $0x268] sm:$0xff]
    %v104 = vld [vmem:[%s1 + $0x270] sm:$0xff]
    %v105 = vld [vmem:[%s1 + $0x278] sm:$0xff]
    %v106 = vld [vmem:[%s1 + $0x280] sm:$0xff]
    %v107 = vld [vmem:[%s1 + $0x288] sm:$0xff]
    %v108 = vld [vmem:[%s1 + $0x290] sm:$0xff]
    %v109 = vld [vmem:[%s1 + $0x298] sm:$0xff]
    %v110 = vld [vmem:[%s1 + $0x2a0] sm:$0xff]
    %v111 = vld [vmem:[%s1 + $0x2a8] sm:$0xff]
    %v112 = vld [vmem:[%s1 + $0x2b0] sm:$0xff]
    %v113 = vld [vmem:[%s1 + $0x2b8] sm:$0xff]
    %v114 = vld [vmem:[%s1 + $0x2c0] sm:$0xff]
    %v115 = vld [vmem:[%s1 + $0x2c8] sm:$0xff]
    %v116 = vld [vmem:[%s1 + $0x2d0] sm:$0xff]
    %v117 = vld [vmem:[%s1 + $0x2d8] sm:$0xff]
    %v118 = vld [vmem:[%s1 + $0x2e0] sm:$0xff]
    %v119 = vld [vmem:[%s1 + $0x2e8] sm:$0xff]
    %v120 = vld [vmem:[%s1 + $0x2f0] sm:$0xff]
    %v121 = vld [vmem:[%s1 + $0x2f8] sm:$0xff]
    %v122 = vld [vmem:[%s1 + $0x300] sm:$0xff]
    %v123 = vld [vmem:[%s1 + $0x308] sm:$0xff]
    %v124 = vld [vmem:[%s1 + $0x310] sm:$0xff]
    %v125 = vld [vmem:[%s1 + $0x318] sm:$0xff]
    %v126 = vld [vmem:[%s1 + $0x320] sm:$0xff]
    %v127 = vld [vmem:[%s1 + $0x328] sm:$0xff]
    %v128 = vld [vmem:[%s1 + $0x330] sm:$0xff]
    %v129 = vld [vmem:[%s1 + $0x338] sm:$0xff]
    %v130 = vld [vmem:[%s1 + $0x340] sm:$0xff]
    %v131 = vld [vmem:[%s1 + $0x348] sm:$0xff]
    %v132 = vld [vmem:[%s1 + $0x350] sm:$0xff]
    %v133 = vld [vmem:[%s1 + $0x358] sm:$0xff]
    %v134 = vld [vmem:[%s1 + $0x360] sm:$0xff]
    %v135 = vld [vmem:[%s1 + $0x368] sm:$0xff]
    %v136 = vld [vmem:[%s1 + $0x370] sm:$0xff]
    %v137 = vld [vmem:[%s1 + $0x378] sm:$0xff]
    %v138 = vld [vmem:[%s1 + $0x380] sm:$0xff]
    %v139 = vld [vmem:[%s1 + $0x388] sm:$0xff]
    %v140 = vld [vmem:[%s1 + $0x390] sm:$0xff]
    %v141 = vld [vmem:[%s1 + $0x398] sm:$0xff]
    %v142 = vld [vmem:[%s1 + $0x3a0] sm:$0xff]
    %v143 = vld [vmem:[%s1 + $0x3a8] sm:$0xff]
    %v144 = vld [vmem:[%s1 + $0x3b0] sm:$0xff]
    %v145 = vld [vmem:[%s1 + $0x3b8] sm:$0xff]
    %v146 = vld [vmem:[%s1 + $0x3c0] sm:$0xff]
    %v147 = vld [vmem:[%s1 + $0x3c8] sm:$0xff]
    %v148 = vld [vmem:[%s1 + $0x3d0] sm:$0xff]
    %v149 = vld [vmem:[%s1 + $0x3d8] sm:$0xff]
    %v150 = vld [vmem:[%s1 + $0x3e0] sm:$0xff]
    %v151 = vld [vmem:[%s1 + $0x3e8] sm:$0xff]
    %v152 = vld [vmem:[%s1 + $0x3f0] sm:$0xff]
    %v153 = vld [vmem:[%s1 + $0x3f8] sm:$0xff]
    %v154 = vld [vmem:[%s2] sm:$0x1]
    %v156 = vlaneseq
    %v157 = vshrl.u32 %v156, 7
    %v158 = vsub.s32 0, %v157
    %v159 = vrot.slane %v154, %v158
    %v163 = vcombine.high %v24, %v24
    %v165 = vunpack.c.l.s4 1983009808
    %v166 = vunpack.c.0.s8 %v165
    %v167 = vlaneseq
    %v168 = vshrl.u32 %v167, 7
    %v169 = vsub.s32 %v166, %v168
    %v170 = vrot.slane %v24, %v169
    %v172 = vunpack.c.l.s4 1983009808
    %v173 = vunpack.c.0.s8 %v172
    %v174 = vlaneseq
    %v175 = vshrl.u32 %v174, 7
    %v176 = vsub.s32 %v173, %v175
    %v177 = vrot.slane %v163, %v176
    %v178 = vcombine.high %v170, %v170
    %v179 = vcombine.high %v177, %v177
    %v180 = vcombine.high %v25, %v25
    %v182 = vunpack.c.l.s4 1983009808
    %v183 = vunpack.c.0.s8 %v182
    %v184 = vlaneseq
    %v185 = vshrl.u32 %v184, 7
    %v186 = vsub.s32 %v183, %v185
    %v187 = vrot.slane %v25, %v186
    %v189 = vunpack.c.l.s4 1983009808
    %v190 = vunpack.c.0.s8 %v189
    %v191 = vlaneseq
    %v192 = vshrl.u32 %v191, 7
    %v193 = vsub.s32 %v190, %v192
    %v194 = vrot.slane %v180, %v193
    %v195 = vcombine.high %v187, %v187
    %v196 = vcombine.high %v194, %v194
    %205 = vmatprep.subr.mxu0 0.0
    %206 = vmatpush1.msra.mxu0 %v26
    %207 = vmatprep.subr.mxu0 0.0
    %208 = vmatpush1.msra.mxu0 %v27
    %209 = vmatprep.subr.mxu0 0.0
    %210 = vmatpush1.msra.mxu0 %v28
    %211 = vmatprep.subr.mxu0 0.0
    %212 = vmatpush1.msra.mxu0 %v29
    %213 = vmatprep.subr.mxu0 0.0
    %214 = vmatpush1.msra.mxu0 %v30
    %215 = vmatprep.subr.mxu0 0.0
    %216 = vmatpush1.msra.mxu0 %v31
    %217 = vmatprep.subr.mxu0 0.0
    %218 = vmatpush1.msra.mxu0 %v32
    %219 = vmatprep.subr.mxu0 0.0
    %220 = vmatpush1.msra.mxu0 %v33
    %221 = vmatprep.subr.mxu0 0.0
    %222 = vmatpush1.msra.mxu0 %v34
    %223 = vmatprep.subr.mxu0 0.0
    %224 = vmatpush1.msra.mxu0 %v35
    %225 = vmatprep.subr.mxu0 0.0
    %226 = vmatpush1.msra.mxu0 %v36
    %227 = vmatprep.subr.mxu0 0.0
    %228 = vmatpush1.msra.mxu0 %v37
    %229 = vmatprep.subr.mxu0 0.0
    %230 = vmatpush1.msra.mxu0 %v38
    %231 = vmatprep.subr.mxu0 0.0
    %232 = vmatpush1.msra.mxu0 %v39
    %233 = vmatprep.subr.mxu0 0.0
    %234 = vmatpush1.msra.mxu0 %v40
    %235 = vmatprep.subr.mxu0 0.0
    %236 = vmatpush1.msra.mxu0 %v41
    %237 = vmatprep.subr.mxu0 0.0
    %238 = vmatpush1.msra.mxu0 %v42
    %239 = vmatprep.subr.mxu0 0.0
    %240 = vmatpush1.msra.mxu0 %v43
    %241 = vmatprep.subr.mxu0 0.0
    %242 = vmatpush1.msra.mxu0 %v44
    %243 = vmatprep.subr.mxu0 0.0
    %244 = vmatpush1.msra.mxu0 %v45
    %245 = vmatprep.subr.mxu0 0.0
    %246 = vmatpush1.msra.mxu0 %v46
    %247 = vmatprep.subr.mxu0 0.0
    %248 = vmatpush1.msra.mxu0 %v47
    %249 = vmatprep.subr.mxu0 0.0
    %250 = vmatpush1.msra.mxu0 %v48
    %251 = vmatprep.subr.mxu0 0.0
    %252 = vmatpush1.msra.mxu0 %v49
    %253 = vmatprep.subr.mxu0 0.0
    %254 = vmatpush1.msra.mxu0 %v50
    %255 = vmatprep.subr.mxu0 0.0
    %256 = vmatpush1.msra.mxu0 %v51
    %257 = vmatprep.subr.mxu0 0.0
    %258 = vmatpush1.msra.mxu0 %v52
    %259 = vmatprep.subr.mxu0 0.0
    %260 = vmatpush1.msra.mxu0 %v53
    %261 = vmatprep.subr.mxu0 0.0
    %262 = vmatpush1.msra.mxu0 %v54
    %263 = vmatprep.subr.mxu0 0.0
    %264 = vmatpush1.msra.mxu0 %v55
    %265 = vmatprep.subr.mxu0 0.0
    %266 = vmatpush1.msra.mxu0 %v56
    %267 = vmatprep.subr.mxu0 0.0
    %268 = vmatpush1.msra.mxu0 %v57
    %269 = vmatprep.mubr.f32.mxu0 %v178
    %270 = vmatmul.mubr.f32.gmra.mrb[0].mxu0 %v170
    %v271 = vpop.f32.mrb[0].mxu0
    %v272 = vadd.f32 %v159, %v271
    %v273 = vpop.f32.mrb[0].mxu0
    %274 = vdwg.mxu0
    %275 = vmatprep.subr.mxu0 0.0
    %276 = vmatpush1.msra.mxu0 %v58
    %277 = vmatprep.subr.mxu0 0.0
    %278 = vmatpush1.msra.mxu0 %v59
    %279 = vmatprep.subr.mxu0 0.0
    %280 = vmatpush1.msra.mxu0 %v60
    %281 = vmatprep.subr.mxu0 0.0
    %282 = vmatpush1.msra.mxu0 %v61
    %283 = vmatprep.subr.mxu0 0.0
    %284 = vmatpush1.msra.mxu0 %v62
    %285 = vmatprep.subr.mxu0 0.0
    %286 = vmatpush1.msra.mxu0 %v63
    %287 = vmatprep.subr.mxu0 0.0
    %288 = vmatpush1.msra.mxu0 %v64
    %289 = vmatprep.subr.mxu0 0.0
    %290 = vmatpush1.msra.mxu0 %v65
    %291 = vmatprep.subr.mxu0 0.0
    %292 = vmatpush1.msra.mxu0 %v66
    %293 = vmatprep.subr.mxu0 0.0
    %294 = vmatpush1.msra.mxu0 %v67
    %295 = vmatprep.subr.mxu0 0.0
    %296 = vmatpush1.msra.mxu0 %v68
    %297 = vmatprep.subr.mxu0 0.0
    %298 = vmatpush1.msra.mxu0 %v69
    %299 = vmatprep.subr.mxu0 0.0
    %300 = vmatpush1.msra.mxu0 %v70
    %301 = vmatprep.subr.mxu0 0.0
    %302 = vmatpush1.msra.mxu0 %v71
    %303 = vmatprep.subr.mxu0 0.0
    %304 = vmatpush1.msra.mxu0 %v72
    %305 = vmatprep.subr.mxu0 0.0
    %306 = vmatpush1.msra.mxu0 %v73
    %307 = vmatprep.subr.mxu0 0.0
    %308 = vmatpush1.msra.mxu0 %v74
    %309 = vmatprep.subr.mxu0 0.0
    %310 = vmatpush1.msra.mxu0 %v75
    %311 = vmatprep.subr.mxu0 0.0
    %312 = vmatpush1.msra.mxu0 %v76
    %313 = vmatprep.subr.mxu0 0.0
    %314 = vmatpush1.msra.mxu0 %v77
    %315 = vmatprep.subr.mxu0 0.0
    %316 = vmatpush1.msra.mxu0 %v78
    %317 = vmatprep.subr.mxu0 0.0
    %318 = vmatpush1.msra.mxu0 %v79
    %319 = vmatprep.subr.mxu0 0.0
    %320 = vmatpush1.msra.mxu0 %v80
    %321 = vmatprep.subr.mxu0 0.0
    %322 = vmatpush1.msra.mxu0 %v81
    %323 = vmatprep.subr.mxu0 0.0
    %324 = vmatpush1.msra.mxu0 %v82
    %325 = vmatprep.subr.mxu0 0.0
    %326 = vmatpush1.msra.mxu0 %v83
    %327 = vmatprep.subr.mxu0 0.0
    %328 = vmatpush1.msra.mxu0 %v84
    %329 = vmatprep.subr.mxu0 0.0
    %330 = vmatpush1.msra.mxu0 %v85
    %331 = vmatprep.subr.mxu0 0.0
    %332 = vmatpush1.msra.mxu0 %v86
    %333 = vmatprep.subr.mxu0 0.0
    %334 = vmatpush1.msra.mxu0 %v87
    %335 = vmatprep.subr.mxu0 0.0
    %336 = vmatpush1.msra.mxu0 %v88
    %337 = vmatprep.subr.mxu0 0.0
    %338 = vmatpush1.msra.mxu0 %v89
    %339 = vmatprep.mubr.f32.mxu0 %v179
    %340 = vmatmul.mubr.f32.gmra.mrb[0].mxu0 %v177
    %v341 = vpop.f32.mrb[0].mxu0
    %v342 = vadd.f32 %v272, %v341
    %v343 = vpop.f32.mrb[0].mxu0
    %344 = vdwg.mxu0
    %345 = vmatprep.subr.mxu0 0.0
    %346 = vmatpush1.msra.mxu0 %v90
    %347 = vmatprep.subr.mxu0 0.0
    %348 = vmatpush1.msra.mxu0 %v91
    %349 = vmatprep.subr.mxu0 0.0
    %350 = vmatpush1.msra.mxu0 %v92
    %351 = vmatprep.subr.mxu0 0.0
    %352 = vmatpush1.msra.mxu0 %v93
    %353 = vmatprep.subr.mxu0 0.0
    %354 = vmatpush1.msra.mxu0 %v94
    %355 = vmatprep.subr.mxu0 0.0
    %356 = vmatpush1.msra.mxu0 %v95
    %357 = vmatprep.subr.mxu0 0.0
    %358 = vmatpush1.msra.mxu0 %v96
    %359 = vmatprep.subr.mxu0 0.0
    %360 = vmatpush1.msra.mxu0 %v97
    %361 = vmatprep.subr.mxu0 0.0
    %362 = vmatpush1.msra.mxu0 %v98
    %363 = vmatprep.subr.mxu0 0.0
    %364 = vmatpush1.msra.mxu0 %v99
    %365 = vmatprep.subr.mxu0 0.0
    %366 = vmatpush1.msra.mxu0 %v100
    %367 = vmatprep.subr.mxu0 0.0
    %368 = vmatpush1.msra.mxu0 %v101
    %369 = vmatprep.subr.mxu0 0.0
    %370 = vmatpush1.msra.mxu0 %v102
    %371 = vmatprep.subr.mxu0 0.0
    %372 = vmatpush1.msra.mxu0 %v103
    %373 = vmatprep.subr.mxu0 0.0
    %374 = vmatpush1.msra.mxu0 %v104
    %375 = vmatprep.subr.mxu0 0.0
    %376 = vmatpush1.msra.mxu0 %v105
    %377 = vmatprep.subr.mxu0 0.0
    %378 = vmatpush1.msra.mxu0 %v106
    %379 = vmatprep.subr.mxu0 0.0
    %380 = vmatpush1.msra.mxu0 %v107
    %381 = vmatprep.subr.mxu0 0.0
    %382 = vmatpush1.msra.mxu0 %v108
    %383 = vmatprep.subr.mxu0 0.0
    %384 = vmatpush1.msra.mxu0 %v109
    %385 = vmatprep.subr.mxu0 0.0
    %386 = vmatpush1.msra.mxu0 %v110
    %387 = vmatprep.subr.mxu0 0.0
    %388 = vmatpush1.msra.mxu0 %v111
    %389 = vmatprep.subr.mxu0 0.0
    %390 = vmatpush1.msra.mxu0 %v112
    %391 = vmatprep.subr.mxu0 0.0
    %392 = vmatpush1.msra.mxu0 %v113
    %393 = vmatprep.subr.mxu0 0.0
    %394 = vmatpush1.msra.mxu0 %v114
    %395 = vmatprep.subr.mxu0 0.0
    %396 = vmatpush1.msra.mxu0 %v115
    %397 = vmatprep.subr.mxu0 0.0
    %398 = vmatpush1.msra.mxu0 %v116
    %399 = vmatprep.subr.mxu0 0.0
    %400 = vmatpush1.msra.mxu0 %v117
    %401 = vmatprep.subr.mxu0 0.0
    %402 = vmatpush1.msra.mxu0 %v118
    %403 = vmatprep.subr.mxu0 0.0
    %404 = vmatpush1.msra.mxu0 %v119
    %405 = vmatprep.subr.mxu0 0.0
    %406 = vmatpush1.msra.mxu0 %v120
    %407 = vmatprep.subr.mxu0 0.0
    %408 = vmatpush1.msra.mxu0 %v121
    %409 = vmatprep.mubr.f32.mxu0 %v195
    %410 = vmatmul.mubr.f32.gmra.mrb[0].mxu0 %v187
    %v411 = vpop.f32.mrb[0].mxu0
    %v412 = vadd.f32 %v342, %v411
    %v413 = vpop.f32.mrb[0].mxu0
    %414 = vdwg.mxu0
    %415 = vmatprep.subr.mxu0 0.0
    %416 = vmatpush1.msra.mxu0 %v122
    %417 = vmatprep.subr.mxu0 0.0
    %418 = vmatpush1.msra.mxu0 %v123
    %419 = vmatprep.subr.mxu0 0.0
    %420 = vmatpush1.msra.mxu0 %v124
    %421 = vmatprep.subr.mxu0 0.0
    %422 = vmatpush1.msra.mxu0 %v125
    %423 = vmatprep.subr.mxu0 0.0
    %424 = vmatpush1.msra.mxu0 %v126
    %425 = vmatprep.subr.mxu0 0.0
    %426 = vmatpush1.msra.mxu0 %v127
    %427 = vmatprep.subr.mxu0 0.0
    %428 = vmatpush1.msra.mxu0 %v128
    %429 = vmatprep.subr.mxu0 0.0
    %430 = vmatpush1.msra.mxu0 %v129
    %431 = vmatprep.subr.mxu0 0.0
    %432 = vmatpush1.msra.mxu0 %v130
    %433 = vmatprep.subr.mxu0 0.0
    %434 = vmatpush1.msra.mxu0 %v131
    %435 = vmatprep.subr.mxu0 0.0
    %436 = vmatpush1.msra.mxu0 %v132
    %437 = vmatprep.subr.mxu0 0.0
    %438 = vmatpush1.msra.mxu0 %v133
    %439 = vmatprep.subr.mxu0 0.0
    %440 = vmatpush1.msra.mxu0 %v134
    %441 = vmatprep.subr.mxu0 0.0
    %442 = vmatpush1.msra.mxu0 %v135
    %443 = vmatprep.subr.mxu0 0.0
    %444 = vmatpush1.msra.mxu0 %v136
    %445 = vmatprep.subr.mxu0 0.0
    %446 = vmatpush1.msra.mxu0 %v137
    %447 = vmatprep.subr.mxu0 0.0
    %448 = vmatpush1.msra.mxu0 %v138
    %449 = vmatprep.subr.mxu0 0.0
    %450 = vmatpush1.msra.mxu0 %v139
    %451 = vmatprep.subr.mxu0 0.0
    %452 = vmatpush1.msra.mxu0 %v140
    %453 = vmatprep.subr.mxu0 0.0
    %454 = vmatpush1.msra.mxu0 %v141
    %455 = vmatprep.subr.mxu0 0.0
    %456 = vmatpush1.msra.mxu0 %v142
    %457 = vmatprep.subr.mxu0 0.0
    %458 = vmatpush1.msra.mxu0 %v143
    %459 = vmatprep.subr.mxu0 0.0
    %460 = vmatpush1.msra.mxu0 %v144
    %461 = vmatprep.subr.mxu0 0.0
    %462 = vmatpush1.msra.mxu0 %v145
    %463 = vmatprep.subr.mxu0 0.0
    %464 = vmatpush1.msra.mxu0 %v146
    %465 = vmatprep.subr.mxu0 0.0
    %466 = vmatpush1.msra.mxu0 %v147
    %467 = vmatprep.subr.mxu0 0.0
    %468 = vmatpush1.msra.mxu0 %v148
    %469 = vmatprep.subr.mxu0 0.0
    %470 = vmatpush1.msra.mxu0 %v149
    %471 = vmatprep.subr.mxu0 0.0
    %472 = vmatpush1.msra.mxu0 %v150
    %473 = vmatprep.subr.mxu0 0.0
    %474 = vmatpush1.msra.mxu0 %v151
    %475 = vmatprep.subr.mxu0 0.0
    %476 = vmatpush1.msra.mxu0 %v152
    %477 = vmatprep.subr.mxu0 0.0
    %478 = vmatpush1.msra.mxu0 %v153
    %479 = vmatprep.mubr.f32.mxu0 %v196
    %480 = vmatmul.mubr.f32.gmra.mrb[0].mxu0 %v194
    %v481 = vpop.f32.mrb[0].mxu0
    %v482 = vadd.f32 %v412, %v481
    %v483 = vpop.f32.mrb[0].mxu0
    %484 = vdwg.mxu0
    %v485 = vmax.f32 %v482, 0.0
    %v486 = vld [vmem:[%s3] sm:$0x3]
    %v487 = vmul.f32 %v485, %v486
    %v488 = vld [vmem:[%s4] sm:$0xff]
    %v489 = vld [vmem:[%s4 + $0x8] sm:$0xff]
    %v490 = vld [vmem:[%s4 + $0x10] sm:$0xff]
    %v491 = vld [vmem:[%s4 + $0x18] sm:$0xff]
    %v492 = vld [vmem:[%s4 + $0x20] sm:$0xff]
    %v493 = vld [vmem:[%s4 + $0x28] sm:$0xff]
    %v494 = vld [vmem:[%s4 + $0x30] sm:$0xff]
    %v495 = vld [vmem:[%s4 + $0x38] sm:$0xff]
    %v496 = vld [vmem:[%s4 + $0x40] sm:$0xff]
    %v497 = vld [vmem:[%s4 + $0x48] sm:$0xff]
    %v498 = vld [vmem:[%s4 + $0x50] sm:$0xff]
    %v499 = vld [vmem:[%s4 + $0x58] sm:$0xff]
    %v500 = vld [vmem:[%s4 + $0x60] sm:$0xff]
    %v501 = vld [vmem:[%s4 + $0x68] sm:$0xff]
    %v502 = vld [vmem:[%s4 + $0x70] sm:$0xff]
    %v503 = vld [vmem:[%s4 + $0x78] sm:$0xff]
    %v504 = vld [vmem:[%s5] sm:$0x1]
    %v506 = vlaneseq
    %v507 = vshrl.u32 %v506, 7
    %v508 = vsub.s32 0, %v507
    %v509 = vrot.slane %v504, %v508
    %511 = vmatprep.subr.mxu0 0.0
    %512 = vmatpush1.msra.mxu0 %v488
    %513 = vmatprep.subr.mxu0 0.0
    %514 = vmatpush1.msra.mxu0 %v489
    %515 = vmatprep.subr.mxu0 0.0
    %516 = vmatpush1.msra.mxu0 %v490
    %517 = vmatprep.subr.mxu0 0.0
    %518 = vmatpush1.msra.mxu0 %v491
    %519 = vmatprep.subr.mxu0 0.0
    %520 = vmatpush1.msra.mxu0 %v492
    %521 = vmatprep.subr.mxu0 0.0
    %522 = vmatpush1.msra.mxu0 %v493
    %523 = vmatprep.subr.mxu0 0.0
    %524 = vmatpush1.msra.mxu0 %v494
    %525 = vmatprep.subr.mxu0 0.0
    %526 = vmatpush1.msra.mxu0 %v495
    %527 = vmatprep.subr.mxu0 0.0
    %528 = vmatpush1.msra.mxu0 %v496
    %529 = vmatprep.subr.mxu0 0.0
    %530 = vmatpush1.msra.mxu0 %v497
    %531 = vmatprep.subr.mxu0 0.0
    %532 = vmatpush1.msra.mxu0 %v498
    %533 = vmatprep.subr.mxu0 0.0
    %534 = vmatpush1.msra.mxu0 %v499
    %535 = vmatprep.subr.mxu0 0.0
    %536 = vmatpush1.msra.mxu0 %v500
    %537 = vmatprep.subr.mxu0 0.0
    %538 = vmatpush1.msra.mxu0 %v501
    %539 = vmatprep.subr.mxu0 0.0
    %540 = vmatpush1.msra.mxu0 %v502
    %541 = vmatprep.subr.mxu0 0.0
    %542 = vmatpush1.msra.mxu0 %v503
    %543 = vmatprep.subr.mxu0 0.0
    %544 = vmatpush1.msra.mxu0 0.0
    %545 = vmatprep.subr.mxu0 0.0
    %546 = vmatpush1.msra.mxu0 0.0
    %547 = vmatprep.subr.mxu0 0.0
    %548 = vmatpush1.msra.mxu0 0.0
    %549 = vmatprep.subr.mxu0 0.0
    %550 = vmatpush1.msra.mxu0 0.0
    %551 = vmatprep.subr.mxu0 0.0
    %552 = vmatpush1.msra.mxu0 0.0
    %553 = vmatprep.subr.mxu0 0.0
    %554 = vmatpush1.msra.mxu0 0.0
    %555 = vmatprep.subr.mxu0 0.0
    %556 = vmatpush1.msra.mxu0 0.0
    %557 = vmatprep.subr.mxu0 0.0
    %558 = vmatpush1.msra.mxu0 0.0
    %559 = vmatprep.subr.mxu0 0.0
    %560 = vmatpush1.msra.mxu0 0.0
    %561 = vmatprep.subr.mxu0 0.0
    %562 = vmatpush1.msra.mxu0 0.0
    %563 = vmatprep.subr.mxu0 0.0
    %564 = vmatpush1.msra.mxu0 0.0
    %565 = vmatprep.subr.mxu0 0.0
    %566 = vmatpush1.msra.mxu0 0.0
    %567 = vmatprep.subr.mxu0 0.0
    %568 = vmatpush1.msra.mxu0 0.0
    %569 = vmatprep.subr.mxu0 0.0
    %570 = vmatpush1.msra.mxu0 0.0
    %571 = vmatprep.subr.mxu0 0.0
    %572 = vmatpush1.msra.mxu0 0.0
    %573 = vmatprep.subr.mxu0 0.0
    %574 = vmatpush1.msra.mxu0 0.0
    %575 = vmatprep.mubr.f32.mxu0 0.0
    %576 = vmatmul.mubr.f32.gmra.mrb[0].mxu0 %v487
    %v577 = vpop.f32.mrb[0].mxu0
    %v578 = vadd.f32 %v509, %v577
    %v579 = vpop.f32.mrb[0].mxu0
    %580 = vdwg.mxu0
    %581 = vst [vmem:[#allocation2] sm:$0x3] %v578
    // Predicated region
    $region26: #{crnn_forward.9} parent=1 // pred_check
      _
    $region27: #{crnn_forward.9} parent=1 // pred_check_branch
      %583 = sbr.rel (0) target = $region29
    $region28: #{crnn_forward.9} parent=1 // pred_region
      %s585 = ssub.s32 32, 32
      %586 = vsyncadd [#allocation3], %s585
      %s588 = sshll.u32 [#allocation2], 4
      %s589 = int_to_ptr.vmem [resolvable:$true] %s588
      %591 = dma.vmem_to_hbm [thread:$0]  %s589, 32, %s6, [#allocation3]
    $region29: #{crnn_forward.9} parent=1 // pred_fallthru
      _
    // Predicated region
    $region30: #{crnn_forward.9} parent=1 // pred_check
      _
    $region31: #{crnn_forward.9} parent=1 // pred_check_branch
      %593 = sbr.rel (0) target = $region33
    $region32: #{crnn_forward.9} parent=1 // pred_region
      %594 = dma.done [#allocation3], 32
    $region33: #{crnn_forward.9} parent=1 // pred_fallthru
      _
    %595 = vsyncpa [#allocation3], 1

</llo_original>
